<compile_context>
chip_gen: v7x
topology: tpu7x:2x2x1
jax: 0.10.0
libtpu: 0.0.40
codegen_flags: <defaults>
</compile_context>

<pallas_src>
import functools

import jax
import jax.numpy as jnp
from jax.experimental import pallas as pl
from jax.experimental.pallas import tpu as pltpu


def _leaky(x, slope):
    return jnp.where(x >= 0, x, slope * x)


def _round_up(v, m):
    return ((v + m - 1) // m) * m


def _zero_halo(pad_ref, H, W, d, padl):
    """Zero only the halo strips of a (H+2d, padl+W+d, C) padded scratch.

    The interior [d:d+H, padl:padl+W, :] is fully overwritten afterwards, so
    only the strips the dilated 3x3 taps can read need to be zero."""
    Hp, Wp, C = pad_ref.shape
    dt = pad_ref.dtype
    pad_ref[0:d, :, :] = jnp.zeros((d, Wp, C), dt)                         # top
    pad_ref[d + H:Hp, :, :] = jnp.zeros((Hp - d - H, Wp, C), dt)           # bottom
    pad_ref[d:d + H, 0:padl, :] = jnp.zeros((H, padl, C), dt)              # left
    pad_ref[d:d + H, padl + W:Wp, :] = jnp.zeros((H, Wp - padl - W, C), dt)  # right


def _conv3x3_taps(pad_ref, w_ref, H, W, d, padl):
    """Dilated 3x3 conv as 9 accumulating tap matmuls (K = C each) into one
    f32 accumulator.  No im2col patch materialization."""
    C_in = pad_ref.shape[-1]
    C_out = w_ref.shape[-1]
    acc = jnp.zeros((H * W, C_out), jnp.float32)
    for t in range(9):                       # static unroll: 9 MXU dots
        kh, kw = divmod(t, 3)
        r0 = kh * d                          # row offset into the padded slab
        c0 = padl - d + kw * d               # col offset (kw==1 is sublane-aligned)
        tap = pad_ref[r0:r0 + H, c0:c0 + W, :].reshape(H * W, C_in)
        acc = acc + jnp.dot(tap, w_ref[t], preferred_element_type=jnp.float32)
    return acc


def fused_unet_conv_block_kernel(x_ref, w1_ref, b1_ref, w2_ref, b2_ref,
                                 wid_ref, bid_ref, o_ref,
                                 xpad_ref, ypad_ref,
                                 *, H, W, d, padl, slope):
    # x_ref:    (1, H, W, Cin)            NHWC input tile (one batch element)
    # w1_ref:   (9, Cin,  Cmid)           conv1 weights, per-tap layout
    # w2_ref:   (9, Cmid, Cout)           conv2 weights, per-tap layout
    # wid_ref:  (Cin, Cout)               1x1 identity weights
    # b*_ref:   (1, C)                    f32 biases
    # xpad_ref: (H+2d, padl+W+d, Cin)     VMEM scratch with zero halo
    # ypad_ref: (H+2d, padl+W+d, Cmid)    VMEM scratch with zero halo
    Cin = x_ref.shape[-1]
    Cmid = w1_ref.shape[-1]
    Cout = w2_ref.shape[-1]

    # Halo-only zeroing (interiors are fully overwritten below).  Re-done
    # every grid step so "parallel" batch sharding across cores is safe.
    _zero_halo(xpad_ref, H, W, d, padl)
    _zero_halo(ypad_ref, H, W, d, padl)

    # Stage the input interior once; the identity branch also reads from here
    # so only one VMEM copy of x feeds compute.
    xpad_ref[d:d + H, padl:padl + W, :] = x_ref[0].astype(xpad_ref.dtype)

    # conv1 (3x3, dilation d): 9 accumulating tap matmuls + bias + LeakyReLU.
    y = _conv3x3_taps(xpad_ref, w1_ref, H, W, d, padl)        # (H*W, Cmid) f32
    y = _leaky(y + b1_ref[...], slope)

    # Intermediate stays in VMEM with its zero halo -> no HBM round trip.
    ypad_ref[d:d + H, padl:padl + W, :] = (
        y.reshape(H, W, Cmid).astype(ypad_ref.dtype))

    # conv2 (3x3, dilation d): 9 accumulating tap matmuls + bias + LeakyReLU.
    z = _conv3x3_taps(ypad_ref, w2_ref, H, W, d, padl)        # (H*W, Cout) f32
    z = _leaky(z + b2_ref[...], slope)

    # 1x1 identity branch (read from the staged interior) + residual add.
    xi = xpad_ref[d:d + H, padl:padl + W, :].reshape(H * W, Cin)
    ident = jnp.dot(xi, wid_ref[...], preferred_element_type=jnp.float32)
    out = z + ident + bid_ref[...]

    o_ref[...] = out.reshape(1, H, W, Cout).astype(o_ref.dtype)


def unet_conv_block(x_nchw, params, *, d, relu_slope=0.1,
                    compute_dtype=jnp.bfloat16, out_dtype=None):
    """Pallas UNetConvBlock.forward. x_nchw: (N, Cin, H, W).

    params = (w1, b1, w2, b2, wid, bid):
      w1: (3,3,Cin,Cout) HWIO   b1: (1,Cout)
      w2: (3,3,Cout,Cout) HWIO  b2: (1,Cout)
      wid: (Cin,Cout)           bid: (1,Cout)
    compute_dtype: MXU operand dtype (bf16 default; f32 accumulation always,
    elementwise bias/LeakyReLU math always f32).  out_dtype defaults to the
    input dtype.
    """
    w1, b1, w2, b2, wid, bid = params
    assert d >= 1, "dilation/padding d must be >= 1 (as in the PyTorch module)"
    x = jnp.transpose(x_nchw, (0, 2, 3, 1))               # NCHW -> NHWC
    N, H, W, Cin = x.shape
    Cmid = w1.shape[-1]
    Cout = w2.shape[-1]
    out_dtype = x_nchw.dtype if out_dtype is None else out_dtype

    # Left halo rounded up to a sublane multiple so interior writes (and the
    # kw==1 tap reads) are aligned.  W should ideally be a multiple of 8 so
    # the (H,W,C)<->(H*W,C) reshapes around the matmuls are free relabelings.
    padl = _round_up(d, 8)
    Hp = H + 2 * d
    Wp = padl + W + d

    # Per-tap weight layout (t = kh*3 + kw): (9, Cin, Cout).
    w1r = w1.reshape(9, Cin, Cmid).astype(compute_dtype)
    w2r = w2.reshape(9, Cmid, Cout).astype(compute_dtype)
    widr = wid.astype(compute_dtype)
    x_in = x.astype(compute_dtype)
    b1f = b1.astype(jnp.float32)
    b2f = b2.astype(jnp.float32)
    bidf = bid.astype(jnp.float32)

    kernel = functools.partial(fused_unet_conv_block_kernel,
                               H=H, W=W, d=d, padl=padl, slope=relu_slope)

    # VMEM working-set estimate: double-buffered in/out blocks, padded
    # scratches, weights, f32 accumulators/temps.  Capped at 64 MiB (v7x
    # physical); on v5e/v6e this could be raised toward ~112 MiB.
    cbytes = jnp.dtype(compute_dtype).itemsize
    obytes = jnp.dtype(out_dtype).itemsize
    est = (2 * H * W * Cin * cbytes
           + 2 * H * W * Cout * obytes
           + Hp * Wp * (Cin + Cmid) * cbytes
           + (9 * Cin * Cmid + 9 * Cmid * Cout + Cin * Cout) * cbytes
           + 4 * H * W * (Cmid + 2 * Cout) * 4)
    vmem_limit = int(min(max(2 * est, 32 * 1024 * 1024), 64 * 1024 * 1024))

    out = pl.pallas_call(
        kernel,
        out_shape=jax.ShapeDtypeStruct((N, H, W, Cout), out_dtype),
        grid=(N,),
        in_specs=[
            pl.BlockSpec((1, H, W, Cin), lambda n: (n, 0, 0, 0)),
            pl.BlockSpec((9, Cin, Cmid), lambda n: (0, 0, 0)),
            pl.BlockSpec((1, Cmid), lambda n: (0, 0)),
            pl.BlockSpec((9, Cmid, Cout), lambda n: (0, 0, 0)),
            pl.BlockSpec((1, Cout), lambda n: (0, 0)),
            pl.BlockSpec((Cin, Cout), lambda n: (0, 0)),
            pl.BlockSpec((1, Cout), lambda n: (0, 0)),
        ],
        out_specs=pl.BlockSpec((1, H, W, Cout), lambda n: (n, 0, 0, 0)),
        scratch_shapes=[
            pltpu.VMEM((Hp, Wp, Cin), compute_dtype),
            pltpu.VMEM((Hp, Wp, Cmid), compute_dtype),
        ],
        compiler_params=pltpu.CompilerParams(
            dimension_semantics=("parallel",),
            vmem_limit_bytes=vmem_limit),
    )(x_in, w1r, b1f, w2r, b2f, widr, bidf)

    # TODO(synk): for large H/W add a halo'd row-band grid axis (manual DMA of
    # band+2d rows of x into xpad, recomputing the conv1 row halo per band) so
    # the fused working set stays under v7x's 64 MiB VMEM and batch-1 uses
    # both TensorCores; and for production Cout < 128 repack the output layout
    # so the lane axis is >= 128 wide (unmasked vst / full MXU width).
    return jnp.transpose(out, (0, 3, 1, 2))               # NHWC -> NCHW


# ---------------------------------------------------------------------------
# Pure-JAX reference (correctness check only)
# ---------------------------------------------------------------------------
def _ref_forward(x_nchw, params, *, d, relu_slope=0.1):
    w1, b1, w2, b2, wid, bid = params
    x = jnp.transpose(x_nchw, (0, 2, 3, 1))
    dn = ('NHWC', 'HWIO', 'NHWC')

    def conv(inp, w, b):
        y = jax.lax.conv_general_dilated(
            inp, w, window_strides=(1, 1), padding=[(d, d), (d, d)],
            rhs_dilation=(d, d), dimension_numbers=dn)
        return y + b.reshape(1, 1, 1, -1)

    y = _leaky(conv(x, w1, b1), relu_slope)
    z = _leaky(conv(y, w2, b2), relu_slope)
    ident = jnp.einsum('nhwc,co->nhwo', x, wid) + bid.reshape(1, 1, 1, -1)
    return jnp.transpose(z + ident, (0, 3, 1, 2))


if __name__ == "__main__":
    # Small shapes consistent with the module.
    N, Cin, Cout, H, W = 2, 4, 8, 16, 16
    d = 2                      # dilation (and padding) of the 3x3 convs
    relu_slope = 0.1

    key = jax.random.PRNGKey(0)
    k = jax.random.split(key, 7)
    x = jax.random.normal(k[0], (N, Cin, H, W), jnp.float32)

    # Deterministic synthetic parameters (HWIO conv weights, (1, Cout) biases).
    w1 = jax.random.normal(k[1], (3, 3, Cin, Cout), jnp.float32) * 0.1
    b1 = jax.random.normal(k[2], (1, Cout), jnp.float32) * 0.1
    w2 = jax.random.normal(k[3], (3, 3, Cout, Cout), jnp.float32) * 0.1
    b2 = jax.random.normal(k[4], (1, Cout), jnp.float32) * 0.1
    wid = jax.random.normal(k[5], (Cin, Cout), jnp.float32) * 0.1
    bid = jax.random.normal(k[6], (1, Cout), jnp.float32) * 0.1
    params = (w1, b1, w2, b2, wid, bid)

    ref = jax.block_until_ready(_ref_forward(x, params, d=d, relu_slope=relu_slope))

    # f32 MXU-operand path: tight correctness check vs the XLA conv reference.
    out_f32 = jax.block_until_ready(
        unet_conv_block(x, params, d=d, relu_slope=relu_slope,
                        compute_dtype=jnp.float32))
    assert out_f32.shape == (N, Cout, H, W)
    assert jnp.allclose(out_f32, ref, atol=5e-3, rtol=5e-3), "f32 mismatch vs reference"

    # Default bf16 MXU-operand path (v6e/v7x peak; f32 accumulation/elementwise).
    # Looser tolerance: inputs/intermediates are rounded to bf16 before the MXU.
    out_bf16 = jax.block_until_ready(
        unet_conv_block(x, params, d=d, relu_slope=relu_slope))
    assert out_bf16.shape == (N, Cout, H, W)
    assert jnp.allclose(out_bf16, ref, atol=8e-2, rtol=8e-2), "bf16 mismatch vs reference"

    print("KERNEL_OK")
</pallas_src>

<mosaic_0001>
module attributes {stable_mosaic.version = 11 : i64} {
  func.func @fused_unet_conv_block_kernel(%arg0: i32, %arg1: memref<1x16x16x4xf32, #tpu.memory_space<vmem>>, %arg2: memref<9x4x8xf32, #tpu.memory_space<vmem>>, %arg3: memref<1x8xf32, #tpu.memory_space<vmem>>, %arg4: memref<9x8x8xf32, #tpu.memory_space<vmem>>, %arg5: memref<1x8xf32, #tpu.memory_space<vmem>>, %arg6: memref<4x8xf32, #tpu.memory_space<vmem>>, %arg7: memref<1x8xf32, #tpu.memory_space<vmem>>, %arg8: memref<1x16x16x8xf32, #tpu.memory_space<vmem>>, %arg9: memref<20x26x4xf32, #tpu.memory_space<vmem>>, %arg10: memref<20x26x8xf32, #tpu.memory_space<vmem>>) attributes {dimension_semantics = [#tpu.dimension_semantics<parallel>], iteration_bounds = array<i64: 2>, scalar_prefetch = 0 : i64, scratch_operands = 2 : i64, tpu.core_type = #tpu.core_type<tc>, window_params = [{transform_indices = @transform_0, window_bounds = array<i64: 1, 16, 16, 4>}, {pipeline_mode = #tpu.pipeline_mode<synchronous>, transform_indices = @transform_1, window_bounds = array<i64: 9, 4, 8>}, {pipeline_mode = #tpu.pipeline_mode<synchronous>, transform_indices = @transform_2, window_bounds = array<i64: 1, 8>}, {pipeline_mode = #tpu.pipeline_mode<synchronous>, transform_indices = @transform_3, window_bounds = array<i64: 9, 8, 8>}, {pipeline_mode = #tpu.pipeline_mode<synchronous>, transform_indices = @transform_4, window_bounds = array<i64: 1, 8>}, {pipeline_mode = #tpu.pipeline_mode<synchronous>, transform_indices = @transform_5, window_bounds = array<i64: 4, 8>}, {pipeline_mode = #tpu.pipeline_mode<synchronous>, transform_indices = @transform_6, window_bounds = array<i64: 1, 8>}, {transform_indices = @transform_7, window_bounds = array<i64: 1, 16, 16, 8>}]} {
    %cst = arith.constant 0.000000e+00 : f32
    %0 = vector.broadcast %cst : f32 to vector<2x26x4xf32>
    %c0 = arith.constant 0 : index
    %c0_0 = arith.constant 0 : index
    %c0_1 = arith.constant 0 : index
    %1 = vector.load %arg9[%c0, %c0_0, %c0_1] : memref<20x26x4xf32, #tpu.memory_space<vmem>>, vector<2x26x4xf32>
    tpu.vector_store %arg9[%c0, %c0_0, %c0_1], %0 {strides = array<i32>} : memref<20x26x4xf32, #tpu.memory_space<vmem>>, vector<2x26x4xf32>,
    %cst_2 = arith.constant 0.000000e+00 : f32
    %2 = vector.broadcast %cst_2 : f32 to vector<2x26x4xf32>
    %c18 = arith.constant 18 : index
    %c0_3 = arith.constant 0 : index
    %c0_4 = arith.constant 0 : index
    %3 = vector.load %arg9[%c18, %c0_3, %c0_4] : memref<20x26x4xf32, #tpu.memory_space<vmem>>, vector<2x26x4xf32>
    tpu.vector_store %arg9[%c18, %c0_3, %c0_4], %2 {strides = array<i32>} : memref<20x26x4xf32, #tpu.memory_space<vmem>>, vector<2x26x4xf32>,
    %cst_5 = arith.constant 0.000000e+00 : f32
    %4 = vector.broadcast %cst_5 : f32 to vector<16x8x4xf32>
    %c2 = arith.constant 2 : index
    %c0_6 = arith.constant 0 : index
    %c0_7 = arith.constant 0 : index
    %5 = vector.load %arg9[%c2, %c0_6, %c0_7] : memref<20x26x4xf32, #tpu.memory_space<vmem>>, vector<16x8x4xf32>
    tpu.vector_store %arg9[%c2, %c0_6, %c0_7], %4 {strides = array<i32>} : memref<20x26x4xf32, #tpu.memory_space<vmem>>, vector<16x8x4xf32>,
    %cst_8 = arith.constant 0.000000e+00 : f32
    %6 = vector.broadcast %cst_8 : f32 to vector<16x2x4xf32>
    %c2_9 = arith.constant 2 : index
    %c24 = arith.constant 24 : index
    %c0_10 = arith.constant 0 : index
    %7 = vector.load %arg9[%c2_9, %c24, %c0_10] : memref<20x26x4xf32, #tpu.memory_space<vmem>>, vector<16x2x4xf32>
    tpu.vector_store %arg9[%c2_9, %c24, %c0_10], %6 {strides = array<i32>} : memref<20x26x4xf32, #tpu.memory_space<vmem>>, vector<16x2x4xf32>,
    %cst_11 = arith.constant 0.000000e+00 : f32
    %8 = vector.broadcast %cst_11 : f32 to vector<2x26x8xf32>
    %c0_12 = arith.constant 0 : index
    %c0_13 = arith.constant 0 : index
    %c0_14 = arith.constant 0 : index
    %9 = vector.load %arg10[%c0_12, %c0_13, %c0_14] : memref<20x26x8xf32, #tpu.memory_space<vmem>>, vector<2x26x8xf32>
    tpu.vector_store %arg10[%c0_12, %c0_13, %c0_14], %8 {strides = array<i32>} : memref<20x26x8xf32, #tpu.memory_space<vmem>>, vector<2x26x8xf32>,
    %cst_15 = arith.constant 0.000000e+00 : f32
    %10 = vector.broadcast %cst_15 : f32 to vector<2x26x8xf32>
    %c18_16 = arith.constant 18 : index
    %c0_17 = arith.constant 0 : index
    %c0_18 = arith.constant 0 : index
    %11 = vector.load %arg10[%c18_16, %c0_17, %c0_18] : memref<20x26x8xf32, #tpu.memory_space<vmem>>, vector<2x26x8xf32>
    tpu.vector_store %arg10[%c18_16, %c0_17, %c0_18], %10 {strides = array<i32>} : memref<20x26x8xf32, #tpu.memory_space<vmem>>, vector<2x26x8xf32>,
    %cst_19 = arith.constant 0.000000e+00 : f32
    %12 = vector.broadcast %cst_19 : f32 to vector<16x8x8xf32>
    %c2_20 = arith.constant 2 : index
    %c0_21 = arith.constant 0 : index
    %c0_22 = arith.constant 0 : index
    %13 = vector.load %arg10[%c2_20, %c0_21, %c0_22] : memref<20x26x8xf32, #tpu.memory_space<vmem>>, vector<16x8x8xf32>
    tpu.vector_store %arg10[%c2_20, %c0_21, %c0_22], %12 {strides = array<i32>} : memref<20x26x8xf32, #tpu.memory_space<vmem>>, vector<16x8x8xf32>,
    %cst_23 = arith.constant 0.000000e+00 : f32
    %14 = vector.broadcast %cst_23 : f32 to vector<16x2x8xf32>
    %c2_24 = arith.constant 2 : index
    %c24_25 = arith.constant 24 : index
    %c0_26 = arith.constant 0 : index
    %15 = vector.load %arg10[%c2_24, %c24_25, %c0_26] : memref<20x26x8xf32, #tpu.memory_space<vmem>>, vector<16x2x8xf32>
    tpu.vector_store %arg10[%c2_24, %c24_25, %c0_26], %14 {strides = array<i32>} : memref<20x26x8xf32, #tpu.memory_space<vmem>>, vector<16x2x8xf32>,
    %c0_27 = arith.constant 0 : index
    %c0_28 = arith.constant 0 : index
    %c0_29 = arith.constant 0 : index
    %c0_30 = arith.constant 0 : index
    %16 = vector.load %arg1[%c0_27, %c0_28, %c0_29, %c0_30] : memref<1x16x16x4xf32, #tpu.memory_space<vmem>>, vector<1x16x16x4xf32>
    %17 = vector.shape_cast %16 : vector<1x16x16x4xf32> to vector<16x16x4xf32>
    %c2_31 = arith.constant 2 : index
    %c8 = arith.constant 8 : index
    %c0_32 = arith.constant 0 : index
    %18 = vector.load %arg9[%c2_31, %c8, %c0_32] : memref<20x26x4xf32, #tpu.memory_space<vmem>>, vector<16x16x4xf32>
    tpu.vector_store %arg9[%c2_31, %c8, %c0_32], %17 {strides = array<i32>} : memref<20x26x4xf32, #tpu.memory_space<vmem>>, vector<16x16x4xf32>,
    %cst_33 = arith.constant 0.000000e+00 : f32
    %19 = vector.broadcast %cst_33 : f32 to vector<256x8xf32>
    %c0_34 = arith.constant 0 : index
    %c6 = arith.constant 6 : index
    %c0_35 = arith.constant 0 : index
    %20 = vector.load %arg9[%c0_34, %c6, %c0_35] : memref<20x26x4xf32, #tpu.memory_space<vmem>>, vector<16x16x4xf32>
    %21 = vector.shape_cast %20 : vector<16x16x4xf32> to vector<256x4xf32>
    %c0_36 = arith.constant 0 : index
    %c0_37 = arith.constant 0 : index
    %c0_38 = arith.constant 0 : index
    %22 = vector.load %arg2[%c0_36, %c0_37, %c0_38] : memref<9x4x8xf32, #tpu.memory_space<vmem>>, vector<1x4x8xf32>
    %23 = vector.shape_cast %22 : vector<1x4x8xf32> to vector<4x8xf32>
    %cst_39 = arith.constant dense<0.000000e+00> : vector<256x8xf32>
    %24 = tpu.matmul %21, %23, %cst_39 {dimension_numbers = #tpu.dot_dimension_numbers<[1], [0], [0], [1], [0, 0, 1, 1], [], []>} : vector<256x4xf32>, vector<4x8xf32>, vector<256x8xf32> -> vector<256x8xf32>
    %25 = arith.addf %19, %24 : vector<256x8xf32>
    %c0_40 = arith.constant 0 : index
    %c8_41 = arith.constant 8 : index
    %c0_42 = arith.constant 0 : index
    %26 = vector.load %arg9[%c0_40, %c8_41, %c0_42] : memref<20x26x4xf32, #tpu.memory_space<vmem>>, vector<16x16x4xf32>
    %27 = vector.shape_cast %26 : vector<16x16x4xf32> to vector<256x4xf32>
    %c1 = arith.constant 1 : index
    %c0_43 = arith.constant 0 : index
    %c0_44 = arith.constant 0 : index
    %28 = vector.load %arg2[%c1, %c0_43, %c0_44] : memref<9x4x8xf32, #tpu.memory_space<vmem>>, vector<1x4x8xf32>
    %29 = vector.shape_cast %28 : vector<1x4x8xf32> to vector<4x8xf32>
    %cst_45 = arith.constant dense<0.000000e+00> : vector<256x8xf32>
    %30 = tpu.matmul %27, %29, %cst_45 {dimension_numbers = #tpu.dot_dimension_numbers<[1], [0], [0], [1], [0, 0, 1, 1], [], []>} : vector<256x4xf32>, vector<4x8xf32>, vector<256x8xf32> -> vector<256x8xf32>
    %31 = arith.addf %25, %30 : vector<256x8xf32>
    %c0_46 = arith.constant 0 : index
    %c10 = arith.constant 10 : index
    %c0_47 = arith.constant 0 : index
    %32 = vector.load %arg9[%c0_46, %c10, %c0_47] : memref<20x26x4xf32, #tpu.memory_space<vmem>>, vector<16x16x4xf32>
    %33 = vector.shape_cast %32 : vector<16x16x4xf32> to vector<256x4xf32>
    %c2_48 = arith.constant 2 : index
    %c0_49 = arith.constant 0 : index
    %c0_50 = arith.constant 0 : index
    %34 = vector.load %arg2[%c2_48, %c0_49, %c0_50] : memref<9x4x8xf32, #tpu.memory_space<vmem>>, vector<1x4x8xf32>
    %35 = vector.shape_cast %34 : vector<1x4x8xf32> to vector<4x8xf32>
    %cst_51 = arith.constant dense<0.000000e+00> : vector<256x8xf32>
    %36 = tpu.matmul %33, %35, %cst_51 {dimension_numbers = #tpu.dot_dimension_numbers<[1], [0], [0], [1], [0, 0, 1, 1], [], []>} : vector<256x4xf32>, vector<4x8xf32>, vector<256x8xf32> -> vector<256x8xf32>
    %37 = arith.addf %31, %36 : vector<256x8xf32>
    %c2_52 = arith.constant 2 : index
    %c6_53 = arith.constant 6 : index
    %c0_54 = arith.constant 0 : index
    %38 = vector.load %arg9[%c2_52, %c6_53, %c0_54] : memref<20x26x4xf32, #tpu.memory_space<vmem>>, vector<16x16x4xf32>
    %39 = vector.shape_cast %38 : vector<16x16x4xf32> to vector<256x4xf32>
    %c3 = arith.constant 3 : index
    %c0_55 = arith.constant 0 : index
    %c0_56 = arith.constant 0 : index
    %40 = vector.load %arg2[%c3, %c0_55, %c0_56] : memref<9x4x8xf32, #tpu.memory_space<vmem>>, vector<1x4x8xf32>
    %41 = vector.shape_cast %40 : vector<1x4x8xf32> to vector<4x8xf32>
    %cst_57 = arith.constant dense<0.000000e+00> : vector<256x8xf32>
    %42 = tpu.matmul %39, %41, %cst_57 {dimension_numbers = #tpu.dot_dimension_numbers<[1], [0], [0], [1], [0, 0, 1, 1], [], []>} : vector<256x4xf32>, vector<4x8xf32>, vector<256x8xf32> -> vector<256x8xf32>
    %43 = arith.addf %37, %42 : vector<256x8xf32>
    %c2_58 = arith.constant 2 : index
    %c8_59 = arith.constant 8 : index
    %c0_60 = arith.constant 0 : index
    %44 = vector.load %arg9[%c2_58, %c8_59, %c0_60] : memref<20x26x4xf32, #tpu.memory_space<vmem>>, vector<16x16x4xf32>
    %45 = vector.shape_cast %44 : vector<16x16x4xf32> to vector<256x4xf32>
    %c4 = arith.constant 4 : index
    %c0_61 = arith.constant 0 : index
    %c0_62 = arith.constant 0 : index
    %46 = vector.load %arg2[%c4, %c0_61, %c0_62] : memref<9x4x8xf32, #tpu.memory_space<vmem>>, vector<1x4x8xf32>
    %47 = vector.shape_cast %46 : vector<1x4x8xf32> to vector<4x8xf32>
    %cst_63 = arith.constant dense<0.000000e+00> : vector<256x8xf32>
    %48 = tpu.matmul %45, %47, %cst_63 {dimension_numbers = #tpu.dot_dimension_numbers<[1], [0], [0], [1], [0, 0, 1, 1], [], []>} : vector<256x4xf32>, vector<4x8xf32>, vector<256x8xf32> -> vector<256x8xf32>
    %49 = arith.addf %43, %48 : vector<256x8xf32>
    %c2_64 = arith.constant 2 : index
    %c10_65 = arith.constant 10 : index
    %c0_66 = arith.constant 0 : index
    %50 = vector.load %arg9[%c2_64, %c10_65, %c0_66] : memref<20x26x4xf32, #tpu.memory_space<vmem>>, vector<16x16x4xf32>
    %51 = vector.shape_cast %50 : vector<16x16x4xf32> to vector<256x4xf32>
    %c5 = arith.constant 5 : index
    %c0_67 = arith.constant 0 : index
    %c0_68 = arith.constant 0 : index
    %52 = vector.load %arg2[%c5, %c0_67, %c0_68] : memref<9x4x8xf32, #tpu.memory_space<vmem>>, vector<1x4x8xf32>
    %53 = vector.shape_cast %52 : vector<1x4x8xf32> to vector<4x8xf32>
    %cst_69 = arith.constant dense<0.000000e+00> : vector<256x8xf32>
    %54 = tpu.matmul %51, %53, %cst_69 {dimension_numbers = #tpu.dot_dimension_numbers<[1], [0], [0], [1], [0, 0, 1, 1], [], []>} : vector<256x4xf32>, vector<4x8xf32>, vector<256x8xf32> -> vector<256x8xf32>
    %55 = arith.addf %49, %54 : vector<256x8xf32>
    %c4_70 = arith.constant 4 : index
    %c6_71 = arith.constant 6 : index
    %c0_72 = arith.constant 0 : index
    %56 = vector.load %arg9[%c4_70, %c6_71, %c0_72] : memref<20x26x4xf32, #tpu.memory_space<vmem>>, vector<16x16x4xf32>
    %57 = vector.shape_cast %56 : vector<16x16x4xf32> to vector<256x4xf32>
    %c6_73 = arith.constant 6 : index
    %c0_74 = arith.constant 0 : index
    %c0_75 = arith.constant 0 : index
    %58 = vector.load %arg2[%c6_73, %c0_74, %c0_75] : memref<9x4x8xf32, #tpu.memory_space<vmem>>, vector<1x4x8xf32>
    %59 = vector.shape_cast %58 : vector<1x4x8xf32> to vector<4x8xf32>
    %cst_76 = arith.constant dense<0.000000e+00> : vector<256x8xf32>
    %60 = tpu.matmul %57, %59, %cst_76 {dimension_numbers = #tpu.dot_dimension_numbers<[1], [0], [0], [1], [0, 0, 1, 1], [], []>} : vector<256x4xf32>, vector<4x8xf32>, vector<256x8xf32> -> vector<256x8xf32>
    %61 = arith.addf %55, %60 : vector<256x8xf32>
    %c4_77 = arith.constant 4 : index
    %c8_78 = arith.constant 8 : index
    %c0_79 = arith.constant 0 : index
    %62 = vector.load %arg9[%c4_77, %c8_78, %c0_79] : memref<20x26x4xf32, #tpu.memory_space<vmem>>, vector<16x16x4xf32>
    %63 = vector.shape_cast %62 : vector<16x16x4xf32> to vector<256x4xf32>
    %c7 = arith.constant 7 : index
    %c0_80 = arith.constant 0 : index
    %c0_81 = arith.constant 0 : index
    %64 = vector.load %arg2[%c7, %c0_80, %c0_81] : memref<9x4x8xf32, #tpu.memory_space<vmem>>, vector<1x4x8xf32>
    %65 = vector.shape_cast %64 : vector<1x4x8xf32> to vector<4x8xf32>
    %cst_82 = arith.constant dense<0.000000e+00> : vector<256x8xf32>
    %66 = tpu.matmul %63, %65, %cst_82 {dimension_numbers = #tpu.dot_dimension_numbers<[1], [0], [0], [1], [0, 0, 1, 1], [], []>} : vector<256x4xf32>, vector<4x8xf32>, vector<256x8xf32> -> vector<256x8xf32>
    %67 = arith.addf %61, %66 : vector<256x8xf32>
    %c4_83 = arith.constant 4 : index
    %c10_84 = arith.constant 10 : index
    %c0_85 = arith.constant 0 : index
    %68 = vector.load %arg9[%c4_83, %c10_84, %c0_85] : memref<20x26x4xf32, #tpu.memory_space<vmem>>, vector<16x16x4xf32>
    %69 = vector.shape_cast %68 : vector<16x16x4xf32> to vector<256x4xf32>
    %c8_86 = arith.constant 8 : index
    %c0_87 = arith.constant 0 : index
    %c0_88 = arith.constant 0 : index
    %70 = vector.load %arg2[%c8_86, %c0_87, %c0_88] : memref<9x4x8xf32, #tpu.memory_space<vmem>>, vector<1x4x8xf32>
    %71 = vector.shape_cast %70 : vector<1x4x8xf32> to vector<4x8xf32>
    %cst_89 = arith.constant dense<0.000000e+00> : vector<256x8xf32>
    %72 = tpu.matmul %69, %71, %cst_89 {dimension_numbers = #tpu.dot_dimension_numbers<[1], [0], [0], [1], [0, 0, 1, 1], [], []>} : vector<256x4xf32>, vector<4x8xf32>, vector<256x8xf32> -> vector<256x8xf32>
    %73 = arith.addf %67, %72 : vector<256x8xf32>
    %c0_90 = arith.constant 0 : index
    %c0_91 = arith.constant 0 : index
    %74 = vector.load %arg3[%c0_90, %c0_91] : memref<1x8xf32, #tpu.memory_space<vmem>>, vector<1x8xf32>
    %75 = vector.broadcast %74 : vector<1x8xf32> to vector<256x8xf32>
    %76 = arith.addf %73, %75 : vector<256x8xf32>
    %cst_92 = arith.constant 0.000000e+00 : f32
    %77 = vector.broadcast %cst_92 : f32 to vector<256x8xf32>
    %78 = arith.cmpf oge, %76, %77 : vector<256x8xf32>
    %cst_93 = arith.constant 1.000000e-01 : f32
    %79 = vector.broadcast %cst_93 : f32 to vector<256x8xf32>
    %80 = arith.mulf %79, %76 : vector<256x8xf32>
    %81 = arith.select %78, %76, %80 : vector<256x8xi1>, vector<256x8xf32>
    %82 = vector.shape_cast %81 : vector<256x8xf32> to vector<16x16x8xf32>
    %c2_94 = arith.constant 2 : index
    %c8_95 = arith.constant 8 : index
    %c0_96 = arith.constant 0 : index
    %83 = vector.load %arg10[%c2_94, %c8_95, %c0_96] : memref<20x26x8xf32, #tpu.memory_space<vmem>>, vector<16x16x8xf32>
    tpu.vector_store %arg10[%c2_94, %c8_95, %c0_96], %82 {strides = array<i32>} : memref<20x26x8xf32, #tpu.memory_space<vmem>>, vector<16x16x8xf32>,
    %cst_97 = arith.constant 0.000000e+00 : f32
    %84 = vector.broadcast %cst_97 : f32 to vector<256x8xf32>
    %c0_98 = arith.constant 0 : index
    %c6_99 = arith.constant 6 : index
    %c0_100 = arith.constant 0 : index
    %85 = vector.load %arg10[%c0_98, %c6_99, %c0_100] : memref<20x26x8xf32, #tpu.memory_space<vmem>>, vector<16x16x8xf32>
    %86 = vector.shape_cast %85 : vector<16x16x8xf32> to vector<256x8xf32>
    %c0_101 = arith.constant 0 : index
    %c0_102 = arith.constant 0 : index
    %c0_103 = arith.constant 0 : index
    %87 = vector.load %arg4[%c0_101, %c0_102, %c0_103] : memref<9x8x8xf32, #tpu.memory_space<vmem>>, vector<1x8x8xf32>
    %88 = vector.shape_cast %87 : vector<1x8x8xf32> to vector<8x8xf32>
    %cst_104 = arith.constant dense<0.000000e+00> : vector<256x8xf32>
    %89 = tpu.matmul %86, %88, %cst_104 {dimension_numbers = #tpu.dot_dimension_numbers<[1], [0], [0], [1], [0, 0, 1, 1], [], []>} : vector<256x8xf32>, vector<8x8xf32>, vector<256x8xf32> -> vector<256x8xf32>
    %90 = arith.addf %84, %89 : vector<256x8xf32>
    %c0_105 = arith.constant 0 : index
    %c8_106 = arith.constant 8 : index
    %c0_107 = arith.constant 0 : index
    %91 = vector.load %arg10[%c0_105, %c8_106, %c0_107] : memref<20x26x8xf32, #tpu.memory_space<vmem>>, vector<16x16x8xf32>
    %92 = vector.shape_cast %91 : vector<16x16x8xf32> to vector<256x8xf32>
    %c1_108 = arith.constant 1 : index
    %c0_109 = arith.constant 0 : index
    %c0_110 = arith.constant 0 : index
    %93 = vector.load %arg4[%c1_108, %c0_109, %c0_110] : memref<9x8x8xf32, #tpu.memory_space<vmem>>, vector<1x8x8xf32>
    %94 = vector.shape_cast %93 : vector<1x8x8xf32> to vector<8x8xf32>
    %cst_111 = arith.constant dense<0.000000e+00> : vector<256x8xf32>
    %95 = tpu.matmul %92, %94, %cst_111 {dimension_numbers = #tpu.dot_dimension_numbers<[1], [0], [0], [1], [0, 0, 1, 1], [], []>} : vector<256x8xf32>, vector<8x8xf32>, vector<256x8xf32> -> vector<256x8xf32>
    %96 = arith.addf %90, %95 : vector<256x8xf32>
    %c0_112 = arith.constant 0 : index
    %c10_113 = arith.constant 10 : index
    %c0_114 = arith.constant 0 : index
    %97 = vector.load %arg10[%c0_112, %c10_113, %c0_114] : memref<20x26x8xf32, #tpu.memory_space<vmem>>, vector<16x16x8xf32>
    %98 = vector.shape_cast %97 : vector<16x16x8xf32> to vector<256x8xf32>
    %c2_115 = arith.constant 2 : index
    %c0_116 = arith.constant 0 : index
    %c0_117 = arith.constant 0 : index
    %99 = vector.load %arg4[%c2_115, %c0_116, %c0_117] : memref<9x8x8xf32, #tpu.memory_space<vmem>>, vector<1x8x8xf32>
    %100 = vector.shape_cast %99 : vector<1x8x8xf32> to vector<8x8xf32>
    %cst_118 = arith.constant dense<0.000000e+00> : vector<256x8xf32>
    %101 = tpu.matmul %98, %100, %cst_118 {dimension_numbers = #tpu.dot_dimension_numbers<[1], [0], [0], [1], [0, 0, 1, 1], [], []>} : vector<256x8xf32>, vector<8x8xf32>, vector<256x8xf32> -> vector<256x8xf32>
    %102 = arith.addf %96, %101 : vector<256x8xf32>
    %c2_119 = arith.constant 2 : index
    %c6_120 = arith.constant 6 : index
    %c0_121 = arith.constant 0 : index
    %103 = vector.load %arg10[%c2_119, %c6_120, %c0_121] : memref<20x26x8xf32, #tpu.memory_space<vmem>>, vector<16x16x8xf32>
    %104 = vector.shape_cast %103 : vector<16x16x8xf32> to vector<256x8xf32>
    %c3_122 = arith.constant 3 : index
    %c0_123 = arith.constant 0 : index
    %c0_124 = arith.constant 0 : index
    %105 = vector.load %arg4[%c3_122, %c0_123, %c0_124] : memref<9x8x8xf32, #tpu.memory_space<vmem>>, vector<1x8x8xf32>
    %106 = vector.shape_cast %105 : vector<1x8x8xf32> to vector<8x8xf32>
    %cst_125 = arith.constant dense<0.000000e+00> : vector<256x8xf32>
    %107 = tpu.matmul %104, %106, %cst_125 {dimension_numbers = #tpu.dot_dimension_numbers<[1], [0], [0], [1], [0, 0, 1, 1], [], []>} : vector<256x8xf32>, vector<8x8xf32>, vector<256x8xf32> -> vector<256x8xf32>
    %108 = arith.addf %102, %107 : vector<256x8xf32>
    %c2_126 = arith.constant 2 : index
    %c8_127 = arith.constant 8 : index
    %c0_128 = arith.constant 0 : index
    %109 = vector.load %arg10[%c2_126, %c8_127, %c0_128] : memref<20x26x8xf32, #tpu.memory_space<vmem>>, vector<16x16x8xf32>
    %110 = vector.shape_cast %109 : vector<16x16x8xf32> to vector<256x8xf32>
    %c4_129 = arith.constant 4 : index
    %c0_130 = arith.constant 0 : index
    %c0_131 = arith.constant 0 : index
    %111 = vector.load %arg4[%c4_129, %c0_130, %c0_131] : memref<9x8x8xf32, #tpu.memory_space<vmem>>, vector<1x8x8xf32>
    %112 = vector.shape_cast %111 : vector<1x8x8xf32> to vector<8x8xf32>
    %cst_132 = arith.constant dense<0.000000e+00> : vector<256x8xf32>
    %113 = tpu.matmul %110, %112, %cst_132 {dimension_numbers = #tpu.dot_dimension_numbers<[1], [0], [0], [1], [0, 0, 1, 1], [], []>} : vector<256x8xf32>, vector<8x8xf32>, vector<256x8xf32> -> vector<256x8xf32>
    %114 = arith.addf %108, %113 : vector<256x8xf32>
    %c2_133 = arith.constant 2 : index
    %c10_134 = arith.constant 10 : index
    %c0_135 = arith.constant 0 : index
    %115 = vector.load %arg10[%c2_133, %c10_134, %c0_135] : memref<20x26x8xf32, #tpu.memory_space<vmem>>, vector<16x16x8xf32>
    %116 = vector.shape_cast %115 : vector<16x16x8xf32> to vector<256x8xf32>
    %c5_136 = arith.constant 5 : index
    %c0_137 = arith.constant 0 : index
    %c0_138 = arith.constant 0 : index
    %117 = vector.load %arg4[%c5_136, %c0_137, %c0_138] : memref<9x8x8xf32, #tpu.memory_space<vmem>>, vector<1x8x8xf32>
    %118 = vector.shape_cast %117 : vector<1x8x8xf32> to vector<8x8xf32>
    %cst_139 = arith.constant dense<0.000000e+00> : vector<256x8xf32>
    %119 = tpu.matmul %116, %118, %cst_139 {dimension_numbers = #tpu.dot_dimension_numbers<[1], [0], [0], [1], [0, 0, 1, 1], [], []>} : vector<256x8xf32>, vector<8x8xf32>, vector<256x8xf32> -> vector<256x8xf32>
    %120 = arith.addf %114, %119 : vector<256x8xf32>
    %c4_140 = arith.constant 4 : index
    %c6_141 = arith.constant 6 : index
    %c0_142 = arith.constant 0 : index
    %121 = vector.load %arg10[%c4_140, %c6_141, %c0_142] : memref<20x26x8xf32, #tpu.memory_space<vmem>>, vector<16x16x8xf32>
    %122 = vector.shape_cast %121 : vector<16x16x8xf32> to vector<256x8xf32>
    %c6_143 = arith.constant 6 : index
    %c0_144 = arith.constant 0 : index
    %c0_145 = arith.constant 0 : index
    %123 = vector.load %arg4[%c6_143, %c0_144, %c0_145] : memref<9x8x8xf32, #tpu.memory_space<vmem>>, vector<1x8x8xf32>
    %124 = vector.shape_cast %123 : vector<1x8x8xf32> to vector<8x8xf32>
    %cst_146 = arith.constant dense<0.000000e+00> : vector<256x8xf32>
    %125 = tpu.matmul %122, %124, %cst_146 {dimension_numbers = #tpu.dot_dimension_numbers<[1], [0], [0], [1], [0, 0, 1, 1], [], []>} : vector<256x8xf32>, vector<8x8xf32>, vector<256x8xf32> -> vector<256x8xf32>
    %126 = arith.addf %120, %125 : vector<256x8xf32>
    %c4_147 = arith.constant 4 : index
    %c8_148 = arith.constant 8 : index
    %c0_149 = arith.constant 0 : index
    %127 = vector.load %arg10[%c4_147, %c8_148, %c0_149] : memref<20x26x8xf32, #tpu.memory_space<vmem>>, vector<16x16x8xf32>
    %128 = vector.shape_cast %127 : vector<16x16x8xf32> to vector<256x8xf32>
    %c7_150 = arith.constant 7 : index
    %c0_151 = arith.constant 0 : index
    %c0_152 = arith.constant 0 : index
    %129 = vector.load %arg4[%c7_150, %c0_151, %c0_152] : memref<9x8x8xf32, #tpu.memory_space<vmem>>, vector<1x8x8xf32>
    %130 = vector.shape_cast %129 : vector<1x8x8xf32> to vector<8x8xf32>
    %cst_153 = arith.constant dense<0.000000e+00> : vector<256x8xf32>
    %131 = tpu.matmul %128, %130, %cst_153 {dimension_numbers = #tpu.dot_dimension_numbers<[1], [0], [0], [1], [0, 0, 1, 1], [], []>} : vector<256x8xf32>, vector<8x8xf32>, vector<256x8xf32> -> vector<256x8xf32>
    %132 = arith.addf %126, %131 : vector<256x8xf32>
    %c4_154 = arith.constant 4 : index
    %c10_155 = arith.constant 10 : index
    %c0_156 = arith.constant 0 : index
    %133 = vector.load %arg10[%c4_154, %c10_155, %c0_156] : memref<20x26x8xf32, #tpu.memory_space<vmem>>, vector<16x16x8xf32>
    %134 = vector.shape_cast %133 : vector<16x16x8xf32> to vector<256x8xf32>
    %c8_157 = arith.constant 8 : index
    %c0_158 = arith.constant 0 : index
    %c0_159 = arith.constant 0 : index
    %135 = vector.load %arg4[%c8_157, %c0_158, %c0_159] : memref<9x8x8xf32, #tpu.memory_space<vmem>>, vector<1x8x8xf32>
    %136 = vector.shape_cast %135 : vector<1x8x8xf32> to vector<8x8xf32>
    %cst_160 = arith.constant dense<0.000000e+00> : vector<256x8xf32>
    %137 = tpu.matmul %134, %136, %cst_160 {dimension_numbers = #tpu.dot_dimension_numbers<[1], [0], [0], [1], [0, 0, 1, 1], [], []>} : vector<256x8xf32>, vector<8x8xf32>, vector<256x8xf32> -> vector<256x8xf32>
    %138 = arith.addf %132, %137 : vector<256x8xf32>
    %c0_161 = arith.constant 0 : index
    %c0_162 = arith.constant 0 : index
    %139 = vector.load %arg5[%c0_161, %c0_162] : memref<1x8xf32, #tpu.memory_space<vmem>>, vector<1x8xf32>
    %140 = vector.broadcast %139 : vector<1x8xf32> to vector<256x8xf32>
    %141 = arith.addf %138, %140 : vector<256x8xf32>
    %cst_163 = arith.constant 0.000000e+00 : f32
    %142 = vector.broadcast %cst_163 : f32 to vector<256x8xf32>
    %143 = arith.cmpf oge, %141, %142 : vector<256x8xf32>
    %cst_164 = arith.constant 1.000000e-01 : f32
    %144 = vector.broadcast %cst_164 : f32 to vector<256x8xf32>
    %145 = arith.mulf %144, %141 : vector<256x8xf32>
    %146 = arith.select %143, %141, %145 : vector<256x8xi1>, vector<256x8xf32>
    %c2_165 = arith.constant 2 : index
    %c8_166 = arith.constant 8 : index
    %c0_167 = arith.constant 0 : index
    %147 = vector.load %arg9[%c2_165, %c8_166, %c0_167] : memref<20x26x4xf32, #tpu.memory_space<vmem>>, vector<16x16x4xf32>
    %148 = vector.shape_cast %147 : vector<16x16x4xf32> to vector<256x4xf32>
    %c0_168 = arith.constant 0 : index
    %c0_169 = arith.constant 0 : index
    %149 = vector.load %arg6[%c0_168, %c0_169] : memref<4x8xf32, #tpu.memory_space<vmem>>, vector<4x8xf32>
    %cst_170 = arith.constant dense<0.000000e+00> : vector<256x8xf32>
    %150 = tpu.matmul %148, %149, %cst_170 {dimension_numbers = #tpu.dot_dimension_numbers<[1], [0], [0], [1], [0, 0, 1, 1], [], []>} : vector<256x4xf32>, vector<4x8xf32>, vector<256x8xf32> -> vector<256x8xf32>
    %151 = arith.addf %146, %150 : vector<256x8xf32>
    %c0_171 = arith.constant 0 : index
    %c0_172 = arith.constant 0 : index
    %152 = vector.load %arg7[%c0_171, %c0_172] : memref<1x8xf32, #tpu.memory_space<vmem>>, vector<1x8xf32>
    %153 = vector.broadcast %152 : vector<1x8xf32> to vector<256x8xf32>
    %154 = arith.addf %151, %153 : vector<256x8xf32>
    %155 = vector.shape_cast %154 : vector<256x8xf32> to vector<1x16x16x8xf32>
    %c0_173 = arith.constant 0 : index
    %c0_174 = arith.constant 0 : index
    %c0_175 = arith.constant 0 : index
    %c0_176 = arith.constant 0 : index
    %156 = vector.load %arg8[%c0_173, %c0_174, %c0_175, %c0_176] : memref<1x16x16x8xf32, #tpu.memory_space<vmem>>, vector<1x16x16x8xf32>
    tpu.vector_store %arg8[%c0_173, %c0_174, %c0_175, %c0_176], %155 {strides = array<i32>} : memref<1x16x16x8xf32, #tpu.memory_space<vmem>>, vector<1x16x16x8xf32>,
    return
  }
  func.func @transform_0(%arg0: i32) -> (i32, i32, i32, i32) {
    %c0_i32 = arith.constant 0 : i32
    %c0_i32_0 = arith.constant 0 : i32
    %c0_i32_1 = arith.constant 0 : i32
    %c0_i32_2 = arith.constant 0 : i32
    return %arg0, %c0_i32, %c0_i32_0, %c0_i32_1 : i32, i32, i32, i32
  }
  func.func @transform_1(%arg0: i32) -> (i32, i32, i32) {
    %c0_i32 = arith.constant 0 : i32
    %c0_i32_0 = arith.constant 0 : i32
    %c0_i32_1 = arith.constant 0 : i32
    %c0_i32_2 = arith.constant 0 : i32
    return %c0_i32, %c0_i32_0, %c0_i32_1 : i32, i32, i32
  }
  func.func @transform_2(%arg0: i32) -> (i32, i32) {
    %c0_i32 = arith.constant 0 : i32
    %c0_i32_0 = arith.constant 0 : i32
    %c0_i32_1 = arith.constant 0 : i32
    return %c0_i32, %c0_i32_0 : i32, i32
  }
  func.func @transform_3(%arg0: i32) -> (i32, i32, i32) {
    %c0_i32 = arith.constant 0 : i32
    %c0_i32_0 = arith.constant 0 : i32
    %c0_i32_1 = arith.constant 0 : i32
    %c0_i32_2 = arith.constant 0 : i32
    return %c0_i32, %c0_i32_0, %c0_i32_1 : i32, i32, i32
  }
  func.func @transform_4(%arg0: i32) -> (i32, i32) {
    %c0_i32 = arith.constant 0 : i32
    %c0_i32_0 = arith.constant 0 : i32
    %c0_i32_1 = arith.constant 0 : i32
    return %c0_i32, %c0_i32_0 : i32, i32
  }
  func.func @transform_5(%arg0: i32) -> (i32, i32) {
    %c0_i32 = arith.constant 0 : i32
    %c0_i32_0 = arith.constant 0 : i32
    %c0_i32_1 = arith.constant 0 : i32
    return %c0_i32, %c0_i32_0 : i32, i32
  }
  func.func @transform_6(%arg0: i32) -> (i32, i32) {
    %c0_i32 = arith.constant 0 : i32
    %c0_i32_0 = arith.constant 0 : i32
    %c0_i32_1 = arith.constant 0 : i32
    return %c0_i32, %c0_i32_0 : i32, i32
  }
  func.func @transform_7(%arg0: i32) -> (i32, i32, i32, i32) {
    %c0_i32 = arith.constant 0 : i32
    %c0_i32_0 = arith.constant 0 : i32
    %c0_i32_1 = arith.constant 0 : i32
    %c0_i32_2 = arith.constant 0 : i32
    return %arg0, %c0_i32, %c0_i32_0, %c0_i32_1 : i32, i32, i32, i32
  }
}

</mosaic_0001>

<llo_original>
// kernel: tpu_custom_call.1
$region0: #{tpu_custom_call.1}
  #allocation0 [shape = 'u32[]', space=smem, size = 0x4, offset = 0x4, fixed_abs, tag = 'smem constant byte address 0x4 - core index']
  #allocation1 [shape = 'u32[144,128]{1,0:T(1,128)}', space=vmem, size = 0x12000, scoped, tag = 'internal scratch']
  #allocation2 [shape = 'f32[20,26,4]{2,1,0:T(8,128)}', space=vmem, size = 0x50000, scoped, tag = 'scratch operand']
  #allocation3 [shape = 'f32[20,26,8]{2,1,0:T(8,128)}', space=vmem, size = 0x50000, scoped, tag = 'scratch operand']
  %s0 = inlined_call_operand.vmem [shape: f32[2,16,16,4], index: 0, kind: input, shape index: {}]
  %s1 = inlined_call_operand.vmem [shape: f32[9,4,8], index: 1, kind: input, shape index: {}]
  %s2 = inlined_call_operand.vmem [shape: f32[1,8], index: 2, kind: input, shape index: {}]
  %s3 = inlined_call_operand.vmem [shape: f32[9,8,8], index: 3, kind: input, shape index: {}]
  %s4 = inlined_call_operand.vmem [shape: f32[1,8], index: 4, kind: input, shape index: {}]
  %s5 = inlined_call_operand.vmem [shape: f32[4,8], index: 5, kind: input, shape index: {}]
  %s6 = inlined_call_operand.vmem [shape: f32[1,8], index: 6, kind: input, shape index: {}]
  %s7 = inlined_call_operand.vmem [shape: f32[2,16,16,8], index: 7, kind: output, shape index: {}]
  %s8 = sld [smem:[#allocation0]]
  $region61: #{tpu_custom_call.1} parent=0
    _
  %s10 = ssub.s32 1, %s8
  %s11 = scalar_select 0, %s10, %s8
  loop: start=0, step=1, limit=4
  $region2: #{tpu_custom_call.1} parent=0 // loop_pre_header
    _
  $region3: #{tpu_custom_call.1} parent=0 // loop_header
    %s13 = sphi 0, %s17
    %p14 = scmp.ge.s32.totalorder %s13, 4
    %s23 = sphi 0, %s25
    %s26 = sphi 0, %s23
    %s27 = sphi 0, %s26
    %s43 = sphi 0, %s27
    %s47 = sphi 0, %s47
    %s49 = sphi 0, %s47
    %s50 = sphi 0, %s49
    %s64 = sphi 0, %s50
    %s68 = sphi 0, %s68
    %s70 = sphi 0, %s68
    %s71 = sphi 0, %s70
    %s85 = sphi 0, %s71
    %s89 = sphi 0, %s89
    %s91 = sphi 0, %s89
    %s92 = sphi 0, %s91
    %s106 = sphi 0, %s92
    %s110 = sphi 0, %s110
    %s112 = sphi 0, %s110
    %s113 = sphi 0, %s112
    %s127 = sphi 0, %s113
    %s131 = sphi 0, %s131
    %s133 = sphi 0, %s131
    %s134 = sphi 0, %s133
    %s148 = sphi 0, %s134
    %s152 = sphi 0, %s152
    %s154 = sphi 0, %s152
    %s155 = sphi 0, %s154
    %s169 = sphi 0, %s155
    %s175 = sphi 0, %s177
    %s178 = sphi 0, %s175
    %s179 = sphi 0, %s178
    %s195 = sphi 0, %s179
  $region4: #{tpu_custom_call.1} parent=0 // loop_header_branch
    %16 = sbr.rel (%p14) target = $region8
  $region5: #{tpu_custom_call.1} parent=0 // loop_body
    %s18 = ssub.s32 %s13, 1
    %s19 = ssub.s32 %s13, 2
    %s20 = sadd.s32 %s13, 1
    %s21 = ssub.s32 %s13, %s20
    %p22 = scmp.eq.s32.totalorder %s21, 0
    %s24 = sadd.s32 %s23, 1
    %s25 = scalar_select %p22, %s23, %s24
    %p28 = pneg %p22
    %p29 = scmp.eq.s32.totalorder %s13, 1
    %p30 = por %p28, %p29
    %p31 = scmp.ne.s32.totalorder %s23, %s26
    %p32 = scmp.eq.s32.totalorder %s13, 0
    %p33 = por %p31, %p32
    %p34 = scmp.ne.s32.totalorder %s23, %s26
    %p35 = scmp.eq.s32.totalorder %s18, 1
    %p36 = por %p34, %p35
    %p37 = scmp.ne.s32.totalorder %s26, %s27
    %p38 = scmp.eq.s32.totalorder %s18, 0
    %p39 = por %p37, %p38
    %p40 = scmp.ne.s32.totalorder %s26, %s27
    %p41 = scmp.eq.s32.totalorder %s19, 1
    %p42 = por %p40, %p41
    %p44 = scmp.ne.s32.totalorder %s27, %s43
    %p45 = scmp.eq.s32.totalorder %s19, 0
    %p46 = por %p44, %p45
    %s48 = sadd.s32 %s47, 1
    %p51 = scmp.eq.s32.totalorder %s13, 1
    %p52 = scmp.ne.s32.totalorder %s47, %s49
    %p53 = scmp.eq.s32.totalorder %s13, 0
    %p54 = por %p52, %p53
    %p55 = scmp.ne.s32.totalorder %s47, %s49
    %p56 = scmp.eq.s32.totalorder %s18, 1
    %p57 = por %p55, %p56
    %p58 = scmp.ne.s32.totalorder %s49, %s50
    %p59 = scmp.eq.s32.totalorder %s18, 0
    %p60 = por %p58, %p59
    %p61 = scmp.ne.s32.totalorder %s49, %s50
    %p62 = scmp.eq.s32.totalorder %s19, 1
    %p63 = por %p61, %p62
    %p65 = scmp.ne.s32.totalorder %s50, %s64
    %p66 = scmp.eq.s32.totalorder %s19, 0
    %p67 = por %p65, %p66
    %s69 = sadd.s32 %s68, 1
    %p72 = scmp.eq.s32.totalorder %s13, 1
    %p73 = scmp.ne.s32.totalorder %s68, %s70
    %p74 = scmp.eq.s32.totalorder %s13, 0
    %p75 = por %p73, %p74
    %p76 = scmp.ne.s32.totalorder %s68, %s70
    %p77 = scmp.eq.s32.totalorder %s18, 1
    %p78 = por %p76, %p77
    %p79 = scmp.ne.s32.totalorder %s70, %s71
    %p80 = scmp.eq.s32.totalorder %s18, 0
    %p81 = por %p79, %p80
    %p82 = scmp.ne.s32.totalorder %s70, %s71
    %p83 = scmp.eq.s32.totalorder %s19, 1
    %p84 = por %p82, %p83
    %p86 = scmp.ne.s32.totalorder %s71, %s85
    %p87 = scmp.eq.s32.totalorder %s19, 0
    %p88 = por %p86, %p87
    %s90 = sadd.s32 %s89, 1
    %p93 = scmp.eq.s32.totalorder %s13, 1
    %p94 = scmp.ne.s32.totalorder %s89, %s91
    %p95 = scmp.eq.s32.totalorder %s13, 0
    %p96 = por %p94, %p95
    %p97 = scmp.ne.s32.totalorder %s89, %s91
    %p98 = scmp.eq.s32.totalorder %s18, 1
    %p99 = por %p97, %p98
    %p100 = scmp.ne.s32.totalorder %s91, %s92
    %p101 = scmp.eq.s32.totalorder %s18, 0
    %p102 = por %p100, %p101
    %p103 = scmp.ne.s32.totalorder %s91, %s92
    %p104 = scmp.eq.s32.totalorder %s19, 1
    %p105 = por %p103, %p104
    %p107 = scmp.ne.s32.totalorder %s92, %s106
    %p108 = scmp.eq.s32.totalorder %s19, 0
    %p109 = por %p107, %p108
    %s111 = sadd.s32 %s110, 1
    %p114 = scmp.eq.s32.totalorder %s13, 1
    %p115 = scmp.ne.s32.totalorder %s110, %s112
    %p116 = scmp.eq.s32.totalorder %s13, 0
    %p117 = por %p115, %p116
    %p118 = scmp.ne.s32.totalorder %s110, %s112
    %p119 = scmp.eq.s32.totalorder %s18, 1
    %p120 = por %p118, %p119
    %p121 = scmp.ne.s32.totalorder %s112, %s113
    %p122 = scmp.eq.s32.totalorder %s18, 0
    %p123 = por %p121, %p122
    %p124 = scmp.ne.s32.totalorder %s112, %s113
    %p125 = scmp.eq.s32.totalorder %s19, 1
    %p126 = por %p124, %p125
    %p128 = scmp.ne.s32.totalorder %s113, %s127
    %p129 = scmp.eq.s32.totalorder %s19, 0
    %p130 = por %p128, %p129
    %s132 = sadd.s32 %s131, 1
    %p135 = scmp.eq.s32.totalorder %s13, 1
    %p136 = scmp.ne.s32.totalorder %s131, %s133
    %p137 = scmp.eq.s32.totalorder %s13, 0
    %p138 = por %p136, %p137
    %p139 = scmp.ne.s32.totalorder %s131, %s133
    %p140 = scmp.eq.s32.totalorder %s18, 1
    %p141 = por %p139, %p140
    %p142 = scmp.ne.s32.totalorder %s133, %s134
    %p143 = scmp.eq.s32.totalorder %s18, 0
    %p144 = por %p142, %p143
    %p145 = scmp.ne.s32.totalorder %s133, %s134
    %p146 = scmp.eq.s32.totalorder %s19, 1
    %p147 = por %p145, %p146
    %p149 = scmp.ne.s32.totalorder %s134, %s148
    %p150 = scmp.eq.s32.totalorder %s19, 0
    %p151 = por %p149, %p150
    %s153 = sadd.s32 %s152, 1
    %p156 = scmp.eq.s32.totalorder %s13, 1
    %p157 = scmp.ne.s32.totalorder %s152, %s154
    %p158 = scmp.eq.s32.totalorder %s13, 0
    %p159 = por %p157, %p158
    %p160 = scmp.ne.s32.totalorder %s152, %s154
    %p161 = scmp.eq.s32.totalorder %s18, 1
    %p162 = por %p160, %p161
    %p163 = scmp.ne.s32.totalorder %s154, %s155
    %p164 = scmp.eq.s32.totalorder %s18, 0
    %p165 = por %p163, %p164
    %p166 = scmp.ne.s32.totalorder %s154, %s155
    %p167 = scmp.eq.s32.totalorder %s19, 1
    %p168 = por %p166, %p167
    %p170 = scmp.ne.s32.totalorder %s155, %s169
    %p171 = scmp.eq.s32.totalorder %s19, 0
    %p172 = por %p170, %p171
    %s173 = ssub.s32 %s13, %s20
    %p174 = scmp.eq.s32.totalorder %s173, 0
    %s176 = sadd.s32 %s175, 1
    %s177 = scalar_select %p174, %s175, %s176
    %p180 = pneg %p174
    %p181 = scmp.eq.s32.totalorder %s13, 1
    %p182 = por %p180, %p181
    %p183 = scmp.ne.s32.totalorder %s175, %s178
    %p184 = scmp.eq.s32.totalorder %s13, 0
    %p185 = por %p183, %p184
    %p186 = scmp.ne.s32.totalorder %s175, %s178
    %p187 = scmp.eq.s32.totalorder %s18, 1
    %p188 = por %p186, %p187
    %p189 = scmp.ne.s32.totalorder %s178, %s179
    %p190 = scmp.eq.s32.totalorder %s18, 0
    %p191 = por %p189, %p190
    %p192 = scmp.ne.s32.totalorder %s178, %s179
    %p193 = scmp.eq.s32.totalorder %s19, 1
    %p194 = por %p192, %p193
    %p196 = scmp.ne.s32.totalorder %s179, %s195
    %p197 = scmp.eq.s32.totalorder %s19, 0
    %p198 = por %p196, %p197
    %p199 = scmp.le.s32.totalorder 1, %s13
    %p200 = scmp.lt.s32.totalorder %s13, 3
    %p201 = pnand %p199, %p200
    %p202 = pneg %p201
    // Predicated region
    $region9: #{tpu_custom_call.1} parent=5 // pred_check
      _
    $region10: #{tpu_custom_call.1} parent=5 // pred_check_branch
      %204 = sbr.rel (%p201) target = $region12
    $region11: #{tpu_custom_call.1} parent=5 // pred_region
      %s205 = ssub.s32 %s13, 1
      // Predicated region
      $region13: #{tpu_custom_call.1} parent=11 // pred_check
        %p206 = pneg %p60
      $region14: #{tpu_custom_call.1} parent=11 // pred_check_branch
        %208 = sbr.rel (%p206) target = $region16
      $region15: #{tpu_custom_call.1} parent=11 // pred_region
        _
      $region16: #{tpu_custom_call.1} parent=11 // pred_fallthru
        _
      // Predicated region
      $region17: #{tpu_custom_call.1} parent=11 // pred_check
        %p209 = pneg %p81
      $region18: #{tpu_custom_call.1} parent=11 // pred_check_branch
        %211 = sbr.rel (%p209) target = $region20
      $region19: #{tpu_custom_call.1} parent=11 // pred_region
        _
      $region20: #{tpu_custom_call.1} parent=11 // pred_fallthru
        _
      // Predicated region
      $region21: #{tpu_custom_call.1} parent=11 // pred_check
        %p212 = pneg %p102
      $region22: #{tpu_custom_call.1} parent=11 // pred_check_branch
        %214 = sbr.rel (%p212) target = $region24
      $region23: #{tpu_custom_call.1} parent=11 // pred_region
        _
      $region24: #{tpu_custom_call.1} parent=11 // pred_fallthru
        _
      // Predicated region
      $region25: #{tpu_custom_call.1} parent=11 // pred_check
        %p215 = pneg %p123
      $region26: #{tpu_custom_call.1} parent=11 // pred_check_branch
        %217 = sbr.rel (%p215) target = $region28
      $region27: #{tpu_custom_call.1} parent=11 // pred_region
        _
      $region28: #{tpu_custom_call.1} parent=11 // pred_fallthru
        _
      // Predicated region
      $region29: #{tpu_custom_call.1} parent=11 // pred_check
        %p218 = pneg %p144
      $region30: #{tpu_custom_call.1} parent=11 // pred_check_branch
        %220 = sbr.rel (%p218) target = $region32
      $region31: #{tpu_custom_call.1} parent=11 // pred_region
        _
      $region32: #{tpu_custom_call.1} parent=11 // pred_fallthru
        _
      // Predicated region
      $region33: #{tpu_custom_call.1} parent=11 // pred_check
        %p221 = pneg %p165
      $region34: #{tpu_custom_call.1} parent=11 // pred_check_branch
        %223 = sbr.rel (%p221) target = $region36
      $region35: #{tpu_custom_call.1} parent=11 // pred_region
        _
      $region36: #{tpu_custom_call.1} parent=11 // pred_fallthru
        _
    $region12: #{tpu_custom_call.1} parent=5 // pred_fallthru
      _
    %p224 = scmp.lt.s32.totalorder %s13, 2
    // Predicated region
    $region37: #{tpu_custom_call.1} parent=5 // pred_check
      %p225 = pneg %p224
    $region38: #{tpu_custom_call.1} parent=5 // pred_check_branch
      %227 = sbr.rel (%p225) target = $region40
    $region39: #{tpu_custom_call.1} parent=5 // pred_region
      // Predicated region
      $region41: #{tpu_custom_call.1} parent=39 // pred_check
        %p228 = pneg %p33
      $region42: #{tpu_custom_call.1} parent=39 // pred_check_branch
        %230 = sbr.rel (%p228) target = $region44
      $region43: #{tpu_custom_call.1} parent=39 // pred_region
        %p231 = scmp.lt.s32.totalorder %s13, 1
        %s232 = scalar_select %p231, %s13, 1
        %s233 = smul.addr %s232, 32
        %s234 = smul.addr %s233, 8
        %s235 = scalar_lea.vmem %s0, %s234
      $region44: #{tpu_custom_call.1} parent=39 // pred_fallthru
        _
    $region40: #{tpu_custom_call.1} parent=5 // pred_fallthru
      _
    %p236 = scmp.le.s32.totalorder 1, %s13
    %p237 = scmp.lt.s32.totalorder %s13, 3
    %p238 = pnand %p236, %p237
    %p239 = pneg %p238
    // Predicated region
    $region45: #{tpu_custom_call.1} parent=5 // pred_check
      _
    $region46: #{tpu_custom_call.1} parent=5 // pred_check_branch
      %241 = sbr.rel (%p238) target = $region48
    $region47: #{tpu_custom_call.1} parent=5 // pred_region
      %s242 = ssub.s32 %s13, 1
      %p243 = scmp.lt.s32.totalorder %s18, 1
      %s244 = scalar_select %p243, %s18, 1
      %s245 = smul.addr %s244, 32
      %s246 = smul.addr %s245, 8
      %s247 = scalar_lea.vmem %s0, %s246
      %p248 = pneg %p39
      %p249 = pneg %p36
      %p250 = pneg %p60
      %p251 = pneg %p57
      %p252 = pneg %p81
      %p253 = pneg %p78
      %p254 = pneg %p102
      %p255 = pneg %p99
      %p256 = pneg %p123
      %p257 = pneg %p120
      %p258 = pneg %p144
      %p259 = pneg %p141
      %p260 = pneg %p165
      %p261 = pneg %p162
      %p262 = pneg %p191
      %p263 = pneg %p188
      %p264 = scmp.lt.s32.totalorder %s18, 1
      %s265 = scalar_select %p264, %s18, 1
      %s266 = smul.addr %s265, 32
      %s267 = smul.addr %s266, 8
      %s268 = scalar_lea.vmem %s7, %s267
      %p269 = scmp.lt.s32.totalorder %s18, 1
      %s270 = scalar_select %p269, %s18, 1
      %s271 = smul.addr %s270, 32
      %s272 = smul.addr %s271, 8
      %s273 = scalar_lea.vmem %s0, %s272
      %p274 = scmp.lt.s32.totalorder %s18, 1
      %s275 = scalar_select %p274, %s18, 1
      %s276 = smul.addr %s275, 32
      %s277 = smul.addr %s276, 8
      %s278 = scalar_lea.vmem %s7, %s277
      %vm279 = vcmask 31744
      %280 = vst.msk [vmem:[#allocation2] sm:$0xff] %vm279, 0.0
      %281 = vst.msk [vmem:[#allocation2 + $0x8] sm:$0xff] %vm279, 0.0
      %282 = vst.msk [vmem:[#allocation2 + $0x10] sm:$0xff] %vm279, 0.0
      %vm283 = vcmask 25600
      %284 = vst.msk [vmem:[#allocation2 + $0x18] sm:$0x3] %vm283, 0.0
      %285 = vst.msk [vmem:[#allocation2 + $0x20] sm:$0xff] %vm279, 0.0
      %286 = vst.msk [vmem:[#allocation2 + $0x28] sm:$0xff] %vm279, 0.0
      %287 = vst.msk [vmem:[#allocation2 + $0x30] sm:$0xff] %vm279, 0.0
      %288 = vst.msk [vmem:[#allocation2 + $0x38] sm:$0x3] %vm283, 0.0
      %s289 = scalar_lea.vmem [#allocation2], 576
      %290 = vst.msk [vmem:[%s289] sm:$0xff] %vm279, 0.0
      %291 = vst.msk [vmem:[%s289 + $0x8] sm:$0xff] %vm279, 0.0
      %292 = vst.msk [vmem:[%s289 + $0x10] sm:$0xff] %vm279, 0.0
      %293 = vst.msk [vmem:[%s289 + $0x18] sm:$0x3] %vm283, 0.0
      %294 = vst.msk [vmem:[%s289 + $0x20] sm:$0xff] %vm279, 0.0
      %295 = vst.msk [vmem:[%s289 + $0x28] sm:$0xff] %vm279, 0.0
      %296 = vst.msk [vmem:[%s289 + $0x30] sm:$0xff] %vm279, 0.0
      %297 = vst.msk [vmem:[%s289 + $0x38] sm:$0x3] %vm283, 0.0
      %s298 = scalar_lea.vmem [#allocation2], 64
      %299 = vst.msk [vmem:[%s298] sm:$0xff] %vm279, 0.0
      %300 = vst.msk [vmem:[%s298 + $0x20] sm:$0xff] %vm279, 0.0
      %301 = vst.msk [vmem:[%s298 + $0x40] sm:$0xff] %vm279, 0.0
      %302 = vst.msk [vmem:[%s298 + $0x60] sm:$0xff] %vm279, 0.0
      %303 = vst.msk [vmem:[%s298 + $0x80] sm:$0xff] %vm279, 0.0
      %304 = vst.msk [vmem:[%s298 + $0xa0] sm:$0xff] %vm279, 0.0
      %305 = vst.msk [vmem:[%s298 + $0xc0] sm:$0xff] %vm279, 0.0
      %306 = vst.msk [vmem:[%s298 + $0xe0] sm:$0xff] %vm279, 0.0
      %307 = vst.msk [vmem:[%s298 + $0x100] sm:$0xff] %vm279, 0.0
      %308 = vst.msk [vmem:[%s298 + $0x120] sm:$0xff] %vm279, 0.0
      %309 = vst.msk [vmem:[%s298 + $0x140] sm:$0xff] %vm279, 0.0
      %310 = vst.msk [vmem:[%s298 + $0x160] sm:$0xff] %vm279, 0.0
      %311 = vst.msk [vmem:[%s298 + $0x180] sm:$0xff] %vm279, 0.0
      %312 = vst.msk [vmem:[%s298 + $0x1a0] sm:$0xff] %vm279, 0.0
      %313 = vst.msk [vmem:[%s298 + $0x1c0] sm:$0xff] %vm279, 0.0
      %314 = vst.msk [vmem:[%s298 + $0x1e0] sm:$0xff] %vm279, 0.0
      %315 = vst.msk [vmem:[%s298 + $0x18] sm:$0x3] %vm283, 0.0
      %316 = vst.msk [vmem:[%s298 + $0x38] sm:$0x3] %vm283, 0.0
      %317 = vst.msk [vmem:[%s298 + $0x58] sm:$0x3] %vm283, 0.0
      %318 = vst.msk [vmem:[%s298 + $0x78] sm:$0x3] %vm283, 0.0
      %319 = vst.msk [vmem:[%s298 + $0x98] sm:$0x3] %vm283, 0.0
      %320 = vst.msk [vmem:[%s298 + $0xb8] sm:$0x3] %vm283, 0.0
      %321 = vst.msk [vmem:[%s298 + $0xd8] sm:$0x3] %vm283, 0.0
      %322 = vst.msk [vmem:[%s298 + $0xf8] sm:$0x3] %vm283, 0.0
      %323 = vst.msk [vmem:[%s298 + $0x118] sm:$0x3] %vm283, 0.0
      %324 = vst.msk [vmem:[%s298 + $0x138] sm:$0x3] %vm283, 0.0
      %325 = vst.msk [vmem:[%s298 + $0x158] sm:$0x3] %vm283, 0.0
      %326 = vst.msk [vmem:[%s298 + $0x178] sm:$0x3] %vm283, 0.0
      %327 = vst.msk [vmem:[%s298 + $0x198] sm:$0x3] %vm283, 0.0
      %328 = vst.msk [vmem:[%s298 + $0x1b8] sm:$0x3] %vm283, 0.0
      %329 = vst.msk [vmem:[%s298 + $0x1d8] sm:$0x3] %vm283, 0.0
      %330 = vst.msk [vmem:[%s298 + $0x1f8] sm:$0x3] %vm283, 0.0
      %vm331 = vcmask 64512
      %332 = vst.msk [vmem:[#allocation3] sm:$0xff] %vm331, 0.0
      %333 = vst.msk [vmem:[#allocation3 + $0x8] sm:$0xff] %vm331, 0.0
      %334 = vst.msk [vmem:[#allocation3 + $0x10] sm:$0xff] %vm331, 0.0
      %vm335 = vcmask 58368
      %336 = vst.msk [vmem:[#allocation3 + $0x18] sm:$0x3] %vm335, 0.0
      %337 = vst.msk [vmem:[#allocation3 + $0x20] sm:$0xff] %vm331, 0.0
      %338 = vst.msk [vmem:[#allocation3 + $0x28] sm:$0xff] %vm331, 0.0
      %339 = vst.msk [vmem:[#allocation3 + $0x30] sm:$0xff] %vm331, 0.0
      %340 = vst.msk [vmem:[#allocation3 + $0x38] sm:$0x3] %vm335, 0.0
      %s341 = scalar_lea.vmem [#allocation3], 576
      %342 = vst.msk [vmem:[%s341] sm:$0xff] %vm331, 0.0
      %343 = vst.msk [vmem:[%s341 + $0x8] sm:$0xff] %vm331, 0.0
      %344 = vst.msk [vmem:[%s341 + $0x10] sm:$0xff] %vm331, 0.0
      %345 = vst.msk [vmem:[%s341 + $0x18] sm:$0x3] %vm335, 0.0
      %346 = vst.msk [vmem:[%s341 + $0x20] sm:$0xff] %vm331, 0.0
      %347 = vst.msk [vmem:[%s341 + $0x28] sm:$0xff] %vm331, 0.0
      %348 = vst.msk [vmem:[%s341 + $0x30] sm:$0xff] %vm331, 0.0
      %349 = vst.msk [vmem:[%s341 + $0x38] sm:$0x3] %vm335, 0.0
      %s350 = scalar_lea.vmem [#allocation3], 64
      %351 = vst.msk [vmem:[%s350] sm:$0xff] %vm331, 0.0
      %352 = vst.msk [vmem:[%s350 + $0x20] sm:$0xff] %vm331, 0.0
      %353 = vst.msk [vmem:[%s350 + $0x40] sm:$0xff] %vm331, 0.0
      %354 = vst.msk [vmem:[%s350 + $0x60] sm:$0xff] %vm331, 0.0
      %355 = vst.msk [vmem:[%s350 + $0x80] sm:$0xff] %vm331, 0.0
      %356 = vst.msk [vmem:[%s350 + $0xa0] sm:$0xff] %vm331, 0.0
      %357 = vst.msk [vmem:[%s350 + $0xc0] sm:$0xff] %vm331, 0.0
      %358 = vst.msk [vmem:[%s350 + $0xe0] sm:$0xff] %vm331, 0.0
      %359 = vst.msk [vmem:[%s350 + $0x100] sm:$0xff] %vm331, 0.0
      %360 = vst.msk [vmem:[%s350 + $0x120] sm:$0xff] %vm331, 0.0
      %361 = vst.msk [vmem:[%s350 + $0x140] sm:$0xff] %vm331, 0.0
      %362 = vst.msk [vmem:[%s350 + $0x160] sm:$0xff] %vm331, 0.0
      %363 = vst.msk [vmem:[%s350 + $0x180] sm:$0xff] %vm331, 0.0
      %364 = vst.msk [vmem:[%s350 + $0x1a0] sm:$0xff] %vm331, 0.0
      %365 = vst.msk [vmem:[%s350 + $0x1c0] sm:$0xff] %vm331, 0.0
      %366 = vst.msk [vmem:[%s350 + $0x1e0] sm:$0xff] %vm331, 0.0
      %367 = vst.msk [vmem:[%s350 + $0x18] sm:$0x3] %vm335, 0.0
      %368 = vst.msk [vmem:[%s350 + $0x38] sm:$0x3] %vm335, 0.0
      %369 = vst.msk [vmem:[%s350 + $0x58] sm:$0x3] %vm335, 0.0
      %370 = vst.msk [vmem:[%s350 + $0x78] sm:$0x3] %vm335, 0.0
      %371 = vst.msk [vmem:[%s350 + $0x98] sm:$0x3] %vm335, 0.0
      %372 = vst.msk [vmem:[%s350 + $0xb8] sm:$0x3] %vm335, 0.0
      %373 = vst.msk [vmem:[%s350 + $0xd8] sm:$0x3] %vm335, 0.0
      %374 = vst.msk [vmem:[%s350 + $0xf8] sm:$0x3] %vm335, 0.0
      %375 = vst.msk [vmem:[%s350 + $0x118] sm:$0x3] %vm335, 0.0
      %376 = vst.msk [vmem:[%s350 + $0x138] sm:$0x3] %vm335, 0.0
      %377 = vst.msk [vmem:[%s350 + $0x158] sm:$0x3] %vm335, 0.0
      %378 = vst.msk [vmem:[%s350 + $0x178] sm:$0x3] %vm335, 0.0
      %379 = vst.msk [vmem:[%s350 + $0x198] sm:$0x3] %vm335, 0.0
      %380 = vst.msk [vmem:[%s350 + $0x1b8] sm:$0x3] %vm335, 0.0
      %381 = vst.msk [vmem:[%s350 + $0x1d8] sm:$0x3] %vm335, 0.0
      %382 = vst.msk [vmem:[%s350 + $0x1f8] sm:$0x3] %vm335, 0.0
      %v383 = vld [vmem:[%s273] sm:$0xff]
      %v384 = vld [vmem:[%s273 + $0x8] sm:$0xff]
      %v385 = vld [vmem:[%s273 + $0x10] sm:$0xff]
      %v386 = vld [vmem:[%s273 + $0x18] sm:$0xff]
      %v387 = vld [vmem:[%s273 + $0x20] sm:$0xff]
      %v388 = vld [vmem:[%s273 + $0x28] sm:$0xff]
      %v389 = vld [vmem:[%s273 + $0x30] sm:$0xff]
      %v390 = vld [vmem:[%s273 + $0x38] sm:$0xff]
      %v391 = vld [vmem:[%s273 + $0x40] sm:$0xff]
      %v392 = vld [vmem:[%s273 + $0x48] sm:$0xff]
      %v393 = vld [vmem:[%s273 + $0x50] sm:$0xff]
      %v394 = vld [vmem:[%s273 + $0x58] sm:$0xff]
      %v395 = vld [vmem:[%s273 + $0x60] sm:$0xff]
      %v396 = vld [vmem:[%s273 + $0x68] sm:$0xff]
      %v397 = vld [vmem:[%s273 + $0x70] sm:$0xff]
      %v398 = vld [vmem:[%s273 + $0x78] sm:$0xff]
      %v399 = vld [vmem:[%s273 + $0x80] sm:$0xff]
      %v400 = vld [vmem:[%s273 + $0x88] sm:$0xff]
      %v401 = vld [vmem:[%s273 + $0x90] sm:$0xff]
      %v402 = vld [vmem:[%s273 + $0x98] sm:$0xff]
      %v403 = vld [vmem:[%s273 + $0xa0] sm:$0xff]
      %v404 = vld [vmem:[%s273 + $0xa8] sm:$0xff]
      %v405 = vld [vmem:[%s273 + $0xb0] sm:$0xff]
      %v406 = vld [vmem:[%s273 + $0xb8] sm:$0xff]
      %v407 = vld [vmem:[%s273 + $0xc0] sm:$0xff]
      %v408 = vld [vmem:[%s273 + $0xc8] sm:$0xff]
      %v409 = vld [vmem:[%s273 + $0xd0] sm:$0xff]
      %v410 = vld [vmem:[%s273 + $0xd8] sm:$0xff]
      %v411 = vld [vmem:[%s273 + $0xe0] sm:$0xff]
      %v412 = vld [vmem:[%s273 + $0xe8] sm:$0xff]
      %v413 = vld [vmem:[%s273 + $0xf0] sm:$0xff]
      %v414 = vld [vmem:[%s273 + $0xf8] sm:$0xff]
      %415 = vst.msk [vmem:[%s298 + $0x8] sm:$0xff] %vm279, %v383
      %416 = vst.msk [vmem:[%s298 + $0x10] sm:$0xff] %vm279, %v384
      %417 = vst.msk [vmem:[%s298 + $0x28] sm:$0xff] %vm279, %v385
      %418 = vst.msk [vmem:[%s298 + $0x30] sm:$0xff] %vm279, %v386
      %419 = vst.msk [vmem:[%s298 + $0x48] sm:$0xff] %vm279, %v387
      %420 = vst.msk [vmem:[%s298 + $0x50] sm:$0xff] %vm279, %v388
      %421 = vst.msk [vmem:[%s298 + $0x68] sm:$0xff] %vm279, %v389
      %422 = vst.msk [vmem:[%s298 + $0x70] sm:$0xff] %vm279, %v390
      %423 = vst.msk [vmem:[%s298 + $0x88] sm:$0xff] %vm279, %v391
      %424 = vst.msk [vmem:[%s298 + $0x90] sm:$0xff] %vm279, %v392
      %425 = vst.msk [vmem:[%s298 + $0xa8] sm:$0xff] %vm279, %v393
      %426 = vst.msk [vmem:[%s298 + $0xb0] sm:$0xff] %vm279, %v394
      %427 = vst.msk [vmem:[%s298 + $0xc8] sm:$0xff] %vm279, %v395
      %428 = vst.msk [vmem:[%s298 + $0xd0] sm:$0xff] %vm279, %v396
      %429 = vst.msk [vmem:[%s298 + $0xe8] sm:$0xff] %vm279, %v397
      %430 = vst.msk [vmem:[%s298 + $0xf0] sm:$0xff] %vm279, %v398
      %431 = vst.msk [vmem:[%s298 + $0x108] sm:$0xff] %vm279, %v399
      %432 = vst.msk [vmem:[%s298 + $0x110] sm:$0xff] %vm279, %v400
      %433 = vst.msk [vmem:[%s298 + $0x128] sm:$0xff] %vm279, %v401
      %434 = vst.msk [vmem:[%s298 + $0x130] sm:$0xff] %vm279, %v402
      %435 = vst.msk [vmem:[%s298 + $0x148] sm:$0xff] %vm279, %v403
      %436 = vst.msk [vmem:[%s298 + $0x150] sm:$0xff] %vm279, %v404
      %437 = vst.msk [vmem:[%s298 + $0x168] sm:$0xff] %vm279, %v405
      %438 = vst.msk [vmem:[%s298 + $0x170] sm:$0xff] %vm279, %v406
      %439 = vst.msk [vmem:[%s298 + $0x188] sm:$0xff] %vm279, %v407
      %440 = vst.msk [vmem:[%s298 + $0x190] sm:$0xff] %vm279, %v408
      %441 = vst.msk [vmem:[%s298 + $0x1a8] sm:$0xff] %vm279, %v409
      %442 = vst.msk [vmem:[%s298 + $0x1b0] sm:$0xff] %vm279, %v410
      %443 = vst.msk [vmem:[%s298 + $0x1c8] sm:$0xff] %vm279, %v411
      %444 = vst.msk [vmem:[%s298 + $0x1d0] sm:$0xff] %vm279, %v412
      %445 = vst.msk [vmem:[%s298 + $0x1e8] sm:$0xff] %vm279, %v413
      %446 = vst.msk [vmem:[%s298 + $0x1f0] sm:$0xff] %vm279, %v414
      %v447 = vld [vmem:[#allocation2 + $0x6] sm:$0xff]
      %v448 = vld [vmem:[#allocation2 + $0xe] sm:$0xff]
      %v449 = vld [vmem:[#allocation2 + $0x26] sm:$0xff]
      %v450 = vld [vmem:[#allocation2 + $0x2e] sm:$0xff]
      %v451 = vld [vmem:[#allocation2 + $0x46] sm:$0xff]
      %v452 = vld [vmem:[#allocation2 + $0x4e] sm:$0xff]
      %v453 = vld [vmem:[#allocation2 + $0x66] sm:$0xff]
      %v454 = vld [vmem:[#allocation2 + $0x6e] sm:$0xff]
      %v455 = vld [vmem:[#allocation2 + $0x86] sm:$0xff]
      %v456 = vld [vmem:[#allocation2 + $0x8e] sm:$0xff]
      %v457 = vld [vmem:[#allocation2 + $0xa6] sm:$0xff]
      %v458 = vld [vmem:[#allocation2 + $0xae] sm:$0xff]
      %v459 = vld [vmem:[#allocation2 + $0xc6] sm:$0xff]
      %v460 = vld [vmem:[#allocation2 + $0xce] sm:$0xff]
      %v461 = vld [vmem:[#allocation2 + $0xe6] sm:$0xff]
      %v462 = vld [vmem:[#allocation2 + $0xee] sm:$0xff]
      %v463 = vld [vmem:[#allocation2 + $0x106] sm:$0xff]
      %v464 = vld [vmem:[#allocation2 + $0x10e] sm:$0xff]
      %v465 = vld [vmem:[#allocation2 + $0x126] sm:$0xff]
      %v466 = vld [vmem:[#allocation2 + $0x12e] sm:$0xff]
      %v467 = vld [vmem:[#allocation2 + $0x146] sm:$0xff]
      %v468 = vld [vmem:[#allocation2 + $0x14e] sm:$0xff]
      %v469 = vld [vmem:[#allocation2 + $0x166] sm:$0xff]
      %v470 = vld [vmem:[#allocation2 + $0x16e] sm:$0xff]
      %v471 = vld [vmem:[#allocation2 + $0x186] sm:$0xff]
      %v472 = vld [vmem:[#allocation2 + $0x18e] sm:$0xff]
      %v473 = vld [vmem:[#allocation2 + $0x1a6] sm:$0xff]
      %v474 = vld [vmem:[#allocation2 + $0x1ae] sm:$0xff]
      %v475 = vld [vmem:[#allocation2 + $0x1c6] sm:$0xff]
      %v476 = vld [vmem:[#allocation2 + $0x1ce] sm:$0xff]
      %v477 = vld [vmem:[#allocation2 + $0x1e6] sm:$0xff]
      %v478 = vld [vmem:[#allocation2 + $0x1ee] sm:$0xff]
      %v479 = vld [vmem:[%s1] sm:$0xf]
      %v480 = vld [vmem:[#allocation2 + $0x8] sm:$0xff]
      %v481 = vld [vmem:[#allocation2 + $0x10] sm:$0xff]
      %v482 = vld [vmem:[#allocation2 + $0x28] sm:$0xff]
      %v483 = vld [vmem:[#allocation2 + $0x30] sm:$0xff]
      %v484 = vld [vmem:[#allocation2 + $0x48] sm:$0xff]
      %v485 = vld [vmem:[#allocation2 + $0x50] sm:$0xff]
      %v486 = vld [vmem:[#allocation2 + $0x68] sm:$0xff]
      %v487 = vld [vmem:[#allocation2 + $0x70] sm:$0xff]
      %v488 = vld [vmem:[#allocation2 + $0x88] sm:$0xff]
      %v489 = vld [vmem:[#allocation2 + $0x90] sm:$0xff]
      %v490 = vld [vmem:[#allocation2 + $0xa8] sm:$0xff]
      %v491 = vld [vmem:[#allocation2 + $0xb0] sm:$0xff]
      %v492 = vld [vmem:[#allocation2 + $0xc8] sm:$0xff]
      %v493 = vld [vmem:[#allocation2 + $0xd0] sm:$0xff]
      %v494 = vld [vmem:[#allocation2 + $0xe8] sm:$0xff]
      %v495 = vld [vmem:[#allocation2 + $0xf0] sm:$0xff]
      %v496 = vld [vmem:[#allocation2 + $0x108] sm:$0xff]
      %v497 = vld [vmem:[#allocation2 + $0x110] sm:$0xff]
      %v498 = vld [vmem:[#allocation2 + $0x128] sm:$0xff]
      %v499 = vld [vmem:[#allocation2 + $0x130] sm:$0xff]
      %v500 = vld [vmem:[#allocation2 + $0x148] sm:$0xff]
      %v501 = vld [vmem:[#allocation2 + $0x150] sm:$0xff]
      %v502 = vld [vmem:[#allocation2 + $0x168] sm:$0xff]
      %v503 = vld [vmem:[#allocation2 + $0x170] sm:$0xff]
      %v504 = vld [vmem:[#allocation2 + $0x188] sm:$0xff]
      %v505 = vld [vmem:[#allocation2 + $0x190] sm:$0xff]
      %v506 = vld [vmem:[#allocation2 + $0x1a8] sm:$0xff]
      %v507 = vld [vmem:[#allocation2 + $0x1b0] sm:$0xff]
      %v508 = vld [vmem:[#allocation2 + $0x1c8] sm:$0xff]
      %v509 = vld [vmem:[#allocation2 + $0x1d0] sm:$0xff]
      %v510 = vld [vmem:[#allocation2 + $0x1e8] sm:$0xff]
      %v511 = vld [vmem:[#allocation2 + $0x1f0] sm:$0xff]
      %s512 = scalar_lea.vmem %s1, 4
      %v513 = vld [vmem:[%s512] sm:$0xf]
      %v515 = vsel %vm279, %v480, 0
      %v518 = vsel %vm279, %v481, 0
      %v521 = vsel %vm279, %v482, 0
      %v524 = vsel %vm279, %v483, 0
      %v527 = vsel %vm279, %v484, 0
      %v530 = vsel %vm279, %v485, 0
      %v533 = vsel %vm279, %v486, 0
      %v536 = vsel %vm279, %v487, 0
      %v539 = vsel %vm279, %v488, 0
      %v542 = vsel %vm279, %v489, 0
      %v545 = vsel %vm279, %v490, 0
      %v548 = vsel %vm279, %v491, 0
      %v551 = vsel %vm279, %v492, 0
      %v554 = vsel %vm279, %v493, 0
      %v557 = vsel %vm279, %v494, 0
      %v560 = vsel %vm279, %v495, 0
      %v563 = vsel %vm279, %v496, 0
      %v566 = vsel %vm279, %v497, 0
      %v569 = vsel %vm279, %v498, 0
      %v572 = vsel %vm279, %v499, 0
      %v575 = vsel %vm279, %v500, 0
      %v578 = vsel %vm279, %v501, 0
      %v581 = vsel %vm279, %v502, 0
      %v584 = vsel %vm279, %v503, 0
      %v587 = vsel %vm279, %v504, 0
      %v590 = vsel %vm279, %v505, 0
      %v593 = vsel %vm279, %v506, 0
      %v596 = vsel %vm279, %v507, 0
      %v599 = vsel %vm279, %v508, 0
      %v602 = vsel %vm279, %v509, 0
      %v605 = vsel %vm279, %v510, 0
      %v608 = vsel %vm279, %v511, 0
      %vm610 = vcmask 1043456
      %v612 = vsel %vm610, %v513, 0
      %614 = vmatprep.subr.mxu0 0.0
      %615 = vmatpush1.msra.mxu0 %v612
      %616 = vmatprep.subr.mxu0 0.0
      %617 = vmatpush1.msra.mxu0 0.0
      %618 = vmatprep.subr.mxu0 0.0
      %619 = vmatpush1.msra.mxu0 0.0
      %620 = vmatprep.subr.mxu0 0.0
      %621 = vmatpush1.msra.mxu0 0.0
      %622 = vmatprep.subr.mxu0 0.0
      %623 = vmatpush1.msra.mxu0 0.0
      %624 = vmatprep.subr.mxu0 0.0
      %625 = vmatpush1.msra.mxu0 0.0
      %626 = vmatprep.subr.mxu0 0.0
      %627 = vmatpush1.msra.mxu0 0.0
      %628 = vmatprep.subr.mxu0 0.0
      %629 = vmatpush1.msra.mxu0 0.0
      %630 = vmatprep.subr.mxu0 0.0
      %631 = vmatpush1.msra.mxu0 0.0
      %632 = vmatprep.subr.mxu0 0.0
      %633 = vmatpush1.msra.mxu0 0.0
      %634 = vmatprep.subr.mxu0 0.0
      %635 = vmatpush1.msra.mxu0 0.0
      %636 = vmatprep.subr.mxu0 0.0
      %637 = vmatpush1.msra.mxu0 0.0
      %638 = vmatprep.subr.mxu0 0.0
      %639 = vmatpush1.msra.mxu0 0.0
      %640 = vmatprep.subr.mxu0 0.0
      %641 = vmatpush1.msra.mxu0 0.0
      %642 = vmatprep.subr.mxu0 0.0
      %643 = vmatpush1.msra.mxu0 0.0
      %644 = vmatprep.subr.mxu0 0.0
      %645 = vmatpush1.msra.mxu0 0.0
      %646 = vmatprep.subr.mxu0 0.0
      %647 = vmatpush1.msra.mxu0 0.0
      %648 = vmatprep.subr.mxu0 0.0
      %649 = vmatpush1.msra.mxu0 0.0
      %650 = vmatprep.subr.mxu0 0.0
      %651 = vmatpush1.msra.mxu0 0.0
      %652 = vmatprep.subr.mxu0 0.0
      %653 = vmatpush1.msra.mxu0 0.0
      %654 = vmatprep.subr.mxu0 0.0
      %655 = vmatpush1.msra.mxu0 0.0
      %656 = vmatprep.subr.mxu0 0.0
      %657 = vmatpush1.msra.mxu0 0.0
      %658 = vmatprep.subr.mxu0 0.0
      %659 = vmatpush1.msra.mxu0 0.0
      %660 = vmatprep.subr.mxu0 0.0
      %661 = vmatpush1.msra.mxu0 0.0
      %662 = vmatprep.subr.mxu0 0.0
      %663 = vmatpush1.msra.mxu0 0.0
      %664 = vmatprep.subr.mxu0 0.0
      %665 = vmatpush1.msra.mxu0 0.0
      %666 = vmatprep.subr.mxu0 0.0
      %667 = vmatpush1.msra.mxu0 0.0
      %668 = vmatprep.subr.mxu0 0.0
      %669 = vmatpush1.msra.mxu0 0.0
      %670 = vmatprep.subr.mxu0 0.0
      %671 = vmatpush1.msra.mxu0 0.0
      %672 = vmatprep.subr.mxu0 0.0
      %673 = vmatpush1.msra.mxu0 0.0
      %674 = vmatprep.subr.mxu0 0.0
      %675 = vmatpush1.msra.mxu0 0.0
      %676 = vmatprep.subr.mxu0 0.0
      %677 = vmatpush1.msra.mxu0 0.0
      %678 = vmatprep.mubr.f32.mxu0 0.0
      %679 = vmatmul.mubr.f32.gmra.mrb[0].mxu0 %v515
      %v680 = vpop.f32.mrb[0].mxu0
      %v681 = vadd.f32 0.0, %v680
      %v682 = vpop.f32.mrb[0].mxu0
      %683 = vmatprep.mubr.f32.mxu0 0.0
      %684 = vmatmul.mubr.f32.gmra.mrb[0].mxu0 %v518
      %v685 = vpop.f32.mrb[0].mxu0
      %v686 = vadd.f32 0.0, %v685
      %v687 = vpop.f32.mrb[0].mxu0
      %688 = vmatprep.mubr.f32.mxu0 0.0
      %689 = vmatmul.mubr.f32.gmra.mrb[0].mxu0 %v521
      %v690 = vpop.f32.mrb[0].mxu0
      %v691 = vadd.f32 0.0, %v690
      %v692 = vpop.f32.mrb[0].mxu0
      %693 = vmatprep.mubr.f32.mxu0 0.0
      %694 = vmatmul.mubr.f32.gmra.mrb[0].mxu0 %v524
      %v695 = vpop.f32.mrb[0].mxu0
      %v696 = vadd.f32 0.0, %v695
      %v697 = vpop.f32.mrb[0].mxu0
      %698 = vmatprep.mubr.f32.mxu0 0.0
      %699 = vmatmul.mubr.f32.gmra.mrb[0].mxu0 %v527
      %v700 = vpop.f32.mrb[0].mxu0
      %v701 = vadd.f32 0.0, %v700
      %v702 = vpop.f32.mrb[0].mxu0
      %703 = vmatprep.mubr.f32.mxu0 0.0
      %704 = vmatmul.mubr.f32.gmra.mrb[0].mxu0 %v530
      %v705 = vpop.f32.mrb[0].mxu0
      %v706 = vadd.f32 0.0, %v705
      %v707 = vpop.f32.mrb[0].mxu0
      %708 = vmatprep.mubr.f32.mxu0 0.0
      %709 = vmatmul.mubr.f32.gmra.mrb[0].mxu0 %v533
      %v710 = vpop.f32.mrb[0].mxu0
      %v711 = vadd.f32 0.0, %v710
      %v712 = vpop.f32.mrb[0].mxu0
      %713 = vmatprep.mubr.f32.mxu0 0.0
      %714 = vmatmul.mubr.f32.gmra.mrb[0].mxu0 %v536
      %v715 = vpop.f32.mrb[0].mxu0
      %v716 = vadd.f32 0.0, %v715
      %v717 = vpop.f32.mrb[0].mxu0
      %718 = vmatprep.mubr.f32.mxu0 0.0
      %719 = vmatmul.mubr.f32.gmra.mrb[0].mxu0 %v539
      %v720 = vpop.f32.mrb[0].mxu0
      %v721 = vadd.f32 0.0, %v720
      %v722 = vpop.f32.mrb[0].mxu0
      %723 = vmatprep.mubr.f32.mxu0 0.0
      %724 = vmatmul.mubr.f32.gmra.mrb[0].mxu0 %v542
      %v725 = vpop.f32.mrb[0].mxu0
      %v726 = vadd.f32 0.0, %v725
      %v727 = vpop.f32.mrb[0].mxu0
      %728 = vmatprep.mubr.f32.mxu0 0.0
      %729 = vmatmul.mubr.f32.gmra.mrb[0].mxu0 %v545
      %v730 = vpop.f32.mrb[0].mxu0
      %v731 = vadd.f32 0.0, %v730
      %v732 = vpop.f32.mrb[0].mxu0
      %733 = vmatprep.mubr.f32.mxu0 0.0
      %734 = vmatmul.mubr.f32.gmra.mrb[0].mxu0 %v548
      %v735 = vpop.f32.mrb[0].mxu0
      %v736 = vadd.f32 0.0, %v735
      %v737 = vpop.f32.mrb[0].mxu0
      %738 = vmatprep.mubr.f32.mxu0 0.0
      %739 = vmatmul.mubr.f32.gmra.mrb[0].mxu0 %v551
      %v740 = vpop.f32.mrb[0].mxu0
      %v741 = vadd.f32 0.0, %v740
      %v742 = vpop.f32.mrb[0].mxu0
      %743 = vmatprep.mubr.f32.mxu0 0.0
      %744 = vmatmul.mubr.f32.gmra.mrb[0].mxu0 %v554
      %v745 = vpop.f32.mrb[0].mxu0
      %v746 = vadd.f32 0.0, %v745
      %v747 = vpop.f32.mrb[0].mxu0
      %748 = vmatprep.mubr.f32.mxu0 0.0
      %749 = vmatmul.mubr.f32.gmra.mrb[0].mxu0 %v557
      %v750 = vpop.f32.mrb[0].mxu0
      %v751 = vadd.f32 0.0, %v750
      %v752 = vpop.f32.mrb[0].mxu0
      %753 = vmatprep.mubr.f32.mxu0 0.0
      %754 = vmatmul.mubr.f32.gmra.mrb[0].mxu0 %v560
      %v755 = vpop.f32.mrb[0].mxu0
      %v756 = vadd.f32 0.0, %v755
      %v757 = vpop.f32.mrb[0].mxu0
      %758 = vmatprep.mubr.f32.mxu0 0.0
      %759 = vmatmul.mubr.f32.gmra.mrb[0].mxu0 %v563
      %v760 = vpop.f32.mrb[0].mxu0
      %v761 = vadd.f32 0.0, %v760
      %v762 = vpop.f32.mrb[0].mxu0
      %763 = vmatprep.mubr.f32.mxu0 0.0
      %764 = vmatmul.mubr.f32.gmra.mrb[0].mxu0 %v566
      %v765 = vpop.f32.mrb[0].mxu0
      %v766 = vadd.f32 0.0, %v765
      %v767 = vpop.f32.mrb[0].mxu0
      %768 = vmatprep.mubr.f32.mxu0 0.0
      %769 = vmatmul.mubr.f32.gmra.mrb[0].mxu0 %v569
      %v770 = vpop.f32.mrb[0].mxu0
      %v771 = vadd.f32 0.0, %v770
      %v772 = vpop.f32.mrb[0].mxu0
      %773 = vmatprep.mubr.f32.mxu0 0.0
      %774 = vmatmul.mubr.f32.gmra.mrb[0].mxu0 %v572
      %v775 = vpop.f32.mrb[0].mxu0
      %v776 = vadd.f32 0.0, %v775
      %v777 = vpop.f32.mrb[0].mxu0
      %778 = vmatprep.mubr.f32.mxu0 0.0
      %779 = vmatmul.mubr.f32.gmra.mrb[0].mxu0 %v575
      %v780 = vpop.f32.mrb[0].mxu0
      %v781 = vadd.f32 0.0, %v780
      %v782 = vpop.f32.mrb[0].mxu0
      %783 = vmatprep.mubr.f32.mxu0 0.0
      %784 = vmatmul.mubr.f32.gmra.mrb[0].mxu0 %v578
      %v785 = vpop.f32.mrb[0].mxu0
      %v786 = vadd.f32 0.0, %v785
      %v787 = vpop.f32.mrb[0].mxu0
      %788 = vmatprep.mubr.f32.mxu0 0.0
      %789 = vmatmul.mubr.f32.gmra.mrb[0].mxu0 %v581
      %v790 = vpop.f32.mrb[0].mxu0
      %v791 = vadd.f32 0.0, %v790
      %v792 = vpop.f32.mrb[0].mxu0
      %793 = vmatprep.mubr.f32.mxu0 0.0
      %794 = vmatmul.mubr.f32.gmra.mrb[0].mxu0 %v584
      %v795 = vpop.f32.mrb[0].mxu0
      %v796 = vadd.f32 0.0, %v795
      %v797 = vpop.f32.mrb[0].mxu0
      %798 = vmatprep.mubr.f32.mxu0 0.0
      %799 = vmatmul.mubr.f32.gmra.mrb[0].mxu0 %v587
      %v800 = vpop.f32.mrb[0].mxu0
      %v801 = vadd.f32 0.0, %v800
      %v802 = vpop.f32.mrb[0].mxu0
      %803 = vmatprep.mubr.f32.mxu0 0.0
      %804 = vmatmul.mubr.f32.gmra.mrb[0].mxu0 %v590
      %v805 = vpop.f32.mrb[0].mxu0
      %v806 = vadd.f32 0.0, %v805
      %v807 = vpop.f32.mrb[0].mxu0
      %808 = vmatprep.mubr.f32.mxu0 0.0
      %809 = vmatmul.mubr.f32.gmra.mrb[0].mxu0 %v593
      %v810 = vpop.f32.mrb[0].mxu0
      %v811 = vadd.f32 0.0, %v810
      %v812 = vpop.f32.mrb[0].mxu0
      %813 = vmatprep.mubr.f32.mxu0 0.0
      %814 = vmatmul.mubr.f32.gmra.mrb[0].mxu0 %v596
      %v815 = vpop.f32.mrb[0].mxu0
      %v816 = vadd.f32 0.0, %v815
      %v817 = vpop.f32.mrb[0].mxu0
      %818 = vmatprep.mubr.f32.mxu0 0.0
      %819 = vmatmul.mubr.f32.gmra.mrb[0].mxu0 %v599
      %v820 = vpop.f32.mrb[0].mxu0
      %v821 = vadd.f32 0.0, %v820
      %v822 = vpop.f32.mrb[0].mxu0
      %823 = vmatprep.mubr.f32.mxu0 0.0
      %824 = vmatmul.mubr.f32.gmra.mrb[0].mxu0 %v602
      %v825 = vpop.f32.mrb[0].mxu0
      %v826 = vadd.f32 0.0, %v825
      %v827 = vpop.f32.mrb[0].mxu0
      %828 = vmatprep.mubr.f32.mxu0 0.0
      %829 = vmatmul.mubr.f32.gmra.mrb[0].mxu0 %v605
      %v830 = vpop.f32.mrb[0].mxu0
      %v831 = vadd.f32 0.0, %v830
      %v832 = vpop.f32.mrb[0].mxu0
      %833 = vmatprep.mubr.f32.mxu0 0.0
      %834 = vmatmul.mubr.f32.gmra.mrb[0].mxu0 %v608
      %v835 = vpop.f32.mrb[0].mxu0
      %v836 = vadd.f32 0.0, %v835
      %v837 = vpop.f32.mrb[0].mxu0
      %838 = vdwg.mxu0
      %v840 = vsel %vm279, %v447, 0
      %v843 = vsel %vm279, %v448, 0
      %v846 = vsel %vm279, %v449, 0
      %v849 = vsel %vm279, %v450, 0
      %v852 = vsel %vm279, %v451, 0
      %v855 = vsel %vm279, %v452, 0
      %v858 = vsel %vm279, %v453, 0
      %v861 = vsel %vm279, %v454, 0
      %v864 = vsel %vm279, %v455, 0
      %v867 = vsel %vm279, %v456, 0
      %v870 = vsel %vm279, %v457, 0
      %v873 = vsel %vm279, %v458, 0
      %v876 = vsel %vm279, %v459, 0
      %v879 = vsel %vm279, %v460, 0
      %v882 = vsel %vm279, %v461, 0
      %v885 = vsel %vm279, %v462, 0
      %v888 = vsel %vm279, %v463, 0
      %v891 = vsel %vm279, %v464, 0
      %v894 = vsel %vm279, %v465, 0
      %v897 = vsel %vm279, %v466, 0
      %v900 = vsel %vm279, %v467, 0
      %v903 = vsel %vm279, %v468, 0
      %v906 = vsel %vm279, %v469, 0
      %v909 = vsel %vm279, %v470, 0
      %v912 = vsel %vm279, %v471, 0
      %v915 = vsel %vm279, %v472, 0
      %v918 = vsel %vm279, %v473, 0
      %v921 = vsel %vm279, %v474, 0
      %v924 = vsel %vm279, %v475, 0
      %v927 = vsel %vm279, %v476, 0
      %v930 = vsel %vm279, %v477, 0
      %v933 = vsel %vm279, %v478, 0
      %v936 = vsel %vm610, %v479, 0
      %938 = vmatprep.subr.mxu0 0.0
      %939 = vmatpush1.msra.mxu0 %v936
      %940 = vmatprep.subr.mxu0 0.0
      %941 = vmatpush1.msra.mxu0 0.0
      %942 = vmatprep.subr.mxu0 0.0
      %943 = vmatpush1.msra.mxu0 0.0
      %944 = vmatprep.subr.mxu0 0.0
      %945 = vmatpush1.msra.mxu0 0.0
      %946 = vmatprep.subr.mxu0 0.0
      %947 = vmatpush1.msra.mxu0 0.0
      %948 = vmatprep.subr.mxu0 0.0
      %949 = vmatpush1.msra.mxu0 0.0
      %950 = vmatprep.subr.mxu0 0.0
      %951 = vmatpush1.msra.mxu0 0.0
      %952 = vmatprep.subr.mxu0 0.0
      %953 = vmatpush1.msra.mxu0 0.0
      %954 = vmatprep.subr.mxu0 0.0
      %955 = vmatpush1.msra.mxu0 0.0
      %956 = vmatprep.subr.mxu0 0.0
      %957 = vmatpush1.msra.mxu0 0.0
      %958 = vmatprep.subr.mxu0 0.0
      %959 = vmatpush1.msra.mxu0 0.0
      %960 = vmatprep.subr.mxu0 0.0
      %961 = vmatpush1.msra.mxu0 0.0
      %962 = vmatprep.subr.mxu0 0.0
      %963 = vmatpush1.msra.mxu0 0.0
      %964 = vmatprep.subr.mxu0 0.0
      %965 = vmatpush1.msra.mxu0 0.0
      %966 = vmatprep.subr.mxu0 0.0
      %967 = vmatpush1.msra.mxu0 0.0
      %968 = vmatprep.subr.mxu0 0.0
      %969 = vmatpush1.msra.mxu0 0.0
      %970 = vmatprep.subr.mxu0 0.0
      %971 = vmatpush1.msra.mxu0 0.0
      %972 = vmatprep.subr.mxu0 0.0
      %973 = vmatpush1.msra.mxu0 0.0
      %974 = vmatprep.subr.mxu0 0.0
      %975 = vmatpush1.msra.mxu0 0.0
      %976 = vmatprep.subr.mxu0 0.0
      %977 = vmatpush1.msra.mxu0 0.0
      %978 = vmatprep.subr.mxu0 0.0
      %979 = vmatpush1.msra.mxu0 0.0
      %980 = vmatprep.subr.mxu0 0.0
      %981 = vmatpush1.msra.mxu0 0.0
      %982 = vmatprep.subr.mxu0 0.0
      %983 = vmatpush1.msra.mxu0 0.0
      %984 = vmatprep.subr.mxu0 0.0
      %985 = vmatpush1.msra.mxu0 0.0
      %986 = vmatprep.subr.mxu0 0.0
      %987 = vmatpush1.msra.mxu0 0.0
      %988 = vmatprep.subr.mxu0 0.0
      %989 = vmatpush1.msra.mxu0 0.0
      %990 = vmatprep.subr.mxu0 0.0
      %991 = vmatpush1.msra.mxu0 0.0
      %992 = vmatprep.subr.mxu0 0.0
      %993 = vmatpush1.msra.mxu0 0.0
      %994 = vmatprep.subr.mxu0 0.0
      %995 = vmatpush1.msra.mxu0 0.0
      %996 = vmatprep.subr.mxu0 0.0
      %997 = vmatpush1.msra.mxu0 0.0
      %998 = vmatprep.subr.mxu0 0.0
      %999 = vmatpush1.msra.mxu0 0.0
      %1000 = vmatprep.subr.mxu0 0.0
      %1001 = vmatpush1.msra.mxu0 0.0
      %1002 = vmatprep.mubr.f32.mxu0 0.0
      %1003 = vmatmul.mubr.f32.gmra.mrb[0].mxu0 %v840
      %v1004 = vpop.f32.mrb[0].mxu0
      %v1005 = vadd.f32 %v681, %v1004
      %v1006 = vpop.f32.mrb[0].mxu0
      %1007 = vmatprep.mubr.f32.mxu0 0.0
      %1008 = vmatmul.mubr.f32.gmra.mrb[0].mxu0 %v843
      %v1009 = vpop.f32.mrb[0].mxu0
      %v1010 = vadd.f32 %v686, %v1009
      %v1011 = vpop.f32.mrb[0].mxu0
      %1012 = vmatprep.mubr.f32.mxu0 0.0
      %1013 = vmatmul.mubr.f32.gmra.mrb[0].mxu0 %v846
      %v1014 = vpop.f32.mrb[0].mxu0
      %v1015 = vadd.f32 %v691, %v1014
      %v1016 = vpop.f32.mrb[0].mxu0
      %1017 = vmatprep.mubr.f32.mxu0 0.0
      %1018 = vmatmul.mubr.f32.gmra.mrb[0].mxu0 %v849
      %v1019 = vpop.f32.mrb[0].mxu0
      %v1020 = vadd.f32 %v696, %v1019
      %v1021 = vpop.f32.mrb[0].mxu0
      %1022 = vmatprep.mubr.f32.mxu0 0.0
      %1023 = vmatmul.mubr.f32.gmra.mrb[0].mxu0 %v852
      %v1024 = vpop.f32.mrb[0].mxu0
      %v1025 = vadd.f32 %v701, %v1024
      %v1026 = vpop.f32.mrb[0].mxu0
      %1027 = vmatprep.mubr.f32.mxu0 0.0
      %1028 = vmatmul.mubr.f32.gmra.mrb[0].mxu0 %v855
      %v1029 = vpop.f32.mrb[0].mxu0
      %v1030 = vadd.f32 %v706, %v1029
      %v1031 = vpop.f32.mrb[0].mxu0
      %1032 = vmatprep.mubr.f32.mxu0 0.0
      %1033 = vmatmul.mubr.f32.gmra.mrb[0].mxu0 %v858
      %v1034 = vpop.f32.mrb[0].mxu0
      %v1035 = vadd.f32 %v711, %v1034
      %v1036 = vpop.f32.mrb[0].mxu0
      %1037 = vmatprep.mubr.f32.mxu0 0.0
      %1038 = vmatmul.mubr.f32.gmra.mrb[0].mxu0 %v861
      %v1039 = vpop.f32.mrb[0].mxu0
      %v1040 = vadd.f32 %v716, %v1039
      %v1041 = vpop.f32.mrb[0].mxu0
      %1042 = vmatprep.mubr.f32.mxu0 0.0
      %1043 = vmatmul.mubr.f32.gmra.mrb[0].mxu0 %v864
      %v1044 = vpop.f32.mrb[0].mxu0
      %v1045 = vadd.f32 %v721, %v1044
      %v1046 = vpop.f32.mrb[0].mxu0
      %1047 = vmatprep.mubr.f32.mxu0 0.0
      %1048 = vmatmul.mubr.f32.gmra.mrb[0].mxu0 %v867
      %v1049 = vpop.f32.mrb[0].mxu0
      %v1050 = vadd.f32 %v726, %v1049
      %v1051 = vpop.f32.mrb[0].mxu0
      %1052 = vmatprep.mubr.f32.mxu0 0.0
      %1053 = vmatmul.mubr.f32.gmra.mrb[0].mxu0 %v870
      %v1054 = vpop.f32.mrb[0].mxu0
      %v1055 = vadd.f32 %v731, %v1054
      %v1056 = vpop.f32.mrb[0].mxu0
      %1057 = vmatprep.mubr.f32.mxu0 0.0
      %1058 = vmatmul.mubr.f32.gmra.mrb[0].mxu0 %v873
      %v1059 = vpop.f32.mrb[0].mxu0
      %v1060 = vadd.f32 %v736, %v1059
      %v1061 = vpop.f32.mrb[0].mxu0
      %1062 = vmatprep.mubr.f32.mxu0 0.0
      %1063 = vmatmul.mubr.f32.gmra.mrb[0].mxu0 %v876
      %v1064 = vpop.f32.mrb[0].mxu0
      %v1065 = vadd.f32 %v741, %v1064
      %v1066 = vpop.f32.mrb[0].mxu0
      %1067 = vmatprep.mubr.f32.mxu0 0.0
      %1068 = vmatmul.mubr.f32.gmra.mrb[0].mxu0 %v879
      %v1069 = vpop.f32.mrb[0].mxu0
      %v1070 = vadd.f32 %v746, %v1069
      %v1071 = vpop.f32.mrb[0].mxu0
      %1072 = vmatprep.mubr.f32.mxu0 0.0
      %1073 = vmatmul.mubr.f32.gmra.mrb[0].mxu0 %v882
      %v1074 = vpop.f32.mrb[0].mxu0
      %v1075 = vadd.f32 %v751, %v1074
      %v1076 = vpop.f32.mrb[0].mxu0
      %1077 = vmatprep.mubr.f32.mxu0 0.0
      %1078 = vmatmul.mubr.f32.gmra.mrb[0].mxu0 %v885
      %v1079 = vpop.f32.mrb[0].mxu0
      %v1080 = vadd.f32 %v756, %v1079
      %v1081 = vpop.f32.mrb[0].mxu0
      %1082 = vmatprep.mubr.f32.mxu0 0.0
      %1083 = vmatmul.mubr.f32.gmra.mrb[0].mxu0 %v888
      %v1084 = vpop.f32.mrb[0].mxu0
      %v1085 = vadd.f32 %v761, %v1084
      %v1086 = vpop.f32.mrb[0].mxu0
      %1087 = vmatprep.mubr.f32.mxu0 0.0
      %1088 = vmatmul.mubr.f32.gmra.mrb[0].mxu0 %v891
      %v1089 = vpop.f32.mrb[0].mxu0
      %v1090 = vadd.f32 %v766, %v1089
      %v1091 = vpop.f32.mrb[0].mxu0
      %1092 = vmatprep.mubr.f32.mxu0 0.0
      %1093 = vmatmul.mubr.f32.gmra.mrb[0].mxu0 %v894
      %v1094 = vpop.f32.mrb[0].mxu0
      %v1095 = vadd.f32 %v771, %v1094
      %v1096 = vpop.f32.mrb[0].mxu0
      %1097 = vmatprep.mubr.f32.mxu0 0.0
      %1098 = vmatmul.mubr.f32.gmra.mrb[0].mxu0 %v897
      %v1099 = vpop.f32.mrb[0].mxu0
      %v1100 = vadd.f32 %v776, %v1099
      %v1101 = vpop.f32.mrb[0].mxu0
      %1102 = vmatprep.mubr.f32.mxu0 0.0
      %1103 = vmatmul.mubr.f32.gmra.mrb[0].mxu0 %v900
      %v1104 = vpop.f32.mrb[0].mxu0
      %v1105 = vadd.f32 %v781, %v1104
      %v1106 = vpop.f32.mrb[0].mxu0
      %1107 = vmatprep.mubr.f32.mxu0 0.0
      %1108 = vmatmul.mubr.f32.gmra.mrb[0].mxu0 %v903
      %v1109 = vpop.f32.mrb[0].mxu0
      %v1110 = vadd.f32 %v786, %v1109
      %v1111 = vpop.f32.mrb[0].mxu0
      %1112 = vmatprep.mubr.f32.mxu0 0.0
      %1113 = vmatmul.mubr.f32.gmra.mrb[0].mxu0 %v906
      %v1114 = vpop.f32.mrb[0].mxu0
      %v1115 = vadd.f32 %v791, %v1114
      %v1116 = vpop.f32.mrb[0].mxu0
      %1117 = vmatprep.mubr.f32.mxu0 0.0
      %1118 = vmatmul.mubr.f32.gmra.mrb[0].mxu0 %v909
      %v1119 = vpop.f32.mrb[0].mxu0
      %v1120 = vadd.f32 %v796, %v1119
      %v1121 = vpop.f32.mrb[0].mxu0
      %1122 = vmatprep.mubr.f32.mxu0 0.0
      %1123 = vmatmul.mubr.f32.gmra.mrb[0].mxu0 %v912
      %v1124 = vpop.f32.mrb[0].mxu0
      %v1125 = vadd.f32 %v801, %v1124
      %v1126 = vpop.f32.mrb[0].mxu0
      %1127 = vmatprep.mubr.f32.mxu0 0.0
      %1128 = vmatmul.mubr.f32.gmra.mrb[0].mxu0 %v915
      %v1129 = vpop.f32.mrb[0].mxu0
      %v1130 = vadd.f32 %v806, %v1129
      %v1131 = vpop.f32.mrb[0].mxu0
      %1132 = vmatprep.mubr.f32.mxu0 0.0
      %1133 = vmatmul.mubr.f32.gmra.mrb[0].mxu0 %v918
      %v1134 = vpop.f32.mrb[0].mxu0
      %v1135 = vadd.f32 %v811, %v1134
      %v1136 = vpop.f32.mrb[0].mxu0
      %1137 = vmatprep.mubr.f32.mxu0 0.0
      %1138 = vmatmul.mubr.f32.gmra.mrb[0].mxu0 %v921
      %v1139 = vpop.f32.mrb[0].mxu0
      %v1140 = vadd.f32 %v816, %v1139
      %v1141 = vpop.f32.mrb[0].mxu0
      %1142 = vmatprep.mubr.f32.mxu0 0.0
      %1143 = vmatmul.mubr.f32.gmra.mrb[0].mxu0 %v924
      %v1144 = vpop.f32.mrb[0].mxu0
      %v1145 = vadd.f32 %v821, %v1144
      %v1146 = vpop.f32.mrb[0].mxu0
      %1147 = vmatprep.mubr.f32.mxu0 0.0
      %1148 = vmatmul.mubr.f32.gmra.mrb[0].mxu0 %v927
      %v1149 = vpop.f32.mrb[0].mxu0
      %v1150 = vadd.f32 %v826, %v1149
      %v1151 = vpop.f32.mrb[0].mxu0
      %1152 = vmatprep.mubr.f32.mxu0 0.0
      %1153 = vmatmul.mubr.f32.gmra.mrb[0].mxu0 %v930
      %v1154 = vpop.f32.mrb[0].mxu0
      %v1155 = vadd.f32 %v831, %v1154
      %v1156 = vpop.f32.mrb[0].mxu0
      %1157 = vmatprep.mubr.f32.mxu0 0.0
      %1158 = vmatmul.mubr.f32.gmra.mrb[0].mxu0 %v933
      %v1159 = vpop.f32.mrb[0].mxu0
      %v1160 = vadd.f32 %v836, %v1159
      %v1161 = vpop.f32.mrb[0].mxu0
      %1162 = vdwg.mxu0
      %v1163 = vld [vmem:[#allocation2 + $0xa] sm:$0xff]
      %v1164 = vld [vmem:[#allocation2 + $0x12] sm:$0xff]
      %v1165 = vld [vmem:[#allocation2 + $0x2a] sm:$0xff]
      %v1166 = vld [vmem:[#allocation2 + $0x32] sm:$0xff]
      %v1167 = vld [vmem:[#allocation2 + $0x4a] sm:$0xff]
      %v1168 = vld [vmem:[#allocation2 + $0x52] sm:$0xff]
      %v1169 = vld [vmem:[#allocation2 + $0x6a] sm:$0xff]
      %v1170 = vld [vmem:[#allocation2 + $0x72] sm:$0xff]
      %v1171 = vld [vmem:[#allocation2 + $0x8a] sm:$0xff]
      %v1172 = vld [vmem:[#allocation2 + $0x92] sm:$0xff]
      %v1173 = vld [vmem:[#allocation2 + $0xaa] sm:$0xff]
      %v1174 = vld [vmem:[#allocation2 + $0xb2] sm:$0xff]
      %v1175 = vld [vmem:[#allocation2 + $0xca] sm:$0xff]
      %v1176 = vld [vmem:[#allocation2 + $0xd2] sm:$0xff]
      %v1177 = vld [vmem:[#allocation2 + $0xea] sm:$0xff]
      %v1178 = vld [vmem:[#allocation2 + $0xf2] sm:$0xff]
      %v1179 = vld [vmem:[#allocation2 + $0x10a] sm:$0xff]
      %v1180 = vld [vmem:[#allocation2 + $0x112] sm:$0xff]
      %v1181 = vld [vmem:[#allocation2 + $0x12a] sm:$0xff]
      %v1182 = vld [vmem:[#allocation2 + $0x132] sm:$0xff]
      %v1183 = vld [vmem:[#allocation2 + $0x14a] sm:$0xff]
      %v1184 = vld [vmem:[#allocation2 + $0x152] sm:$0xff]
      %v1185 = vld [vmem:[#allocation2 + $0x16a] sm:$0xff]
      %v1186 = vld [vmem:[#allocation2 + $0x172] sm:$0xff]
      %v1187 = vld [vmem:[#allocation2 + $0x18a] sm:$0xff]
      %v1188 = vld [vmem:[#allocation2 + $0x192] sm:$0xff]
      %v1189 = vld [vmem:[#allocation2 + $0x1aa] sm:$0xff]
      %v1190 = vld [vmem:[#allocation2 + $0x1b2] sm:$0xff]
      %v1191 = vld [vmem:[#allocation2 + $0x1ca] sm:$0xff]
      %v1192 = vld [vmem:[#allocation2 + $0x1d2] sm:$0xff]
      %v1193 = vld [vmem:[#allocation2 + $0x1ea] sm:$0xff]
      %v1194 = vld [vmem:[#allocation2 + $0x1f2] sm:$0xff]
      %s1195 = scalar_lea.vmem %s1, 8
      %v1196 = vld [vmem:[%s1195] sm:$0xf]
      %v1198 = vsel %vm279, %v1163, 0
      %v1201 = vsel %vm279, %v1164, 0
      %v1204 = vsel %vm279, %v1165, 0
      %v1207 = vsel %vm279, %v1166, 0
      %v1210 = vsel %vm279, %v1167, 0
      %v1213 = vsel %vm279, %v1168, 0
      %v1216 = vsel %vm279, %v1169, 0
      %v1219 = vsel %vm279, %v1170, 0
      %v1222 = vsel %vm279, %v1171, 0
      %v1225 = vsel %vm279, %v1172, 0
      %v1228 = vsel %vm279, %v1173, 0
      %v1231 = vsel %vm279, %v1174, 0
      %v1234 = vsel %vm279, %v1175, 0
      %v1237 = vsel %vm279, %v1176, 0
      %v1240 = vsel %vm279, %v1177, 0
      %v1243 = vsel %vm279, %v1178, 0
      %v1246 = vsel %vm279, %v1179, 0
      %v1249 = vsel %vm279, %v1180, 0
      %v1252 = vsel %vm279, %v1181, 0
      %v1255 = vsel %vm279, %v1182, 0
      %v1258 = vsel %vm279, %v1183, 0
      %v1261 = vsel %vm279, %v1184, 0
      %v1264 = vsel %vm279, %v1185, 0
      %v1267 = vsel %vm279, %v1186, 0
      %v1270 = vsel %vm279, %v1187, 0
      %v1273 = vsel %vm279, %v1188, 0
      %v1276 = vsel %vm279, %v1189, 0
      %v1279 = vsel %vm279, %v1190, 0
      %v1282 = vsel %vm279, %v1191, 0
      %v1285 = vsel %vm279, %v1192, 0
      %v1288 = vsel %vm279, %v1193, 0
      %v1291 = vsel %vm279, %v1194, 0
      %v1294 = vsel %vm610, %v1196, 0
      %1296 = vmatprep.subr.mxu0 0.0
      %1297 = vmatpush1.msra.mxu0 %v1294
      %1298 = vmatprep.subr.mxu0 0.0
      %1299 = vmatpush1.msra.mxu0 0.0
      %1300 = vmatprep.subr.mxu0 0.0
      %1301 = vmatpush1.msra.mxu0 0.0
      %1302 = vmatprep.subr.mxu0 0.0
      %1303 = vmatpush1.msra.mxu0 0.0
      %1304 = vmatprep.subr.mxu0 0.0
      %1305 = vmatpush1.msra.mxu0 0.0
      %1306 = vmatprep.subr.mxu0 0.0
      %1307 = vmatpush1.msra.mxu0 0.0
      %1308 = vmatprep.subr.mxu0 0.0
      %1309 = vmatpush1.msra.mxu0 0.0
      %1310 = vmatprep.subr.mxu0 0.0
      %1311 = vmatpush1.msra.mxu0 0.0
      %1312 = vmatprep.subr.mxu0 0.0
      %1313 = vmatpush1.msra.mxu0 0.0
      %1314 = vmatprep.subr.mxu0 0.0
      %1315 = vmatpush1.msra.mxu0 0.0
      %1316 = vmatprep.subr.mxu0 0.0
      %1317 = vmatpush1.msra.mxu0 0.0
      %1318 = vmatprep.subr.mxu0 0.0
      %1319 = vmatpush1.msra.mxu0 0.0
      %1320 = vmatprep.subr.mxu0 0.0
      %1321 = vmatpush1.msra.mxu0 0.0
      %1322 = vmatprep.subr.mxu0 0.0
      %1323 = vmatpush1.msra.mxu0 0.0
      %1324 = vmatprep.subr.mxu0 0.0
      %1325 = vmatpush1.msra.mxu0 0.0
      %1326 = vmatprep.subr.mxu0 0.0
      %1327 = vmatpush1.msra.mxu0 0.0
      %1328 = vmatprep.subr.mxu0 0.0
      %1329 = vmatpush1.msra.mxu0 0.0
      %1330 = vmatprep.subr.mxu0 0.0
      %1331 = vmatpush1.msra.mxu0 0.0
      %1332 = vmatprep.subr.mxu0 0.0
      %1333 = vmatpush1.msra.mxu0 0.0
      %1334 = vmatprep.subr.mxu0 0.0
      %1335 = vmatpush1.msra.mxu0 0.0
      %1336 = vmatprep.subr.mxu0 0.0
      %1337 = vmatpush1.msra.mxu0 0.0
      %1338 = vmatprep.subr.mxu0 0.0
      %1339 = vmatpush1.msra.mxu0 0.0
      %1340 = vmatprep.subr.mxu0 0.0
      %1341 = vmatpush1.msra.mxu0 0.0
      %1342 = vmatprep.subr.mxu0 0.0
      %1343 = vmatpush1.msra.mxu0 0.0
      %1344 = vmatprep.subr.mxu0 0.0
      %1345 = vmatpush1.msra.mxu0 0.0
      %1346 = vmatprep.subr.mxu0 0.0
      %1347 = vmatpush1.msra.mxu0 0.0
      %1348 = vmatprep.subr.mxu0 0.0
      %1349 = vmatpush1.msra.mxu0 0.0
      %1350 = vmatprep.subr.mxu0 0.0
      %1351 = vmatpush1.msra.mxu0 0.0
      %1352 = vmatprep.subr.mxu0 0.0
      %1353 = vmatpush1.msra.mxu0 0.0
      %1354 = vmatprep.subr.mxu0 0.0
      %1355 = vmatpush1.msra.mxu0 0.0
      %1356 = vmatprep.subr.mxu0 0.0
      %1357 = vmatpush1.msra.mxu0 0.0
      %1358 = vmatprep.subr.mxu0 0.0
      %1359 = vmatpush1.msra.mxu0 0.0
      %1360 = vmatprep.mubr.f32.mxu0 0.0
      %1361 = vmatmul.mubr.f32.gmra.mrb[0].mxu0 %v1198
      %v1362 = vpop.f32.mrb[0].mxu0
      %v1363 = vadd.f32 0.0, %v1362
      %v1364 = vpop.f32.mrb[0].mxu0
      %1365 = vmatprep.mubr.f32.mxu0 0.0
      %1366 = vmatmul.mubr.f32.gmra.mrb[0].mxu0 %v1201
      %v1367 = vpop.f32.mrb[0].mxu0
      %v1368 = vadd.f32 0.0, %v1367
      %v1369 = vpop.f32.mrb[0].mxu0
      %1370 = vmatprep.mubr.f32.mxu0 0.0
      %1371 = vmatmul.mubr.f32.gmra.mrb[0].mxu0 %v1204
      %v1372 = vpop.f32.mrb[0].mxu0
      %v1373 = vadd.f32 0.0, %v1372
      %v1374 = vpop.f32.mrb[0].mxu0
      %1375 = vmatprep.mubr.f32.mxu0 0.0
      %1376 = vmatmul.mubr.f32.gmra.mrb[0].mxu0 %v1207
      %v1377 = vpop.f32.mrb[0].mxu0
      %v1378 = vadd.f32 0.0, %v1377
      %v1379 = vpop.f32.mrb[0].mxu0
      %1380 = vmatprep.mubr.f32.mxu0 0.0
      %1381 = vmatmul.mubr.f32.gmra.mrb[0].mxu0 %v1210
      %v1382 = vpop.f32.mrb[0].mxu0
      %v1383 = vadd.f32 0.0, %v1382
      %v1384 = vpop.f32.mrb[0].mxu0
      %1385 = vmatprep.mubr.f32.mxu0 0.0
      %1386 = vmatmul.mubr.f32.gmra.mrb[0].mxu0 %v1213
      %v1387 = vpop.f32.mrb[0].mxu0
      %v1388 = vadd.f32 0.0, %v1387
      %v1389 = vpop.f32.mrb[0].mxu0
      %1390 = vmatprep.mubr.f32.mxu0 0.0
      %1391 = vmatmul.mubr.f32.gmra.mrb[0].mxu0 %v1216
      %v1392 = vpop.f32.mrb[0].mxu0
      %v1393 = vadd.f32 0.0, %v1392
      %v1394 = vpop.f32.mrb[0].mxu0
      %1395 = vmatprep.mubr.f32.mxu0 0.0
      %1396 = vmatmul.mubr.f32.gmra.mrb[0].mxu0 %v1219
      %v1397 = vpop.f32.mrb[0].mxu0
      %v1398 = vadd.f32 0.0, %v1397
      %v1399 = vpop.f32.mrb[0].mxu0
      %1400 = vmatprep.mubr.f32.mxu0 0.0
      %1401 = vmatmul.mubr.f32.gmra.mrb[0].mxu0 %v1222
      %v1402 = vpop.f32.mrb[0].mxu0
      %v1403 = vadd.f32 0.0, %v1402
      %v1404 = vpop.f32.mrb[0].mxu0
      %1405 = vmatprep.mubr.f32.mxu0 0.0
      %1406 = vmatmul.mubr.f32.gmra.mrb[0].mxu0 %v1225
      %v1407 = vpop.f32.mrb[0].mxu0
      %v1408 = vadd.f32 0.0, %v1407
      %v1409 = vpop.f32.mrb[0].mxu0
      %1410 = vmatprep.mubr.f32.mxu0 0.0
      %1411 = vmatmul.mubr.f32.gmra.mrb[0].mxu0 %v1228
      %v1412 = vpop.f32.mrb[0].mxu0
      %v1413 = vadd.f32 0.0, %v1412
      %v1414 = vpop.f32.mrb[0].mxu0
      %1415 = vmatprep.mubr.f32.mxu0 0.0
      %1416 = vmatmul.mubr.f32.gmra.mrb[0].mxu0 %v1231
      %v1417 = vpop.f32.mrb[0].mxu0
      %v1418 = vadd.f32 0.0, %v1417
      %v1419 = vpop.f32.mrb[0].mxu0
      %1420 = vmatprep.mubr.f32.mxu0 0.0
      %1421 = vmatmul.mubr.f32.gmra.mrb[0].mxu0 %v1234
      %v1422 = vpop.f32.mrb[0].mxu0
      %v1423 = vadd.f32 0.0, %v1422
      %v1424 = vpop.f32.mrb[0].mxu0
      %1425 = vmatprep.mubr.f32.mxu0 0.0
      %1426 = vmatmul.mubr.f32.gmra.mrb[0].mxu0 %v1237
      %v1427 = vpop.f32.mrb[0].mxu0
      %v1428 = vadd.f32 0.0, %v1427
      %v1429 = vpop.f32.mrb[0].mxu0
      %1430 = vmatprep.mubr.f32.mxu0 0.0
      %1431 = vmatmul.mubr.f32.gmra.mrb[0].mxu0 %v1240
      %v1432 = vpop.f32.mrb[0].mxu0
      %v1433 = vadd.f32 0.0, %v1432
      %v1434 = vpop.f32.mrb[0].mxu0
      %1435 = vmatprep.mubr.f32.mxu0 0.0
      %1436 = vmatmul.mubr.f32.gmra.mrb[0].mxu0 %v1243
      %v1437 = vpop.f32.mrb[0].mxu0
      %v1438 = vadd.f32 0.0, %v1437
      %v1439 = vpop.f32.mrb[0].mxu0
      %1440 = vmatprep.mubr.f32.mxu0 0.0
      %1441 = vmatmul.mubr.f32.gmra.mrb[0].mxu0 %v1246
      %v1442 = vpop.f32.mrb[0].mxu0
      %v1443 = vadd.f32 0.0, %v1442
      %v1444 = vpop.f32.mrb[0].mxu0
      %1445 = vmatprep.mubr.f32.mxu0 0.0
      %1446 = vmatmul.mubr.f32.gmra.mrb[0].mxu0 %v1249
      %v1447 = vpop.f32.mrb[0].mxu0
      %v1448 = vadd.f32 0.0, %v1447
      %v1449 = vpop.f32.mrb[0].mxu0
      %1450 = vmatprep.mubr.f32.mxu0 0.0
      %1451 = vmatmul.mubr.f32.gmra.mrb[0].mxu0 %v1252
      %v1452 = vpop.f32.mrb[0].mxu0
      %v1453 = vadd.f32 0.0, %v1452
      %v1454 = vpop.f32.mrb[0].mxu0
      %1455 = vmatprep.mubr.f32.mxu0 0.0
      %1456 = vmatmul.mubr.f32.gmra.mrb[0].mxu0 %v1255
      %v1457 = vpop.f32.mrb[0].mxu0
      %v1458 = vadd.f32 0.0, %v1457
      %v1459 = vpop.f32.mrb[0].mxu0
      %1460 = vmatprep.mubr.f32.mxu0 0.0
      %1461 = vmatmul.mubr.f32.gmra.mrb[0].mxu0 %v1258
      %v1462 = vpop.f32.mrb[0].mxu0
      %v1463 = vadd.f32 0.0, %v1462
      %v1464 = vpop.f32.mrb[0].mxu0
      %1465 = vmatprep.mubr.f32.mxu0 0.0
      %1466 = vmatmul.mubr.f32.gmra.mrb[0].mxu0 %v1261
      %v1467 = vpop.f32.mrb[0].mxu0
      %v1468 = vadd.f32 0.0, %v1467
      %v1469 = vpop.f32.mrb[0].mxu0
      %1470 = vmatprep.mubr.f32.mxu0 0.0
      %1471 = vmatmul.mubr.f32.gmra.mrb[0].mxu0 %v1264
      %v1472 = vpop.f32.mrb[0].mxu0
      %v1473 = vadd.f32 0.0, %v1472
      %v1474 = vpop.f32.mrb[0].mxu0
      %1475 = vmatprep.mubr.f32.mxu0 0.0
      %1476 = vmatmul.mubr.f32.gmra.mrb[0].mxu0 %v1267
      %v1477 = vpop.f32.mrb[0].mxu0
      %v1478 = vadd.f32 0.0, %v1477
      %v1479 = vpop.f32.mrb[0].mxu0
      %1480 = vmatprep.mubr.f32.mxu0 0.0
      %1481 = vmatmul.mubr.f32.gmra.mrb[0].mxu0 %v1270
      %v1482 = vpop.f32.mrb[0].mxu0
      %v1483 = vadd.f32 0.0, %v1482
      %v1484 = vpop.f32.mrb[0].mxu0
      %1485 = vmatprep.mubr.f32.mxu0 0.0
      %1486 = vmatmul.mubr.f32.gmra.mrb[0].mxu0 %v1273
      %v1487 = vpop.f32.mrb[0].mxu0
      %v1488 = vadd.f32 0.0, %v1487
      %v1489 = vpop.f32.mrb[0].mxu0
      %1490 = vmatprep.mubr.f32.mxu0 0.0
      %1491 = vmatmul.mubr.f32.gmra.mrb[0].mxu0 %v1276
      %v1492 = vpop.f32.mrb[0].mxu0
      %v1493 = vadd.f32 0.0, %v1492
      %v1494 = vpop.f32.mrb[0].mxu0
      %1495 = vmatprep.mubr.f32.mxu0 0.0
      %1496 = vmatmul.mubr.f32.gmra.mrb[0].mxu0 %v1279
      %v1497 = vpop.f32.mrb[0].mxu0
      %v1498 = vadd.f32 0.0, %v1497
      %v1499 = vpop.f32.mrb[0].mxu0
      %1500 = vmatprep.mubr.f32.mxu0 0.0
      %1501 = vmatmul.mubr.f32.gmra.mrb[0].mxu0 %v1282
      %v1502 = vpop.f32.mrb[0].mxu0
      %v1503 = vadd.f32 0.0, %v1502
      %v1504 = vpop.f32.mrb[0].mxu0
      %1505 = vmatprep.mubr.f32.mxu0 0.0
      %1506 = vmatmul.mubr.f32.gmra.mrb[0].mxu0 %v1285
      %v1507 = vpop.f32.mrb[0].mxu0
      %v1508 = vadd.f32 0.0, %v1507
      %v1509 = vpop.f32.mrb[0].mxu0
      %1510 = vmatprep.mubr.f32.mxu0 0.0
      %1511 = vmatmul.mubr.f32.gmra.mrb[0].mxu0 %v1288
      %v1512 = vpop.f32.mrb[0].mxu0
      %v1513 = vadd.f32 0.0, %v1512
      %v1514 = vpop.f32.mrb[0].mxu0
      %1515 = vmatprep.mubr.f32.mxu0 0.0
      %1516 = vmatmul.mubr.f32.gmra.mrb[0].mxu0 %v1291
      %v1517 = vpop.f32.mrb[0].mxu0
      %v1518 = vadd.f32 0.0, %v1517
      %v1519 = vpop.f32.mrb[0].mxu0
      %1520 = vdwg.mxu0
      %v1521 = vadd.f32 %v1005, %v1363
      %v1522 = vadd.f32 %v1010, %v1368
      %v1523 = vadd.f32 %v1015, %v1373
      %v1524 = vadd.f32 %v1020, %v1378
      %v1525 = vadd.f32 %v1025, %v1383
      %v1526 = vadd.f32 %v1030, %v1388
      %v1527 = vadd.f32 %v1035, %v1393
      %v1528 = vadd.f32 %v1040, %v1398
      %v1529 = vadd.f32 %v1045, %v1403
      %v1530 = vadd.f32 %v1050, %v1408
      %v1531 = vadd.f32 %v1055, %v1413
      %v1532 = vadd.f32 %v1060, %v1418
      %v1533 = vadd.f32 %v1065, %v1423
      %v1534 = vadd.f32 %v1070, %v1428
      %v1535 = vadd.f32 %v1075, %v1433
      %v1536 = vadd.f32 %v1080, %v1438
      %v1537 = vadd.f32 %v1085, %v1443
      %v1538 = vadd.f32 %v1090, %v1448
      %v1539 = vadd.f32 %v1095, %v1453
      %v1540 = vadd.f32 %v1100, %v1458
      %v1541 = vadd.f32 %v1105, %v1463
      %v1542 = vadd.f32 %v1110, %v1468
      %v1543 = vadd.f32 %v1115, %v1473
      %v1544 = vadd.f32 %v1120, %v1478
      %v1545 = vadd.f32 %v1125, %v1483
      %v1546 = vadd.f32 %v1130, %v1488
      %v1547 = vadd.f32 %v1135, %v1493
      %v1548 = vadd.f32 %v1140, %v1498
      %v1549 = vadd.f32 %v1145, %v1503
      %v1550 = vadd.f32 %v1150, %v1508
      %v1551 = vadd.f32 %v1155, %v1513
      %v1552 = vadd.f32 %v1160, %v1518
      %v1553 = vld [vmem:[%s298 + $0x6] sm:$0xff]
      %v1554 = vld [vmem:[%s298 + $0xe] sm:$0xff]
      %v1555 = vld [vmem:[%s298 + $0x26] sm:$0xff]
      %v1556 = vld [vmem:[%s298 + $0x2e] sm:$0xff]
      %v1557 = vld [vmem:[%s298 + $0x46] sm:$0xff]
      %v1558 = vld [vmem:[%s298 + $0x4e] sm:$0xff]
      %v1559 = vld [vmem:[%s298 + $0x66] sm:$0xff]
      %v1560 = vld [vmem:[%s298 + $0x6e] sm:$0xff]
      %v1561 = vld [vmem:[%s298 + $0x86] sm:$0xff]
      %v1562 = vld [vmem:[%s298 + $0x8e] sm:$0xff]
      %v1563 = vld [vmem:[%s298 + $0xa6] sm:$0xff]
      %v1564 = vld [vmem:[%s298 + $0xae] sm:$0xff]
      %v1565 = vld [vmem:[%s298 + $0xc6] sm:$0xff]
      %v1566 = vld [vmem:[%s298 + $0xce] sm:$0xff]
      %v1567 = vld [vmem:[%s298 + $0xe6] sm:$0xff]
      %v1568 = vld [vmem:[%s298 + $0xee] sm:$0xff]
      %v1569 = vld [vmem:[%s298 + $0x106] sm:$0xff]
      %v1570 = vld [vmem:[%s298 + $0x10e] sm:$0xff]
      %v1571 = vld [vmem:[%s298 + $0x126] sm:$0xff]
      %v1572 = vld [vmem:[%s298 + $0x12e] sm:$0xff]
      %v1573 = vld [vmem:[%s298 + $0x146] sm:$0xff]
      %v1574 = vld [vmem:[%s298 + $0x14e] sm:$0xff]
      %v1575 = vld [vmem:[%s298 + $0x166] sm:$0xff]
      %v1576 = vld [vmem:[%s298 + $0x16e] sm:$0xff]
      %v1577 = vld [vmem:[%s298 + $0x186] sm:$0xff]
      %v1578 = vld [vmem:[%s298 + $0x18e] sm:$0xff]
      %v1579 = vld [vmem:[%s298 + $0x1a6] sm:$0xff]
      %v1580 = vld [vmem:[%s298 + $0x1ae] sm:$0xff]
      %v1581 = vld [vmem:[%s298 + $0x1c6] sm:$0xff]
      %v1582 = vld [vmem:[%s298 + $0x1ce] sm:$0xff]
      %v1583 = vld [vmem:[%s298 + $0x1e6] sm:$0xff]
      %v1584 = vld [vmem:[%s298 + $0x1ee] sm:$0xff]
      %s1585 = scalar_lea.vmem %s1, 12
      %v1586 = vld [vmem:[%s1585] sm:$0xf]
      %v1588 = vsel %vm279, %v1553, 0
      %v1591 = vsel %vm279, %v1554, 0
      %v1594 = vsel %vm279, %v1555, 0
      %v1597 = vsel %vm279, %v1556, 0
      %v1600 = vsel %vm279, %v1557, 0
      %v1603 = vsel %vm279, %v1558, 0
      %v1606 = vsel %vm279, %v1559, 0
      %v1609 = vsel %vm279, %v1560, 0
      %v1612 = vsel %vm279, %v1561, 0
      %v1615 = vsel %vm279, %v1562, 0
      %v1618 = vsel %vm279, %v1563, 0
      %v1621 = vsel %vm279, %v1564, 0
      %v1624 = vsel %vm279, %v1565, 0
      %v1627 = vsel %vm279, %v1566, 0
      %v1630 = vsel %vm279, %v1567, 0
      %v1633 = vsel %vm279, %v1568, 0
      %v1636 = vsel %vm279, %v1569, 0
      %v1639 = vsel %vm279, %v1570, 0
      %v1642 = vsel %vm279, %v1571, 0
      %v1645 = vsel %vm279, %v1572, 0
      %v1648 = vsel %vm279, %v1573, 0
      %v1651 = vsel %vm279, %v1574, 0
      %v1654 = vsel %vm279, %v1575, 0
      %v1657 = vsel %vm279, %v1576, 0
      %v1660 = vsel %vm279, %v1577, 0
      %v1663 = vsel %vm279, %v1578, 0
      %v1666 = vsel %vm279, %v1579, 0
      %v1669 = vsel %vm279, %v1580, 0
      %v1672 = vsel %vm279, %v1581, 0
      %v1675 = vsel %vm279, %v1582, 0
      %v1678 = vsel %vm279, %v1583, 0
      %v1681 = vsel %vm279, %v1584, 0
      %v1684 = vsel %vm610, %v1586, 0
      %1686 = vmatprep.subr.mxu0 0.0
      %1687 = vmatpush1.msra.mxu0 %v1684
      %1688 = vmatprep.subr.mxu0 0.0
      %1689 = vmatpush1.msra.mxu0 0.0
      %1690 = vmatprep.subr.mxu0 0.0
      %1691 = vmatpush1.msra.mxu0 0.0
      %1692 = vmatprep.subr.mxu0 0.0
      %1693 = vmatpush1.msra.mxu0 0.0
      %1694 = vmatprep.subr.mxu0 0.0
      %1695 = vmatpush1.msra.mxu0 0.0
      %1696 = vmatprep.subr.mxu0 0.0
      %1697 = vmatpush1.msra.mxu0 0.0
      %1698 = vmatprep.subr.mxu0 0.0
      %1699 = vmatpush1.msra.mxu0 0.0
      %1700 = vmatprep.subr.mxu0 0.0
      %1701 = vmatpush1.msra.mxu0 0.0
      %1702 = vmatprep.subr.mxu0 0.0
      %1703 = vmatpush1.msra.mxu0 0.0
      %1704 = vmatprep.subr.mxu0 0.0
      %1705 = vmatpush1.msra.mxu0 0.0
      %1706 = vmatprep.subr.mxu0 0.0
      %1707 = vmatpush1.msra.mxu0 0.0
      %1708 = vmatprep.subr.mxu0 0.0
      %1709 = vmatpush1.msra.mxu0 0.0
      %1710 = vmatprep.subr.mxu0 0.0
      %1711 = vmatpush1.msra.mxu0 0.0
      %1712 = vmatprep.subr.mxu0 0.0
      %1713 = vmatpush1.msra.mxu0 0.0
      %1714 = vmatprep.subr.mxu0 0.0
      %1715 = vmatpush1.msra.mxu0 0.0
      %1716 = vmatprep.subr.mxu0 0.0
      %1717 = vmatpush1.msra.mxu0 0.0
      %1718 = vmatprep.subr.mxu0 0.0
      %1719 = vmatpush1.msra.mxu0 0.0
      %1720 = vmatprep.subr.mxu0 0.0
      %1721 = vmatpush1.msra.mxu0 0.0
      %1722 = vmatprep.subr.mxu0 0.0
      %1723 = vmatpush1.msra.mxu0 0.0
      %1724 = vmatprep.subr.mxu0 0.0
      %1725 = vmatpush1.msra.mxu0 0.0
      %1726 = vmatprep.subr.mxu0 0.0
      %1727 = vmatpush1.msra.mxu0 0.0
      %1728 = vmatprep.subr.mxu0 0.0
      %1729 = vmatpush1.msra.mxu0 0.0
      %1730 = vmatprep.subr.mxu0 0.0
      %1731 = vmatpush1.msra.mxu0 0.0
      %1732 = vmatprep.subr.mxu0 0.0
      %1733 = vmatpush1.msra.mxu0 0.0
      %1734 = vmatprep.subr.mxu0 0.0
      %1735 = vmatpush1.msra.mxu0 0.0
      %1736 = vmatprep.subr.mxu0 0.0
      %1737 = vmatpush1.msra.mxu0 0.0
      %1738 = vmatprep.subr.mxu0 0.0
      %1739 = vmatpush1.msra.mxu0 0.0
      %1740 = vmatprep.subr.mxu0 0.0
      %1741 = vmatpush1.msra.mxu0 0.0
      %1742 = vmatprep.subr.mxu0 0.0
      %1743 = vmatpush1.msra.mxu0 0.0
      %1744 = vmatprep.subr.mxu0 0.0
      %1745 = vmatpush1.msra.mxu0 0.0
      %1746 = vmatprep.subr.mxu0 0.0
      %1747 = vmatpush1.msra.mxu0 0.0
      %1748 = vmatprep.subr.mxu0 0.0
      %1749 = vmatpush1.msra.mxu0 0.0
      %1750 = vmatprep.mubr.f32.mxu0 0.0
      %1751 = vmatmul.mubr.f32.gmra.mrb[0].mxu0 %v1588
      %v1752 = vpop.f32.mrb[0].mxu0
      %v1753 = vadd.f32 0.0, %v1752
      %v1754 = vpop.f32.mrb[0].mxu0
      %1755 = vmatprep.mubr.f32.mxu0 0.0
      %1756 = vmatmul.mubr.f32.gmra.mrb[0].mxu0 %v1591
      %v1757 = vpop.f32.mrb[0].mxu0
      %v1758 = vadd.f32 0.0, %v1757
      %v1759 = vpop.f32.mrb[0].mxu0
      %1760 = vmatprep.mubr.f32.mxu0 0.0
      %1761 = vmatmul.mubr.f32.gmra.mrb[0].mxu0 %v1594
      %v1762 = vpop.f32.mrb[0].mxu0
      %v1763 = vadd.f32 0.0, %v1762
      %v1764 = vpop.f32.mrb[0].mxu0
      %1765 = vmatprep.mubr.f32.mxu0 0.0
      %1766 = vmatmul.mubr.f32.gmra.mrb[0].mxu0 %v1597
      %v1767 = vpop.f32.mrb[0].mxu0
      %v1768 = vadd.f32 0.0, %v1767
      %v1769 = vpop.f32.mrb[0].mxu0
      %1770 = vmatprep.mubr.f32.mxu0 0.0
      %1771 = vmatmul.mubr.f32.gmra.mrb[0].mxu0 %v1600
      %v1772 = vpop.f32.mrb[0].mxu0
      %v1773 = vadd.f32 0.0, %v1772
      %v1774 = vpop.f32.mrb[0].mxu0
      %1775 = vmatprep.mubr.f32.mxu0 0.0
      %1776 = vmatmul.mubr.f32.gmra.mrb[0].mxu0 %v1603
      %v1777 = vpop.f32.mrb[0].mxu0
      %v1778 = vadd.f32 0.0, %v1777
      %v1779 = vpop.f32.mrb[0].mxu0
      %1780 = vmatprep.mubr.f32.mxu0 0.0
      %1781 = vmatmul.mubr.f32.gmra.mrb[0].mxu0 %v1606
      %v1782 = vpop.f32.mrb[0].mxu0
      %v1783 = vadd.f32 0.0, %v1782
      %v1784 = vpop.f32.mrb[0].mxu0
      %1785 = vmatprep.mubr.f32.mxu0 0.0
      %1786 = vmatmul.mubr.f32.gmra.mrb[0].mxu0 %v1609
      %v1787 = vpop.f32.mrb[0].mxu0
      %v1788 = vadd.f32 0.0, %v1787
      %v1789 = vpop.f32.mrb[0].mxu0
      %1790 = vmatprep.mubr.f32.mxu0 0.0
      %1791 = vmatmul.mubr.f32.gmra.mrb[0].mxu0 %v1612
      %v1792 = vpop.f32.mrb[0].mxu0
      %v1793 = vadd.f32 0.0, %v1792
      %v1794 = vpop.f32.mrb[0].mxu0
      %1795 = vmatprep.mubr.f32.mxu0 0.0
      %1796 = vmatmul.mubr.f32.gmra.mrb[0].mxu0 %v1615
      %v1797 = vpop.f32.mrb[0].mxu0
      %v1798 = vadd.f32 0.0, %v1797
      %v1799 = vpop.f32.mrb[0].mxu0
      %1800 = vmatprep.mubr.f32.mxu0 0.0
      %1801 = vmatmul.mubr.f32.gmra.mrb[0].mxu0 %v1618
      %v1802 = vpop.f32.mrb[0].mxu0
      %v1803 = vadd.f32 0.0, %v1802
      %v1804 = vpop.f32.mrb[0].mxu0
      %1805 = vmatprep.mubr.f32.mxu0 0.0
      %1806 = vmatmul.mubr.f32.gmra.mrb[0].mxu0 %v1621
      %v1807 = vpop.f32.mrb[0].mxu0
      %v1808 = vadd.f32 0.0, %v1807
      %v1809 = vpop.f32.mrb[0].mxu0
      %1810 = vmatprep.mubr.f32.mxu0 0.0
      %1811 = vmatmul.mubr.f32.gmra.mrb[0].mxu0 %v1624
      %v1812 = vpop.f32.mrb[0].mxu0
      %v1813 = vadd.f32 0.0, %v1812
      %v1814 = vpop.f32.mrb[0].mxu0
      %1815 = vmatprep.mubr.f32.mxu0 0.0
      %1816 = vmatmul.mubr.f32.gmra.mrb[0].mxu0 %v1627
      %v1817 = vpop.f32.mrb[0].mxu0
      %v1818 = vadd.f32 0.0, %v1817
      %v1819 = vpop.f32.mrb[0].mxu0
      %1820 = vmatprep.mubr.f32.mxu0 0.0
      %1821 = vmatmul.mubr.f32.gmra.mrb[0].mxu0 %v1630
      %v1822 = vpop.f32.mrb[0].mxu0
      %v1823 = vadd.f32 0.0, %v1822
      %v1824 = vpop.f32.mrb[0].mxu0
      %1825 = vmatprep.mubr.f32.mxu0 0.0
      %1826 = vmatmul.mubr.f32.gmra.mrb[0].mxu0 %v1633
      %v1827 = vpop.f32.mrb[0].mxu0
      %v1828 = vadd.f32 0.0, %v1827
      %v1829 = vpop.f32.mrb[0].mxu0
      %1830 = vmatprep.mubr.f32.mxu0 0.0
      %1831 = vmatmul.mubr.f32.gmra.mrb[0].mxu0 %v1636
      %v1832 = vpop.f32.mrb[0].mxu0
      %v1833 = vadd.f32 0.0, %v1832
      %v1834 = vpop.f32.mrb[0].mxu0
      %1835 = vmatprep.mubr.f32.mxu0 0.0
      %1836 = vmatmul.mubr.f32.gmra.mrb[0].mxu0 %v1639
      %v1837 = vpop.f32.mrb[0].mxu0
      %v1838 = vadd.f32 0.0, %v1837
      %v1839 = vpop.f32.mrb[0].mxu0
      %1840 = vmatprep.mubr.f32.mxu0 0.0
      %1841 = vmatmul.mubr.f32.gmra.mrb[0].mxu0 %v1642
      %v1842 = vpop.f32.mrb[0].mxu0
      %v1843 = vadd.f32 0.0, %v1842
      %v1844 = vpop.f32.mrb[0].mxu0
      %1845 = vmatprep.mubr.f32.mxu0 0.0
      %1846 = vmatmul.mubr.f32.gmra.mrb[0].mxu0 %v1645
      %v1847 = vpop.f32.mrb[0].mxu0
      %v1848 = vadd.f32 0.0, %v1847
      %v1849 = vpop.f32.mrb[0].mxu0
      %1850 = vmatprep.mubr.f32.mxu0 0.0
      %1851 = vmatmul.mubr.f32.gmra.mrb[0].mxu0 %v1648
      %v1852 = vpop.f32.mrb[0].mxu0
      %v1853 = vadd.f32 0.0, %v1852
      %v1854 = vpop.f32.mrb[0].mxu0
      %1855 = vmatprep.mubr.f32.mxu0 0.0
      %1856 = vmatmul.mubr.f32.gmra.mrb[0].mxu0 %v1651
      %v1857 = vpop.f32.mrb[0].mxu0
      %v1858 = vadd.f32 0.0, %v1857
      %v1859 = vpop.f32.mrb[0].mxu0
      %1860 = vmatprep.mubr.f32.mxu0 0.0
      %1861 = vmatmul.mubr.f32.gmra.mrb[0].mxu0 %v1654
      %v1862 = vpop.f32.mrb[0].mxu0
      %v1863 = vadd.f32 0.0, %v1862
      %v1864 = vpop.f32.mrb[0].mxu0
      %1865 = vmatprep.mubr.f32.mxu0 0.0
      %1866 = vmatmul.mubr.f32.gmra.mrb[0].mxu0 %v1657
      %v1867 = vpop.f32.mrb[0].mxu0
      %v1868 = vadd.f32 0.0, %v1867
      %v1869 = vpop.f32.mrb[0].mxu0
      %1870 = vmatprep.mubr.f32.mxu0 0.0
      %1871 = vmatmul.mubr.f32.gmra.mrb[0].mxu0 %v1660
      %v1872 = vpop.f32.mrb[0].mxu0
      %v1873 = vadd.f32 0.0, %v1872
      %v1874 = vpop.f32.mrb[0].mxu0
      %1875 = vmatprep.mubr.f32.mxu0 0.0
      %1876 = vmatmul.mubr.f32.gmra.mrb[0].mxu0 %v1663
      %v1877 = vpop.f32.mrb[0].mxu0
      %v1878 = vadd.f32 0.0, %v1877
      %v1879 = vpop.f32.mrb[0].mxu0
      %1880 = vmatprep.mubr.f32.mxu0 0.0
      %1881 = vmatmul.mubr.f32.gmra.mrb[0].mxu0 %v1666
      %v1882 = vpop.f32.mrb[0].mxu0
      %v1883 = vadd.f32 0.0, %v1882
      %v1884 = vpop.f32.mrb[0].mxu0
      %1885 = vmatprep.mubr.f32.mxu0 0.0
      %1886 = vmatmul.mubr.f32.gmra.mrb[0].mxu0 %v1669
      %v1887 = vpop.f32.mrb[0].mxu0
      %v1888 = vadd.f32 0.0, %v1887
      %v1889 = vpop.f32.mrb[0].mxu0
      %1890 = vmatprep.mubr.f32.mxu0 0.0
      %1891 = vmatmul.mubr.f32.gmra.mrb[0].mxu0 %v1672
      %v1892 = vpop.f32.mrb[0].mxu0
      %v1893 = vadd.f32 0.0, %v1892
      %v1894 = vpop.f32.mrb[0].mxu0
      %1895 = vmatprep.mubr.f32.mxu0 0.0
      %1896 = vmatmul.mubr.f32.gmra.mrb[0].mxu0 %v1675
      %v1897 = vpop.f32.mrb[0].mxu0
      %v1898 = vadd.f32 0.0, %v1897
      %v1899 = vpop.f32.mrb[0].mxu0
      %1900 = vmatprep.mubr.f32.mxu0 0.0
      %1901 = vmatmul.mubr.f32.gmra.mrb[0].mxu0 %v1678
      %v1902 = vpop.f32.mrb[0].mxu0
      %v1903 = vadd.f32 0.0, %v1902
      %v1904 = vpop.f32.mrb[0].mxu0
      %1905 = vmatprep.mubr.f32.mxu0 0.0
      %1906 = vmatmul.mubr.f32.gmra.mrb[0].mxu0 %v1681
      %v1907 = vpop.f32.mrb[0].mxu0
      %v1908 = vadd.f32 0.0, %v1907
      %v1909 = vpop.f32.mrb[0].mxu0
      %1910 = vdwg.mxu0
      %v1911 = vadd.f32 %v1521, %v1753
      %v1912 = vadd.f32 %v1522, %v1758
      %v1913 = vadd.f32 %v1523, %v1763
      %v1914 = vadd.f32 %v1524, %v1768
      %v1915 = vadd.f32 %v1525, %v1773
      %v1916 = vadd.f32 %v1526, %v1778
      %v1917 = vadd.f32 %v1527, %v1783
      %v1918 = vadd.f32 %v1528, %v1788
      %v1919 = vadd.f32 %v1529, %v1793
      %v1920 = vadd.f32 %v1530, %v1798
      %v1921 = vadd.f32 %v1531, %v1803
      %v1922 = vadd.f32 %v1532, %v1808
      %v1923 = vadd.f32 %v1533, %v1813
      %v1924 = vadd.f32 %v1534, %v1818
      %v1925 = vadd.f32 %v1535, %v1823
      %v1926 = vadd.f32 %v1536, %v1828
      %v1927 = vadd.f32 %v1537, %v1833
      %v1928 = vadd.f32 %v1538, %v1838
      %v1929 = vadd.f32 %v1539, %v1843
      %v1930 = vadd.f32 %v1540, %v1848
      %v1931 = vadd.f32 %v1541, %v1853
      %v1932 = vadd.f32 %v1542, %v1858
      %v1933 = vadd.f32 %v1543, %v1863
      %v1934 = vadd.f32 %v1544, %v1868
      %v1935 = vadd.f32 %v1545, %v1873
      %v1936 = vadd.f32 %v1546, %v1878
      %v1937 = vadd.f32 %v1547, %v1883
      %v1938 = vadd.f32 %v1548, %v1888
      %v1939 = vadd.f32 %v1549, %v1893
      %v1940 = vadd.f32 %v1550, %v1898
      %v1941 = vadd.f32 %v1551, %v1903
      %v1942 = vadd.f32 %v1552, %v1908
      %v1943 = vld [vmem:[%s298 + $0x8] sm:$0xff]
      %v1944 = vld [vmem:[%s298 + $0x10] sm:$0xff]
      %v1945 = vld [vmem:[%s298 + $0x28] sm:$0xff]
      %v1946 = vld [vmem:[%s298 + $0x30] sm:$0xff]
      %v1947 = vld [vmem:[%s298 + $0x48] sm:$0xff]
      %v1948 = vld [vmem:[%s298 + $0x50] sm:$0xff]
      %v1949 = vld [vmem:[%s298 + $0x68] sm:$0xff]
      %v1950 = vld [vmem:[%s298 + $0x70] sm:$0xff]
      %v1951 = vld [vmem:[%s298 + $0x88] sm:$0xff]
      %v1952 = vld [vmem:[%s298 + $0x90] sm:$0xff]
      %v1953 = vld [vmem:[%s298 + $0xa8] sm:$0xff]
      %v1954 = vld [vmem:[%s298 + $0xb0] sm:$0xff]
      %v1955 = vld [vmem:[%s298 + $0xc8] sm:$0xff]
      %v1956 = vld [vmem:[%s298 + $0xd0] sm:$0xff]
      %v1957 = vld [vmem:[%s298 + $0xe8] sm:$0xff]
      %v1958 = vld [vmem:[%s298 + $0xf0] sm:$0xff]
      %v1959 = vld [vmem:[%s298 + $0x108] sm:$0xff]
      %v1960 = vld [vmem:[%s298 + $0x110] sm:$0xff]
      %v1961 = vld [vmem:[%s298 + $0x128] sm:$0xff]
      %v1962 = vld [vmem:[%s298 + $0x130] sm:$0xff]
      %v1963 = vld [vmem:[%s298 + $0x148] sm:$0xff]
      %v1964 = vld [vmem:[%s298 + $0x150] sm:$0xff]
      %v1965 = vld [vmem:[%s298 + $0x168] sm:$0xff]
      %v1966 = vld [vmem:[%s298 + $0x170] sm:$0xff]
      %v1967 = vld [vmem:[%s298 + $0x188] sm:$0xff]
      %v1968 = vld [vmem:[%s298 + $0x190] sm:$0xff]
      %v1969 = vld [vmem:[%s298 + $0x1a8] sm:$0xff]
      %v1970 = vld [vmem:[%s298 + $0x1b0] sm:$0xff]
      %v1971 = vld [vmem:[%s298 + $0x1c8] sm:$0xff]
      %v1972 = vld [vmem:[%s298 + $0x1d0] sm:$0xff]
      %v1973 = vld [vmem:[%s298 + $0x1e8] sm:$0xff]
      %v1974 = vld [vmem:[%s298 + $0x1f0] sm:$0xff]
      %s1975 = scalar_lea.vmem %s1, 16
      %v1976 = vld [vmem:[%s1975] sm:$0xf]
      %v1978 = vsel %vm279, %v1943, 0
      %v1981 = vsel %vm279, %v1944, 0
      %v1984 = vsel %vm279, %v1945, 0
      %v1987 = vsel %vm279, %v1946, 0
      %v1990 = vsel %vm279, %v1947, 0
      %v1993 = vsel %vm279, %v1948, 0
      %v1996 = vsel %vm279, %v1949, 0
      %v1999 = vsel %vm279, %v1950, 0
      %v2002 = vsel %vm279, %v1951, 0
      %v2005 = vsel %vm279, %v1952, 0
      %v2008 = vsel %vm279, %v1953, 0
      %v2011 = vsel %vm279, %v1954, 0
      %v2014 = vsel %vm279, %v1955, 0
      %v2017 = vsel %vm279, %v1956, 0
      %v2020 = vsel %vm279, %v1957, 0
      %v2023 = vsel %vm279, %v1958, 0
      %v2026 = vsel %vm279, %v1959, 0
      %v2029 = vsel %vm279, %v1960, 0
      %v2032 = vsel %vm279, %v1961, 0
      %v2035 = vsel %vm279, %v1962, 0
      %v2038 = vsel %vm279, %v1963, 0
      %v2041 = vsel %vm279, %v1964, 0
      %v2044 = vsel %vm279, %v1965, 0
      %v2047 = vsel %vm279, %v1966, 0
      %v2050 = vsel %vm279, %v1967, 0
      %v2053 = vsel %vm279, %v1968, 0
      %v2056 = vsel %vm279, %v1969, 0
      %v2059 = vsel %vm279, %v1970, 0
      %v2062 = vsel %vm279, %v1971, 0
      %v2065 = vsel %vm279, %v1972, 0
      %v2068 = vsel %vm279, %v1973, 0
      %v2071 = vsel %vm279, %v1974, 0
      %v2074 = vsel %vm610, %v1976, 0
      %2076 = vmatprep.subr.mxu0 0.0
      %2077 = vmatpush1.msra.mxu0 %v2074
      %2078 = vmatprep.subr.mxu0 0.0
      %2079 = vmatpush1.msra.mxu0 0.0
      %2080 = vmatprep.subr.mxu0 0.0
      %2081 = vmatpush1.msra.mxu0 0.0
      %2082 = vmatprep.subr.mxu0 0.0
      %2083 = vmatpush1.msra.mxu0 0.0
      %2084 = vmatprep.subr.mxu0 0.0
      %2085 = vmatpush1.msra.mxu0 0.0
      %2086 = vmatprep.subr.mxu0 0.0
      %2087 = vmatpush1.msra.mxu0 0.0
      %2088 = vmatprep.subr.mxu0 0.0
      %2089 = vmatpush1.msra.mxu0 0.0
      %2090 = vmatprep.subr.mxu0 0.0
      %2091 = vmatpush1.msra.mxu0 0.0
      %2092 = vmatprep.subr.mxu0 0.0
      %2093 = vmatpush1.msra.mxu0 0.0
      %2094 = vmatprep.subr.mxu0 0.0
      %2095 = vmatpush1.msra.mxu0 0.0
      %2096 = vmatprep.subr.mxu0 0.0
      %2097 = vmatpush1.msra.mxu0 0.0
      %2098 = vmatprep.subr.mxu0 0.0
      %2099 = vmatpush1.msra.mxu0 0.0
      %2100 = vmatprep.subr.mxu0 0.0
      %2101 = vmatpush1.msra.mxu0 0.0
      %2102 = vmatprep.subr.mxu0 0.0
      %2103 = vmatpush1.msra.mxu0 0.0
      %2104 = vmatprep.subr.mxu0 0.0
      %2105 = vmatpush1.msra.mxu0 0.0
      %2106 = vmatprep.subr.mxu0 0.0
      %2107 = vmatpush1.msra.mxu0 0.0
      %2108 = vmatprep.subr.mxu0 0.0
      %2109 = vmatpush1.msra.mxu0 0.0
      %2110 = vmatprep.subr.mxu0 0.0
      %2111 = vmatpush1.msra.mxu0 0.0
      %2112 = vmatprep.subr.mxu0 0.0
      %2113 = vmatpush1.msra.mxu0 0.0
      %2114 = vmatprep.subr.mxu0 0.0
      %2115 = vmatpush1.msra.mxu0 0.0
      %2116 = vmatprep.subr.mxu0 0.0
      %2117 = vmatpush1.msra.mxu0 0.0
      %2118 = vmatprep.subr.mxu0 0.0
      %2119 = vmatpush1.msra.mxu0 0.0
      %2120 = vmatprep.subr.mxu0 0.0
      %2121 = vmatpush1.msra.mxu0 0.0
      %2122 = vmatprep.subr.mxu0 0.0
      %2123 = vmatpush1.msra.mxu0 0.0
      %2124 = vmatprep.subr.mxu0 0.0
      %2125 = vmatpush1.msra.mxu0 0.0
      %2126 = vmatprep.subr.mxu0 0.0
      %2127 = vmatpush1.msra.mxu0 0.0
      %2128 = vmatprep.subr.mxu0 0.0
      %2129 = vmatpush1.msra.mxu0 0.0
      %2130 = vmatprep.subr.mxu0 0.0
      %2131 = vmatpush1.msra.mxu0 0.0
      %2132 = vmatprep.subr.mxu0 0.0
      %2133 = vmatpush1.msra.mxu0 0.0
      %2134 = vmatprep.subr.mxu0 0.0
      %2135 = vmatpush1.msra.mxu0 0.0
      %2136 = vmatprep.subr.mxu0 0.0
      %2137 = vmatpush1.msra.mxu0 0.0
      %2138 = vmatprep.subr.mxu0 0.0
      %2139 = vmatpush1.msra.mxu0 0.0
      %2140 = vmatprep.mubr.f32.mxu0 0.0
      %2141 = vmatmul.mubr.f32.gmra.mrb[0].mxu0 %v1978
      %v2142 = vpop.f32.mrb[0].mxu0
      %v2143 = vadd.f32 0.0, %v2142
      %v2144 = vpop.f32.mrb[0].mxu0
      %2145 = vmatprep.mubr.f32.mxu0 0.0
      %2146 = vmatmul.mubr.f32.gmra.mrb[0].mxu0 %v1981
      %v2147 = vpop.f32.mrb[0].mxu0
      %v2148 = vadd.f32 0.0, %v2147
      %v2149 = vpop.f32.mrb[0].mxu0
      %2150 = vmatprep.mubr.f32.mxu0 0.0
      %2151 = vmatmul.mubr.f32.gmra.mrb[0].mxu0 %v1984
      %v2152 = vpop.f32.mrb[0].mxu0
      %v2153 = vadd.f32 0.0, %v2152
      %v2154 = vpop.f32.mrb[0].mxu0
      %2155 = vmatprep.mubr.f32.mxu0 0.0
      %2156 = vmatmul.mubr.f32.gmra.mrb[0].mxu0 %v1987
      %v2157 = vpop.f32.mrb[0].mxu0
      %v2158 = vadd.f32 0.0, %v2157
      %v2159 = vpop.f32.mrb[0].mxu0
      %2160 = vmatprep.mubr.f32.mxu0 0.0
      %2161 = vmatmul.mubr.f32.gmra.mrb[0].mxu0 %v1990
      %v2162 = vpop.f32.mrb[0].mxu0
      %v2163 = vadd.f32 0.0, %v2162
      %v2164 = vpop.f32.mrb[0].mxu0
      %2165 = vmatprep.mubr.f32.mxu0 0.0
      %2166 = vmatmul.mubr.f32.gmra.mrb[0].mxu0 %v1993
      %v2167 = vpop.f32.mrb[0].mxu0
      %v2168 = vadd.f32 0.0, %v2167
      %v2169 = vpop.f32.mrb[0].mxu0
      %2170 = vmatprep.mubr.f32.mxu0 0.0
      %2171 = vmatmul.mubr.f32.gmra.mrb[0].mxu0 %v1996
      %v2172 = vpop.f32.mrb[0].mxu0
      %v2173 = vadd.f32 0.0, %v2172
      %v2174 = vpop.f32.mrb[0].mxu0
      %2175 = vmatprep.mubr.f32.mxu0 0.0
      %2176 = vmatmul.mubr.f32.gmra.mrb[0].mxu0 %v1999
      %v2177 = vpop.f32.mrb[0].mxu0
      %v2178 = vadd.f32 0.0, %v2177
      %v2179 = vpop.f32.mrb[0].mxu0
      %2180 = vmatprep.mubr.f32.mxu0 0.0
      %2181 = vmatmul.mubr.f32.gmra.mrb[0].mxu0 %v2002
      %v2182 = vpop.f32.mrb[0].mxu0
      %v2183 = vadd.f32 0.0, %v2182
      %v2184 = vpop.f32.mrb[0].mxu0
      %2185 = vmatprep.mubr.f32.mxu0 0.0
      %2186 = vmatmul.mubr.f32.gmra.mrb[0].mxu0 %v2005
      %v2187 = vpop.f32.mrb[0].mxu0
      %v2188 = vadd.f32 0.0, %v2187
      %v2189 = vpop.f32.mrb[0].mxu0
      %2190 = vmatprep.mubr.f32.mxu0 0.0
      %2191 = vmatmul.mubr.f32.gmra.mrb[0].mxu0 %v2008
      %v2192 = vpop.f32.mrb[0].mxu0
      %v2193 = vadd.f32 0.0, %v2192
      %v2194 = vpop.f32.mrb[0].mxu0
      %2195 = vmatprep.mubr.f32.mxu0 0.0
      %2196 = vmatmul.mubr.f32.gmra.mrb[0].mxu0 %v2011
      %v2197 = vpop.f32.mrb[0].mxu0
      %v2198 = vadd.f32 0.0, %v2197
      %v2199 = vpop.f32.mrb[0].mxu0
      %2200 = vmatprep.mubr.f32.mxu0 0.0
      %2201 = vmatmul.mubr.f32.gmra.mrb[0].mxu0 %v2014
      %v2202 = vpop.f32.mrb[0].mxu0
      %v2203 = vadd.f32 0.0, %v2202
      %v2204 = vpop.f32.mrb[0].mxu0
      %2205 = vmatprep.mubr.f32.mxu0 0.0
      %2206 = vmatmul.mubr.f32.gmra.mrb[0].mxu0 %v2017
      %v2207 = vpop.f32.mrb[0].mxu0
      %v2208 = vadd.f32 0.0, %v2207
      %v2209 = vpop.f32.mrb[0].mxu0
      %2210 = vmatprep.mubr.f32.mxu0 0.0
      %2211 = vmatmul.mubr.f32.gmra.mrb[0].mxu0 %v2020
      %v2212 = vpop.f32.mrb[0].mxu0
      %v2213 = vadd.f32 0.0, %v2212
      %v2214 = vpop.f32.mrb[0].mxu0
      %2215 = vmatprep.mubr.f32.mxu0 0.0
      %2216 = vmatmul.mubr.f32.gmra.mrb[0].mxu0 %v2023
      %v2217 = vpop.f32.mrb[0].mxu0
      %v2218 = vadd.f32 0.0, %v2217
      %v2219 = vpop.f32.mrb[0].mxu0
      %2220 = vmatprep.mubr.f32.mxu0 0.0
      %2221 = vmatmul.mubr.f32.gmra.mrb[0].mxu0 %v2026
      %v2222 = vpop.f32.mrb[0].mxu0
      %v2223 = vadd.f32 0.0, %v2222
      %v2224 = vpop.f32.mrb[0].mxu0
      %2225 = vmatprep.mubr.f32.mxu0 0.0
      %2226 = vmatmul.mubr.f32.gmra.mrb[0].mxu0 %v2029
      %v2227 = vpop.f32.mrb[0].mxu0
      %v2228 = vadd.f32 0.0, %v2227
      %v2229 = vpop.f32.mrb[0].mxu0
      %2230 = vmatprep.mubr.f32.mxu0 0.0
      %2231 = vmatmul.mubr.f32.gmra.mrb[0].mxu0 %v2032
      %v2232 = vpop.f32.mrb[0].mxu0
      %v2233 = vadd.f32 0.0, %v2232
      %v2234 = vpop.f32.mrb[0].mxu0
      %2235 = vmatprep.mubr.f32.mxu0 0.0
      %2236 = vmatmul.mubr.f32.gmra.mrb[0].mxu0 %v2035
      %v2237 = vpop.f32.mrb[0].mxu0
      %v2238 = vadd.f32 0.0, %v2237
      %v2239 = vpop.f32.mrb[0].mxu0
      %2240 = vmatprep.mubr.f32.mxu0 0.0
      %2241 = vmatmul.mubr.f32.gmra.mrb[0].mxu0 %v2038
      %v2242 = vpop.f32.mrb[0].mxu0
      %v2243 = vadd.f32 0.0, %v2242
      %v2244 = vpop.f32.mrb[0].mxu0
      %2245 = vmatprep.mubr.f32.mxu0 0.0
      %2246 = vmatmul.mubr.f32.gmra.mrb[0].mxu0 %v2041
      %v2247 = vpop.f32.mrb[0].mxu0
      %v2248 = vadd.f32 0.0, %v2247
      %v2249 = vpop.f32.mrb[0].mxu0
      %2250 = vmatprep.mubr.f32.mxu0 0.0
      %2251 = vmatmul.mubr.f32.gmra.mrb[0].mxu0 %v2044
      %v2252 = vpop.f32.mrb[0].mxu0
      %v2253 = vadd.f32 0.0, %v2252
      %v2254 = vpop.f32.mrb[0].mxu0
      %2255 = vmatprep.mubr.f32.mxu0 0.0
      %2256 = vmatmul.mubr.f32.gmra.mrb[0].mxu0 %v2047
      %v2257 = vpop.f32.mrb[0].mxu0
      %v2258 = vadd.f32 0.0, %v2257
      %v2259 = vpop.f32.mrb[0].mxu0
      %2260 = vmatprep.mubr.f32.mxu0 0.0
      %2261 = vmatmul.mubr.f32.gmra.mrb[0].mxu0 %v2050
      %v2262 = vpop.f32.mrb[0].mxu0
      %v2263 = vadd.f32 0.0, %v2262
      %v2264 = vpop.f32.mrb[0].mxu0
      %2265 = vmatprep.mubr.f32.mxu0 0.0
      %2266 = vmatmul.mubr.f32.gmra.mrb[0].mxu0 %v2053
      %v2267 = vpop.f32.mrb[0].mxu0
      %v2268 = vadd.f32 0.0, %v2267
      %v2269 = vpop.f32.mrb[0].mxu0
      %2270 = vmatprep.mubr.f32.mxu0 0.0
      %2271 = vmatmul.mubr.f32.gmra.mrb[0].mxu0 %v2056
      %v2272 = vpop.f32.mrb[0].mxu0
      %v2273 = vadd.f32 0.0, %v2272
      %v2274 = vpop.f32.mrb[0].mxu0
      %2275 = vmatprep.mubr.f32.mxu0 0.0
      %2276 = vmatmul.mubr.f32.gmra.mrb[0].mxu0 %v2059
      %v2277 = vpop.f32.mrb[0].mxu0
      %v2278 = vadd.f32 0.0, %v2277
      %v2279 = vpop.f32.mrb[0].mxu0
      %2280 = vmatprep.mubr.f32.mxu0 0.0
      %2281 = vmatmul.mubr.f32.gmra.mrb[0].mxu0 %v2062
      %v2282 = vpop.f32.mrb[0].mxu0
      %v2283 = vadd.f32 0.0, %v2282
      %v2284 = vpop.f32.mrb[0].mxu0
      %2285 = vmatprep.mubr.f32.mxu0 0.0
      %2286 = vmatmul.mubr.f32.gmra.mrb[0].mxu0 %v2065
      %v2287 = vpop.f32.mrb[0].mxu0
      %v2288 = vadd.f32 0.0, %v2287
      %v2289 = vpop.f32.mrb[0].mxu0
      %2290 = vmatprep.mubr.f32.mxu0 0.0
      %2291 = vmatmul.mubr.f32.gmra.mrb[0].mxu0 %v2068
      %v2292 = vpop.f32.mrb[0].mxu0
      %v2293 = vadd.f32 0.0, %v2292
      %v2294 = vpop.f32.mrb[0].mxu0
      %2295 = vmatprep.mubr.f32.mxu0 0.0
      %2296 = vmatmul.mubr.f32.gmra.mrb[0].mxu0 %v2071
      %v2297 = vpop.f32.mrb[0].mxu0
      %v2298 = vadd.f32 0.0, %v2297
      %v2299 = vpop.f32.mrb[0].mxu0
      %2300 = vdwg.mxu0
      %v2301 = vadd.f32 %v1911, %v2143
      %v2302 = vadd.f32 %v1912, %v2148
      %v2303 = vadd.f32 %v1913, %v2153
      %v2304 = vadd.f32 %v1914, %v2158
      %v2305 = vadd.f32 %v1915, %v2163
      %v2306 = vadd.f32 %v1916, %v2168
      %v2307 = vadd.f32 %v1917, %v2173
      %v2308 = vadd.f32 %v1918, %v2178
      %v2309 = vadd.f32 %v1919, %v2183
      %v2310 = vadd.f32 %v1920, %v2188
      %v2311 = vadd.f32 %v1921, %v2193
      %v2312 = vadd.f32 %v1922, %v2198
      %v2313 = vadd.f32 %v1923, %v2203
      %v2314 = vadd.f32 %v1924, %v2208
      %v2315 = vadd.f32 %v1925, %v2213
      %v2316 = vadd.f32 %v1926, %v2218
      %v2317 = vadd.f32 %v1927, %v2223
      %v2318 = vadd.f32 %v1928, %v2228
      %v2319 = vadd.f32 %v1929, %v2233
      %v2320 = vadd.f32 %v1930, %v2238
      %v2321 = vadd.f32 %v1931, %v2243
      %v2322 = vadd.f32 %v1932, %v2248
      %v2323 = vadd.f32 %v1933, %v2253
      %v2324 = vadd.f32 %v1934, %v2258
      %v2325 = vadd.f32 %v1935, %v2263
      %v2326 = vadd.f32 %v1936, %v2268
      %v2327 = vadd.f32 %v1937, %v2273
      %v2328 = vadd.f32 %v1938, %v2278
      %v2329 = vadd.f32 %v1939, %v2283
      %v2330 = vadd.f32 %v1940, %v2288
      %v2331 = vadd.f32 %v1941, %v2293
      %v2332 = vadd.f32 %v1942, %v2298
      %v2333 = vld [vmem:[%s298 + $0xa] sm:$0xff]
      %v2334 = vld [vmem:[%s298 + $0x12] sm:$0xff]
      %v2335 = vld [vmem:[%s298 + $0x2a] sm:$0xff]
      %v2336 = vld [vmem:[%s298 + $0x32] sm:$0xff]
      %v2337 = vld [vmem:[%s298 + $0x4a] sm:$0xff]
      %v2338 = vld [vmem:[%s298 + $0x52] sm:$0xff]
      %v2339 = vld [vmem:[%s298 + $0x6a] sm:$0xff]
      %v2340 = vld [vmem:[%s298 + $0x72] sm:$0xff]
      %v2341 = vld [vmem:[%s298 + $0x8a] sm:$0xff]
      %v2342 = vld [vmem:[%s298 + $0x92] sm:$0xff]
      %v2343 = vld [vmem:[%s298 + $0xaa] sm:$0xff]
      %v2344 = vld [vmem:[%s298 + $0xb2] sm:$0xff]
      %v2345 = vld [vmem:[%s298 + $0xca] sm:$0xff]
      %v2346 = vld [vmem:[%s298 + $0xd2] sm:$0xff]
      %v2347 = vld [vmem:[%s298 + $0xea] sm:$0xff]
      %v2348 = vld [vmem:[%s298 + $0xf2] sm:$0xff]
      %v2349 = vld [vmem:[%s298 + $0x10a] sm:$0xff]
      %v2350 = vld [vmem:[%s298 + $0x112] sm:$0xff]
      %v2351 = vld [vmem:[%s298 + $0x12a] sm:$0xff]
      %v2352 = vld [vmem:[%s298 + $0x132] sm:$0xff]
      %v2353 = vld [vmem:[%s298 + $0x14a] sm:$0xff]
      %v2354 = vld [vmem:[%s298 + $0x152] sm:$0xff]
      %v2355 = vld [vmem:[%s298 + $0x16a] sm:$0xff]
      %v2356 = vld [vmem:[%s298 + $0x172] sm:$0xff]
      %v2357 = vld [vmem:[%s298 + $0x18a] sm:$0xff]
      %v2358 = vld [vmem:[%s298 + $0x192] sm:$0xff]
      %v2359 = vld [vmem:[%s298 + $0x1aa] sm:$0xff]
      %v2360 = vld [vmem:[%s298 + $0x1b2] sm:$0xff]
      %v2361 = vld [vmem:[%s298 + $0x1ca] sm:$0xff]
      %v2362 = vld [vmem:[%s298 + $0x1d2] sm:$0xff]
      %v2363 = vld [vmem:[%s298 + $0x1ea] sm:$0xff]
      %v2364 = vld [vmem:[%s298 + $0x1f2] sm:$0xff]
      %s2365 = scalar_lea.vmem %s1, 20
      %v2366 = vld [vmem:[%s2365] sm:$0xf]
      %v2368 = vsel %vm279, %v2333, 0
      %v2371 = vsel %vm279, %v2334, 0
      %v2374 = vsel %vm279, %v2335, 0
      %v2377 = vsel %vm279, %v2336, 0
      %v2380 = vsel %vm279, %v2337, 0
      %v2383 = vsel %vm279, %v2338, 0
      %v2386 = vsel %vm279, %v2339, 0
      %v2389 = vsel %vm279, %v2340, 0
      %v2392 = vsel %vm279, %v2341, 0
      %v2395 = vsel %vm279, %v2342, 0
      %v2398 = vsel %vm279, %v2343, 0
      %v2401 = vsel %vm279, %v2344, 0
      %v2404 = vsel %vm279, %v2345, 0
      %v2407 = vsel %vm279, %v2346, 0
      %v2410 = vsel %vm279, %v2347, 0
      %v2413 = vsel %vm279, %v2348, 0
      %v2416 = vsel %vm279, %v2349, 0
      %v2419 = vsel %vm279, %v2350, 0
      %v2422 = vsel %vm279, %v2351, 0
      %v2425 = vsel %vm279, %v2352, 0
      %v2428 = vsel %vm279, %v2353, 0
      %v2431 = vsel %vm279, %v2354, 0
      %v2434 = vsel %vm279, %v2355, 0
      %v2437 = vsel %vm279, %v2356, 0
      %v2440 = vsel %vm279, %v2357, 0
      %v2443 = vsel %vm279, %v2358, 0
      %v2446 = vsel %vm279, %v2359, 0
      %v2449 = vsel %vm279, %v2360, 0
      %v2452 = vsel %vm279, %v2361, 0
      %v2455 = vsel %vm279, %v2362, 0
      %v2458 = vsel %vm279, %v2363, 0
      %v2461 = vsel %vm279, %v2364, 0
      %v2464 = vsel %vm610, %v2366, 0
      %2466 = vmatprep.subr.mxu0 0.0
      %2467 = vmatpush1.msra.mxu0 %v2464
      %2468 = vmatprep.subr.mxu0 0.0
      %2469 = vmatpush1.msra.mxu0 0.0
      %2470 = vmatprep.subr.mxu0 0.0
      %2471 = vmatpush1.msra.mxu0 0.0
      %2472 = vmatprep.subr.mxu0 0.0
      %2473 = vmatpush1.msra.mxu0 0.0
      %2474 = vmatprep.subr.mxu0 0.0
      %2475 = vmatpush1.msra.mxu0 0.0
      %2476 = vmatprep.subr.mxu0 0.0
      %2477 = vmatpush1.msra.mxu0 0.0
      %2478 = vmatprep.subr.mxu0 0.0
      %2479 = vmatpush1.msra.mxu0 0.0
      %2480 = vmatprep.subr.mxu0 0.0
      %2481 = vmatpush1.msra.mxu0 0.0
      %2482 = vmatprep.subr.mxu0 0.0
      %2483 = vmatpush1.msra.mxu0 0.0
      %2484 = vmatprep.subr.mxu0 0.0
      %2485 = vmatpush1.msra.mxu0 0.0
      %2486 = vmatprep.subr.mxu0 0.0
      %2487 = vmatpush1.msra.mxu0 0.0
      %2488 = vmatprep.subr.mxu0 0.0
      %2489 = vmatpush1.msra.mxu0 0.0
      %2490 = vmatprep.subr.mxu0 0.0
      %2491 = vmatpush1.msra.mxu0 0.0
      %2492 = vmatprep.subr.mxu0 0.0
      %2493 = vmatpush1.msra.mxu0 0.0
      %2494 = vmatprep.subr.mxu0 0.0
      %2495 = vmatpush1.msra.mxu0 0.0
      %2496 = vmatprep.subr.mxu0 0.0
      %2497 = vmatpush1.msra.mxu0 0.0
      %2498 = vmatprep.subr.mxu0 0.0
      %2499 = vmatpush1.msra.mxu0 0.0
      %2500 = vmatprep.subr.mxu0 0.0
      %2501 = vmatpush1.msra.mxu0 0.0
      %2502 = vmatprep.subr.mxu0 0.0
      %2503 = vmatpush1.msra.mxu0 0.0
      %2504 = vmatprep.subr.mxu0 0.0
      %2505 = vmatpush1.msra.mxu0 0.0
      %2506 = vmatprep.subr.mxu0 0.0
      %2507 = vmatpush1.msra.mxu0 0.0
      %2508 = vmatprep.subr.mxu0 0.0
      %2509 = vmatpush1.msra.mxu0 0.0
      %2510 = vmatprep.subr.mxu0 0.0
      %2511 = vmatpush1.msra.mxu0 0.0
      %2512 = vmatprep.subr.mxu0 0.0
      %2513 = vmatpush1.msra.mxu0 0.0
      %2514 = vmatprep.subr.mxu0 0.0
      %2515 = vmatpush1.msra.mxu0 0.0
      %2516 = vmatprep.subr.mxu0 0.0
      %2517 = vmatpush1.msra.mxu0 0.0
      %2518 = vmatprep.subr.mxu0 0.0
      %2519 = vmatpush1.msra.mxu0 0.0
      %2520 = vmatprep.subr.mxu0 0.0
      %2521 = vmatpush1.msra.mxu0 0.0
      %2522 = vmatprep.subr.mxu0 0.0
      %2523 = vmatpush1.msra.mxu0 0.0
      %2524 = vmatprep.subr.mxu0 0.0
      %2525 = vmatpush1.msra.mxu0 0.0
      %2526 = vmatprep.subr.mxu0 0.0
      %2527 = vmatpush1.msra.mxu0 0.0
      %2528 = vmatprep.subr.mxu0 0.0
      %2529 = vmatpush1.msra.mxu0 0.0
      %2530 = vmatprep.mubr.f32.mxu0 0.0
      %2531 = vmatmul.mubr.f32.gmra.mrb[0].mxu0 %v2368
      %v2532 = vpop.f32.mrb[0].mxu0
      %v2533 = vadd.f32 0.0, %v2532
      %v2534 = vpop.f32.mrb[0].mxu0
      %2535 = vmatprep.mubr.f32.mxu0 0.0
      %2536 = vmatmul.mubr.f32.gmra.mrb[0].mxu0 %v2371
      %v2537 = vpop.f32.mrb[0].mxu0
      %v2538 = vadd.f32 0.0, %v2537
      %v2539 = vpop.f32.mrb[0].mxu0
      %2540 = vmatprep.mubr.f32.mxu0 0.0
      %2541 = vmatmul.mubr.f32.gmra.mrb[0].mxu0 %v2374
      %v2542 = vpop.f32.mrb[0].mxu0
      %v2543 = vadd.f32 0.0, %v2542
      %v2544 = vpop.f32.mrb[0].mxu0
      %2545 = vmatprep.mubr.f32.mxu0 0.0
      %2546 = vmatmul.mubr.f32.gmra.mrb[0].mxu0 %v2377
      %v2547 = vpop.f32.mrb[0].mxu0
      %v2548 = vadd.f32 0.0, %v2547
      %v2549 = vpop.f32.mrb[0].mxu0
      %2550 = vmatprep.mubr.f32.mxu0 0.0
      %2551 = vmatmul.mubr.f32.gmra.mrb[0].mxu0 %v2380
      %v2552 = vpop.f32.mrb[0].mxu0
      %v2553 = vadd.f32 0.0, %v2552
      %v2554 = vpop.f32.mrb[0].mxu0
      %2555 = vmatprep.mubr.f32.mxu0 0.0
      %2556 = vmatmul.mubr.f32.gmra.mrb[0].mxu0 %v2383
      %v2557 = vpop.f32.mrb[0].mxu0
      %v2558 = vadd.f32 0.0, %v2557
      %v2559 = vpop.f32.mrb[0].mxu0
      %2560 = vmatprep.mubr.f32.mxu0 0.0
      %2561 = vmatmul.mubr.f32.gmra.mrb[0].mxu0 %v2386
      %v2562 = vpop.f32.mrb[0].mxu0
      %v2563 = vadd.f32 0.0, %v2562
      %v2564 = vpop.f32.mrb[0].mxu0
      %2565 = vmatprep.mubr.f32.mxu0 0.0
      %2566 = vmatmul.mubr.f32.gmra.mrb[0].mxu0 %v2389
      %v2567 = vpop.f32.mrb[0].mxu0
      %v2568 = vadd.f32 0.0, %v2567
      %v2569 = vpop.f32.mrb[0].mxu0
      %2570 = vmatprep.mubr.f32.mxu0 0.0
      %2571 = vmatmul.mubr.f32.gmra.mrb[0].mxu0 %v2392
      %v2572 = vpop.f32.mrb[0].mxu0
      %v2573 = vadd.f32 0.0, %v2572
      %v2574 = vpop.f32.mrb[0].mxu0
      %2575 = vmatprep.mubr.f32.mxu0 0.0
      %2576 = vmatmul.mubr.f32.gmra.mrb[0].mxu0 %v2395
      %v2577 = vpop.f32.mrb[0].mxu0
      %v2578 = vadd.f32 0.0, %v2577
      %v2579 = vpop.f32.mrb[0].mxu0
      %2580 = vmatprep.mubr.f32.mxu0 0.0
      %2581 = vmatmul.mubr.f32.gmra.mrb[0].mxu0 %v2398
      %v2582 = vpop.f32.mrb[0].mxu0
      %v2583 = vadd.f32 0.0, %v2582
      %v2584 = vpop.f32.mrb[0].mxu0
      %2585 = vmatprep.mubr.f32.mxu0 0.0
      %2586 = vmatmul.mubr.f32.gmra.mrb[0].mxu0 %v2401
      %v2587 = vpop.f32.mrb[0].mxu0
      %v2588 = vadd.f32 0.0, %v2587
      %v2589 = vpop.f32.mrb[0].mxu0
      %2590 = vmatprep.mubr.f32.mxu0 0.0
      %2591 = vmatmul.mubr.f32.gmra.mrb[0].mxu0 %v2404
      %v2592 = vpop.f32.mrb[0].mxu0
      %v2593 = vadd.f32 0.0, %v2592
      %v2594 = vpop.f32.mrb[0].mxu0
      %2595 = vmatprep.mubr.f32.mxu0 0.0
      %2596 = vmatmul.mubr.f32.gmra.mrb[0].mxu0 %v2407
      %v2597 = vpop.f32.mrb[0].mxu0
      %v2598 = vadd.f32 0.0, %v2597
      %v2599 = vpop.f32.mrb[0].mxu0
      %2600 = vmatprep.mubr.f32.mxu0 0.0
      %2601 = vmatmul.mubr.f32.gmra.mrb[0].mxu0 %v2410
      %v2602 = vpop.f32.mrb[0].mxu0
      %v2603 = vadd.f32 0.0, %v2602
      %v2604 = vpop.f32.mrb[0].mxu0
      %2605 = vmatprep.mubr.f32.mxu0 0.0
      %2606 = vmatmul.mubr.f32.gmra.mrb[0].mxu0 %v2413
      %v2607 = vpop.f32.mrb[0].mxu0
      %v2608 = vadd.f32 0.0, %v2607
      %v2609 = vpop.f32.mrb[0].mxu0
      %2610 = vmatprep.mubr.f32.mxu0 0.0
      %2611 = vmatmul.mubr.f32.gmra.mrb[0].mxu0 %v2416
      %v2612 = vpop.f32.mrb[0].mxu0
      %v2613 = vadd.f32 0.0, %v2612
      %v2614 = vpop.f32.mrb[0].mxu0
      %2615 = vmatprep.mubr.f32.mxu0 0.0
      %2616 = vmatmul.mubr.f32.gmra.mrb[0].mxu0 %v2419
      %v2617 = vpop.f32.mrb[0].mxu0
      %v2618 = vadd.f32 0.0, %v2617
      %v2619 = vpop.f32.mrb[0].mxu0
      %2620 = vmatprep.mubr.f32.mxu0 0.0
      %2621 = vmatmul.mubr.f32.gmra.mrb[0].mxu0 %v2422
      %v2622 = vpop.f32.mrb[0].mxu0
      %v2623 = vadd.f32 0.0, %v2622
      %v2624 = vpop.f32.mrb[0].mxu0
      %2625 = vmatprep.mubr.f32.mxu0 0.0
      %2626 = vmatmul.mubr.f32.gmra.mrb[0].mxu0 %v2425
      %v2627 = vpop.f32.mrb[0].mxu0
      %v2628 = vadd.f32 0.0, %v2627
      %v2629 = vpop.f32.mrb[0].mxu0
      %2630 = vmatprep.mubr.f32.mxu0 0.0
      %2631 = vmatmul.mubr.f32.gmra.mrb[0].mxu0 %v2428
      %v2632 = vpop.f32.mrb[0].mxu0
      %v2633 = vadd.f32 0.0, %v2632
      %v2634 = vpop.f32.mrb[0].mxu0
      %2635 = vmatprep.mubr.f32.mxu0 0.0
      %2636 = vmatmul.mubr.f32.gmra.mrb[0].mxu0 %v2431
      %v2637 = vpop.f32.mrb[0].mxu0
      %v2638 = vadd.f32 0.0, %v2637
      %v2639 = vpop.f32.mrb[0].mxu0
      %2640 = vmatprep.mubr.f32.mxu0 0.0
      %2641 = vmatmul.mubr.f32.gmra.mrb[0].mxu0 %v2434
      %v2642 = vpop.f32.mrb[0].mxu0
      %v2643 = vadd.f32 0.0, %v2642
      %v2644 = vpop.f32.mrb[0].mxu0
      %2645 = vmatprep.mubr.f32.mxu0 0.0
      %2646 = vmatmul.mubr.f32.gmra.mrb[0].mxu0 %v2437
      %v2647 = vpop.f32.mrb[0].mxu0
      %v2648 = vadd.f32 0.0, %v2647
      %v2649 = vpop.f32.mrb[0].mxu0
      %2650 = vmatprep.mubr.f32.mxu0 0.0
      %2651 = vmatmul.mubr.f32.gmra.mrb[0].mxu0 %v2440
      %v2652 = vpop.f32.mrb[0].mxu0
      %v2653 = vadd.f32 0.0, %v2652
      %v2654 = vpop.f32.mrb[0].mxu0
      %2655 = vmatprep.mubr.f32.mxu0 0.0
      %2656 = vmatmul.mubr.f32.gmra.mrb[0].mxu0 %v2443
      %v2657 = vpop.f32.mrb[0].mxu0
      %v2658 = vadd.f32 0.0, %v2657
      %v2659 = vpop.f32.mrb[0].mxu0
      %2660 = vmatprep.mubr.f32.mxu0 0.0
      %2661 = vmatmul.mubr.f32.gmra.mrb[0].mxu0 %v2446
      %v2662 = vpop.f32.mrb[0].mxu0
      %v2663 = vadd.f32 0.0, %v2662
      %v2664 = vpop.f32.mrb[0].mxu0
      %2665 = vmatprep.mubr.f32.mxu0 0.0
      %2666 = vmatmul.mubr.f32.gmra.mrb[0].mxu0 %v2449
      %v2667 = vpop.f32.mrb[0].mxu0
      %v2668 = vadd.f32 0.0, %v2667
      %v2669 = vpop.f32.mrb[0].mxu0
      %2670 = vmatprep.mubr.f32.mxu0 0.0
      %2671 = vmatmul.mubr.f32.gmra.mrb[0].mxu0 %v2452
      %v2672 = vpop.f32.mrb[0].mxu0
      %v2673 = vadd.f32 0.0, %v2672
      %v2674 = vpop.f32.mrb[0].mxu0
      %2675 = vmatprep.mubr.f32.mxu0 0.0
      %2676 = vmatmul.mubr.f32.gmra.mrb[0].mxu0 %v2455
      %v2677 = vpop.f32.mrb[0].mxu0
      %v2678 = vadd.f32 0.0, %v2677
      %v2679 = vpop.f32.mrb[0].mxu0
      %2680 = vmatprep.mubr.f32.mxu0 0.0
      %2681 = vmatmul.mubr.f32.gmra.mrb[0].mxu0 %v2458
      %v2682 = vpop.f32.mrb[0].mxu0
      %v2683 = vadd.f32 0.0, %v2682
      %v2684 = vpop.f32.mrb[0].mxu0
      %2685 = vmatprep.mubr.f32.mxu0 0.0
      %2686 = vmatmul.mubr.f32.gmra.mrb[0].mxu0 %v2461
      %v2687 = vpop.f32.mrb[0].mxu0
      %v2688 = vadd.f32 0.0, %v2687
      %v2689 = vpop.f32.mrb[0].mxu0
      %2690 = vdwg.mxu0
      %v2691 = vadd.f32 %v2301, %v2533
      %v2692 = vadd.f32 %v2302, %v2538
      %v2693 = vadd.f32 %v2303, %v2543
      %v2694 = vadd.f32 %v2304, %v2548
      %v2695 = vadd.f32 %v2305, %v2553
      %v2696 = vadd.f32 %v2306, %v2558
      %v2697 = vadd.f32 %v2307, %v2563
      %v2698 = vadd.f32 %v2308, %v2568
      %v2699 = vadd.f32 %v2309, %v2573
      %v2700 = vadd.f32 %v2310, %v2578
      %v2701 = vadd.f32 %v2311, %v2583
      %v2702 = vadd.f32 %v2312, %v2588
      %v2703 = vadd.f32 %v2313, %v2593
      %v2704 = vadd.f32 %v2314, %v2598
      %v2705 = vadd.f32 %v2315, %v2603
      %v2706 = vadd.f32 %v2316, %v2608
      %v2707 = vadd.f32 %v2317, %v2613
      %v2708 = vadd.f32 %v2318, %v2618
      %v2709 = vadd.f32 %v2319, %v2623
      %v2710 = vadd.f32 %v2320, %v2628
      %v2711 = vadd.f32 %v2321, %v2633
      %v2712 = vadd.f32 %v2322, %v2638
      %v2713 = vadd.f32 %v2323, %v2643
      %v2714 = vadd.f32 %v2324, %v2648
      %v2715 = vadd.f32 %v2325, %v2653
      %v2716 = vadd.f32 %v2326, %v2658
      %v2717 = vadd.f32 %v2327, %v2663
      %v2718 = vadd.f32 %v2328, %v2668
      %v2719 = vadd.f32 %v2329, %v2673
      %v2720 = vadd.f32 %v2330, %v2678
      %v2721 = vadd.f32 %v2331, %v2683
      %v2722 = vadd.f32 %v2332, %v2688
      %s2723 = scalar_lea.vmem [#allocation2], 128
      %v2724 = vld [vmem:[%s2723 + $0x6] sm:$0xff]
      %v2725 = vld [vmem:[%s2723 + $0xe] sm:$0xff]
      %v2726 = vld [vmem:[%s2723 + $0x26] sm:$0xff]
      %v2727 = vld [vmem:[%s2723 + $0x2e] sm:$0xff]
      %v2728 = vld [vmem:[%s2723 + $0x46] sm:$0xff]
      %v2729 = vld [vmem:[%s2723 + $0x4e] sm:$0xff]
      %v2730 = vld [vmem:[%s2723 + $0x66] sm:$0xff]
      %v2731 = vld [vmem:[%s2723 + $0x6e] sm:$0xff]
      %v2732 = vld [vmem:[%s2723 + $0x86] sm:$0xff]
      %v2733 = vld [vmem:[%s2723 + $0x8e] sm:$0xff]
      %v2734 = vld [vmem:[%s2723 + $0xa6] sm:$0xff]
      %v2735 = vld [vmem:[%s2723 + $0xae] sm:$0xff]
      %v2736 = vld [vmem:[%s2723 + $0xc6] sm:$0xff]
      %v2737 = vld [vmem:[%s2723 + $0xce] sm:$0xff]
      %v2738 = vld [vmem:[%s2723 + $0xe6] sm:$0xff]
      %v2739 = vld [vmem:[%s2723 + $0xee] sm:$0xff]
      %v2740 = vld [vmem:[%s2723 + $0x106] sm:$0xff]
      %v2741 = vld [vmem:[%s2723 + $0x10e] sm:$0xff]
      %v2742 = vld [vmem:[%s2723 + $0x126] sm:$0xff]
      %v2743 = vld [vmem:[%s2723 + $0x12e] sm:$0xff]
      %v2744 = vld [vmem:[%s2723 + $0x146] sm:$0xff]
      %v2745 = vld [vmem:[%s2723 + $0x14e] sm:$0xff]
      %v2746 = vld [vmem:[%s2723 + $0x166] sm:$0xff]
      %v2747 = vld [vmem:[%s2723 + $0x16e] sm:$0xff]
      %v2748 = vld [vmem:[%s2723 + $0x186] sm:$0xff]
      %v2749 = vld [vmem:[%s2723 + $0x18e] sm:$0xff]
      %v2750 = vld [vmem:[%s2723 + $0x1a6] sm:$0xff]
      %v2751 = vld [vmem:[%s2723 + $0x1ae] sm:$0xff]
      %v2752 = vld [vmem:[%s2723 + $0x1c6] sm:$0xff]
      %v2753 = vld [vmem:[%s2723 + $0x1ce] sm:$0xff]
      %v2754 = vld [vmem:[%s2723 + $0x1e6] sm:$0xff]
      %v2755 = vld [vmem:[%s2723 + $0x1ee] sm:$0xff]
      %s2756 = scalar_lea.vmem %s1, 24
      %v2757 = vld [vmem:[%s2756] sm:$0xf]
      %v2759 = vsel %vm279, %v2724, 0
      %v2762 = vsel %vm279, %v2725, 0
      %v2765 = vsel %vm279, %v2726, 0
      %v2768 = vsel %vm279, %v2727, 0
      %v2771 = vsel %vm279, %v2728, 0
      %v2774 = vsel %vm279, %v2729, 0
      %v2777 = vsel %vm279, %v2730, 0
      %v2780 = vsel %vm279, %v2731, 0
      %v2783 = vsel %vm279, %v2732, 0
      %v2786 = vsel %vm279, %v2733, 0
      %v2789 = vsel %vm279, %v2734, 0
      %v2792 = vsel %vm279, %v2735, 0
      %v2795 = vsel %vm279, %v2736, 0
      %v2798 = vsel %vm279, %v2737, 0
      %v2801 = vsel %vm279, %v2738, 0
      %v2804 = vsel %vm279, %v2739, 0
      %v2807 = vsel %vm279, %v2740, 0
      %v2810 = vsel %vm279, %v2741, 0
      %v2813 = vsel %vm279, %v2742, 0
      %v2816 = vsel %vm279, %v2743, 0
      %v2819 = vsel %vm279, %v2744, 0
      %v2822 = vsel %vm279, %v2745, 0
      %v2825 = vsel %vm279, %v2746, 0
      %v2828 = vsel %vm279, %v2747, 0
      %v2831 = vsel %vm279, %v2748, 0
      %v2834 = vsel %vm279, %v2749, 0
      %v2837 = vsel %vm279, %v2750, 0
      %v2840 = vsel %vm279, %v2751, 0
      %v2843 = vsel %vm279, %v2752, 0
      %v2846 = vsel %vm279, %v2753, 0
      %v2849 = vsel %vm279, %v2754, 0
      %v2852 = vsel %vm279, %v2755, 0
      %v2855 = vsel %vm610, %v2757, 0
      %2857 = vmatprep.subr.mxu0 0.0
      %2858 = vmatpush1.msra.mxu0 %v2855
      %2859 = vmatprep.subr.mxu0 0.0
      %2860 = vmatpush1.msra.mxu0 0.0
      %2861 = vmatprep.subr.mxu0 0.0
      %2862 = vmatpush1.msra.mxu0 0.0
      %2863 = vmatprep.subr.mxu0 0.0
      %2864 = vmatpush1.msra.mxu0 0.0
      %2865 = vmatprep.subr.mxu0 0.0
      %2866 = vmatpush1.msra.mxu0 0.0
      %2867 = vmatprep.subr.mxu0 0.0
      %2868 = vmatpush1.msra.mxu0 0.0
      %2869 = vmatprep.subr.mxu0 0.0
      %2870 = vmatpush1.msra.mxu0 0.0
      %2871 = vmatprep.subr.mxu0 0.0
      %2872 = vmatpush1.msra.mxu0 0.0
      %2873 = vmatprep.subr.mxu0 0.0
      %2874 = vmatpush1.msra.mxu0 0.0
      %2875 = vmatprep.subr.mxu0 0.0
      %2876 = vmatpush1.msra.mxu0 0.0
      %2877 = vmatprep.subr.mxu0 0.0
      %2878 = vmatpush1.msra.mxu0 0.0
      %2879 = vmatprep.subr.mxu0 0.0
      %2880 = vmatpush1.msra.mxu0 0.0
      %2881 = vmatprep.subr.mxu0 0.0
      %2882 = vmatpush1.msra.mxu0 0.0
      %2883 = vmatprep.subr.mxu0 0.0
      %2884 = vmatpush1.msra.mxu0 0.0
      %2885 = vmatprep.subr.mxu0 0.0
      %2886 = vmatpush1.msra.mxu0 0.0
      %2887 = vmatprep.subr.mxu0 0.0
      %2888 = vmatpush1.msra.mxu0 0.0
      %2889 = vmatprep.subr.mxu0 0.0
      %2890 = vmatpush1.msra.mxu0 0.0
      %2891 = vmatprep.subr.mxu0 0.0
      %2892 = vmatpush1.msra.mxu0 0.0
      %2893 = vmatprep.subr.mxu0 0.0
      %2894 = vmatpush1.msra.mxu0 0.0
      %2895 = vmatprep.subr.mxu0 0.0
      %2896 = vmatpush1.msra.mxu0 0.0
      %2897 = vmatprep.subr.mxu0 0.0
      %2898 = vmatpush1.msra.mxu0 0.0
      %2899 = vmatprep.subr.mxu0 0.0
      %2900 = vmatpush1.msra.mxu0 0.0
      %2901 = vmatprep.subr.mxu0 0.0
      %2902 = vmatpush1.msra.mxu0 0.0
      %2903 = vmatprep.subr.mxu0 0.0
      %2904 = vmatpush1.msra.mxu0 0.0
      %2905 = vmatprep.subr.mxu0 0.0
      %2906 = vmatpush1.msra.mxu0 0.0
      %2907 = vmatprep.subr.mxu0 0.0
      %2908 = vmatpush1.msra.mxu0 0.0
      %2909 = vmatprep.subr.mxu0 0.0
      %2910 = vmatpush1.msra.mxu0 0.0
      %2911 = vmatprep.subr.mxu0 0.0
      %2912 = vmatpush1.msra.mxu0 0.0
      %2913 = vmatprep.subr.mxu0 0.0
      %2914 = vmatpush1.msra.mxu0 0.0
      %2915 = vmatprep.subr.mxu0 0.0
      %2916 = vmatpush1.msra.mxu0 0.0
      %2917 = vmatprep.subr.mxu0 0.0
      %2918 = vmatpush1.msra.mxu0 0.0
      %2919 = vmatprep.subr.mxu0 0.0
      %2920 = vmatpush1.msra.mxu0 0.0
      %2921 = vmatprep.mubr.f32.mxu0 0.0
      %2922 = vmatmul.mubr.f32.gmra.mrb[0].mxu0 %v2759
      %v2923 = vpop.f32.mrb[0].mxu0
      %v2924 = vadd.f32 0.0, %v2923
      %v2925 = vpop.f32.mrb[0].mxu0
      %2926 = vmatprep.mubr.f32.mxu0 0.0
      %2927 = vmatmul.mubr.f32.gmra.mrb[0].mxu0 %v2762
      %v2928 = vpop.f32.mrb[0].mxu0
      %v2929 = vadd.f32 0.0, %v2928
      %v2930 = vpop.f32.mrb[0].mxu0
      %2931 = vmatprep.mubr.f32.mxu0 0.0
      %2932 = vmatmul.mubr.f32.gmra.mrb[0].mxu0 %v2765
      %v2933 = vpop.f32.mrb[0].mxu0
      %v2934 = vadd.f32 0.0, %v2933
      %v2935 = vpop.f32.mrb[0].mxu0
      %2936 = vmatprep.mubr.f32.mxu0 0.0
      %2937 = vmatmul.mubr.f32.gmra.mrb[0].mxu0 %v2768
      %v2938 = vpop.f32.mrb[0].mxu0
      %v2939 = vadd.f32 0.0, %v2938
      %v2940 = vpop.f32.mrb[0].mxu0
      %2941 = vmatprep.mubr.f32.mxu0 0.0
      %2942 = vmatmul.mubr.f32.gmra.mrb[0].mxu0 %v2771
      %v2943 = vpop.f32.mrb[0].mxu0
      %v2944 = vadd.f32 0.0, %v2943
      %v2945 = vpop.f32.mrb[0].mxu0
      %2946 = vmatprep.mubr.f32.mxu0 0.0
      %2947 = vmatmul.mubr.f32.gmra.mrb[0].mxu0 %v2774
      %v2948 = vpop.f32.mrb[0].mxu0
      %v2949 = vadd.f32 0.0, %v2948
      %v2950 = vpop.f32.mrb[0].mxu0
      %2951 = vmatprep.mubr.f32.mxu0 0.0
      %2952 = vmatmul.mubr.f32.gmra.mrb[0].mxu0 %v2777
      %v2953 = vpop.f32.mrb[0].mxu0
      %v2954 = vadd.f32 0.0, %v2953
      %v2955 = vpop.f32.mrb[0].mxu0
      %2956 = vmatprep.mubr.f32.mxu0 0.0
      %2957 = vmatmul.mubr.f32.gmra.mrb[0].mxu0 %v2780
      %v2958 = vpop.f32.mrb[0].mxu0
      %v2959 = vadd.f32 0.0, %v2958
      %v2960 = vpop.f32.mrb[0].mxu0
      %2961 = vmatprep.mubr.f32.mxu0 0.0
      %2962 = vmatmul.mubr.f32.gmra.mrb[0].mxu0 %v2783
      %v2963 = vpop.f32.mrb[0].mxu0
      %v2964 = vadd.f32 0.0, %v2963
      %v2965 = vpop.f32.mrb[0].mxu0
      %2966 = vmatprep.mubr.f32.mxu0 0.0
      %2967 = vmatmul.mubr.f32.gmra.mrb[0].mxu0 %v2786
      %v2968 = vpop.f32.mrb[0].mxu0
      %v2969 = vadd.f32 0.0, %v2968
      %v2970 = vpop.f32.mrb[0].mxu0
      %2971 = vmatprep.mubr.f32.mxu0 0.0
      %2972 = vmatmul.mubr.f32.gmra.mrb[0].mxu0 %v2789
      %v2973 = vpop.f32.mrb[0].mxu0
      %v2974 = vadd.f32 0.0, %v2973
      %v2975 = vpop.f32.mrb[0].mxu0
      %2976 = vmatprep.mubr.f32.mxu0 0.0
      %2977 = vmatmul.mubr.f32.gmra.mrb[0].mxu0 %v2792
      %v2978 = vpop.f32.mrb[0].mxu0
      %v2979 = vadd.f32 0.0, %v2978
      %v2980 = vpop.f32.mrb[0].mxu0
      %2981 = vmatprep.mubr.f32.mxu0 0.0
      %2982 = vmatmul.mubr.f32.gmra.mrb[0].mxu0 %v2795
      %v2983 = vpop.f32.mrb[0].mxu0
      %v2984 = vadd.f32 0.0, %v2983
      %v2985 = vpop.f32.mrb[0].mxu0
      %2986 = vmatprep.mubr.f32.mxu0 0.0
      %2987 = vmatmul.mubr.f32.gmra.mrb[0].mxu0 %v2798
      %v2988 = vpop.f32.mrb[0].mxu0
      %v2989 = vadd.f32 0.0, %v2988
      %v2990 = vpop.f32.mrb[0].mxu0
      %2991 = vmatprep.mubr.f32.mxu0 0.0
      %2992 = vmatmul.mubr.f32.gmra.mrb[0].mxu0 %v2801
      %v2993 = vpop.f32.mrb[0].mxu0
      %v2994 = vadd.f32 0.0, %v2993
      %v2995 = vpop.f32.mrb[0].mxu0
      %2996 = vmatprep.mubr.f32.mxu0 0.0
      %2997 = vmatmul.mubr.f32.gmra.mrb[0].mxu0 %v2804
      %v2998 = vpop.f32.mrb[0].mxu0
      %v2999 = vadd.f32 0.0, %v2998
      %v3000 = vpop.f32.mrb[0].mxu0
      %3001 = vmatprep.mubr.f32.mxu0 0.0
      %3002 = vmatmul.mubr.f32.gmra.mrb[0].mxu0 %v2807
      %v3003 = vpop.f32.mrb[0].mxu0
      %v3004 = vadd.f32 0.0, %v3003
      %v3005 = vpop.f32.mrb[0].mxu0
      %3006 = vmatprep.mubr.f32.mxu0 0.0
      %3007 = vmatmul.mubr.f32.gmra.mrb[0].mxu0 %v2810
      %v3008 = vpop.f32.mrb[0].mxu0
      %v3009 = vadd.f32 0.0, %v3008
      %v3010 = vpop.f32.mrb[0].mxu0
      %3011 = vmatprep.mubr.f32.mxu0 0.0
      %3012 = vmatmul.mubr.f32.gmra.mrb[0].mxu0 %v2813
      %v3013 = vpop.f32.mrb[0].mxu0
      %v3014 = vadd.f32 0.0, %v3013
      %v3015 = vpop.f32.mrb[0].mxu0
      %3016 = vmatprep.mubr.f32.mxu0 0.0
      %3017 = vmatmul.mubr.f32.gmra.mrb[0].mxu0 %v2816
      %v3018 = vpop.f32.mrb[0].mxu0
      %v3019 = vadd.f32 0.0, %v3018
      %v3020 = vpop.f32.mrb[0].mxu0
      %3021 = vmatprep.mubr.f32.mxu0 0.0
      %3022 = vmatmul.mubr.f32.gmra.mrb[0].mxu0 %v2819
      %v3023 = vpop.f32.mrb[0].mxu0
      %v3024 = vadd.f32 0.0, %v3023
      %v3025 = vpop.f32.mrb[0].mxu0
      %3026 = vmatprep.mubr.f32.mxu0 0.0
      %3027 = vmatmul.mubr.f32.gmra.mrb[0].mxu0 %v2822
      %v3028 = vpop.f32.mrb[0].mxu0
      %v3029 = vadd.f32 0.0, %v3028
      %v3030 = vpop.f32.mrb[0].mxu0
      %3031 = vmatprep.mubr.f32.mxu0 0.0
      %3032 = vmatmul.mubr.f32.gmra.mrb[0].mxu0 %v2825
      %v3033 = vpop.f32.mrb[0].mxu0
      %v3034 = vadd.f32 0.0, %v3033
      %v3035 = vpop.f32.mrb[0].mxu0
      %3036 = vmatprep.mubr.f32.mxu0 0.0
      %3037 = vmatmul.mubr.f32.gmra.mrb[0].mxu0 %v2828
      %v3038 = vpop.f32.mrb[0].mxu0
      %v3039 = vadd.f32 0.0, %v3038
      %v3040 = vpop.f32.mrb[0].mxu0
      %3041 = vmatprep.mubr.f32.mxu0 0.0
      %3042 = vmatmul.mubr.f32.gmra.mrb[0].mxu0 %v2831
      %v3043 = vpop.f32.mrb[0].mxu0
      %v3044 = vadd.f32 0.0, %v3043
      %v3045 = vpop.f32.mrb[0].mxu0
      %3046 = vmatprep.mubr.f32.mxu0 0.0
      %3047 = vmatmul.mubr.f32.gmra.mrb[0].mxu0 %v2834
      %v3048 = vpop.f32.mrb[0].mxu0
      %v3049 = vadd.f32 0.0, %v3048
      %v3050 = vpop.f32.mrb[0].mxu0
      %3051 = vmatprep.mubr.f32.mxu0 0.0
      %3052 = vmatmul.mubr.f32.gmra.mrb[0].mxu0 %v2837
      %v3053 = vpop.f32.mrb[0].mxu0
      %v3054 = vadd.f32 0.0, %v3053
      %v3055 = vpop.f32.mrb[0].mxu0
      %3056 = vmatprep.mubr.f32.mxu0 0.0
      %3057 = vmatmul.mubr.f32.gmra.mrb[0].mxu0 %v2840
      %v3058 = vpop.f32.mrb[0].mxu0
      %v3059 = vadd.f32 0.0, %v3058
      %v3060 = vpop.f32.mrb[0].mxu0
      %3061 = vmatprep.mubr.f32.mxu0 0.0
      %3062 = vmatmul.mubr.f32.gmra.mrb[0].mxu0 %v2843
      %v3063 = vpop.f32.mrb[0].mxu0
      %v3064 = vadd.f32 0.0, %v3063
      %v3065 = vpop.f32.mrb[0].mxu0
      %3066 = vmatprep.mubr.f32.mxu0 0.0
      %3067 = vmatmul.mubr.f32.gmra.mrb[0].mxu0 %v2846
      %v3068 = vpop.f32.mrb[0].mxu0
      %v3069 = vadd.f32 0.0, %v3068
      %v3070 = vpop.f32.mrb[0].mxu0
      %3071 = vmatprep.mubr.f32.mxu0 0.0
      %3072 = vmatmul.mubr.f32.gmra.mrb[0].mxu0 %v2849
      %v3073 = vpop.f32.mrb[0].mxu0
      %v3074 = vadd.f32 0.0, %v3073
      %v3075 = vpop.f32.mrb[0].mxu0
      %3076 = vmatprep.mubr.f32.mxu0 0.0
      %3077 = vmatmul.mubr.f32.gmra.mrb[0].mxu0 %v2852
      %v3078 = vpop.f32.mrb[0].mxu0
      %v3079 = vadd.f32 0.0, %v3078
      %v3080 = vpop.f32.mrb[0].mxu0
      %3081 = vdwg.mxu0
      %v3082 = vadd.f32 %v2691, %v2924
      %v3083 = vadd.f32 %v2692, %v2929
      %v3084 = vadd.f32 %v2693, %v2934
      %v3085 = vadd.f32 %v2694, %v2939
      %v3086 = vadd.f32 %v2695, %v2944
      %v3087 = vadd.f32 %v2696, %v2949
      %v3088 = vadd.f32 %v2697, %v2954
      %v3089 = vadd.f32 %v2698, %v2959
      %v3090 = vadd.f32 %v2699, %v2964
      %v3091 = vadd.f32 %v2700, %v2969
      %v3092 = vadd.f32 %v2701, %v2974
      %v3093 = vadd.f32 %v2702, %v2979
      %v3094 = vadd.f32 %v2703, %v2984
      %v3095 = vadd.f32 %v2704, %v2989
      %v3096 = vadd.f32 %v2705, %v2994
      %v3097 = vadd.f32 %v2706, %v2999
      %v3098 = vadd.f32 %v2707, %v3004
      %v3099 = vadd.f32 %v2708, %v3009
      %v3100 = vadd.f32 %v2709, %v3014
      %v3101 = vadd.f32 %v2710, %v3019
      %v3102 = vadd.f32 %v2711, %v3024
      %v3103 = vadd.f32 %v2712, %v3029
      %v3104 = vadd.f32 %v2713, %v3034
      %v3105 = vadd.f32 %v2714, %v3039
      %v3106 = vadd.f32 %v2715, %v3044
      %v3107 = vadd.f32 %v2716, %v3049
      %v3108 = vadd.f32 %v2717, %v3054
      %v3109 = vadd.f32 %v2718, %v3059
      %v3110 = vadd.f32 %v2719, %v3064
      %v3111 = vadd.f32 %v2720, %v3069
      %v3112 = vadd.f32 %v2721, %v3074
      %v3113 = vadd.f32 %v2722, %v3079
      %v3114 = vld [vmem:[%s2723 + $0x8] sm:$0xff]
      %v3115 = vld [vmem:[%s2723 + $0x10] sm:$0xff]
      %v3116 = vld [vmem:[%s2723 + $0x28] sm:$0xff]
      %v3117 = vld [vmem:[%s2723 + $0x30] sm:$0xff]
      %v3118 = vld [vmem:[%s2723 + $0x48] sm:$0xff]
      %v3119 = vld [vmem:[%s2723 + $0x50] sm:$0xff]
      %v3120 = vld [vmem:[%s2723 + $0x68] sm:$0xff]
      %v3121 = vld [vmem:[%s2723 + $0x70] sm:$0xff]
      %v3122 = vld [vmem:[%s2723 + $0x88] sm:$0xff]
      %v3123 = vld [vmem:[%s2723 + $0x90] sm:$0xff]
      %v3124 = vld [vmem:[%s2723 + $0xa8] sm:$0xff]
      %v3125 = vld [vmem:[%s2723 + $0xb0] sm:$0xff]
      %v3126 = vld [vmem:[%s2723 + $0xc8] sm:$0xff]
      %v3127 = vld [vmem:[%s2723 + $0xd0] sm:$0xff]
      %v3128 = vld [vmem:[%s2723 + $0xe8] sm:$0xff]
      %v3129 = vld [vmem:[%s2723 + $0xf0] sm:$0xff]
      %v3130 = vld [vmem:[%s2723 + $0x108] sm:$0xff]
      %v3131 = vld [vmem:[%s2723 + $0x110] sm:$0xff]
      %v3132 = vld [vmem:[%s2723 + $0x128] sm:$0xff]
      %v3133 = vld [vmem:[%s2723 + $0x130] sm:$0xff]
      %v3134 = vld [vmem:[%s2723 + $0x148] sm:$0xff]
      %v3135 = vld [vmem:[%s2723 + $0x150] sm:$0xff]
      %v3136 = vld [vmem:[%s2723 + $0x168] sm:$0xff]
      %v3137 = vld [vmem:[%s2723 + $0x170] sm:$0xff]
      %v3138 = vld [vmem:[%s2723 + $0x188] sm:$0xff]
      %v3139 = vld [vmem:[%s2723 + $0x190] sm:$0xff]
      %v3140 = vld [vmem:[%s2723 + $0x1a8] sm:$0xff]
      %v3141 = vld [vmem:[%s2723 + $0x1b0] sm:$0xff]
      %v3142 = vld [vmem:[%s2723 + $0x1c8] sm:$0xff]
      %v3143 = vld [vmem:[%s2723 + $0x1d0] sm:$0xff]
      %v3144 = vld [vmem:[%s2723 + $0x1e8] sm:$0xff]
      %v3145 = vld [vmem:[%s2723 + $0x1f0] sm:$0xff]
      %s3146 = scalar_lea.vmem %s1, 28
      %v3147 = vld [vmem:[%s3146] sm:$0xf]
      %v3149 = vsel %vm279, %v3114, 0
      %v3152 = vsel %vm279, %v3115, 0
      %v3155 = vsel %vm279, %v3116, 0
      %v3158 = vsel %vm279, %v3117, 0
      %v3161 = vsel %vm279, %v3118, 0
      %v3164 = vsel %vm279, %v3119, 0
      %v3167 = vsel %vm279, %v3120, 0
      %v3170 = vsel %vm279, %v3121, 0
      %v3173 = vsel %vm279, %v3122, 0
      %v3176 = vsel %vm279, %v3123, 0
      %v3179 = vsel %vm279, %v3124, 0
      %v3182 = vsel %vm279, %v3125, 0
      %v3185 = vsel %vm279, %v3126, 0
      %v3188 = vsel %vm279, %v3127, 0
      %v3191 = vsel %vm279, %v3128, 0
      %v3194 = vsel %vm279, %v3129, 0
      %v3197 = vsel %vm279, %v3130, 0
      %v3200 = vsel %vm279, %v3131, 0
      %v3203 = vsel %vm279, %v3132, 0
      %v3206 = vsel %vm279, %v3133, 0
      %v3209 = vsel %vm279, %v3134, 0
      %v3212 = vsel %vm279, %v3135, 0
      %v3215 = vsel %vm279, %v3136, 0
      %v3218 = vsel %vm279, %v3137, 0
      %v3221 = vsel %vm279, %v3138, 0
      %v3224 = vsel %vm279, %v3139, 0
      %v3227 = vsel %vm279, %v3140, 0
      %v3230 = vsel %vm279, %v3141, 0
      %v3233 = vsel %vm279, %v3142, 0
      %v3236 = vsel %vm279, %v3143, 0
      %v3239 = vsel %vm279, %v3144, 0
      %v3242 = vsel %vm279, %v3145, 0
      %v3245 = vsel %vm610, %v3147, 0
      %3247 = vmatprep.subr.mxu0 0.0
      %3248 = vmatpush1.msra.mxu0 %v3245
      %3249 = vmatprep.subr.mxu0 0.0
      %3250 = vmatpush1.msra.mxu0 0.0
      %3251 = vmatprep.subr.mxu0 0.0
      %3252 = vmatpush1.msra.mxu0 0.0
      %3253 = vmatprep.subr.mxu0 0.0
      %3254 = vmatpush1.msra.mxu0 0.0
      %3255 = vmatprep.subr.mxu0 0.0
      %3256 = vmatpush1.msra.mxu0 0.0
      %3257 = vmatprep.subr.mxu0 0.0
      %3258 = vmatpush1.msra.mxu0 0.0
      %3259 = vmatprep.subr.mxu0 0.0
      %3260 = vmatpush1.msra.mxu0 0.0
      %3261 = vmatprep.subr.mxu0 0.0
      %3262 = vmatpush1.msra.mxu0 0.0
      %3263 = vmatprep.subr.mxu0 0.0
      %3264 = vmatpush1.msra.mxu0 0.0
      %3265 = vmatprep.subr.mxu0 0.0
      %3266 = vmatpush1.msra.mxu0 0.0
      %3267 = vmatprep.subr.mxu0 0.0
      %3268 = vmatpush1.msra.mxu0 0.0
      %3269 = vmatprep.subr.mxu0 0.0
      %3270 = vmatpush1.msra.mxu0 0.0
      %3271 = vmatprep.subr.mxu0 0.0
      %3272 = vmatpush1.msra.mxu0 0.0
      %3273 = vmatprep.subr.mxu0 0.0
      %3274 = vmatpush1.msra.mxu0 0.0
      %3275 = vmatprep.subr.mxu0 0.0
      %3276 = vmatpush1.msra.mxu0 0.0
      %3277 = vmatprep.subr.mxu0 0.0
      %3278 = vmatpush1.msra.mxu0 0.0
      %3279 = vmatprep.subr.mxu0 0.0
      %3280 = vmatpush1.msra.mxu0 0.0
      %3281 = vmatprep.subr.mxu0 0.0
      %3282 = vmatpush1.msra.mxu0 0.0
      %3283 = vmatprep.subr.mxu0 0.0
      %3284 = vmatpush1.msra.mxu0 0.0
      %3285 = vmatprep.subr.mxu0 0.0
      %3286 = vmatpush1.msra.mxu0 0.0
      %3287 = vmatprep.subr.mxu0 0.0
      %3288 = vmatpush1.msra.mxu0 0.0
      %3289 = vmatprep.subr.mxu0 0.0
      %3290 = vmatpush1.msra.mxu0 0.0
      %3291 = vmatprep.subr.mxu0 0.0
      %3292 = vmatpush1.msra.mxu0 0.0
      %3293 = vmatprep.subr.mxu0 0.0
      %3294 = vmatpush1.msra.mxu0 0.0
      %3295 = vmatprep.subr.mxu0 0.0
      %3296 = vmatpush1.msra.mxu0 0.0
      %3297 = vmatprep.subr.mxu0 0.0
      %3298 = vmatpush1.msra.mxu0 0.0
      %3299 = vmatprep.subr.mxu0 0.0
      %3300 = vmatpush1.msra.mxu0 0.0
      %3301 = vmatprep.subr.mxu0 0.0
      %3302 = vmatpush1.msra.mxu0 0.0
      %3303 = vmatprep.subr.mxu0 0.0
      %3304 = vmatpush1.msra.mxu0 0.0
      %3305 = vmatprep.subr.mxu0 0.0
      %3306 = vmatpush1.msra.mxu0 0.0
      %3307 = vmatprep.subr.mxu0 0.0
      %3308 = vmatpush1.msra.mxu0 0.0
      %3309 = vmatprep.subr.mxu0 0.0
      %3310 = vmatpush1.msra.mxu0 0.0
      %3311 = vmatprep.mubr.f32.mxu0 0.0
      %3312 = vmatmul.mubr.f32.gmra.mrb[0].mxu0 %v3149
      %v3313 = vpop.f32.mrb[0].mxu0
      %v3314 = vadd.f32 0.0, %v3313
      %v3315 = vpop.f32.mrb[0].mxu0
      %3316 = vmatprep.mubr.f32.mxu0 0.0
      %3317 = vmatmul.mubr.f32.gmra.mrb[0].mxu0 %v3152
      %v3318 = vpop.f32.mrb[0].mxu0
      %v3319 = vadd.f32 0.0, %v3318
      %v3320 = vpop.f32.mrb[0].mxu0
      %3321 = vmatprep.mubr.f32.mxu0 0.0
      %3322 = vmatmul.mubr.f32.gmra.mrb[0].mxu0 %v3155
      %v3323 = vpop.f32.mrb[0].mxu0
      %v3324 = vadd.f32 0.0, %v3323
      %v3325 = vpop.f32.mrb[0].mxu0
      %3326 = vmatprep.mubr.f32.mxu0 0.0
      %3327 = vmatmul.mubr.f32.gmra.mrb[0].mxu0 %v3158
      %v3328 = vpop.f32.mrb[0].mxu0
      %v3329 = vadd.f32 0.0, %v3328
      %v3330 = vpop.f32.mrb[0].mxu0
      %3331 = vmatprep.mubr.f32.mxu0 0.0
      %3332 = vmatmul.mubr.f32.gmra.mrb[0].mxu0 %v3161
      %v3333 = vpop.f32.mrb[0].mxu0
      %v3334 = vadd.f32 0.0, %v3333
      %v3335 = vpop.f32.mrb[0].mxu0
      %3336 = vmatprep.mubr.f32.mxu0 0.0
      %3337 = vmatmul.mubr.f32.gmra.mrb[0].mxu0 %v3164
      %v3338 = vpop.f32.mrb[0].mxu0
      %v3339 = vadd.f32 0.0, %v3338
      %v3340 = vpop.f32.mrb[0].mxu0
      %3341 = vmatprep.mubr.f32.mxu0 0.0
      %3342 = vmatmul.mubr.f32.gmra.mrb[0].mxu0 %v3167
      %v3343 = vpop.f32.mrb[0].mxu0
      %v3344 = vadd.f32 0.0, %v3343
      %v3345 = vpop.f32.mrb[0].mxu0
      %3346 = vmatprep.mubr.f32.mxu0 0.0
      %3347 = vmatmul.mubr.f32.gmra.mrb[0].mxu0 %v3170
      %v3348 = vpop.f32.mrb[0].mxu0
      %v3349 = vadd.f32 0.0, %v3348
      %v3350 = vpop.f32.mrb[0].mxu0
      %3351 = vmatprep.mubr.f32.mxu0 0.0
      %3352 = vmatmul.mubr.f32.gmra.mrb[0].mxu0 %v3173
      %v3353 = vpop.f32.mrb[0].mxu0
      %v3354 = vadd.f32 0.0, %v3353
      %v3355 = vpop.f32.mrb[0].mxu0
      %3356 = vmatprep.mubr.f32.mxu0 0.0
      %3357 = vmatmul.mubr.f32.gmra.mrb[0].mxu0 %v3176
      %v3358 = vpop.f32.mrb[0].mxu0
      %v3359 = vadd.f32 0.0, %v3358
      %v3360 = vpop.f32.mrb[0].mxu0
      %3361 = vmatprep.mubr.f32.mxu0 0.0
      %3362 = vmatmul.mubr.f32.gmra.mrb[0].mxu0 %v3179
      %v3363 = vpop.f32.mrb[0].mxu0
      %v3364 = vadd.f32 0.0, %v3363
      %v3365 = vpop.f32.mrb[0].mxu0
      %3366 = vmatprep.mubr.f32.mxu0 0.0
      %3367 = vmatmul.mubr.f32.gmra.mrb[0].mxu0 %v3182
      %v3368 = vpop.f32.mrb[0].mxu0
      %v3369 = vadd.f32 0.0, %v3368
      %v3370 = vpop.f32.mrb[0].mxu0
      %3371 = vmatprep.mubr.f32.mxu0 0.0
      %3372 = vmatmul.mubr.f32.gmra.mrb[0].mxu0 %v3185
      %v3373 = vpop.f32.mrb[0].mxu0
      %v3374 = vadd.f32 0.0, %v3373
      %v3375 = vpop.f32.mrb[0].mxu0
      %3376 = vmatprep.mubr.f32.mxu0 0.0
      %3377 = vmatmul.mubr.f32.gmra.mrb[0].mxu0 %v3188
      %v3378 = vpop.f32.mrb[0].mxu0
      %v3379 = vadd.f32 0.0, %v3378
      %v3380 = vpop.f32.mrb[0].mxu0
      %3381 = vmatprep.mubr.f32.mxu0 0.0
      %3382 = vmatmul.mubr.f32.gmra.mrb[0].mxu0 %v3191
      %v3383 = vpop.f32.mrb[0].mxu0
      %v3384 = vadd.f32 0.0, %v3383
      %v3385 = vpop.f32.mrb[0].mxu0
      %3386 = vmatprep.mubr.f32.mxu0 0.0
      %3387 = vmatmul.mubr.f32.gmra.mrb[0].mxu0 %v3194
      %v3388 = vpop.f32.mrb[0].mxu0
      %v3389 = vadd.f32 0.0, %v3388
      %v3390 = vpop.f32.mrb[0].mxu0
      %3391 = vmatprep.mubr.f32.mxu0 0.0
      %3392 = vmatmul.mubr.f32.gmra.mrb[0].mxu0 %v3197
      %v3393 = vpop.f32.mrb[0].mxu0
      %v3394 = vadd.f32 0.0, %v3393
      %v3395 = vpop.f32.mrb[0].mxu0
      %3396 = vmatprep.mubr.f32.mxu0 0.0
      %3397 = vmatmul.mubr.f32.gmra.mrb[0].mxu0 %v3200
      %v3398 = vpop.f32.mrb[0].mxu0
      %v3399 = vadd.f32 0.0, %v3398
      %v3400 = vpop.f32.mrb[0].mxu0
      %3401 = vmatprep.mubr.f32.mxu0 0.0
      %3402 = vmatmul.mubr.f32.gmra.mrb[0].mxu0 %v3203
      %v3403 = vpop.f32.mrb[0].mxu0
      %v3404 = vadd.f32 0.0, %v3403
      %v3405 = vpop.f32.mrb[0].mxu0
      %3406 = vmatprep.mubr.f32.mxu0 0.0
      %3407 = vmatmul.mubr.f32.gmra.mrb[0].mxu0 %v3206
      %v3408 = vpop.f32.mrb[0].mxu0
      %v3409 = vadd.f32 0.0, %v3408
      %v3410 = vpop.f32.mrb[0].mxu0
      %3411 = vmatprep.mubr.f32.mxu0 0.0
      %3412 = vmatmul.mubr.f32.gmra.mrb[0].mxu0 %v3209
      %v3413 = vpop.f32.mrb[0].mxu0
      %v3414 = vadd.f32 0.0, %v3413
      %v3415 = vpop.f32.mrb[0].mxu0
      %3416 = vmatprep.mubr.f32.mxu0 0.0
      %3417 = vmatmul.mubr.f32.gmra.mrb[0].mxu0 %v3212
      %v3418 = vpop.f32.mrb[0].mxu0
      %v3419 = vadd.f32 0.0, %v3418
      %v3420 = vpop.f32.mrb[0].mxu0
      %3421 = vmatprep.mubr.f32.mxu0 0.0
      %3422 = vmatmul.mubr.f32.gmra.mrb[0].mxu0 %v3215
      %v3423 = vpop.f32.mrb[0].mxu0
      %v3424 = vadd.f32 0.0, %v3423
      %v3425 = vpop.f32.mrb[0].mxu0
      %3426 = vmatprep.mubr.f32.mxu0 0.0
      %3427 = vmatmul.mubr.f32.gmra.mrb[0].mxu0 %v3218
      %v3428 = vpop.f32.mrb[0].mxu0
      %v3429 = vadd.f32 0.0, %v3428
      %v3430 = vpop.f32.mrb[0].mxu0
      %3431 = vmatprep.mubr.f32.mxu0 0.0
      %3432 = vmatmul.mubr.f32.gmra.mrb[0].mxu0 %v3221
      %v3433 = vpop.f32.mrb[0].mxu0
      %v3434 = vadd.f32 0.0, %v3433
      %v3435 = vpop.f32.mrb[0].mxu0
      %3436 = vmatprep.mubr.f32.mxu0 0.0
      %3437 = vmatmul.mubr.f32.gmra.mrb[0].mxu0 %v3224
      %v3438 = vpop.f32.mrb[0].mxu0
      %v3439 = vadd.f32 0.0, %v3438
      %v3440 = vpop.f32.mrb[0].mxu0
      %3441 = vmatprep.mubr.f32.mxu0 0.0
      %3442 = vmatmul.mubr.f32.gmra.mrb[0].mxu0 %v3227
      %v3443 = vpop.f32.mrb[0].mxu0
      %v3444 = vadd.f32 0.0, %v3443
      %v3445 = vpop.f32.mrb[0].mxu0
      %3446 = vmatprep.mubr.f32.mxu0 0.0
      %3447 = vmatmul.mubr.f32.gmra.mrb[0].mxu0 %v3230
      %v3448 = vpop.f32.mrb[0].mxu0
      %v3449 = vadd.f32 0.0, %v3448
      %v3450 = vpop.f32.mrb[0].mxu0
      %3451 = vmatprep.mubr.f32.mxu0 0.0
      %3452 = vmatmul.mubr.f32.gmra.mrb[0].mxu0 %v3233
      %v3453 = vpop.f32.mrb[0].mxu0
      %v3454 = vadd.f32 0.0, %v3453
      %v3455 = vpop.f32.mrb[0].mxu0
      %3456 = vmatprep.mubr.f32.mxu0 0.0
      %3457 = vmatmul.mubr.f32.gmra.mrb[0].mxu0 %v3236
      %v3458 = vpop.f32.mrb[0].mxu0
      %v3459 = vadd.f32 0.0, %v3458
      %v3460 = vpop.f32.mrb[0].mxu0
      %3461 = vmatprep.mubr.f32.mxu0 0.0
      %3462 = vmatmul.mubr.f32.gmra.mrb[0].mxu0 %v3239
      %v3463 = vpop.f32.mrb[0].mxu0
      %v3464 = vadd.f32 0.0, %v3463
      %v3465 = vpop.f32.mrb[0].mxu0
      %3466 = vmatprep.mubr.f32.mxu0 0.0
      %3467 = vmatmul.mubr.f32.gmra.mrb[0].mxu0 %v3242
      %v3468 = vpop.f32.mrb[0].mxu0
      %v3469 = vadd.f32 0.0, %v3468
      %v3470 = vpop.f32.mrb[0].mxu0
      %3471 = vdwg.mxu0
      %v3472 = vadd.f32 %v3082, %v3314
      %v3473 = vadd.f32 %v3083, %v3319
      %v3474 = vadd.f32 %v3084, %v3324
      %v3475 = vadd.f32 %v3085, %v3329
      %v3476 = vadd.f32 %v3086, %v3334
      %v3477 = vadd.f32 %v3087, %v3339
      %v3478 = vadd.f32 %v3088, %v3344
      %v3479 = vadd.f32 %v3089, %v3349
      %v3480 = vadd.f32 %v3090, %v3354
      %v3481 = vadd.f32 %v3091, %v3359
      %v3482 = vadd.f32 %v3092, %v3364
      %v3483 = vadd.f32 %v3093, %v3369
      %v3484 = vadd.f32 %v3094, %v3374
      %v3485 = vadd.f32 %v3095, %v3379
      %v3486 = vadd.f32 %v3096, %v3384
      %v3487 = vadd.f32 %v3097, %v3389
      %v3488 = vadd.f32 %v3098, %v3394
      %v3489 = vadd.f32 %v3099, %v3399
      %v3490 = vadd.f32 %v3100, %v3404
      %v3491 = vadd.f32 %v3101, %v3409
      %v3492 = vadd.f32 %v3102, %v3414
      %v3493 = vadd.f32 %v3103, %v3419
      %v3494 = vadd.f32 %v3104, %v3424
      %v3495 = vadd.f32 %v3105, %v3429
      %v3496 = vadd.f32 %v3106, %v3434
      %v3497 = vadd.f32 %v3107, %v3439
      %v3498 = vadd.f32 %v3108, %v3444
      %v3499 = vadd.f32 %v3109, %v3449
      %v3500 = vadd.f32 %v3110, %v3454
      %v3501 = vadd.f32 %v3111, %v3459
      %v3502 = vadd.f32 %v3112, %v3464
      %v3503 = vadd.f32 %v3113, %v3469
      %v3504 = vld [vmem:[%s2723 + $0xa] sm:$0xff]
      %v3505 = vld [vmem:[%s2723 + $0x12] sm:$0xff]
      %v3506 = vld [vmem:[%s2723 + $0x2a] sm:$0xff]
      %v3507 = vld [vmem:[%s2723 + $0x32] sm:$0xff]
      %v3508 = vld [vmem:[%s2723 + $0x4a] sm:$0xff]
      %v3509 = vld [vmem:[%s2723 + $0x52] sm:$0xff]
      %v3510 = vld [vmem:[%s2723 + $0x6a] sm:$0xff]
      %v3511 = vld [vmem:[%s2723 + $0x72] sm:$0xff]
      %v3512 = vld [vmem:[%s2723 + $0x8a] sm:$0xff]
      %v3513 = vld [vmem:[%s2723 + $0x92] sm:$0xff]
      %v3514 = vld [vmem:[%s2723 + $0xaa] sm:$0xff]
      %v3515 = vld [vmem:[%s2723 + $0xb2] sm:$0xff]
      %v3516 = vld [vmem:[%s2723 + $0xca] sm:$0xff]
      %v3517 = vld [vmem:[%s2723 + $0xd2] sm:$0xff]
      %v3518 = vld [vmem:[%s2723 + $0xea] sm:$0xff]
      %v3519 = vld [vmem:[%s2723 + $0xf2] sm:$0xff]
      %v3520 = vld [vmem:[%s2723 + $0x10a] sm:$0xff]
      %v3521 = vld [vmem:[%s2723 + $0x112] sm:$0xff]
      %v3522 = vld [vmem:[%s2723 + $0x12a] sm:$0xff]
      %v3523 = vld [vmem:[%s2723 + $0x132] sm:$0xff]
      %v3524 = vld [vmem:[%s2723 + $0x14a] sm:$0xff]
      %v3525 = vld [vmem:[%s2723 + $0x152] sm:$0xff]
      %v3526 = vld [vmem:[%s2723 + $0x16a] sm:$0xff]
      %v3527 = vld [vmem:[%s2723 + $0x172] sm:$0xff]
      %v3528 = vld [vmem:[%s2723 + $0x18a] sm:$0xff]
      %v3529 = vld [vmem:[%s2723 + $0x192] sm:$0xff]
      %v3530 = vld [vmem:[%s2723 + $0x1aa] sm:$0xff]
      %v3531 = vld [vmem:[%s2723 + $0x1b2] sm:$0xff]
      %v3532 = vld [vmem:[%s2723 + $0x1ca] sm:$0xff]
      %v3533 = vld [vmem:[%s2723 + $0x1d2] sm:$0xff]
      %v3534 = vld [vmem:[%s2723 + $0x1ea] sm:$0xff]
      %v3535 = vld [vmem:[%s2723 + $0x1f2] sm:$0xff]
      %s3536 = scalar_lea.vmem %s1, 32
      %v3537 = vld [vmem:[%s3536] sm:$0xf]
      %v3539 = vsel %vm279, %v3504, 0
      %v3542 = vsel %vm279, %v3505, 0
      %v3545 = vsel %vm279, %v3506, 0
      %v3548 = vsel %vm279, %v3507, 0
      %v3551 = vsel %vm279, %v3508, 0
      %v3554 = vsel %vm279, %v3509, 0
      %v3557 = vsel %vm279, %v3510, 0
      %v3560 = vsel %vm279, %v3511, 0
      %v3563 = vsel %vm279, %v3512, 0
      %v3566 = vsel %vm279, %v3513, 0
      %v3569 = vsel %vm279, %v3514, 0
      %v3572 = vsel %vm279, %v3515, 0
      %v3575 = vsel %vm279, %v3516, 0
      %v3578 = vsel %vm279, %v3517, 0
      %v3581 = vsel %vm279, %v3518, 0
      %v3584 = vsel %vm279, %v3519, 0
      %v3587 = vsel %vm279, %v3520, 0
      %v3590 = vsel %vm279, %v3521, 0
      %v3593 = vsel %vm279, %v3522, 0
      %v3596 = vsel %vm279, %v3523, 0
      %v3599 = vsel %vm279, %v3524, 0
      %v3602 = vsel %vm279, %v3525, 0
      %v3605 = vsel %vm279, %v3526, 0
      %v3608 = vsel %vm279, %v3527, 0
      %v3611 = vsel %vm279, %v3528, 0
      %v3614 = vsel %vm279, %v3529, 0
      %v3617 = vsel %vm279, %v3530, 0
      %v3620 = vsel %vm279, %v3531, 0
      %v3623 = vsel %vm279, %v3532, 0
      %v3626 = vsel %vm279, %v3533, 0
      %v3629 = vsel %vm279, %v3534, 0
      %v3632 = vsel %vm279, %v3535, 0
      %v3635 = vsel %vm610, %v3537, 0
      %3637 = vmatprep.subr.mxu0 0.0
      %3638 = vmatpush1.msra.mxu0 %v3635
      %3639 = vmatprep.subr.mxu0 0.0
      %3640 = vmatpush1.msra.mxu0 0.0
      %3641 = vmatprep.subr.mxu0 0.0
      %3642 = vmatpush1.msra.mxu0 0.0
      %3643 = vmatprep.subr.mxu0 0.0
      %3644 = vmatpush1.msra.mxu0 0.0
      %3645 = vmatprep.subr.mxu0 0.0
      %3646 = vmatpush1.msra.mxu0 0.0
      %3647 = vmatprep.subr.mxu0 0.0
      %3648 = vmatpush1.msra.mxu0 0.0
      %3649 = vmatprep.subr.mxu0 0.0
      %3650 = vmatpush1.msra.mxu0 0.0
      %3651 = vmatprep.subr.mxu0 0.0
      %3652 = vmatpush1.msra.mxu0 0.0
      %3653 = vmatprep.subr.mxu0 0.0
      %3654 = vmatpush1.msra.mxu0 0.0
      %3655 = vmatprep.subr.mxu0 0.0
      %3656 = vmatpush1.msra.mxu0 0.0
      %3657 = vmatprep.subr.mxu0 0.0
      %3658 = vmatpush1.msra.mxu0 0.0
      %3659 = vmatprep.subr.mxu0 0.0
      %3660 = vmatpush1.msra.mxu0 0.0
      %3661 = vmatprep.subr.mxu0 0.0
      %3662 = vmatpush1.msra.mxu0 0.0
      %3663 = vmatprep.subr.mxu0 0.0
      %3664 = vmatpush1.msra.mxu0 0.0
      %3665 = vmatprep.subr.mxu0 0.0
      %3666 = vmatpush1.msra.mxu0 0.0
      %3667 = vmatprep.subr.mxu0 0.0
      %3668 = vmatpush1.msra.mxu0 0.0
      %3669 = vmatprep.subr.mxu0 0.0
      %3670 = vmatpush1.msra.mxu0 0.0
      %3671 = vmatprep.subr.mxu0 0.0
      %3672 = vmatpush1.msra.mxu0 0.0
      %3673 = vmatprep.subr.mxu0 0.0
      %3674 = vmatpush1.msra.mxu0 0.0
      %3675 = vmatprep.subr.mxu0 0.0
      %3676 = vmatpush1.msra.mxu0 0.0
      %3677 = vmatprep.subr.mxu0 0.0
      %3678 = vmatpush1.msra.mxu0 0.0
      %3679 = vmatprep.subr.mxu0 0.0
      %3680 = vmatpush1.msra.mxu0 0.0
      %3681 = vmatprep.subr.mxu0 0.0
      %3682 = vmatpush1.msra.mxu0 0.0
      %3683 = vmatprep.subr.mxu0 0.0
      %3684 = vmatpush1.msra.mxu0 0.0
      %3685 = vmatprep.subr.mxu0 0.0
      %3686 = vmatpush1.msra.mxu0 0.0
      %3687 = vmatprep.subr.mxu0 0.0
      %3688 = vmatpush1.msra.mxu0 0.0
      %3689 = vmatprep.subr.mxu0 0.0
      %3690 = vmatpush1.msra.mxu0 0.0
      %3691 = vmatprep.subr.mxu0 0.0
      %3692 = vmatpush1.msra.mxu0 0.0
      %3693 = vmatprep.subr.mxu0 0.0
      %3694 = vmatpush1.msra.mxu0 0.0
      %3695 = vmatprep.subr.mxu0 0.0
      %3696 = vmatpush1.msra.mxu0 0.0
      %3697 = vmatprep.subr.mxu0 0.0
      %3698 = vmatpush1.msra.mxu0 0.0
      %3699 = vmatprep.subr.mxu0 0.0
      %3700 = vmatpush1.msra.mxu0 0.0
      %3701 = vmatprep.mubr.f32.mxu0 0.0
      %3702 = vmatmul.mubr.f32.gmra.mrb[0].mxu0 %v3539
      %v3703 = vpop.f32.mrb[0].mxu0
      %v3704 = vadd.f32 0.0, %v3703
      %v3705 = vpop.f32.mrb[0].mxu0
      %3706 = vmatprep.mubr.f32.mxu0 0.0
      %3707 = vmatmul.mubr.f32.gmra.mrb[0].mxu0 %v3542
      %v3708 = vpop.f32.mrb[0].mxu0
      %v3709 = vadd.f32 0.0, %v3708
      %v3710 = vpop.f32.mrb[0].mxu0
      %3711 = vmatprep.mubr.f32.mxu0 0.0
      %3712 = vmatmul.mubr.f32.gmra.mrb[0].mxu0 %v3545
      %v3713 = vpop.f32.mrb[0].mxu0
      %v3714 = vadd.f32 0.0, %v3713
      %v3715 = vpop.f32.mrb[0].mxu0
      %3716 = vmatprep.mubr.f32.mxu0 0.0
      %3717 = vmatmul.mubr.f32.gmra.mrb[0].mxu0 %v3548
      %v3718 = vpop.f32.mrb[0].mxu0
      %v3719 = vadd.f32 0.0, %v3718
      %v3720 = vpop.f32.mrb[0].mxu0
      %3721 = vmatprep.mubr.f32.mxu0 0.0
      %3722 = vmatmul.mubr.f32.gmra.mrb[0].mxu0 %v3551
      %v3723 = vpop.f32.mrb[0].mxu0
      %v3724 = vadd.f32 0.0, %v3723
      %v3725 = vpop.f32.mrb[0].mxu0
      %3726 = vmatprep.mubr.f32.mxu0 0.0
      %3727 = vmatmul.mubr.f32.gmra.mrb[0].mxu0 %v3554
      %v3728 = vpop.f32.mrb[0].mxu0
      %v3729 = vadd.f32 0.0, %v3728
      %v3730 = vpop.f32.mrb[0].mxu0
      %3731 = vmatprep.mubr.f32.mxu0 0.0
      %3732 = vmatmul.mubr.f32.gmra.mrb[0].mxu0 %v3557
      %v3733 = vpop.f32.mrb[0].mxu0
      %v3734 = vadd.f32 0.0, %v3733
      %v3735 = vpop.f32.mrb[0].mxu0
      %3736 = vmatprep.mubr.f32.mxu0 0.0
      %3737 = vmatmul.mubr.f32.gmra.mrb[0].mxu0 %v3560
      %v3738 = vpop.f32.mrb[0].mxu0
      %v3739 = vadd.f32 0.0, %v3738
      %v3740 = vpop.f32.mrb[0].mxu0
      %3741 = vmatprep.mubr.f32.mxu0 0.0
      %3742 = vmatmul.mubr.f32.gmra.mrb[0].mxu0 %v3563
      %v3743 = vpop.f32.mrb[0].mxu0
      %v3744 = vadd.f32 0.0, %v3743
      %v3745 = vpop.f32.mrb[0].mxu0
      %3746 = vmatprep.mubr.f32.mxu0 0.0
      %3747 = vmatmul.mubr.f32.gmra.mrb[0].mxu0 %v3566
      %v3748 = vpop.f32.mrb[0].mxu0
      %v3749 = vadd.f32 0.0, %v3748
      %v3750 = vpop.f32.mrb[0].mxu0
      %3751 = vmatprep.mubr.f32.mxu0 0.0
      %3752 = vmatmul.mubr.f32.gmra.mrb[0].mxu0 %v3569
      %v3753 = vpop.f32.mrb[0].mxu0
      %v3754 = vadd.f32 0.0, %v3753
      %v3755 = vpop.f32.mrb[0].mxu0
      %3756 = vmatprep.mubr.f32.mxu0 0.0
      %3757 = vmatmul.mubr.f32.gmra.mrb[0].mxu0 %v3572
      %v3758 = vpop.f32.mrb[0].mxu0
      %v3759 = vadd.f32 0.0, %v3758
      %v3760 = vpop.f32.mrb[0].mxu0
      %3761 = vmatprep.mubr.f32.mxu0 0.0
      %3762 = vmatmul.mubr.f32.gmra.mrb[0].mxu0 %v3575
      %v3763 = vpop.f32.mrb[0].mxu0
      %v3764 = vadd.f32 0.0, %v3763
      %v3765 = vpop.f32.mrb[0].mxu0
      %3766 = vmatprep.mubr.f32.mxu0 0.0
      %3767 = vmatmul.mubr.f32.gmra.mrb[0].mxu0 %v3578
      %v3768 = vpop.f32.mrb[0].mxu0
      %v3769 = vadd.f32 0.0, %v3768
      %v3770 = vpop.f32.mrb[0].mxu0
      %3771 = vmatprep.mubr.f32.mxu0 0.0
      %3772 = vmatmul.mubr.f32.gmra.mrb[0].mxu0 %v3581
      %v3773 = vpop.f32.mrb[0].mxu0
      %v3774 = vadd.f32 0.0, %v3773
      %v3775 = vpop.f32.mrb[0].mxu0
      %3776 = vmatprep.mubr.f32.mxu0 0.0
      %3777 = vmatmul.mubr.f32.gmra.mrb[0].mxu0 %v3584
      %v3778 = vpop.f32.mrb[0].mxu0
      %v3779 = vadd.f32 0.0, %v3778
      %v3780 = vpop.f32.mrb[0].mxu0
      %3781 = vmatprep.mubr.f32.mxu0 0.0
      %3782 = vmatmul.mubr.f32.gmra.mrb[0].mxu0 %v3587
      %v3783 = vpop.f32.mrb[0].mxu0
      %v3784 = vadd.f32 0.0, %v3783
      %v3785 = vpop.f32.mrb[0].mxu0
      %3786 = vmatprep.mubr.f32.mxu0 0.0
      %3787 = vmatmul.mubr.f32.gmra.mrb[0].mxu0 %v3590
      %v3788 = vpop.f32.mrb[0].mxu0
      %v3789 = vadd.f32 0.0, %v3788
      %v3790 = vpop.f32.mrb[0].mxu0
      %3791 = vmatprep.mubr.f32.mxu0 0.0
      %3792 = vmatmul.mubr.f32.gmra.mrb[0].mxu0 %v3593
      %v3793 = vpop.f32.mrb[0].mxu0
      %v3794 = vadd.f32 0.0, %v3793
      %v3795 = vpop.f32.mrb[0].mxu0
      %3796 = vmatprep.mubr.f32.mxu0 0.0
      %3797 = vmatmul.mubr.f32.gmra.mrb[0].mxu0 %v3596
      %v3798 = vpop.f32.mrb[0].mxu0
      %v3799 = vadd.f32 0.0, %v3798
      %v3800 = vpop.f32.mrb[0].mxu0
      %3801 = vmatprep.mubr.f32.mxu0 0.0
      %3802 = vmatmul.mubr.f32.gmra.mrb[0].mxu0 %v3599
      %v3803 = vpop.f32.mrb[0].mxu0
      %v3804 = vadd.f32 0.0, %v3803
      %v3805 = vpop.f32.mrb[0].mxu0
      %3806 = vmatprep.mubr.f32.mxu0 0.0
      %3807 = vmatmul.mubr.f32.gmra.mrb[0].mxu0 %v3602
      %v3808 = vpop.f32.mrb[0].mxu0
      %v3809 = vadd.f32 0.0, %v3808
      %v3810 = vpop.f32.mrb[0].mxu0
      %3811 = vmatprep.mubr.f32.mxu0 0.0
      %3812 = vmatmul.mubr.f32.gmra.mrb[0].mxu0 %v3605
      %v3813 = vpop.f32.mrb[0].mxu0
      %v3814 = vadd.f32 0.0, %v3813
      %v3815 = vpop.f32.mrb[0].mxu0
      %3816 = vmatprep.mubr.f32.mxu0 0.0
      %3817 = vmatmul.mubr.f32.gmra.mrb[0].mxu0 %v3608
      %v3818 = vpop.f32.mrb[0].mxu0
      %v3819 = vadd.f32 0.0, %v3818
      %v3820 = vpop.f32.mrb[0].mxu0
      %3821 = vmatprep.mubr.f32.mxu0 0.0
      %3822 = vmatmul.mubr.f32.gmra.mrb[0].mxu0 %v3611
      %v3823 = vpop.f32.mrb[0].mxu0
      %v3824 = vadd.f32 0.0, %v3823
      %v3825 = vpop.f32.mrb[0].mxu0
      %3826 = vmatprep.mubr.f32.mxu0 0.0
      %3827 = vmatmul.mubr.f32.gmra.mrb[0].mxu0 %v3614
      %v3828 = vpop.f32.mrb[0].mxu0
      %v3829 = vadd.f32 0.0, %v3828
      %v3830 = vpop.f32.mrb[0].mxu0
      %3831 = vmatprep.mubr.f32.mxu0 0.0
      %3832 = vmatmul.mubr.f32.gmra.mrb[0].mxu0 %v3617
      %v3833 = vpop.f32.mrb[0].mxu0
      %v3834 = vadd.f32 0.0, %v3833
      %v3835 = vpop.f32.mrb[0].mxu0
      %3836 = vmatprep.mubr.f32.mxu0 0.0
      %3837 = vmatmul.mubr.f32.gmra.mrb[0].mxu0 %v3620
      %v3838 = vpop.f32.mrb[0].mxu0
      %v3839 = vadd.f32 0.0, %v3838
      %v3840 = vpop.f32.mrb[0].mxu0
      %3841 = vmatprep.mubr.f32.mxu0 0.0
      %3842 = vmatmul.mubr.f32.gmra.mrb[0].mxu0 %v3623
      %v3843 = vpop.f32.mrb[0].mxu0
      %v3844 = vadd.f32 0.0, %v3843
      %v3845 = vpop.f32.mrb[0].mxu0
      %3846 = vmatprep.mubr.f32.mxu0 0.0
      %3847 = vmatmul.mubr.f32.gmra.mrb[0].mxu0 %v3626
      %v3848 = vpop.f32.mrb[0].mxu0
      %v3849 = vadd.f32 0.0, %v3848
      %v3850 = vpop.f32.mrb[0].mxu0
      %3851 = vmatprep.mubr.f32.mxu0 0.0
      %3852 = vmatmul.mubr.f32.gmra.mrb[0].mxu0 %v3629
      %v3853 = vpop.f32.mrb[0].mxu0
      %v3854 = vadd.f32 0.0, %v3853
      %v3855 = vpop.f32.mrb[0].mxu0
      %3856 = vmatprep.mubr.f32.mxu0 0.0
      %3857 = vmatmul.mubr.f32.gmra.mrb[0].mxu0 %v3632
      %v3858 = vpop.f32.mrb[0].mxu0
      %v3859 = vadd.f32 0.0, %v3858
      %v3860 = vpop.f32.mrb[0].mxu0
      %3861 = vdwg.mxu0
      %v3862 = vadd.f32 %v3472, %v3704
      %v3863 = vadd.f32 %v3473, %v3709
      %v3864 = vadd.f32 %v3474, %v3714
      %v3865 = vadd.f32 %v3475, %v3719
      %v3866 = vadd.f32 %v3476, %v3724
      %v3867 = vadd.f32 %v3477, %v3729
      %v3868 = vadd.f32 %v3478, %v3734
      %v3869 = vadd.f32 %v3479, %v3739
      %v3870 = vadd.f32 %v3480, %v3744
      %v3871 = vadd.f32 %v3481, %v3749
      %v3872 = vadd.f32 %v3482, %v3754
      %v3873 = vadd.f32 %v3483, %v3759
      %v3874 = vadd.f32 %v3484, %v3764
      %v3875 = vadd.f32 %v3485, %v3769
      %v3876 = vadd.f32 %v3486, %v3774
      %v3877 = vadd.f32 %v3487, %v3779
      %v3878 = vadd.f32 %v3488, %v3784
      %v3879 = vadd.f32 %v3489, %v3789
      %v3880 = vadd.f32 %v3490, %v3794
      %v3881 = vadd.f32 %v3491, %v3799
      %v3882 = vadd.f32 %v3492, %v3804
      %v3883 = vadd.f32 %v3493, %v3809
      %v3884 = vadd.f32 %v3494, %v3814
      %v3885 = vadd.f32 %v3495, %v3819
      %v3886 = vadd.f32 %v3496, %v3824
      %v3887 = vadd.f32 %v3497, %v3829
      %v3888 = vadd.f32 %v3498, %v3834
      %v3889 = vadd.f32 %v3499, %v3839
      %v3890 = vadd.f32 %v3500, %v3844
      %v3891 = vadd.f32 %v3501, %v3849
      %v3892 = vadd.f32 %v3502, %v3854
      %v3893 = vadd.f32 %v3503, %v3859
      %v3894 = vld [vmem:[%s2] sm:$0x1]
      %v3896 = vlaneseq
      %v3897 = vshrl.u32 %v3896, 7
      %v3898 = vsub.s32 0, %v3897
      %v3899 = vrot.slane %v3894, %v3898
      %v3901 = vadd.f32 %v3862, %v3899
      %v3902 = vadd.f32 %v3863, %v3899
      %v3903 = vadd.f32 %v3864, %v3899
      %v3904 = vadd.f32 %v3865, %v3899
      %v3905 = vadd.f32 %v3866, %v3899
      %v3906 = vadd.f32 %v3867, %v3899
      %v3907 = vadd.f32 %v3868, %v3899
      %v3908 = vadd.f32 %v3869, %v3899
      %v3909 = vadd.f32 %v3870, %v3899
      %v3910 = vadd.f32 %v3871, %v3899
      %v3911 = vadd.f32 %v3872, %v3899
      %v3912 = vadd.f32 %v3873, %v3899
      %v3913 = vadd.f32 %v3874, %v3899
      %v3914 = vadd.f32 %v3875, %v3899
      %v3915 = vadd.f32 %v3876, %v3899
      %v3916 = vadd.f32 %v3877, %v3899
      %v3917 = vadd.f32 %v3878, %v3899
      %v3918 = vadd.f32 %v3879, %v3899
      %v3919 = vadd.f32 %v3880, %v3899
      %v3920 = vadd.f32 %v3881, %v3899
      %v3921 = vadd.f32 %v3882, %v3899
      %v3922 = vadd.f32 %v3883, %v3899
      %v3923 = vadd.f32 %v3884, %v3899
      %v3924 = vadd.f32 %v3885, %v3899
      %v3925 = vadd.f32 %v3886, %v3899
      %v3926 = vadd.f32 %v3887, %v3899
      %v3927 = vadd.f32 %v3888, %v3899
      %v3928 = vadd.f32 %v3889, %v3899
      %v3929 = vadd.f32 %v3890, %v3899
      %v3930 = vadd.f32 %v3891, %v3899
      %v3931 = vadd.f32 %v3892, %v3899
      %v3932 = vadd.f32 %v3893, %v3899
      %vm3933 = vcmp.ge.f32.partialorder %v3901, 0.0
      %vm3934 = vcmp.ge.f32.partialorder %v3902, 0.0
      %vm3935 = vcmp.ge.f32.partialorder %v3903, 0.0
      %vm3936 = vcmp.ge.f32.partialorder %v3904, 0.0
      %vm3937 = vcmp.ge.f32.partialorder %v3905, 0.0
      %vm3938 = vcmp.ge.f32.partialorder %v3906, 0.0
      %vm3939 = vcmp.ge.f32.partialorder %v3907, 0.0
      %vm3940 = vcmp.ge.f32.partialorder %v3908, 0.0
      %vm3941 = vcmp.ge.f32.partialorder %v3909, 0.0
      %vm3942 = vcmp.ge.f32.partialorder %v3910, 0.0
      %vm3943 = vcmp.ge.f32.partialorder %v3911, 0.0
      %vm3944 = vcmp.ge.f32.partialorder %v3912, 0.0
      %vm3945 = vcmp.ge.f32.partialorder %v3913, 0.0
      %vm3946 = vcmp.ge.f32.partialorder %v3914, 0.0
      %vm3947 = vcmp.ge.f32.partialorder %v3915, 0.0
      %vm3948 = vcmp.ge.f32.partialorder %v3916, 0.0
      %vm3949 = vcmp.ge.f32.partialorder %v3917, 0.0
      %vm3950 = vcmp.ge.f32.partialorder %v3918, 0.0
      %vm3951 = vcmp.ge.f32.partialorder %v3919, 0.0
      %vm3952 = vcmp.ge.f32.partialorder %v3920, 0.0
      %vm3953 = vcmp.ge.f32.partialorder %v3921, 0.0
      %vm3954 = vcmp.ge.f32.partialorder %v3922, 0.0
      %vm3955 = vcmp.ge.f32.partialorder %v3923, 0.0
      %vm3956 = vcmp.ge.f32.partialorder %v3924, 0.0
      %vm3957 = vcmp.ge.f32.partialorder %v3925, 0.0
      %vm3958 = vcmp.ge.f32.partialorder %v3926, 0.0
      %vm3959 = vcmp.ge.f32.partialorder %v3927, 0.0
      %vm3960 = vcmp.ge.f32.partialorder %v3928, 0.0
      %vm3961 = vcmp.ge.f32.partialorder %v3929, 0.0
      %vm3962 = vcmp.ge.f32.partialorder %v3930, 0.0
      %vm3963 = vcmp.ge.f32.partialorder %v3931, 0.0
      %vm3964 = vcmp.ge.f32.partialorder %v3932, 0.0
      %v3965 = vmul.f32 %v3901, 0.1
      %v3966 = vmul.f32 %v3902, 0.1
      %v3967 = vmul.f32 %v3903, 0.1
      %v3968 = vmul.f32 %v3904, 0.1
      %v3969 = vmul.f32 %v3905, 0.1
      %v3970 = vmul.f32 %v3906, 0.1
      %v3971 = vmul.f32 %v3907, 0.1
      %v3972 = vmul.f32 %v3908, 0.1
      %v3973 = vmul.f32 %v3909, 0.1
      %v3974 = vmul.f32 %v3910, 0.1
      %v3975 = vmul.f32 %v3911, 0.1
      %v3976 = vmul.f32 %v3912, 0.1
      %v3977 = vmul.f32 %v3913, 0.1
      %v3978 = vmul.f32 %v3914, 0.1
      %v3979 = vmul.f32 %v3915, 0.1
      %v3980 = vmul.f32 %v3916, 0.1
      %v3981 = vmul.f32 %v3917, 0.1
      %v3982 = vmul.f32 %v3918, 0.1
      %v3983 = vmul.f32 %v3919, 0.1
      %v3984 = vmul.f32 %v3920, 0.1
      %v3985 = vmul.f32 %v3921, 0.1
      %v3986 = vmul.f32 %v3922, 0.1
      %v3987 = vmul.f32 %v3923, 0.1
      %v3988 = vmul.f32 %v3924, 0.1
      %v3989 = vmul.f32 %v3925, 0.1
      %v3990 = vmul.f32 %v3926, 0.1
      %v3991 = vmul.f32 %v3927, 0.1
      %v3992 = vmul.f32 %v3928, 0.1
      %v3993 = vmul.f32 %v3929, 0.1
      %v3994 = vmul.f32 %v3930, 0.1
      %v3995 = vmul.f32 %v3931, 0.1
      %v3996 = vmul.f32 %v3932, 0.1
      %v3997 = vsel %vm3933, %v3901, %v3965
      %v3998 = vsel %vm3934, %v3902, %v3966
      %v3999 = vsel %vm3935, %v3903, %v3967
      %v4000 = vsel %vm3936, %v3904, %v3968
      %v4001 = vsel %vm3937, %v3905, %v3969
      %v4002 = vsel %vm3938, %v3906, %v3970
      %v4003 = vsel %vm3939, %v3907, %v3971
      %v4004 = vsel %vm3940, %v3908, %v3972
      %v4005 = vsel %vm3941, %v3909, %v3973
      %v4006 = vsel %vm3942, %v3910, %v3974
      %v4007 = vsel %vm3943, %v3911, %v3975
      %v4008 = vsel %vm3944, %v3912, %v3976
      %v4009 = vsel %vm3945, %v3913, %v3977
      %v4010 = vsel %vm3946, %v3914, %v3978
      %v4011 = vsel %vm3947, %v3915, %v3979
      %v4012 = vsel %vm3948, %v3916, %v3980
      %v4013 = vsel %vm3949, %v3917, %v3981
      %v4014 = vsel %vm3950, %v3918, %v3982
      %v4015 = vsel %vm3951, %v3919, %v3983
      %v4016 = vsel %vm3952, %v3920, %v3984
      %v4017 = vsel %vm3953, %v3921, %v3985
      %v4018 = vsel %vm3954, %v3922, %v3986
      %v4019 = vsel %vm3955, %v3923, %v3987
      %v4020 = vsel %vm3956, %v3924, %v3988
      %v4021 = vsel %vm3957, %v3925, %v3989
      %v4022 = vsel %vm3958, %v3926, %v3990
      %v4023 = vsel %vm3959, %v3927, %v3991
      %v4024 = vsel %vm3960, %v3928, %v3992
      %v4025 = vsel %vm3961, %v3929, %v3993
      %v4026 = vsel %vm3962, %v3930, %v3994
      %v4027 = vsel %vm3963, %v3931, %v3995
      %v4028 = vsel %vm3964, %v3932, %v3996
      %4029 = vst.msk [vmem:[%s350 + $0x8] sm:$0xff] %vm331, %v3997
      %4030 = vst.msk [vmem:[%s350 + $0x10] sm:$0xff] %vm331, %v3998
      %4031 = vst.msk [vmem:[%s350 + $0x28] sm:$0xff] %vm331, %v3999
      %4032 = vst.msk [vmem:[%s350 + $0x30] sm:$0xff] %vm331, %v4000
      %4033 = vst.msk [vmem:[%s350 + $0x48] sm:$0xff] %vm331, %v4001
      %4034 = vst.msk [vmem:[%s350 + $0x50] sm:$0xff] %vm331, %v4002
      %4035 = vst.msk [vmem:[%s350 + $0x68] sm:$0xff] %vm331, %v4003
      %4036 = vst.msk [vmem:[%s350 + $0x70] sm:$0xff] %vm331, %v4004
      %4037 = vst.msk [vmem:[%s350 + $0x88] sm:$0xff] %vm331, %v4005
      %4038 = vst.msk [vmem:[%s350 + $0x90] sm:$0xff] %vm331, %v4006
      %4039 = vst.msk [vmem:[%s350 + $0xa8] sm:$0xff] %vm331, %v4007
      %4040 = vst.msk [vmem:[%s350 + $0xb0] sm:$0xff] %vm331, %v4008
      %4041 = vst.msk [vmem:[%s350 + $0xc8] sm:$0xff] %vm331, %v4009
      %4042 = vst.msk [vmem:[%s350 + $0xd0] sm:$0xff] %vm331, %v4010
      %4043 = vst.msk [vmem:[%s350 + $0xe8] sm:$0xff] %vm331, %v4011
      %4044 = vst.msk [vmem:[%s350 + $0xf0] sm:$0xff] %vm331, %v4012
      %4045 = vst.msk [vmem:[%s350 + $0x108] sm:$0xff] %vm331, %v4013
      %4046 = vst.msk [vmem:[%s350 + $0x110] sm:$0xff] %vm331, %v4014
      %4047 = vst.msk [vmem:[%s350 + $0x128] sm:$0xff] %vm331, %v4015
      %4048 = vst.msk [vmem:[%s350 + $0x130] sm:$0xff] %vm331, %v4016
      %4049 = vst.msk [vmem:[%s350 + $0x148] sm:$0xff] %vm331, %v4017
      %4050 = vst.msk [vmem:[%s350 + $0x150] sm:$0xff] %vm331, %v4018
      %4051 = vst.msk [vmem:[%s350 + $0x168] sm:$0xff] %vm331, %v4019
      %4052 = vst.msk [vmem:[%s350 + $0x170] sm:$0xff] %vm331, %v4020
      %4053 = vst.msk [vmem:[%s350 + $0x188] sm:$0xff] %vm331, %v4021
      %4054 = vst.msk [vmem:[%s350 + $0x190] sm:$0xff] %vm331, %v4022
      %4055 = vst.msk [vmem:[%s350 + $0x1a8] sm:$0xff] %vm331, %v4023
      %4056 = vst.msk [vmem:[%s350 + $0x1b0] sm:$0xff] %vm331, %v4024
      %4057 = vst.msk [vmem:[%s350 + $0x1c8] sm:$0xff] %vm331, %v4025
      %4058 = vst.msk [vmem:[%s350 + $0x1d0] sm:$0xff] %vm331, %v4026
      %4059 = vst.msk [vmem:[%s350 + $0x1e8] sm:$0xff] %vm331, %v4027
      %4060 = vst.msk [vmem:[%s350 + $0x1f0] sm:$0xff] %vm331, %v4028
      %v4061 = vld [vmem:[#allocation3 + $0x6] sm:$0xff]
      %v4062 = vld [vmem:[#allocation3 + $0xe] sm:$0xff]
      %v4063 = vld [vmem:[#allocation3 + $0x26] sm:$0xff]
      %v4064 = vld [vmem:[#allocation3 + $0x2e] sm:$0xff]
      %v4065 = vld [vmem:[#allocation3 + $0x46] sm:$0xff]
      %v4066 = vld [vmem:[#allocation3 + $0x4e] sm:$0xff]
      %v4067 = vld [vmem:[#allocation3 + $0x66] sm:$0xff]
      %v4068 = vld [vmem:[#allocation3 + $0x6e] sm:$0xff]
      %v4069 = vld [vmem:[#allocation3 + $0x86] sm:$0xff]
      %v4070 = vld [vmem:[#allocation3 + $0x8e] sm:$0xff]
      %v4071 = vld [vmem:[#allocation3 + $0xa6] sm:$0xff]
      %v4072 = vld [vmem:[#allocation3 + $0xae] sm:$0xff]
      %v4073 = vld [vmem:[#allocation3 + $0xc6] sm:$0xff]
      %v4074 = vld [vmem:[#allocation3 + $0xce] sm:$0xff]
      %v4075 = vld [vmem:[#allocation3 + $0xe6] sm:$0xff]
      %v4076 = vld [vmem:[#allocation3 + $0xee] sm:$0xff]
      %v4077 = vld [vmem:[#allocation3 + $0x106] sm:$0xff]
      %v4078 = vld [vmem:[#allocation3 + $0x10e] sm:$0xff]
      %v4079 = vld [vmem:[#allocation3 + $0x126] sm:$0xff]
      %v4080 = vld [vmem:[#allocation3 + $0x12e] sm:$0xff]
      %v4081 = vld [vmem:[#allocation3 + $0x146] sm:$0xff]
      %v4082 = vld [vmem:[#allocation3 + $0x14e] sm:$0xff]
      %v4083 = vld [vmem:[#allocation3 + $0x166] sm:$0xff]
      %v4084 = vld [vmem:[#allocation3 + $0x16e] sm:$0xff]
      %v4085 = vld [vmem:[#allocation3 + $0x186] sm:$0xff]
      %v4086 = vld [vmem:[#allocation3 + $0x18e] sm:$0xff]
      %v4087 = vld [vmem:[#allocation3 + $0x1a6] sm:$0xff]
      %v4088 = vld [vmem:[#allocation3 + $0x1ae] sm:$0xff]
      %v4089 = vld [vmem:[#allocation3 + $0x1c6] sm:$0xff]
      %v4090 = vld [vmem:[#allocation3 + $0x1ce] sm:$0xff]
      %v4091 = vld [vmem:[#allocation3 + $0x1e6] sm:$0xff]
      %v4092 = vld [vmem:[#allocation3 + $0x1ee] sm:$0xff]
      %v4093 = vld [vmem:[%s3] sm:$0xff]
      %v4094 = vld [vmem:[#allocation3 + $0x8] sm:$0xff]
      %v4095 = vld [vmem:[#allocation3 + $0x10] sm:$0xff]
      %v4096 = vld [vmem:[#allocation3 + $0x28] sm:$0xff]
      %v4097 = vld [vmem:[#allocation3 + $0x30] sm:$0xff]
      %v4098 = vld [vmem:[#allocation3 + $0x48] sm:$0xff]
      %v4099 = vld [vmem:[#allocation3 + $0x50] sm:$0xff]
      %v4100 = vld [vmem:[#allocation3 + $0x68] sm:$0xff]
      %v4101 = vld [vmem:[#allocation3 + $0x70] sm:$0xff]
      %v4102 = vld [vmem:[#allocation3 + $0x88] sm:$0xff]
      %v4103 = vld [vmem:[#allocation3 + $0x90] sm:$0xff]
      %v4104 = vld [vmem:[#allocation3 + $0xa8] sm:$0xff]
      %v4105 = vld [vmem:[#allocation3 + $0xb0] sm:$0xff]
      %v4106 = vld [vmem:[#allocation3 + $0xc8] sm:$0xff]
      %v4107 = vld [vmem:[#allocation3 + $0xd0] sm:$0xff]
      %v4108 = vld [vmem:[#allocation3 + $0xe8] sm:$0xff]
      %v4109 = vld [vmem:[#allocation3 + $0xf0] sm:$0xff]
      %v4110 = vld [vmem:[#allocation3 + $0x108] sm:$0xff]
      %v4111 = vld [vmem:[#allocation3 + $0x110] sm:$0xff]
      %v4112 = vld [vmem:[#allocation3 + $0x128] sm:$0xff]
      %v4113 = vld [vmem:[#allocation3 + $0x130] sm:$0xff]
      %v4114 = vld [vmem:[#allocation3 + $0x148] sm:$0xff]
      %v4115 = vld [vmem:[#allocation3 + $0x150] sm:$0xff]
      %v4116 = vld [vmem:[#allocation3 + $0x168] sm:$0xff]
      %v4117 = vld [vmem:[#allocation3 + $0x170] sm:$0xff]
      %v4118 = vld [vmem:[#allocation3 + $0x188] sm:$0xff]
      %v4119 = vld [vmem:[#allocation3 + $0x190] sm:$0xff]
      %v4120 = vld [vmem:[#allocation3 + $0x1a8] sm:$0xff]
      %v4121 = vld [vmem:[#allocation3 + $0x1b0] sm:$0xff]
      %v4122 = vld [vmem:[#allocation3 + $0x1c8] sm:$0xff]
      %v4123 = vld [vmem:[#allocation3 + $0x1d0] sm:$0xff]
      %v4124 = vld [vmem:[#allocation3 + $0x1e8] sm:$0xff]
      %v4125 = vld [vmem:[#allocation3 + $0x1f0] sm:$0xff]
      %s4126 = scalar_lea.vmem %s3, 8
      %v4127 = vld [vmem:[%s4126] sm:$0xff]
      %v4129 = vsel %vm331, %v4094, 0
      %v4132 = vsel %vm331, %v4095, 0
      %v4135 = vsel %vm331, %v4096, 0
      %v4138 = vsel %vm331, %v4097, 0
      %v4141 = vsel %vm331, %v4098, 0
      %v4144 = vsel %vm331, %v4099, 0
      %v4147 = vsel %vm331, %v4100, 0
      %v4150 = vsel %vm331, %v4101, 0
      %v4153 = vsel %vm331, %v4102, 0
      %v4156 = vsel %vm331, %v4103, 0
      %v4159 = vsel %vm331, %v4104, 0
      %v4162 = vsel %vm331, %v4105, 0
      %v4165 = vsel %vm331, %v4106, 0
      %v4168 = vsel %vm331, %v4107, 0
      %v4171 = vsel %vm331, %v4108, 0
      %v4174 = vsel %vm331, %v4109, 0
      %v4177 = vsel %vm331, %v4110, 0
      %v4180 = vsel %vm331, %v4111, 0
      %v4183 = vsel %vm331, %v4112, 0
      %v4186 = vsel %vm331, %v4113, 0
      %v4189 = vsel %vm331, %v4114, 0
      %v4192 = vsel %vm331, %v4115, 0
      %v4195 = vsel %vm331, %v4116, 0
      %v4198 = vsel %vm331, %v4117, 0
      %v4201 = vsel %vm331, %v4118, 0
      %v4204 = vsel %vm331, %v4119, 0
      %v4207 = vsel %vm331, %v4120, 0
      %v4210 = vsel %vm331, %v4121, 0
      %v4213 = vsel %vm331, %v4122, 0
      %v4216 = vsel %vm331, %v4123, 0
      %v4219 = vsel %vm331, %v4124, 0
      %v4222 = vsel %vm331, %v4125, 0
      %4224 = vmatprep.subr.mxu0 0.0
      %4225 = vmatpush1.msra.mxu0 %v4127
      %4226 = vmatprep.subr.mxu0 0.0
      %4227 = vmatpush1.msra.mxu0 0.0
      %4228 = vmatprep.subr.mxu0 0.0
      %4229 = vmatpush1.msra.mxu0 0.0
      %4230 = vmatprep.subr.mxu0 0.0
      %4231 = vmatpush1.msra.mxu0 0.0
      %4232 = vmatprep.subr.mxu0 0.0
      %4233 = vmatpush1.msra.mxu0 0.0
      %4234 = vmatprep.subr.mxu0 0.0
      %4235 = vmatpush1.msra.mxu0 0.0
      %4236 = vmatprep.subr.mxu0 0.0
      %4237 = vmatpush1.msra.mxu0 0.0
      %4238 = vmatprep.subr.mxu0 0.0
      %4239 = vmatpush1.msra.mxu0 0.0
      %4240 = vmatprep.subr.mxu0 0.0
      %4241 = vmatpush1.msra.mxu0 0.0
      %4242 = vmatprep.subr.mxu0 0.0
      %4243 = vmatpush1.msra.mxu0 0.0
      %4244 = vmatprep.subr.mxu0 0.0
      %4245 = vmatpush1.msra.mxu0 0.0
      %4246 = vmatprep.subr.mxu0 0.0
      %4247 = vmatpush1.msra.mxu0 0.0
      %4248 = vmatprep.subr.mxu0 0.0
      %4249 = vmatpush1.msra.mxu0 0.0
      %4250 = vmatprep.subr.mxu0 0.0
      %4251 = vmatpush1.msra.mxu0 0.0
      %4252 = vmatprep.subr.mxu0 0.0
      %4253 = vmatpush1.msra.mxu0 0.0
      %4254 = vmatprep.subr.mxu0 0.0
      %4255 = vmatpush1.msra.mxu0 0.0
      %4256 = vmatprep.subr.mxu0 0.0
      %4257 = vmatpush1.msra.mxu0 0.0
      %4258 = vmatprep.subr.mxu0 0.0
      %4259 = vmatpush1.msra.mxu0 0.0
      %4260 = vmatprep.subr.mxu0 0.0
      %4261 = vmatpush1.msra.mxu0 0.0
      %4262 = vmatprep.subr.mxu0 0.0
      %4263 = vmatpush1.msra.mxu0 0.0
      %4264 = vmatprep.subr.mxu0 0.0
      %4265 = vmatpush1.msra.mxu0 0.0
      %4266 = vmatprep.subr.mxu0 0.0
      %4267 = vmatpush1.msra.mxu0 0.0
      %4268 = vmatprep.subr.mxu0 0.0
      %4269 = vmatpush1.msra.mxu0 0.0
      %4270 = vmatprep.subr.mxu0 0.0
      %4271 = vmatpush1.msra.mxu0 0.0
      %4272 = vmatprep.subr.mxu0 0.0
      %4273 = vmatpush1.msra.mxu0 0.0
      %4274 = vmatprep.subr.mxu0 0.0
      %4275 = vmatpush1.msra.mxu0 0.0
      %4276 = vmatprep.subr.mxu0 0.0
      %4277 = vmatpush1.msra.mxu0 0.0
      %4278 = vmatprep.subr.mxu0 0.0
      %4279 = vmatpush1.msra.mxu0 0.0
      %4280 = vmatprep.subr.mxu0 0.0
      %4281 = vmatpush1.msra.mxu0 0.0
      %4282 = vmatprep.subr.mxu0 0.0
      %4283 = vmatpush1.msra.mxu0 0.0
      %4284 = vmatprep.subr.mxu0 0.0
      %4285 = vmatpush1.msra.mxu0 0.0
      %4286 = vmatprep.subr.mxu0 0.0
      %4287 = vmatpush1.msra.mxu0 0.0
      %4288 = vmatprep.mubr.f32.mxu0 0.0
      %4289 = vmatmul.mubr.f32.gmra.mrb[0].mxu0 %v4129
      %v4290 = vpop.f32.mrb[0].mxu0
      %v4291 = vadd.f32 0.0, %v4290
      %v4292 = vpop.f32.mrb[0].mxu0
      %4293 = vmatprep.mubr.f32.mxu0 0.0
      %4294 = vmatmul.mubr.f32.gmra.mrb[0].mxu0 %v4132
      %v4295 = vpop.f32.mrb[0].mxu0
      %v4296 = vadd.f32 0.0, %v4295
      %v4297 = vpop.f32.mrb[0].mxu0
      %4298 = vmatprep.mubr.f32.mxu0 0.0
      %4299 = vmatmul.mubr.f32.gmra.mrb[0].mxu0 %v4135
      %v4300 = vpop.f32.mrb[0].mxu0
      %v4301 = vadd.f32 0.0, %v4300
      %v4302 = vpop.f32.mrb[0].mxu0
      %4303 = vmatprep.mubr.f32.mxu0 0.0
      %4304 = vmatmul.mubr.f32.gmra.mrb[0].mxu0 %v4138
      %v4305 = vpop.f32.mrb[0].mxu0
      %v4306 = vadd.f32 0.0, %v4305
      %v4307 = vpop.f32.mrb[0].mxu0
      %4308 = vmatprep.mubr.f32.mxu0 0.0
      %4309 = vmatmul.mubr.f32.gmra.mrb[0].mxu0 %v4141
      %v4310 = vpop.f32.mrb[0].mxu0
      %v4311 = vadd.f32 0.0, %v4310
      %v4312 = vpop.f32.mrb[0].mxu0
      %4313 = vmatprep.mubr.f32.mxu0 0.0
      %4314 = vmatmul.mubr.f32.gmra.mrb[0].mxu0 %v4144
      %v4315 = vpop.f32.mrb[0].mxu0
      %v4316 = vadd.f32 0.0, %v4315
      %v4317 = vpop.f32.mrb[0].mxu0
      %4318 = vmatprep.mubr.f32.mxu0 0.0
      %4319 = vmatmul.mubr.f32.gmra.mrb[0].mxu0 %v4147
      %v4320 = vpop.f32.mrb[0].mxu0
      %v4321 = vadd.f32 0.0, %v4320
      %v4322 = vpop.f32.mrb[0].mxu0
      %4323 = vmatprep.mubr.f32.mxu0 0.0
      %4324 = vmatmul.mubr.f32.gmra.mrb[0].mxu0 %v4150
      %v4325 = vpop.f32.mrb[0].mxu0
      %v4326 = vadd.f32 0.0, %v4325
      %v4327 = vpop.f32.mrb[0].mxu0
      %4328 = vmatprep.mubr.f32.mxu0 0.0
      %4329 = vmatmul.mubr.f32.gmra.mrb[0].mxu0 %v4153
      %v4330 = vpop.f32.mrb[0].mxu0
      %v4331 = vadd.f32 0.0, %v4330
      %v4332 = vpop.f32.mrb[0].mxu0
      %4333 = vmatprep.mubr.f32.mxu0 0.0
      %4334 = vmatmul.mubr.f32.gmra.mrb[0].mxu0 %v4156
      %v4335 = vpop.f32.mrb[0].mxu0
      %v4336 = vadd.f32 0.0, %v4335
      %v4337 = vpop.f32.mrb[0].mxu0
      %4338 = vmatprep.mubr.f32.mxu0 0.0
      %4339 = vmatmul.mubr.f32.gmra.mrb[0].mxu0 %v4159
      %v4340 = vpop.f32.mrb[0].mxu0
      %v4341 = vadd.f32 0.0, %v4340
      %v4342 = vpop.f32.mrb[0].mxu0
      %4343 = vmatprep.mubr.f32.mxu0 0.0
      %4344 = vmatmul.mubr.f32.gmra.mrb[0].mxu0 %v4162
      %v4345 = vpop.f32.mrb[0].mxu0
      %v4346 = vadd.f32 0.0, %v4345
      %v4347 = vpop.f32.mrb[0].mxu0
      %4348 = vmatprep.mubr.f32.mxu0 0.0
      %4349 = vmatmul.mubr.f32.gmra.mrb[0].mxu0 %v4165
      %v4350 = vpop.f32.mrb[0].mxu0
      %v4351 = vadd.f32 0.0, %v4350
      %v4352 = vpop.f32.mrb[0].mxu0
      %4353 = vmatprep.mubr.f32.mxu0 0.0
      %4354 = vmatmul.mubr.f32.gmra.mrb[0].mxu0 %v4168
      %v4355 = vpop.f32.mrb[0].mxu0
      %v4356 = vadd.f32 0.0, %v4355
      %v4357 = vpop.f32.mrb[0].mxu0
      %4358 = vmatprep.mubr.f32.mxu0 0.0
      %4359 = vmatmul.mubr.f32.gmra.mrb[0].mxu0 %v4171
      %v4360 = vpop.f32.mrb[0].mxu0
      %v4361 = vadd.f32 0.0, %v4360
      %v4362 = vpop.f32.mrb[0].mxu0
      %4363 = vmatprep.mubr.f32.mxu0 0.0
      %4364 = vmatmul.mubr.f32.gmra.mrb[0].mxu0 %v4174
      %v4365 = vpop.f32.mrb[0].mxu0
      %v4366 = vadd.f32 0.0, %v4365
      %v4367 = vpop.f32.mrb[0].mxu0
      %4368 = vmatprep.mubr.f32.mxu0 0.0
      %4369 = vmatmul.mubr.f32.gmra.mrb[0].mxu0 %v4177
      %v4370 = vpop.f32.mrb[0].mxu0
      %v4371 = vadd.f32 0.0, %v4370
      %v4372 = vpop.f32.mrb[0].mxu0
      %4373 = vmatprep.mubr.f32.mxu0 0.0
      %4374 = vmatmul.mubr.f32.gmra.mrb[0].mxu0 %v4180
      %v4375 = vpop.f32.mrb[0].mxu0
      %v4376 = vadd.f32 0.0, %v4375
      %v4377 = vpop.f32.mrb[0].mxu0
      %4378 = vmatprep.mubr.f32.mxu0 0.0
      %4379 = vmatmul.mubr.f32.gmra.mrb[0].mxu0 %v4183
      %v4380 = vpop.f32.mrb[0].mxu0
      %v4381 = vadd.f32 0.0, %v4380
      %v4382 = vpop.f32.mrb[0].mxu0
      %4383 = vmatprep.mubr.f32.mxu0 0.0
      %4384 = vmatmul.mubr.f32.gmra.mrb[0].mxu0 %v4186
      %v4385 = vpop.f32.mrb[0].mxu0
      %v4386 = vadd.f32 0.0, %v4385
      %v4387 = vpop.f32.mrb[0].mxu0
      %4388 = vmatprep.mubr.f32.mxu0 0.0
      %4389 = vmatmul.mubr.f32.gmra.mrb[0].mxu0 %v4189
      %v4390 = vpop.f32.mrb[0].mxu0
      %v4391 = vadd.f32 0.0, %v4390
      %v4392 = vpop.f32.mrb[0].mxu0
      %4393 = vmatprep.mubr.f32.mxu0 0.0
      %4394 = vmatmul.mubr.f32.gmra.mrb[0].mxu0 %v4192
      %v4395 = vpop.f32.mrb[0].mxu0
      %v4396 = vadd.f32 0.0, %v4395
      %v4397 = vpop.f32.mrb[0].mxu0
      %4398 = vmatprep.mubr.f32.mxu0 0.0
      %4399 = vmatmul.mubr.f32.gmra.mrb[0].mxu0 %v4195
      %v4400 = vpop.f32.mrb[0].mxu0
      %v4401 = vadd.f32 0.0, %v4400
      %v4402 = vpop.f32.mrb[0].mxu0
      %4403 = vmatprep.mubr.f32.mxu0 0.0
      %4404 = vmatmul.mubr.f32.gmra.mrb[0].mxu0 %v4198
      %v4405 = vpop.f32.mrb[0].mxu0
      %v4406 = vadd.f32 0.0, %v4405
      %v4407 = vpop.f32.mrb[0].mxu0
      %4408 = vmatprep.mubr.f32.mxu0 0.0
      %4409 = vmatmul.mubr.f32.gmra.mrb[0].mxu0 %v4201
      %v4410 = vpop.f32.mrb[0].mxu0
      %v4411 = vadd.f32 0.0, %v4410
      %v4412 = vpop.f32.mrb[0].mxu0
      %4413 = vmatprep.mubr.f32.mxu0 0.0
      %4414 = vmatmul.mubr.f32.gmra.mrb[0].mxu0 %v4204
      %v4415 = vpop.f32.mrb[0].mxu0
      %v4416 = vadd.f32 0.0, %v4415
      %v4417 = vpop.f32.mrb[0].mxu0
      %4418 = vmatprep.mubr.f32.mxu0 0.0
      %4419 = vmatmul.mubr.f32.gmra.mrb[0].mxu0 %v4207
      %v4420 = vpop.f32.mrb[0].mxu0
      %v4421 = vadd.f32 0.0, %v4420
      %v4422 = vpop.f32.mrb[0].mxu0
      %4423 = vmatprep.mubr.f32.mxu0 0.0
      %4424 = vmatmul.mubr.f32.gmra.mrb[0].mxu0 %v4210
      %v4425 = vpop.f32.mrb[0].mxu0
      %v4426 = vadd.f32 0.0, %v4425
      %v4427 = vpop.f32.mrb[0].mxu0
      %4428 = vmatprep.mubr.f32.mxu0 0.0
      %4429 = vmatmul.mubr.f32.gmra.mrb[0].mxu0 %v4213
      %v4430 = vpop.f32.mrb[0].mxu0
      %v4431 = vadd.f32 0.0, %v4430
      %v4432 = vpop.f32.mrb[0].mxu0
      %4433 = vmatprep.mubr.f32.mxu0 0.0
      %4434 = vmatmul.mubr.f32.gmra.mrb[0].mxu0 %v4216
      %v4435 = vpop.f32.mrb[0].mxu0
      %v4436 = vadd.f32 0.0, %v4435
      %v4437 = vpop.f32.mrb[0].mxu0
      %4438 = vmatprep.mubr.f32.mxu0 0.0
      %4439 = vmatmul.mubr.f32.gmra.mrb[0].mxu0 %v4219
      %v4440 = vpop.f32.mrb[0].mxu0
      %v4441 = vadd.f32 0.0, %v4440
      %v4442 = vpop.f32.mrb[0].mxu0
      %4443 = vmatprep.mubr.f32.mxu0 0.0
      %4444 = vmatmul.mubr.f32.gmra.mrb[0].mxu0 %v4222
      %v4445 = vpop.f32.mrb[0].mxu0
      %v4446 = vadd.f32 0.0, %v4445
      %v4447 = vpop.f32.mrb[0].mxu0
      %4448 = vdwg.mxu0
      %v4450 = vsel %vm331, %v4061, 0
      %v4453 = vsel %vm331, %v4062, 0
      %v4456 = vsel %vm331, %v4063, 0
      %v4459 = vsel %vm331, %v4064, 0
      %v4462 = vsel %vm331, %v4065, 0
      %v4465 = vsel %vm331, %v4066, 0
      %v4468 = vsel %vm331, %v4067, 0
      %v4471 = vsel %vm331, %v4068, 0
      %v4474 = vsel %vm331, %v4069, 0
      %v4477 = vsel %vm331, %v4070, 0
      %v4480 = vsel %vm331, %v4071, 0
      %v4483 = vsel %vm331, %v4072, 0
      %v4486 = vsel %vm331, %v4073, 0
      %v4489 = vsel %vm331, %v4074, 0
      %v4492 = vsel %vm331, %v4075, 0
      %v4495 = vsel %vm331, %v4076, 0
      %v4498 = vsel %vm331, %v4077, 0
      %v4501 = vsel %vm331, %v4078, 0
      %v4504 = vsel %vm331, %v4079, 0
      %v4507 = vsel %vm331, %v4080, 0
      %v4510 = vsel %vm331, %v4081, 0
      %v4513 = vsel %vm331, %v4082, 0
      %v4516 = vsel %vm331, %v4083, 0
      %v4519 = vsel %vm331, %v4084, 0
      %v4522 = vsel %vm331, %v4085, 0
      %v4525 = vsel %vm331, %v4086, 0
      %v4528 = vsel %vm331, %v4087, 0
      %v4531 = vsel %vm331, %v4088, 0
      %v4534 = vsel %vm331, %v4089, 0
      %v4537 = vsel %vm331, %v4090, 0
      %v4540 = vsel %vm331, %v4091, 0
      %v4543 = vsel %vm331, %v4092, 0
      %4545 = vmatprep.subr.mxu0 0.0
      %4546 = vmatpush1.msra.mxu0 %v4093
      %4547 = vmatprep.subr.mxu0 0.0
      %4548 = vmatpush1.msra.mxu0 0.0
      %4549 = vmatprep.subr.mxu0 0.0
      %4550 = vmatpush1.msra.mxu0 0.0
      %4551 = vmatprep.subr.mxu0 0.0
      %4552 = vmatpush1.msra.mxu0 0.0
      %4553 = vmatprep.subr.mxu0 0.0
      %4554 = vmatpush1.msra.mxu0 0.0
      %4555 = vmatprep.subr.mxu0 0.0
      %4556 = vmatpush1.msra.mxu0 0.0
      %4557 = vmatprep.subr.mxu0 0.0
      %4558 = vmatpush1.msra.mxu0 0.0
      %4559 = vmatprep.subr.mxu0 0.0
      %4560 = vmatpush1.msra.mxu0 0.0
      %4561 = vmatprep.subr.mxu0 0.0
      %4562 = vmatpush1.msra.mxu0 0.0
      %4563 = vmatprep.subr.mxu0 0.0
      %4564 = vmatpush1.msra.mxu0 0.0
      %4565 = vmatprep.subr.mxu0 0.0
      %4566 = vmatpush1.msra.mxu0 0.0
      %4567 = vmatprep.subr.mxu0 0.0
      %4568 = vmatpush1.msra.mxu0 0.0
      %4569 = vmatprep.subr.mxu0 0.0
      %4570 = vmatpush1.msra.mxu0 0.0
      %4571 = vmatprep.subr.mxu0 0.0
      %4572 = vmatpush1.msra.mxu0 0.0
      %4573 = vmatprep.subr.mxu0 0.0
      %4574 = vmatpush1.msra.mxu0 0.0
      %4575 = vmatprep.subr.mxu0 0.0
      %4576 = vmatpush1.msra.mxu0 0.0
      %4577 = vmatprep.subr.mxu0 0.0
      %4578 = vmatpush1.msra.mxu0 0.0
      %4579 = vmatprep.subr.mxu0 0.0
      %4580 = vmatpush1.msra.mxu0 0.0
      %4581 = vmatprep.subr.mxu0 0.0
      %4582 = vmatpush1.msra.mxu0 0.0
      %4583 = vmatprep.subr.mxu0 0.0
      %4584 = vmatpush1.msra.mxu0 0.0
      %4585 = vmatprep.subr.mxu0 0.0
      %4586 = vmatpush1.msra.mxu0 0.0
      %4587 = vmatprep.subr.mxu0 0.0
      %4588 = vmatpush1.msra.mxu0 0.0
      %4589 = vmatprep.subr.mxu0 0.0
      %4590 = vmatpush1.msra.mxu0 0.0
      %4591 = vmatprep.subr.mxu0 0.0
      %4592 = vmatpush1.msra.mxu0 0.0
      %4593 = vmatprep.subr.mxu0 0.0
      %4594 = vmatpush1.msra.mxu0 0.0
      %4595 = vmatprep.subr.mxu0 0.0
      %4596 = vmatpush1.msra.mxu0 0.0
      %4597 = vmatprep.subr.mxu0 0.0
      %4598 = vmatpush1.msra.mxu0 0.0
      %4599 = vmatprep.subr.mxu0 0.0
      %4600 = vmatpush1.msra.mxu0 0.0
      %4601 = vmatprep.subr.mxu0 0.0
      %4602 = vmatpush1.msra.mxu0 0.0
      %4603 = vmatprep.subr.mxu0 0.0
      %4604 = vmatpush1.msra.mxu0 0.0
      %4605 = vmatprep.subr.mxu0 0.0
      %4606 = vmatpush1.msra.mxu0 0.0
      %4607 = vmatprep.subr.mxu0 0.0
      %4608 = vmatpush1.msra.mxu0 0.0
      %4609 = vmatprep.mubr.f32.mxu0 0.0
      %4610 = vmatmul.mubr.f32.gmra.mrb[0].mxu0 %v4450
      %v4611 = vpop.f32.mrb[0].mxu0
      %v4612 = vadd.f32 %v4291, %v4611
      %v4613 = vpop.f32.mrb[0].mxu0
      %4614 = vmatprep.mubr.f32.mxu0 0.0
      %4615 = vmatmul.mubr.f32.gmra.mrb[0].mxu0 %v4453
      %v4616 = vpop.f32.mrb[0].mxu0
      %v4617 = vadd.f32 %v4296, %v4616
      %v4618 = vpop.f32.mrb[0].mxu0
      %4619 = vmatprep.mubr.f32.mxu0 0.0
      %4620 = vmatmul.mubr.f32.gmra.mrb[0].mxu0 %v4456
      %v4621 = vpop.f32.mrb[0].mxu0
      %v4622 = vadd.f32 %v4301, %v4621
      %v4623 = vpop.f32.mrb[0].mxu0
      %4624 = vmatprep.mubr.f32.mxu0 0.0
      %4625 = vmatmul.mubr.f32.gmra.mrb[0].mxu0 %v4459
      %v4626 = vpop.f32.mrb[0].mxu0
      %v4627 = vadd.f32 %v4306, %v4626
      %v4628 = vpop.f32.mrb[0].mxu0
      %4629 = vmatprep.mubr.f32.mxu0 0.0
      %4630 = vmatmul.mubr.f32.gmra.mrb[0].mxu0 %v4462
      %v4631 = vpop.f32.mrb[0].mxu0
      %v4632 = vadd.f32 %v4311, %v4631
      %v4633 = vpop.f32.mrb[0].mxu0
      %4634 = vmatprep.mubr.f32.mxu0 0.0
      %4635 = vmatmul.mubr.f32.gmra.mrb[0].mxu0 %v4465
      %v4636 = vpop.f32.mrb[0].mxu0
      %v4637 = vadd.f32 %v4316, %v4636
      %v4638 = vpop.f32.mrb[0].mxu0
      %4639 = vmatprep.mubr.f32.mxu0 0.0
      %4640 = vmatmul.mubr.f32.gmra.mrb[0].mxu0 %v4468
      %v4641 = vpop.f32.mrb[0].mxu0
      %v4642 = vadd.f32 %v4321, %v4641
      %v4643 = vpop.f32.mrb[0].mxu0
      %4644 = vmatprep.mubr.f32.mxu0 0.0
      %4645 = vmatmul.mubr.f32.gmra.mrb[0].mxu0 %v4471
      %v4646 = vpop.f32.mrb[0].mxu0
      %v4647 = vadd.f32 %v4326, %v4646
      %v4648 = vpop.f32.mrb[0].mxu0
      %4649 = vmatprep.mubr.f32.mxu0 0.0
      %4650 = vmatmul.mubr.f32.gmra.mrb[0].mxu0 %v4474
      %v4651 = vpop.f32.mrb[0].mxu0
      %v4652 = vadd.f32 %v4331, %v4651
      %v4653 = vpop.f32.mrb[0].mxu0
      %4654 = vmatprep.mubr.f32.mxu0 0.0
      %4655 = vmatmul.mubr.f32.gmra.mrb[0].mxu0 %v4477
      %v4656 = vpop.f32.mrb[0].mxu0
      %v4657 = vadd.f32 %v4336, %v4656
      %v4658 = vpop.f32.mrb[0].mxu0
      %4659 = vmatprep.mubr.f32.mxu0 0.0
      %4660 = vmatmul.mubr.f32.gmra.mrb[0].mxu0 %v4480
      %v4661 = vpop.f32.mrb[0].mxu0
      %v4662 = vadd.f32 %v4341, %v4661
      %v4663 = vpop.f32.mrb[0].mxu0
      %4664 = vmatprep.mubr.f32.mxu0 0.0
      %4665 = vmatmul.mubr.f32.gmra.mrb[0].mxu0 %v4483
      %v4666 = vpop.f32.mrb[0].mxu0
      %v4667 = vadd.f32 %v4346, %v4666
      %v4668 = vpop.f32.mrb[0].mxu0
      %4669 = vmatprep.mubr.f32.mxu0 0.0
      %4670 = vmatmul.mubr.f32.gmra.mrb[0].mxu0 %v4486
      %v4671 = vpop.f32.mrb[0].mxu0
      %v4672 = vadd.f32 %v4351, %v4671
      %v4673 = vpop.f32.mrb[0].mxu0
      %4674 = vmatprep.mubr.f32.mxu0 0.0
      %4675 = vmatmul.mubr.f32.gmra.mrb[0].mxu0 %v4489
      %v4676 = vpop.f32.mrb[0].mxu0
      %v4677 = vadd.f32 %v4356, %v4676
      %v4678 = vpop.f32.mrb[0].mxu0
      %4679 = vmatprep.mubr.f32.mxu0 0.0
      %4680 = vmatmul.mubr.f32.gmra.mrb[0].mxu0 %v4492
      %v4681 = vpop.f32.mrb[0].mxu0
      %v4682 = vadd.f32 %v4361, %v4681
      %v4683 = vpop.f32.mrb[0].mxu0
      %4684 = vmatprep.mubr.f32.mxu0 0.0
      %4685 = vmatmul.mubr.f32.gmra.mrb[0].mxu0 %v4495
      %v4686 = vpop.f32.mrb[0].mxu0
      %v4687 = vadd.f32 %v4366, %v4686
      %v4688 = vpop.f32.mrb[0].mxu0
      %4689 = vmatprep.mubr.f32.mxu0 0.0
      %4690 = vmatmul.mubr.f32.gmra.mrb[0].mxu0 %v4498
      %v4691 = vpop.f32.mrb[0].mxu0
      %v4692 = vadd.f32 %v4371, %v4691
      %v4693 = vpop.f32.mrb[0].mxu0
      %4694 = vmatprep.mubr.f32.mxu0 0.0
      %4695 = vmatmul.mubr.f32.gmra.mrb[0].mxu0 %v4501
      %v4696 = vpop.f32.mrb[0].mxu0
      %v4697 = vadd.f32 %v4376, %v4696
      %v4698 = vpop.f32.mrb[0].mxu0
      %4699 = vmatprep.mubr.f32.mxu0 0.0
      %4700 = vmatmul.mubr.f32.gmra.mrb[0].mxu0 %v4504
      %v4701 = vpop.f32.mrb[0].mxu0
      %v4702 = vadd.f32 %v4381, %v4701
      %v4703 = vpop.f32.mrb[0].mxu0
      %4704 = vmatprep.mubr.f32.mxu0 0.0
      %4705 = vmatmul.mubr.f32.gmra.mrb[0].mxu0 %v4507
      %v4706 = vpop.f32.mrb[0].mxu0
      %v4707 = vadd.f32 %v4386, %v4706
      %v4708 = vpop.f32.mrb[0].mxu0
      %4709 = vmatprep.mubr.f32.mxu0 0.0
      %4710 = vmatmul.mubr.f32.gmra.mrb[0].mxu0 %v4510
      %v4711 = vpop.f32.mrb[0].mxu0
      %v4712 = vadd.f32 %v4391, %v4711
      %v4713 = vpop.f32.mrb[0].mxu0
      %4714 = vmatprep.mubr.f32.mxu0 0.0
      %4715 = vmatmul.mubr.f32.gmra.mrb[0].mxu0 %v4513
      %v4716 = vpop.f32.mrb[0].mxu0
      %v4717 = vadd.f32 %v4396, %v4716
      %v4718 = vpop.f32.mrb[0].mxu0
      %4719 = vmatprep.mubr.f32.mxu0 0.0
      %4720 = vmatmul.mubr.f32.gmra.mrb[0].mxu0 %v4516
      %v4721 = vpop.f32.mrb[0].mxu0
      %v4722 = vadd.f32 %v4401, %v4721
      %v4723 = vpop.f32.mrb[0].mxu0
      %4724 = vmatprep.mubr.f32.mxu0 0.0
      %4725 = vmatmul.mubr.f32.gmra.mrb[0].mxu0 %v4519
      %v4726 = vpop.f32.mrb[0].mxu0
      %v4727 = vadd.f32 %v4406, %v4726
      %v4728 = vpop.f32.mrb[0].mxu0
      %4729 = vmatprep.mubr.f32.mxu0 0.0
      %4730 = vmatmul.mubr.f32.gmra.mrb[0].mxu0 %v4522
      %v4731 = vpop.f32.mrb[0].mxu0
      %v4732 = vadd.f32 %v4411, %v4731
      %v4733 = vpop.f32.mrb[0].mxu0
      %4734 = vmatprep.mubr.f32.mxu0 0.0
      %4735 = vmatmul.mubr.f32.gmra.mrb[0].mxu0 %v4525
      %v4736 = vpop.f32.mrb[0].mxu0
      %v4737 = vadd.f32 %v4416, %v4736
      %v4738 = vpop.f32.mrb[0].mxu0
      %4739 = vmatprep.mubr.f32.mxu0 0.0
      %4740 = vmatmul.mubr.f32.gmra.mrb[0].mxu0 %v4528
      %v4741 = vpop.f32.mrb[0].mxu0
      %v4742 = vadd.f32 %v4421, %v4741
      %v4743 = vpop.f32.mrb[0].mxu0
      %4744 = vmatprep.mubr.f32.mxu0 0.0
      %4745 = vmatmul.mubr.f32.gmra.mrb[0].mxu0 %v4531
      %v4746 = vpop.f32.mrb[0].mxu0
      %v4747 = vadd.f32 %v4426, %v4746
      %v4748 = vpop.f32.mrb[0].mxu0
      %4749 = vmatprep.mubr.f32.mxu0 0.0
      %4750 = vmatmul.mubr.f32.gmra.mrb[0].mxu0 %v4534
      %v4751 = vpop.f32.mrb[0].mxu0
      %v4752 = vadd.f32 %v4431, %v4751
      %v4753 = vpop.f32.mrb[0].mxu0
      %4754 = vmatprep.mubr.f32.mxu0 0.0
      %4755 = vmatmul.mubr.f32.gmra.mrb[0].mxu0 %v4537
      %v4756 = vpop.f32.mrb[0].mxu0
      %v4757 = vadd.f32 %v4436, %v4756
      %v4758 = vpop.f32.mrb[0].mxu0
      %4759 = vmatprep.mubr.f32.mxu0 0.0
      %4760 = vmatmul.mubr.f32.gmra.mrb[0].mxu0 %v4540
      %v4761 = vpop.f32.mrb[0].mxu0
      %v4762 = vadd.f32 %v4441, %v4761
      %v4763 = vpop.f32.mrb[0].mxu0
      %4764 = vmatprep.mubr.f32.mxu0 0.0
      %4765 = vmatmul.mubr.f32.gmra.mrb[0].mxu0 %v4543
      %v4766 = vpop.f32.mrb[0].mxu0
      %v4767 = vadd.f32 %v4446, %v4766
      %v4768 = vpop.f32.mrb[0].mxu0
      %4769 = vdwg.mxu0
      %v4770 = vld [vmem:[#allocation3 + $0xa] sm:$0xff]
      %v4771 = vld [vmem:[#allocation3 + $0x12] sm:$0xff]
      %v4772 = vld [vmem:[#allocation3 + $0x2a] sm:$0xff]
      %v4773 = vld [vmem:[#allocation3 + $0x32] sm:$0xff]
      %v4774 = vld [vmem:[#allocation3 + $0x4a] sm:$0xff]
      %v4775 = vld [vmem:[#allocation3 + $0x52] sm:$0xff]
      %v4776 = vld [vmem:[#allocation3 + $0x6a] sm:$0xff]
      %v4777 = vld [vmem:[#allocation3 + $0x72] sm:$0xff]
      %v4778 = vld [vmem:[#allocation3 + $0x8a] sm:$0xff]
      %v4779 = vld [vmem:[#allocation3 + $0x92] sm:$0xff]
      %v4780 = vld [vmem:[#allocation3 + $0xaa] sm:$0xff]
      %v4781 = vld [vmem:[#allocation3 + $0xb2] sm:$0xff]
      %v4782 = vld [vmem:[#allocation3 + $0xca] sm:$0xff]
      %v4783 = vld [vmem:[#allocation3 + $0xd2] sm:$0xff]
      %v4784 = vld [vmem:[#allocation3 + $0xea] sm:$0xff]
      %v4785 = vld [vmem:[#allocation3 + $0xf2] sm:$0xff]
      %v4786 = vld [vmem:[#allocation3 + $0x10a] sm:$0xff]
      %v4787 = vld [vmem:[#allocation3 + $0x112] sm:$0xff]
      %v4788 = vld [vmem:[#allocation3 + $0x12a] sm:$0xff]
      %v4789 = vld [vmem:[#allocation3 + $0x132] sm:$0xff]
      %v4790 = vld [vmem:[#allocation3 + $0x14a] sm:$0xff]
      %v4791 = vld [vmem:[#allocation3 + $0x152] sm:$0xff]
      %v4792 = vld [vmem:[#allocation3 + $0x16a] sm:$0xff]
      %v4793 = vld [vmem:[#allocation3 + $0x172] sm:$0xff]
      %v4794 = vld [vmem:[#allocation3 + $0x18a] sm:$0xff]
      %v4795 = vld [vmem:[#allocation3 + $0x192] sm:$0xff]
      %v4796 = vld [vmem:[#allocation3 + $0x1aa] sm:$0xff]
      %v4797 = vld [vmem:[#allocation3 + $0x1b2] sm:$0xff]
      %v4798 = vld [vmem:[#allocation3 + $0x1ca] sm:$0xff]
      %v4799 = vld [vmem:[#allocation3 + $0x1d2] sm:$0xff]
      %v4800 = vld [vmem:[#allocation3 + $0x1ea] sm:$0xff]
      %v4801 = vld [vmem:[#allocation3 + $0x1f2] sm:$0xff]
      %s4802 = scalar_lea.vmem %s3, 16
      %v4803 = vld [vmem:[%s4802] sm:$0xff]
      %v4805 = vsel %vm331, %v4770, 0
      %v4808 = vsel %vm331, %v4771, 0
      %v4811 = vsel %vm331, %v4772, 0
      %v4814 = vsel %vm331, %v4773, 0
      %v4817 = vsel %vm331, %v4774, 0
      %v4820 = vsel %vm331, %v4775, 0
      %v4823 = vsel %vm331, %v4776, 0
      %v4826 = vsel %vm331, %v4777, 0
      %v4829 = vsel %vm331, %v4778, 0
      %v4832 = vsel %vm331, %v4779, 0
      %v4835 = vsel %vm331, %v4780, 0
      %v4838 = vsel %vm331, %v4781, 0
      %v4841 = vsel %vm331, %v4782, 0
      %v4844 = vsel %vm331, %v4783, 0
      %v4847 = vsel %vm331, %v4784, 0
      %v4850 = vsel %vm331, %v4785, 0
      %v4853 = vsel %vm331, %v4786, 0
      %v4856 = vsel %vm331, %v4787, 0
      %v4859 = vsel %vm331, %v4788, 0
      %v4862 = vsel %vm331, %v4789, 0
      %v4865 = vsel %vm331, %v4790, 0
      %v4868 = vsel %vm331, %v4791, 0
      %v4871 = vsel %vm331, %v4792, 0
      %v4874 = vsel %vm331, %v4793, 0
      %v4877 = vsel %vm331, %v4794, 0
      %v4880 = vsel %vm331, %v4795, 0
      %v4883 = vsel %vm331, %v4796, 0
      %v4886 = vsel %vm331, %v4797, 0
      %v4889 = vsel %vm331, %v4798, 0
      %v4892 = vsel %vm331, %v4799, 0
      %v4895 = vsel %vm331, %v4800, 0
      %v4898 = vsel %vm331, %v4801, 0
      %4900 = vmatprep.subr.mxu0 0.0
      %4901 = vmatpush1.msra.mxu0 %v4803
      %4902 = vmatprep.subr.mxu0 0.0
      %4903 = vmatpush1.msra.mxu0 0.0
      %4904 = vmatprep.subr.mxu0 0.0
      %4905 = vmatpush1.msra.mxu0 0.0
      %4906 = vmatprep.subr.mxu0 0.0
      %4907 = vmatpush1.msra.mxu0 0.0
      %4908 = vmatprep.subr.mxu0 0.0
      %4909 = vmatpush1.msra.mxu0 0.0
      %4910 = vmatprep.subr.mxu0 0.0
      %4911 = vmatpush1.msra.mxu0 0.0
      %4912 = vmatprep.subr.mxu0 0.0
      %4913 = vmatpush1.msra.mxu0 0.0
      %4914 = vmatprep.subr.mxu0 0.0
      %4915 = vmatpush1.msra.mxu0 0.0
      %4916 = vmatprep.subr.mxu0 0.0
      %4917 = vmatpush1.msra.mxu0 0.0
      %4918 = vmatprep.subr.mxu0 0.0
      %4919 = vmatpush1.msra.mxu0 0.0
      %4920 = vmatprep.subr.mxu0 0.0
      %4921 = vmatpush1.msra.mxu0 0.0
      %4922 = vmatprep.subr.mxu0 0.0
      %4923 = vmatpush1.msra.mxu0 0.0
      %4924 = vmatprep.subr.mxu0 0.0
      %4925 = vmatpush1.msra.mxu0 0.0
      %4926 = vmatprep.subr.mxu0 0.0
      %4927 = vmatpush1.msra.mxu0 0.0
      %4928 = vmatprep.subr.mxu0 0.0
      %4929 = vmatpush1.msra.mxu0 0.0
      %4930 = vmatprep.subr.mxu0 0.0
      %4931 = vmatpush1.msra.mxu0 0.0
      %4932 = vmatprep.subr.mxu0 0.0
      %4933 = vmatpush1.msra.mxu0 0.0
      %4934 = vmatprep.subr.mxu0 0.0
      %4935 = vmatpush1.msra.mxu0 0.0
      %4936 = vmatprep.subr.mxu0 0.0
      %4937 = vmatpush1.msra.mxu0 0.0
      %4938 = vmatprep.subr.mxu0 0.0
      %4939 = vmatpush1.msra.mxu0 0.0
      %4940 = vmatprep.subr.mxu0 0.0
      %4941 = vmatpush1.msra.mxu0 0.0
      %4942 = vmatprep.subr.mxu0 0.0
      %4943 = vmatpush1.msra.mxu0 0.0
      %4944 = vmatprep.subr.mxu0 0.0
      %4945 = vmatpush1.msra.mxu0 0.0
      %4946 = vmatprep.subr.mxu0 0.0
      %4947 = vmatpush1.msra.mxu0 0.0
      %4948 = vmatprep.subr.mxu0 0.0
      %4949 = vmatpush1.msra.mxu0 0.0
      %4950 = vmatprep.subr.mxu0 0.0
      %4951 = vmatpush1.msra.mxu0 0.0
      %4952 = vmatprep.subr.mxu0 0.0
      %4953 = vmatpush1.msra.mxu0 0.0
      %4954 = vmatprep.subr.mxu0 0.0
      %4955 = vmatpush1.msra.mxu0 0.0
      %4956 = vmatprep.subr.mxu0 0.0
      %4957 = vmatpush1.msra.mxu0 0.0
      %4958 = vmatprep.subr.mxu0 0.0
      %4959 = vmatpush1.msra.mxu0 0.0
      %4960 = vmatprep.subr.mxu0 0.0
      %4961 = vmatpush1.msra.mxu0 0.0
      %4962 = vmatprep.subr.mxu0 0.0
      %4963 = vmatpush1.msra.mxu0 0.0
      %4964 = vmatprep.mubr.f32.mxu0 0.0
      %4965 = vmatmul.mubr.f32.gmra.mrb[0].mxu0 %v4805
      %v4966 = vpop.f32.mrb[0].mxu0
      %v4967 = vadd.f32 0.0, %v4966
      %v4968 = vpop.f32.mrb[0].mxu0
      %4969 = vmatprep.mubr.f32.mxu0 0.0
      %4970 = vmatmul.mubr.f32.gmra.mrb[0].mxu0 %v4808
      %v4971 = vpop.f32.mrb[0].mxu0
      %v4972 = vadd.f32 0.0, %v4971
      %v4973 = vpop.f32.mrb[0].mxu0
      %4974 = vmatprep.mubr.f32.mxu0 0.0
      %4975 = vmatmul.mubr.f32.gmra.mrb[0].mxu0 %v4811
      %v4976 = vpop.f32.mrb[0].mxu0
      %v4977 = vadd.f32 0.0, %v4976
      %v4978 = vpop.f32.mrb[0].mxu0
      %4979 = vmatprep.mubr.f32.mxu0 0.0
      %4980 = vmatmul.mubr.f32.gmra.mrb[0].mxu0 %v4814
      %v4981 = vpop.f32.mrb[0].mxu0
      %v4982 = vadd.f32 0.0, %v4981
      %v4983 = vpop.f32.mrb[0].mxu0
      %4984 = vmatprep.mubr.f32.mxu0 0.0
      %4985 = vmatmul.mubr.f32.gmra.mrb[0].mxu0 %v4817
      %v4986 = vpop.f32.mrb[0].mxu0
      %v4987 = vadd.f32 0.0, %v4986
      %v4988 = vpop.f32.mrb[0].mxu0
      %4989 = vmatprep.mubr.f32.mxu0 0.0
      %4990 = vmatmul.mubr.f32.gmra.mrb[0].mxu0 %v4820
      %v4991 = vpop.f32.mrb[0].mxu0
      %v4992 = vadd.f32 0.0, %v4991
      %v4993 = vpop.f32.mrb[0].mxu0
      %4994 = vmatprep.mubr.f32.mxu0 0.0
      %4995 = vmatmul.mubr.f32.gmra.mrb[0].mxu0 %v4823
      %v4996 = vpop.f32.mrb[0].mxu0
      %v4997 = vadd.f32 0.0, %v4996
      %v4998 = vpop.f32.mrb[0].mxu0
      %4999 = vmatprep.mubr.f32.mxu0 0.0
      %5000 = vmatmul.mubr.f32.gmra.mrb[0].mxu0 %v4826
      %v5001 = vpop.f32.mrb[0].mxu0
      %v5002 = vadd.f32 0.0, %v5001
      %v5003 = vpop.f32.mrb[0].mxu0
      %5004 = vmatprep.mubr.f32.mxu0 0.0
      %5005 = vmatmul.mubr.f32.gmra.mrb[0].mxu0 %v4829
      %v5006 = vpop.f32.mrb[0].mxu0
      %v5007 = vadd.f32 0.0, %v5006
      %v5008 = vpop.f32.mrb[0].mxu0
      %5009 = vmatprep.mubr.f32.mxu0 0.0
      %5010 = vmatmul.mubr.f32.gmra.mrb[0].mxu0 %v4832
      %v5011 = vpop.f32.mrb[0].mxu0
      %v5012 = vadd.f32 0.0, %v5011
      %v5013 = vpop.f32.mrb[0].mxu0
      %5014 = vmatprep.mubr.f32.mxu0 0.0
      %5015 = vmatmul.mubr.f32.gmra.mrb[0].mxu0 %v4835
      %v5016 = vpop.f32.mrb[0].mxu0
      %v5017 = vadd.f32 0.0, %v5016
      %v5018 = vpop.f32.mrb[0].mxu0
      %5019 = vmatprep.mubr.f32.mxu0 0.0
      %5020 = vmatmul.mubr.f32.gmra.mrb[0].mxu0 %v4838
      %v5021 = vpop.f32.mrb[0].mxu0
      %v5022 = vadd.f32 0.0, %v5021
      %v5023 = vpop.f32.mrb[0].mxu0
      %5024 = vmatprep.mubr.f32.mxu0 0.0
      %5025 = vmatmul.mubr.f32.gmra.mrb[0].mxu0 %v4841
      %v5026 = vpop.f32.mrb[0].mxu0
      %v5027 = vadd.f32 0.0, %v5026
      %v5028 = vpop.f32.mrb[0].mxu0
      %5029 = vmatprep.mubr.f32.mxu0 0.0
      %5030 = vmatmul.mubr.f32.gmra.mrb[0].mxu0 %v4844
      %v5031 = vpop.f32.mrb[0].mxu0
      %v5032 = vadd.f32 0.0, %v5031
      %v5033 = vpop.f32.mrb[0].mxu0
      %5034 = vmatprep.mubr.f32.mxu0 0.0
      %5035 = vmatmul.mubr.f32.gmra.mrb[0].mxu0 %v4847
      %v5036 = vpop.f32.mrb[0].mxu0
      %v5037 = vadd.f32 0.0, %v5036
      %v5038 = vpop.f32.mrb[0].mxu0
      %5039 = vmatprep.mubr.f32.mxu0 0.0
      %5040 = vmatmul.mubr.f32.gmra.mrb[0].mxu0 %v4850
      %v5041 = vpop.f32.mrb[0].mxu0
      %v5042 = vadd.f32 0.0, %v5041
      %v5043 = vpop.f32.mrb[0].mxu0
      %5044 = vmatprep.mubr.f32.mxu0 0.0
      %5045 = vmatmul.mubr.f32.gmra.mrb[0].mxu0 %v4853
      %v5046 = vpop.f32.mrb[0].mxu0
      %v5047 = vadd.f32 0.0, %v5046
      %v5048 = vpop.f32.mrb[0].mxu0
      %5049 = vmatprep.mubr.f32.mxu0 0.0
      %5050 = vmatmul.mubr.f32.gmra.mrb[0].mxu0 %v4856
      %v5051 = vpop.f32.mrb[0].mxu0
      %v5052 = vadd.f32 0.0, %v5051
      %v5053 = vpop.f32.mrb[0].mxu0
      %5054 = vmatprep.mubr.f32.mxu0 0.0
      %5055 = vmatmul.mubr.f32.gmra.mrb[0].mxu0 %v4859
      %v5056 = vpop.f32.mrb[0].mxu0
      %v5057 = vadd.f32 0.0, %v5056
      %v5058 = vpop.f32.mrb[0].mxu0
      %5059 = vmatprep.mubr.f32.mxu0 0.0
      %5060 = vmatmul.mubr.f32.gmra.mrb[0].mxu0 %v4862
      %v5061 = vpop.f32.mrb[0].mxu0
      %v5062 = vadd.f32 0.0, %v5061
      %v5063 = vpop.f32.mrb[0].mxu0
      %5064 = vmatprep.mubr.f32.mxu0 0.0
      %5065 = vmatmul.mubr.f32.gmra.mrb[0].mxu0 %v4865
      %v5066 = vpop.f32.mrb[0].mxu0
      %v5067 = vadd.f32 0.0, %v5066
      %v5068 = vpop.f32.mrb[0].mxu0
      %5069 = vmatprep.mubr.f32.mxu0 0.0
      %5070 = vmatmul.mubr.f32.gmra.mrb[0].mxu0 %v4868
      %v5071 = vpop.f32.mrb[0].mxu0
      %v5072 = vadd.f32 0.0, %v5071
      %v5073 = vpop.f32.mrb[0].mxu0
      %5074 = vmatprep.mubr.f32.mxu0 0.0
      %5075 = vmatmul.mubr.f32.gmra.mrb[0].mxu0 %v4871
      %v5076 = vpop.f32.mrb[0].mxu0
      %v5077 = vadd.f32 0.0, %v5076
      %v5078 = vpop.f32.mrb[0].mxu0
      %5079 = vmatprep.mubr.f32.mxu0 0.0
      %5080 = vmatmul.mubr.f32.gmra.mrb[0].mxu0 %v4874
      %v5081 = vpop.f32.mrb[0].mxu0
      %v5082 = vadd.f32 0.0, %v5081
      %v5083 = vpop.f32.mrb[0].mxu0
      %5084 = vmatprep.mubr.f32.mxu0 0.0
      %5085 = vmatmul.mubr.f32.gmra.mrb[0].mxu0 %v4877
      %v5086 = vpop.f32.mrb[0].mxu0
      %v5087 = vadd.f32 0.0, %v5086
      %v5088 = vpop.f32.mrb[0].mxu0
      %5089 = vmatprep.mubr.f32.mxu0 0.0
      %5090 = vmatmul.mubr.f32.gmra.mrb[0].mxu0 %v4880
      %v5091 = vpop.f32.mrb[0].mxu0
      %v5092 = vadd.f32 0.0, %v5091
      %v5093 = vpop.f32.mrb[0].mxu0
      %5094 = vmatprep.mubr.f32.mxu0 0.0
      %5095 = vmatmul.mubr.f32.gmra.mrb[0].mxu0 %v4883
      %v5096 = vpop.f32.mrb[0].mxu0
      %v5097 = vadd.f32 0.0, %v5096
      %v5098 = vpop.f32.mrb[0].mxu0
      %5099 = vmatprep.mubr.f32.mxu0 0.0
      %5100 = vmatmul.mubr.f32.gmra.mrb[0].mxu0 %v4886
      %v5101 = vpop.f32.mrb[0].mxu0
      %v5102 = vadd.f32 0.0, %v5101
      %v5103 = vpop.f32.mrb[0].mxu0
      %5104 = vmatprep.mubr.f32.mxu0 0.0
      %5105 = vmatmul.mubr.f32.gmra.mrb[0].mxu0 %v4889
      %v5106 = vpop.f32.mrb[0].mxu0
      %v5107 = vadd.f32 0.0, %v5106
      %v5108 = vpop.f32.mrb[0].mxu0
      %5109 = vmatprep.mubr.f32.mxu0 0.0
      %5110 = vmatmul.mubr.f32.gmra.mrb[0].mxu0 %v4892
      %v5111 = vpop.f32.mrb[0].mxu0
      %v5112 = vadd.f32 0.0, %v5111
      %v5113 = vpop.f32.mrb[0].mxu0
      %5114 = vmatprep.mubr.f32.mxu0 0.0
      %5115 = vmatmul.mubr.f32.gmra.mrb[0].mxu0 %v4895
      %v5116 = vpop.f32.mrb[0].mxu0
      %v5117 = vadd.f32 0.0, %v5116
      %v5118 = vpop.f32.mrb[0].mxu0
      %5119 = vmatprep.mubr.f32.mxu0 0.0
      %5120 = vmatmul.mubr.f32.gmra.mrb[0].mxu0 %v4898
      %v5121 = vpop.f32.mrb[0].mxu0
      %v5122 = vadd.f32 0.0, %v5121
      %v5123 = vpop.f32.mrb[0].mxu0
      %5124 = vdwg.mxu0
      %v5125 = vadd.f32 %v4612, %v4967
      %v5126 = vadd.f32 %v4617, %v4972
      %v5127 = vadd.f32 %v4622, %v4977
      %v5128 = vadd.f32 %v4627, %v4982
      %v5129 = vadd.f32 %v4632, %v4987
      %v5130 = vadd.f32 %v4637, %v4992
      %v5131 = vadd.f32 %v4642, %v4997
      %v5132 = vadd.f32 %v4647, %v5002
      %v5133 = vadd.f32 %v4652, %v5007
      %v5134 = vadd.f32 %v4657, %v5012
      %v5135 = vadd.f32 %v4662, %v5017
      %v5136 = vadd.f32 %v4667, %v5022
      %v5137 = vadd.f32 %v4672, %v5027
      %v5138 = vadd.f32 %v4677, %v5032
      %v5139 = vadd.f32 %v4682, %v5037
      %v5140 = vadd.f32 %v4687, %v5042
      %v5141 = vadd.f32 %v4692, %v5047
      %v5142 = vadd.f32 %v4697, %v5052
      %v5143 = vadd.f32 %v4702, %v5057
      %v5144 = vadd.f32 %v4707, %v5062
      %v5145 = vadd.f32 %v4712, %v5067
      %v5146 = vadd.f32 %v4717, %v5072
      %v5147 = vadd.f32 %v4722, %v5077
      %v5148 = vadd.f32 %v4727, %v5082
      %v5149 = vadd.f32 %v4732, %v5087
      %v5150 = vadd.f32 %v4737, %v5092
      %v5151 = vadd.f32 %v4742, %v5097
      %v5152 = vadd.f32 %v4747, %v5102
      %v5153 = vadd.f32 %v4752, %v5107
      %v5154 = vadd.f32 %v4757, %v5112
      %v5155 = vadd.f32 %v4762, %v5117
      %v5156 = vadd.f32 %v4767, %v5122
      %v5157 = vld [vmem:[%s350 + $0x6] sm:$0xff]
      %v5158 = vld [vmem:[%s350 + $0xe] sm:$0xff]
      %v5159 = vld [vmem:[%s350 + $0x26] sm:$0xff]
      %v5160 = vld [vmem:[%s350 + $0x2e] sm:$0xff]
      %v5161 = vld [vmem:[%s350 + $0x46] sm:$0xff]
      %v5162 = vld [vmem:[%s350 + $0x4e] sm:$0xff]
      %v5163 = vld [vmem:[%s350 + $0x66] sm:$0xff]
      %v5164 = vld [vmem:[%s350 + $0x6e] sm:$0xff]
      %v5165 = vld [vmem:[%s350 + $0x86] sm:$0xff]
      %v5166 = vld [vmem:[%s350 + $0x8e] sm:$0xff]
      %v5167 = vld [vmem:[%s350 + $0xa6] sm:$0xff]
      %v5168 = vld [vmem:[%s350 + $0xae] sm:$0xff]
      %v5169 = vld [vmem:[%s350 + $0xc6] sm:$0xff]
      %v5170 = vld [vmem:[%s350 + $0xce] sm:$0xff]
      %v5171 = vld [vmem:[%s350 + $0xe6] sm:$0xff]
      %v5172 = vld [vmem:[%s350 + $0xee] sm:$0xff]
      %v5173 = vld [vmem:[%s350 + $0x106] sm:$0xff]
      %v5174 = vld [vmem:[%s350 + $0x10e] sm:$0xff]
      %v5175 = vld [vmem:[%s350 + $0x126] sm:$0xff]
      %v5176 = vld [vmem:[%s350 + $0x12e] sm:$0xff]
      %v5177 = vld [vmem:[%s350 + $0x146] sm:$0xff]
      %v5178 = vld [vmem:[%s350 + $0x14e] sm:$0xff]
      %v5179 = vld [vmem:[%s350 + $0x166] sm:$0xff]
      %v5180 = vld [vmem:[%s350 + $0x16e] sm:$0xff]
      %v5181 = vld [vmem:[%s350 + $0x186] sm:$0xff]
      %v5182 = vld [vmem:[%s350 + $0x18e] sm:$0xff]
      %v5183 = vld [vmem:[%s350 + $0x1a6] sm:$0xff]
      %v5184 = vld [vmem:[%s350 + $0x1ae] sm:$0xff]
      %v5185 = vld [vmem:[%s350 + $0x1c6] sm:$0xff]
      %v5186 = vld [vmem:[%s350 + $0x1ce] sm:$0xff]
      %v5187 = vld [vmem:[%s350 + $0x1e6] sm:$0xff]
      %v5188 = vld [vmem:[%s350 + $0x1ee] sm:$0xff]
      %s5189 = scalar_lea.vmem %s3, 24
      %v5190 = vld [vmem:[%s5189] sm:$0xff]
      %v5192 = vsel %vm331, %v5157, 0
      %v5195 = vsel %vm331, %v5158, 0
      %v5198 = vsel %vm331, %v5159, 0
      %v5201 = vsel %vm331, %v5160, 0
      %v5204 = vsel %vm331, %v5161, 0
      %v5207 = vsel %vm331, %v5162, 0
      %v5210 = vsel %vm331, %v5163, 0
      %v5213 = vsel %vm331, %v5164, 0
      %v5216 = vsel %vm331, %v5165, 0
      %v5219 = vsel %vm331, %v5166, 0
      %v5222 = vsel %vm331, %v5167, 0
      %v5225 = vsel %vm331, %v5168, 0
      %v5228 = vsel %vm331, %v5169, 0
      %v5231 = vsel %vm331, %v5170, 0
      %v5234 = vsel %vm331, %v5171, 0
      %v5237 = vsel %vm331, %v5172, 0
      %v5240 = vsel %vm331, %v5173, 0
      %v5243 = vsel %vm331, %v5174, 0
      %v5246 = vsel %vm331, %v5175, 0
      %v5249 = vsel %vm331, %v5176, 0
      %v5252 = vsel %vm331, %v5177, 0
      %v5255 = vsel %vm331, %v5178, 0
      %v5258 = vsel %vm331, %v5179, 0
      %v5261 = vsel %vm331, %v5180, 0
      %v5264 = vsel %vm331, %v5181, 0
      %v5267 = vsel %vm331, %v5182, 0
      %v5270 = vsel %vm331, %v5183, 0
      %v5273 = vsel %vm331, %v5184, 0
      %v5276 = vsel %vm331, %v5185, 0
      %v5279 = vsel %vm331, %v5186, 0
      %v5282 = vsel %vm331, %v5187, 0
      %v5285 = vsel %vm331, %v5188, 0
      %5287 = vmatprep.subr.mxu0 0.0
      %5288 = vmatpush1.msra.mxu0 %v5190
      %5289 = vmatprep.subr.mxu0 0.0
      %5290 = vmatpush1.msra.mxu0 0.0
      %5291 = vmatprep.subr.mxu0 0.0
      %5292 = vmatpush1.msra.mxu0 0.0
      %5293 = vmatprep.subr.mxu0 0.0
      %5294 = vmatpush1.msra.mxu0 0.0
      %5295 = vmatprep.subr.mxu0 0.0
      %5296 = vmatpush1.msra.mxu0 0.0
      %5297 = vmatprep.subr.mxu0 0.0
      %5298 = vmatpush1.msra.mxu0 0.0
      %5299 = vmatprep.subr.mxu0 0.0
      %5300 = vmatpush1.msra.mxu0 0.0
      %5301 = vmatprep.subr.mxu0 0.0
      %5302 = vmatpush1.msra.mxu0 0.0
      %5303 = vmatprep.subr.mxu0 0.0
      %5304 = vmatpush1.msra.mxu0 0.0
      %5305 = vmatprep.subr.mxu0 0.0
      %5306 = vmatpush1.msra.mxu0 0.0
      %5307 = vmatprep.subr.mxu0 0.0
      %5308 = vmatpush1.msra.mxu0 0.0
      %5309 = vmatprep.subr.mxu0 0.0
      %5310 = vmatpush1.msra.mxu0 0.0
      %5311 = vmatprep.subr.mxu0 0.0
      %5312 = vmatpush1.msra.mxu0 0.0
      %5313 = vmatprep.subr.mxu0 0.0
      %5314 = vmatpush1.msra.mxu0 0.0
      %5315 = vmatprep.subr.mxu0 0.0
      %5316 = vmatpush1.msra.mxu0 0.0
      %5317 = vmatprep.subr.mxu0 0.0
      %5318 = vmatpush1.msra.mxu0 0.0
      %5319 = vmatprep.subr.mxu0 0.0
      %5320 = vmatpush1.msra.mxu0 0.0
      %5321 = vmatprep.subr.mxu0 0.0
      %5322 = vmatpush1.msra.mxu0 0.0
      %5323 = vmatprep.subr.mxu0 0.0
      %5324 = vmatpush1.msra.mxu0 0.0
      %5325 = vmatprep.subr.mxu0 0.0
      %5326 = vmatpush1.msra.mxu0 0.0
      %5327 = vmatprep.subr.mxu0 0.0
      %5328 = vmatpush1.msra.mxu0 0.0
      %5329 = vmatprep.subr.mxu0 0.0
      %5330 = vmatpush1.msra.mxu0 0.0
      %5331 = vmatprep.subr.mxu0 0.0
      %5332 = vmatpush1.msra.mxu0 0.0
      %5333 = vmatprep.subr.mxu0 0.0
      %5334 = vmatpush1.msra.mxu0 0.0
      %5335 = vmatprep.subr.mxu0 0.0
      %5336 = vmatpush1.msra.mxu0 0.0
      %5337 = vmatprep.subr.mxu0 0.0
      %5338 = vmatpush1.msra.mxu0 0.0
      %5339 = vmatprep.subr.mxu0 0.0
      %5340 = vmatpush1.msra.mxu0 0.0
      %5341 = vmatprep.subr.mxu0 0.0
      %5342 = vmatpush1.msra.mxu0 0.0
      %5343 = vmatprep.subr.mxu0 0.0
      %5344 = vmatpush1.msra.mxu0 0.0
      %5345 = vmatprep.subr.mxu0 0.0
      %5346 = vmatpush1.msra.mxu0 0.0
      %5347 = vmatprep.subr.mxu0 0.0
      %5348 = vmatpush1.msra.mxu0 0.0
      %5349 = vmatprep.subr.mxu0 0.0
      %5350 = vmatpush1.msra.mxu0 0.0
      %5351 = vmatprep.mubr.f32.mxu0 0.0
      %5352 = vmatmul.mubr.f32.gmra.mrb[0].mxu0 %v5192
      %v5353 = vpop.f32.mrb[0].mxu0
      %v5354 = vadd.f32 0.0, %v5353
      %v5355 = vpop.f32.mrb[0].mxu0
      %5356 = vmatprep.mubr.f32.mxu0 0.0
      %5357 = vmatmul.mubr.f32.gmra.mrb[0].mxu0 %v5195
      %v5358 = vpop.f32.mrb[0].mxu0
      %v5359 = vadd.f32 0.0, %v5358
      %v5360 = vpop.f32.mrb[0].mxu0
      %5361 = vmatprep.mubr.f32.mxu0 0.0
      %5362 = vmatmul.mubr.f32.gmra.mrb[0].mxu0 %v5198
      %v5363 = vpop.f32.mrb[0].mxu0
      %v5364 = vadd.f32 0.0, %v5363
      %v5365 = vpop.f32.mrb[0].mxu0
      %5366 = vmatprep.mubr.f32.mxu0 0.0
      %5367 = vmatmul.mubr.f32.gmra.mrb[0].mxu0 %v5201
      %v5368 = vpop.f32.mrb[0].mxu0
      %v5369 = vadd.f32 0.0, %v5368
      %v5370 = vpop.f32.mrb[0].mxu0
      %5371 = vmatprep.mubr.f32.mxu0 0.0
      %5372 = vmatmul.mubr.f32.gmra.mrb[0].mxu0 %v5204
      %v5373 = vpop.f32.mrb[0].mxu0
      %v5374 = vadd.f32 0.0, %v5373
      %v5375 = vpop.f32.mrb[0].mxu0
      %5376 = vmatprep.mubr.f32.mxu0 0.0
      %5377 = vmatmul.mubr.f32.gmra.mrb[0].mxu0 %v5207
      %v5378 = vpop.f32.mrb[0].mxu0
      %v5379 = vadd.f32 0.0, %v5378
      %v5380 = vpop.f32.mrb[0].mxu0
      %5381 = vmatprep.mubr.f32.mxu0 0.0
      %5382 = vmatmul.mubr.f32.gmra.mrb[0].mxu0 %v5210
      %v5383 = vpop.f32.mrb[0].mxu0
      %v5384 = vadd.f32 0.0, %v5383
      %v5385 = vpop.f32.mrb[0].mxu0
      %5386 = vmatprep.mubr.f32.mxu0 0.0
      %5387 = vmatmul.mubr.f32.gmra.mrb[0].mxu0 %v5213
      %v5388 = vpop.f32.mrb[0].mxu0
      %v5389 = vadd.f32 0.0, %v5388
      %v5390 = vpop.f32.mrb[0].mxu0
      %5391 = vmatprep.mubr.f32.mxu0 0.0
      %5392 = vmatmul.mubr.f32.gmra.mrb[0].mxu0 %v5216
      %v5393 = vpop.f32.mrb[0].mxu0
      %v5394 = vadd.f32 0.0, %v5393
      %v5395 = vpop.f32.mrb[0].mxu0
      %5396 = vmatprep.mubr.f32.mxu0 0.0
      %5397 = vmatmul.mubr.f32.gmra.mrb[0].mxu0 %v5219
      %v5398 = vpop.f32.mrb[0].mxu0
      %v5399 = vadd.f32 0.0, %v5398
      %v5400 = vpop.f32.mrb[0].mxu0
      %5401 = vmatprep.mubr.f32.mxu0 0.0
      %5402 = vmatmul.mubr.f32.gmra.mrb[0].mxu0 %v5222
      %v5403 = vpop.f32.mrb[0].mxu0
      %v5404 = vadd.f32 0.0, %v5403
      %v5405 = vpop.f32.mrb[0].mxu0
      %5406 = vmatprep.mubr.f32.mxu0 0.0
      %5407 = vmatmul.mubr.f32.gmra.mrb[0].mxu0 %v5225
      %v5408 = vpop.f32.mrb[0].mxu0
      %v5409 = vadd.f32 0.0, %v5408
      %v5410 = vpop.f32.mrb[0].mxu0
      %5411 = vmatprep.mubr.f32.mxu0 0.0
      %5412 = vmatmul.mubr.f32.gmra.mrb[0].mxu0 %v5228
      %v5413 = vpop.f32.mrb[0].mxu0
      %v5414 = vadd.f32 0.0, %v5413
      %v5415 = vpop.f32.mrb[0].mxu0
      %5416 = vmatprep.mubr.f32.mxu0 0.0
      %5417 = vmatmul.mubr.f32.gmra.mrb[0].mxu0 %v5231
      %v5418 = vpop.f32.mrb[0].mxu0
      %v5419 = vadd.f32 0.0, %v5418
      %v5420 = vpop.f32.mrb[0].mxu0
      %5421 = vmatprep.mubr.f32.mxu0 0.0
      %5422 = vmatmul.mubr.f32.gmra.mrb[0].mxu0 %v5234
      %v5423 = vpop.f32.mrb[0].mxu0
      %v5424 = vadd.f32 0.0, %v5423
      %v5425 = vpop.f32.mrb[0].mxu0
      %5426 = vmatprep.mubr.f32.mxu0 0.0
      %5427 = vmatmul.mubr.f32.gmra.mrb[0].mxu0 %v5237
      %v5428 = vpop.f32.mrb[0].mxu0
      %v5429 = vadd.f32 0.0, %v5428
      %v5430 = vpop.f32.mrb[0].mxu0
      %5431 = vmatprep.mubr.f32.mxu0 0.0
      %5432 = vmatmul.mubr.f32.gmra.mrb[0].mxu0 %v5240
      %v5433 = vpop.f32.mrb[0].mxu0
      %v5434 = vadd.f32 0.0, %v5433
      %v5435 = vpop.f32.mrb[0].mxu0
      %5436 = vmatprep.mubr.f32.mxu0 0.0
      %5437 = vmatmul.mubr.f32.gmra.mrb[0].mxu0 %v5243
      %v5438 = vpop.f32.mrb[0].mxu0
      %v5439 = vadd.f32 0.0, %v5438
      %v5440 = vpop.f32.mrb[0].mxu0
      %5441 = vmatprep.mubr.f32.mxu0 0.0
      %5442 = vmatmul.mubr.f32.gmra.mrb[0].mxu0 %v5246
      %v5443 = vpop.f32.mrb[0].mxu0
      %v5444 = vadd.f32 0.0, %v5443
      %v5445 = vpop.f32.mrb[0].mxu0
      %5446 = vmatprep.mubr.f32.mxu0 0.0
      %5447 = vmatmul.mubr.f32.gmra.mrb[0].mxu0 %v5249
      %v5448 = vpop.f32.mrb[0].mxu0
      %v5449 = vadd.f32 0.0, %v5448
      %v5450 = vpop.f32.mrb[0].mxu0
      %5451 = vmatprep.mubr.f32.mxu0 0.0
      %5452 = vmatmul.mubr.f32.gmra.mrb[0].mxu0 %v5252
      %v5453 = vpop.f32.mrb[0].mxu0
      %v5454 = vadd.f32 0.0, %v5453
      %v5455 = vpop.f32.mrb[0].mxu0
      %5456 = vmatprep.mubr.f32.mxu0 0.0
      %5457 = vmatmul.mubr.f32.gmra.mrb[0].mxu0 %v5255
      %v5458 = vpop.f32.mrb[0].mxu0
      %v5459 = vadd.f32 0.0, %v5458
      %v5460 = vpop.f32.mrb[0].mxu0
      %5461 = vmatprep.mubr.f32.mxu0 0.0
      %5462 = vmatmul.mubr.f32.gmra.mrb[0].mxu0 %v5258
      %v5463 = vpop.f32.mrb[0].mxu0
      %v5464 = vadd.f32 0.0, %v5463
      %v5465 = vpop.f32.mrb[0].mxu0
      %5466 = vmatprep.mubr.f32.mxu0 0.0
      %5467 = vmatmul.mubr.f32.gmra.mrb[0].mxu0 %v5261
      %v5468 = vpop.f32.mrb[0].mxu0
      %v5469 = vadd.f32 0.0, %v5468
      %v5470 = vpop.f32.mrb[0].mxu0
      %5471 = vmatprep.mubr.f32.mxu0 0.0
      %5472 = vmatmul.mubr.f32.gmra.mrb[0].mxu0 %v5264
      %v5473 = vpop.f32.mrb[0].mxu0
      %v5474 = vadd.f32 0.0, %v5473
      %v5475 = vpop.f32.mrb[0].mxu0
      %5476 = vmatprep.mubr.f32.mxu0 0.0
      %5477 = vmatmul.mubr.f32.gmra.mrb[0].mxu0 %v5267
      %v5478 = vpop.f32.mrb[0].mxu0
      %v5479 = vadd.f32 0.0, %v5478
      %v5480 = vpop.f32.mrb[0].mxu0
      %5481 = vmatprep.mubr.f32.mxu0 0.0
      %5482 = vmatmul.mubr.f32.gmra.mrb[0].mxu0 %v5270
      %v5483 = vpop.f32.mrb[0].mxu0
      %v5484 = vadd.f32 0.0, %v5483
      %v5485 = vpop.f32.mrb[0].mxu0
      %5486 = vmatprep.mubr.f32.mxu0 0.0
      %5487 = vmatmul.mubr.f32.gmra.mrb[0].mxu0 %v5273
      %v5488 = vpop.f32.mrb[0].mxu0
      %v5489 = vadd.f32 0.0, %v5488
      %v5490 = vpop.f32.mrb[0].mxu0
      %5491 = vmatprep.mubr.f32.mxu0 0.0
      %5492 = vmatmul.mubr.f32.gmra.mrb[0].mxu0 %v5276
      %v5493 = vpop.f32.mrb[0].mxu0
      %v5494 = vadd.f32 0.0, %v5493
      %v5495 = vpop.f32.mrb[0].mxu0
      %5496 = vmatprep.mubr.f32.mxu0 0.0
      %5497 = vmatmul.mubr.f32.gmra.mrb[0].mxu0 %v5279
      %v5498 = vpop.f32.mrb[0].mxu0
      %v5499 = vadd.f32 0.0, %v5498
      %v5500 = vpop.f32.mrb[0].mxu0
      %5501 = vmatprep.mubr.f32.mxu0 0.0
      %5502 = vmatmul.mubr.f32.gmra.mrb[0].mxu0 %v5282
      %v5503 = vpop.f32.mrb[0].mxu0
      %v5504 = vadd.f32 0.0, %v5503
      %v5505 = vpop.f32.mrb[0].mxu0
      %5506 = vmatprep.mubr.f32.mxu0 0.0
      %5507 = vmatmul.mubr.f32.gmra.mrb[0].mxu0 %v5285
      %v5508 = vpop.f32.mrb[0].mxu0
      %v5509 = vadd.f32 0.0, %v5508
      %v5510 = vpop.f32.mrb[0].mxu0
      %5511 = vdwg.mxu0
      %v5512 = vadd.f32 %v5125, %v5354
      %v5513 = vadd.f32 %v5126, %v5359
      %v5514 = vadd.f32 %v5127, %v5364
      %v5515 = vadd.f32 %v5128, %v5369
      %v5516 = vadd.f32 %v5129, %v5374
      %v5517 = vadd.f32 %v5130, %v5379
      %v5518 = vadd.f32 %v5131, %v5384
      %v5519 = vadd.f32 %v5132, %v5389
      %v5520 = vadd.f32 %v5133, %v5394
      %v5521 = vadd.f32 %v5134, %v5399
      %v5522 = vadd.f32 %v5135, %v5404
      %v5523 = vadd.f32 %v5136, %v5409
      %v5524 = vadd.f32 %v5137, %v5414
      %v5525 = vadd.f32 %v5138, %v5419
      %v5526 = vadd.f32 %v5139, %v5424
      %v5527 = vadd.f32 %v5140, %v5429
      %v5528 = vadd.f32 %v5141, %v5434
      %v5529 = vadd.f32 %v5142, %v5439
      %v5530 = vadd.f32 %v5143, %v5444
      %v5531 = vadd.f32 %v5144, %v5449
      %v5532 = vadd.f32 %v5145, %v5454
      %v5533 = vadd.f32 %v5146, %v5459
      %v5534 = vadd.f32 %v5147, %v5464
      %v5535 = vadd.f32 %v5148, %v5469
      %v5536 = vadd.f32 %v5149, %v5474
      %v5537 = vadd.f32 %v5150, %v5479
      %v5538 = vadd.f32 %v5151, %v5484
      %v5539 = vadd.f32 %v5152, %v5489
      %v5540 = vadd.f32 %v5153, %v5494
      %v5541 = vadd.f32 %v5154, %v5499
      %v5542 = vadd.f32 %v5155, %v5504
      %v5543 = vadd.f32 %v5156, %v5509
      %v5544 = vld [vmem:[%s350 + $0x8] sm:$0xff]
      %v5545 = vld [vmem:[%s350 + $0x10] sm:$0xff]
      %v5546 = vld [vmem:[%s350 + $0x28] sm:$0xff]
      %v5547 = vld [vmem:[%s350 + $0x30] sm:$0xff]
      %v5548 = vld [vmem:[%s350 + $0x48] sm:$0xff]
      %v5549 = vld [vmem:[%s350 + $0x50] sm:$0xff]
      %v5550 = vld [vmem:[%s350 + $0x68] sm:$0xff]
      %v5551 = vld [vmem:[%s350 + $0x70] sm:$0xff]
      %v5552 = vld [vmem:[%s350 + $0x88] sm:$0xff]
      %v5553 = vld [vmem:[%s350 + $0x90] sm:$0xff]
      %v5554 = vld [vmem:[%s350 + $0xa8] sm:$0xff]
      %v5555 = vld [vmem:[%s350 + $0xb0] sm:$0xff]
      %v5556 = vld [vmem:[%s350 + $0xc8] sm:$0xff]
      %v5557 = vld [vmem:[%s350 + $0xd0] sm:$0xff]
      %v5558 = vld [vmem:[%s350 + $0xe8] sm:$0xff]
      %v5559 = vld [vmem:[%s350 + $0xf0] sm:$0xff]
      %v5560 = vld [vmem:[%s350 + $0x108] sm:$0xff]
      %v5561 = vld [vmem:[%s350 + $0x110] sm:$0xff]
      %v5562 = vld [vmem:[%s350 + $0x128] sm:$0xff]
      %v5563 = vld [vmem:[%s350 + $0x130] sm:$0xff]
      %v5564 = vld [vmem:[%s350 + $0x148] sm:$0xff]
      %v5565 = vld [vmem:[%s350 + $0x150] sm:$0xff]
      %v5566 = vld [vmem:[%s350 + $0x168] sm:$0xff]
      %v5567 = vld [vmem:[%s350 + $0x170] sm:$0xff]
      %v5568 = vld [vmem:[%s350 + $0x188] sm:$0xff]
      %v5569 = vld [vmem:[%s350 + $0x190] sm:$0xff]
      %v5570 = vld [vmem:[%s350 + $0x1a8] sm:$0xff]
      %v5571 = vld [vmem:[%s350 + $0x1b0] sm:$0xff]
      %v5572 = vld [vmem:[%s350 + $0x1c8] sm:$0xff]
      %v5573 = vld [vmem:[%s350 + $0x1d0] sm:$0xff]
      %v5574 = vld [vmem:[%s350 + $0x1e8] sm:$0xff]
      %v5575 = vld [vmem:[%s350 + $0x1f0] sm:$0xff]
      %s5576 = scalar_lea.vmem %s3, 32
      %v5577 = vld [vmem:[%s5576] sm:$0xff]
      %v5579 = vsel %vm331, %v5544, 0
      %v5582 = vsel %vm331, %v5545, 0
      %v5585 = vsel %vm331, %v5546, 0
      %v5588 = vsel %vm331, %v5547, 0
      %v5591 = vsel %vm331, %v5548, 0
      %v5594 = vsel %vm331, %v5549, 0
      %v5597 = vsel %vm331, %v5550, 0
      %v5600 = vsel %vm331, %v5551, 0
      %v5603 = vsel %vm331, %v5552, 0
      %v5606 = vsel %vm331, %v5553, 0
      %v5609 = vsel %vm331, %v5554, 0
      %v5612 = vsel %vm331, %v5555, 0
      %v5615 = vsel %vm331, %v5556, 0
      %v5618 = vsel %vm331, %v5557, 0
      %v5621 = vsel %vm331, %v5558, 0
      %v5624 = vsel %vm331, %v5559, 0
      %v5627 = vsel %vm331, %v5560, 0
      %v5630 = vsel %vm331, %v5561, 0
      %v5633 = vsel %vm331, %v5562, 0
      %v5636 = vsel %vm331, %v5563, 0
      %v5639 = vsel %vm331, %v5564, 0
      %v5642 = vsel %vm331, %v5565, 0
      %v5645 = vsel %vm331, %v5566, 0
      %v5648 = vsel %vm331, %v5567, 0
      %v5651 = vsel %vm331, %v5568, 0
      %v5654 = vsel %vm331, %v5569, 0
      %v5657 = vsel %vm331, %v5570, 0
      %v5660 = vsel %vm331, %v5571, 0
      %v5663 = vsel %vm331, %v5572, 0
      %v5666 = vsel %vm331, %v5573, 0
      %v5669 = vsel %vm331, %v5574, 0
      %v5672 = vsel %vm331, %v5575, 0
      %5674 = vmatprep.subr.mxu0 0.0
      %5675 = vmatpush1.msra.mxu0 %v5577
      %5676 = vmatprep.subr.mxu0 0.0
      %5677 = vmatpush1.msra.mxu0 0.0
      %5678 = vmatprep.subr.mxu0 0.0
      %5679 = vmatpush1.msra.mxu0 0.0
      %5680 = vmatprep.subr.mxu0 0.0
      %5681 = vmatpush1.msra.mxu0 0.0
      %5682 = vmatprep.subr.mxu0 0.0
      %5683 = vmatpush1.msra.mxu0 0.0
      %5684 = vmatprep.subr.mxu0 0.0
      %5685 = vmatpush1.msra.mxu0 0.0
      %5686 = vmatprep.subr.mxu0 0.0
      %5687 = vmatpush1.msra.mxu0 0.0
      %5688 = vmatprep.subr.mxu0 0.0
      %5689 = vmatpush1.msra.mxu0 0.0
      %5690 = vmatprep.subr.mxu0 0.0
      %5691 = vmatpush1.msra.mxu0 0.0
      %5692 = vmatprep.subr.mxu0 0.0
      %5693 = vmatpush1.msra.mxu0 0.0
      %5694 = vmatprep.subr.mxu0 0.0
      %5695 = vmatpush1.msra.mxu0 0.0
      %5696 = vmatprep.subr.mxu0 0.0
      %5697 = vmatpush1.msra.mxu0 0.0
      %5698 = vmatprep.subr.mxu0 0.0
      %5699 = vmatpush1.msra.mxu0 0.0
      %5700 = vmatprep.subr.mxu0 0.0
      %5701 = vmatpush1.msra.mxu0 0.0
      %5702 = vmatprep.subr.mxu0 0.0
      %5703 = vmatpush1.msra.mxu0 0.0
      %5704 = vmatprep.subr.mxu0 0.0
      %5705 = vmatpush1.msra.mxu0 0.0
      %5706 = vmatprep.subr.mxu0 0.0
      %5707 = vmatpush1.msra.mxu0 0.0
      %5708 = vmatprep.subr.mxu0 0.0
      %5709 = vmatpush1.msra.mxu0 0.0
      %5710 = vmatprep.subr.mxu0 0.0
      %5711 = vmatpush1.msra.mxu0 0.0
      %5712 = vmatprep.subr.mxu0 0.0
      %5713 = vmatpush1.msra.mxu0 0.0
      %5714 = vmatprep.subr.mxu0 0.0
      %5715 = vmatpush1.msra.mxu0 0.0
      %5716 = vmatprep.subr.mxu0 0.0
      %5717 = vmatpush1.msra.mxu0 0.0
      %5718 = vmatprep.subr.mxu0 0.0
      %5719 = vmatpush1.msra.mxu0 0.0
      %5720 = vmatprep.subr.mxu0 0.0
      %5721 = vmatpush1.msra.mxu0 0.0
      %5722 = vmatprep.subr.mxu0 0.0
      %5723 = vmatpush1.msra.mxu0 0.0
      %5724 = vmatprep.subr.mxu0 0.0
      %5725 = vmatpush1.msra.mxu0 0.0
      %5726 = vmatprep.subr.mxu0 0.0
      %5727 = vmatpush1.msra.mxu0 0.0
      %5728 = vmatprep.subr.mxu0 0.0
      %5729 = vmatpush1.msra.mxu0 0.0
      %5730 = vmatprep.subr.mxu0 0.0
      %5731 = vmatpush1.msra.mxu0 0.0
      %5732 = vmatprep.subr.mxu0 0.0
      %5733 = vmatpush1.msra.mxu0 0.0
      %5734 = vmatprep.subr.mxu0 0.0
      %5735 = vmatpush1.msra.mxu0 0.0
      %5736 = vmatprep.subr.mxu0 0.0
      %5737 = vmatpush1.msra.mxu0 0.0
      %5738 = vmatprep.mubr.f32.mxu0 0.0
      %5739 = vmatmul.mubr.f32.gmra.mrb[0].mxu0 %v5579
      %v5740 = vpop.f32.mrb[0].mxu0
      %v5741 = vadd.f32 0.0, %v5740
      %v5742 = vpop.f32.mrb[0].mxu0
      %5743 = vmatprep.mubr.f32.mxu0 0.0
      %5744 = vmatmul.mubr.f32.gmra.mrb[0].mxu0 %v5582
      %v5745 = vpop.f32.mrb[0].mxu0
      %v5746 = vadd.f32 0.0, %v5745
      %v5747 = vpop.f32.mrb[0].mxu0
      %5748 = vmatprep.mubr.f32.mxu0 0.0
      %5749 = vmatmul.mubr.f32.gmra.mrb[0].mxu0 %v5585
      %v5750 = vpop.f32.mrb[0].mxu0
      %v5751 = vadd.f32 0.0, %v5750
      %v5752 = vpop.f32.mrb[0].mxu0
      %5753 = vmatprep.mubr.f32.mxu0 0.0
      %5754 = vmatmul.mubr.f32.gmra.mrb[0].mxu0 %v5588
      %v5755 = vpop.f32.mrb[0].mxu0
      %v5756 = vadd.f32 0.0, %v5755
      %v5757 = vpop.f32.mrb[0].mxu0
      %5758 = vmatprep.mubr.f32.mxu0 0.0
      %5759 = vmatmul.mubr.f32.gmra.mrb[0].mxu0 %v5591
      %v5760 = vpop.f32.mrb[0].mxu0
      %v5761 = vadd.f32 0.0, %v5760
      %v5762 = vpop.f32.mrb[0].mxu0
      %5763 = vmatprep.mubr.f32.mxu0 0.0
      %5764 = vmatmul.mubr.f32.gmra.mrb[0].mxu0 %v5594
      %v5765 = vpop.f32.mrb[0].mxu0
      %v5766 = vadd.f32 0.0, %v5765
      %v5767 = vpop.f32.mrb[0].mxu0
      %5768 = vmatprep.mubr.f32.mxu0 0.0
      %5769 = vmatmul.mubr.f32.gmra.mrb[0].mxu0 %v5597
      %v5770 = vpop.f32.mrb[0].mxu0
      %v5771 = vadd.f32 0.0, %v5770
      %v5772 = vpop.f32.mrb[0].mxu0
      %5773 = vmatprep.mubr.f32.mxu0 0.0
      %5774 = vmatmul.mubr.f32.gmra.mrb[0].mxu0 %v5600
      %v5775 = vpop.f32.mrb[0].mxu0
      %v5776 = vadd.f32 0.0, %v5775
      %v5777 = vpop.f32.mrb[0].mxu0
      %5778 = vmatprep.mubr.f32.mxu0 0.0
      %5779 = vmatmul.mubr.f32.gmra.mrb[0].mxu0 %v5603
      %v5780 = vpop.f32.mrb[0].mxu0
      %v5781 = vadd.f32 0.0, %v5780
      %v5782 = vpop.f32.mrb[0].mxu0
      %5783 = vmatprep.mubr.f32.mxu0 0.0
      %5784 = vmatmul.mubr.f32.gmra.mrb[0].mxu0 %v5606
      %v5785 = vpop.f32.mrb[0].mxu0
      %v5786 = vadd.f32 0.0, %v5785
      %v5787 = vpop.f32.mrb[0].mxu0
      %5788 = vmatprep.mubr.f32.mxu0 0.0
      %5789 = vmatmul.mubr.f32.gmra.mrb[0].mxu0 %v5609
      %v5790 = vpop.f32.mrb[0].mxu0
      %v5791 = vadd.f32 0.0, %v5790
      %v5792 = vpop.f32.mrb[0].mxu0
      %5793 = vmatprep.mubr.f32.mxu0 0.0
      %5794 = vmatmul.mubr.f32.gmra.mrb[0].mxu0 %v5612
      %v5795 = vpop.f32.mrb[0].mxu0
      %v5796 = vadd.f32 0.0, %v5795
      %v5797 = vpop.f32.mrb[0].mxu0
      %5798 = vmatprep.mubr.f32.mxu0 0.0
      %5799 = vmatmul.mubr.f32.gmra.mrb[0].mxu0 %v5615
      %v5800 = vpop.f32.mrb[0].mxu0
      %v5801 = vadd.f32 0.0, %v5800
      %v5802 = vpop.f32.mrb[0].mxu0
      %5803 = vmatprep.mubr.f32.mxu0 0.0
      %5804 = vmatmul.mubr.f32.gmra.mrb[0].mxu0 %v5618
      %v5805 = vpop.f32.mrb[0].mxu0
      %v5806 = vadd.f32 0.0, %v5805
      %v5807 = vpop.f32.mrb[0].mxu0
      %5808 = vmatprep.mubr.f32.mxu0 0.0
      %5809 = vmatmul.mubr.f32.gmra.mrb[0].mxu0 %v5621
      %v5810 = vpop.f32.mrb[0].mxu0
      %v5811 = vadd.f32 0.0, %v5810
      %v5812 = vpop.f32.mrb[0].mxu0
      %5813 = vmatprep.mubr.f32.mxu0 0.0
      %5814 = vmatmul.mubr.f32.gmra.mrb[0].mxu0 %v5624
      %v5815 = vpop.f32.mrb[0].mxu0
      %v5816 = vadd.f32 0.0, %v5815
      %v5817 = vpop.f32.mrb[0].mxu0
      %5818 = vmatprep.mubr.f32.mxu0 0.0
      %5819 = vmatmul.mubr.f32.gmra.mrb[0].mxu0 %v5627
      %v5820 = vpop.f32.mrb[0].mxu0
      %v5821 = vadd.f32 0.0, %v5820
      %v5822 = vpop.f32.mrb[0].mxu0
      %5823 = vmatprep.mubr.f32.mxu0 0.0
      %5824 = vmatmul.mubr.f32.gmra.mrb[0].mxu0 %v5630
      %v5825 = vpop.f32.mrb[0].mxu0
      %v5826 = vadd.f32 0.0, %v5825
      %v5827 = vpop.f32.mrb[0].mxu0
      %5828 = vmatprep.mubr.f32.mxu0 0.0
      %5829 = vmatmul.mubr.f32.gmra.mrb[0].mxu0 %v5633
      %v5830 = vpop.f32.mrb[0].mxu0
      %v5831 = vadd.f32 0.0, %v5830
      %v5832 = vpop.f32.mrb[0].mxu0
      %5833 = vmatprep.mubr.f32.mxu0 0.0
      %5834 = vmatmul.mubr.f32.gmra.mrb[0].mxu0 %v5636
      %v5835 = vpop.f32.mrb[0].mxu0
      %v5836 = vadd.f32 0.0, %v5835
      %v5837 = vpop.f32.mrb[0].mxu0
      %5838 = vmatprep.mubr.f32.mxu0 0.0
      %5839 = vmatmul.mubr.f32.gmra.mrb[0].mxu0 %v5639
      %v5840 = vpop.f32.mrb[0].mxu0
      %v5841 = vadd.f32 0.0, %v5840
      %v5842 = vpop.f32.mrb[0].mxu0
      %5843 = vmatprep.mubr.f32.mxu0 0.0
      %5844 = vmatmul.mubr.f32.gmra.mrb[0].mxu0 %v5642
      %v5845 = vpop.f32.mrb[0].mxu0
      %v5846 = vadd.f32 0.0, %v5845
      %v5847 = vpop.f32.mrb[0].mxu0
      %5848 = vmatprep.mubr.f32.mxu0 0.0
      %5849 = vmatmul.mubr.f32.gmra.mrb[0].mxu0 %v5645
      %v5850 = vpop.f32.mrb[0].mxu0
      %v5851 = vadd.f32 0.0, %v5850
      %v5852 = vpop.f32.mrb[0].mxu0
      %5853 = vmatprep.mubr.f32.mxu0 0.0
      %5854 = vmatmul.mubr.f32.gmra.mrb[0].mxu0 %v5648
      %v5855 = vpop.f32.mrb[0].mxu0
      %v5856 = vadd.f32 0.0, %v5855
      %v5857 = vpop.f32.mrb[0].mxu0
      %5858 = vmatprep.mubr.f32.mxu0 0.0
      %5859 = vmatmul.mubr.f32.gmra.mrb[0].mxu0 %v5651
      %v5860 = vpop.f32.mrb[0].mxu0
      %v5861 = vadd.f32 0.0, %v5860
      %v5862 = vpop.f32.mrb[0].mxu0
      %5863 = vmatprep.mubr.f32.mxu0 0.0
      %5864 = vmatmul.mubr.f32.gmra.mrb[0].mxu0 %v5654
      %v5865 = vpop.f32.mrb[0].mxu0
      %v5866 = vadd.f32 0.0, %v5865
      %v5867 = vpop.f32.mrb[0].mxu0
      %5868 = vmatprep.mubr.f32.mxu0 0.0
      %5869 = vmatmul.mubr.f32.gmra.mrb[0].mxu0 %v5657
      %v5870 = vpop.f32.mrb[0].mxu0
      %v5871 = vadd.f32 0.0, %v5870
      %v5872 = vpop.f32.mrb[0].mxu0
      %5873 = vmatprep.mubr.f32.mxu0 0.0
      %5874 = vmatmul.mubr.f32.gmra.mrb[0].mxu0 %v5660
      %v5875 = vpop.f32.mrb[0].mxu0
      %v5876 = vadd.f32 0.0, %v5875
      %v5877 = vpop.f32.mrb[0].mxu0
      %5878 = vmatprep.mubr.f32.mxu0 0.0
      %5879 = vmatmul.mubr.f32.gmra.mrb[0].mxu0 %v5663
      %v5880 = vpop.f32.mrb[0].mxu0
      %v5881 = vadd.f32 0.0, %v5880
      %v5882 = vpop.f32.mrb[0].mxu0
      %5883 = vmatprep.mubr.f32.mxu0 0.0
      %5884 = vmatmul.mubr.f32.gmra.mrb[0].mxu0 %v5666
      %v5885 = vpop.f32.mrb[0].mxu0
      %v5886 = vadd.f32 0.0, %v5885
      %v5887 = vpop.f32.mrb[0].mxu0
      %5888 = vmatprep.mubr.f32.mxu0 0.0
      %5889 = vmatmul.mubr.f32.gmra.mrb[0].mxu0 %v5669
      %v5890 = vpop.f32.mrb[0].mxu0
      %v5891 = vadd.f32 0.0, %v5890
      %v5892 = vpop.f32.mrb[0].mxu0
      %5893 = vmatprep.mubr.f32.mxu0 0.0
      %5894 = vmatmul.mubr.f32.gmra.mrb[0].mxu0 %v5672
      %v5895 = vpop.f32.mrb[0].mxu0
      %v5896 = vadd.f32 0.0, %v5895
      %v5897 = vpop.f32.mrb[0].mxu0
      %5898 = vdwg.mxu0
      %v5899 = vadd.f32 %v5512, %v5741
      %v5900 = vadd.f32 %v5513, %v5746
      %v5901 = vadd.f32 %v5514, %v5751
      %v5902 = vadd.f32 %v5515, %v5756
      %v5903 = vadd.f32 %v5516, %v5761
      %v5904 = vadd.f32 %v5517, %v5766
      %v5905 = vadd.f32 %v5518, %v5771
      %v5906 = vadd.f32 %v5519, %v5776
      %v5907 = vadd.f32 %v5520, %v5781
      %v5908 = vadd.f32 %v5521, %v5786
      %v5909 = vadd.f32 %v5522, %v5791
      %v5910 = vadd.f32 %v5523, %v5796
      %v5911 = vadd.f32 %v5524, %v5801
      %v5912 = vadd.f32 %v5525, %v5806
      %v5913 = vadd.f32 %v5526, %v5811
      %v5914 = vadd.f32 %v5527, %v5816
      %v5915 = vadd.f32 %v5528, %v5821
      %v5916 = vadd.f32 %v5529, %v5826
      %v5917 = vadd.f32 %v5530, %v5831
      %v5918 = vadd.f32 %v5531, %v5836
      %v5919 = vadd.f32 %v5532, %v5841
      %v5920 = vadd.f32 %v5533, %v5846
      %v5921 = vadd.f32 %v5534, %v5851
      %v5922 = vadd.f32 %v5535, %v5856
      %v5923 = vadd.f32 %v5536, %v5861
      %v5924 = vadd.f32 %v5537, %v5866
      %v5925 = vadd.f32 %v5538, %v5871
      %v5926 = vadd.f32 %v5539, %v5876
      %v5927 = vadd.f32 %v5540, %v5881
      %v5928 = vadd.f32 %v5541, %v5886
      %v5929 = vadd.f32 %v5542, %v5891
      %v5930 = vadd.f32 %v5543, %v5896
      %v5931 = vld [vmem:[%s350 + $0xa] sm:$0xff]
      %v5932 = vld [vmem:[%s350 + $0x12] sm:$0xff]
      %v5933 = vld [vmem:[%s350 + $0x2a] sm:$0xff]
      %v5934 = vld [vmem:[%s350 + $0x32] sm:$0xff]
      %v5935 = vld [vmem:[%s350 + $0x4a] sm:$0xff]
      %v5936 = vld [vmem:[%s350 + $0x52] sm:$0xff]
      %v5937 = vld [vmem:[%s350 + $0x6a] sm:$0xff]
      %v5938 = vld [vmem:[%s350 + $0x72] sm:$0xff]
      %v5939 = vld [vmem:[%s350 + $0x8a] sm:$0xff]
      %v5940 = vld [vmem:[%s350 + $0x92] sm:$0xff]
      %v5941 = vld [vmem:[%s350 + $0xaa] sm:$0xff]
      %v5942 = vld [vmem:[%s350 + $0xb2] sm:$0xff]
      %v5943 = vld [vmem:[%s350 + $0xca] sm:$0xff]
      %v5944 = vld [vmem:[%s350 + $0xd2] sm:$0xff]
      %v5945 = vld [vmem:[%s350 + $0xea] sm:$0xff]
      %v5946 = vld [vmem:[%s350 + $0xf2] sm:$0xff]
      %v5947 = vld [vmem:[%s350 + $0x10a] sm:$0xff]
      %v5948 = vld [vmem:[%s350 + $0x112] sm:$0xff]
      %v5949 = vld [vmem:[%s350 + $0x12a] sm:$0xff]
      %v5950 = vld [vmem:[%s350 + $0x132] sm:$0xff]
      %v5951 = vld [vmem:[%s350 + $0x14a] sm:$0xff]
      %v5952 = vld [vmem:[%s350 + $0x152] sm:$0xff]
      %v5953 = vld [vmem:[%s350 + $0x16a] sm:$0xff]
      %v5954 = vld [vmem:[%s350 + $0x172] sm:$0xff]
      %v5955 = vld [vmem:[%s350 + $0x18a] sm:$0xff]
      %v5956 = vld [vmem:[%s350 + $0x192] sm:$0xff]
      %v5957 = vld [vmem:[%s350 + $0x1aa] sm:$0xff]
      %v5958 = vld [vmem:[%s350 + $0x1b2] sm:$0xff]
      %v5959 = vld [vmem:[%s350 + $0x1ca] sm:$0xff]
      %v5960 = vld [vmem:[%s350 + $0x1d2] sm:$0xff]
      %v5961 = vld [vmem:[%s350 + $0x1ea] sm:$0xff]
      %v5962 = vld [vmem:[%s350 + $0x1f2] sm:$0xff]
      %s5963 = scalar_lea.vmem %s3, 40
      %v5964 = vld [vmem:[%s5963] sm:$0xff]
      %v5966 = vsel %vm331, %v5931, 0
      %v5969 = vsel %vm331, %v5932, 0
      %v5972 = vsel %vm331, %v5933, 0
      %v5975 = vsel %vm331, %v5934, 0
      %v5978 = vsel %vm331, %v5935, 0
      %v5981 = vsel %vm331, %v5936, 0
      %v5984 = vsel %vm331, %v5937, 0
      %v5987 = vsel %vm331, %v5938, 0
      %v5990 = vsel %vm331, %v5939, 0
      %v5993 = vsel %vm331, %v5940, 0
      %v5996 = vsel %vm331, %v5941, 0
      %v5999 = vsel %vm331, %v5942, 0
      %v6002 = vsel %vm331, %v5943, 0
      %v6005 = vsel %vm331, %v5944, 0
      %v6008 = vsel %vm331, %v5945, 0
      %v6011 = vsel %vm331, %v5946, 0
      %v6014 = vsel %vm331, %v5947, 0
      %v6017 = vsel %vm331, %v5948, 0
      %v6020 = vsel %vm331, %v5949, 0
      %v6023 = vsel %vm331, %v5950, 0
      %v6026 = vsel %vm331, %v5951, 0
      %v6029 = vsel %vm331, %v5952, 0
      %v6032 = vsel %vm331, %v5953, 0
      %v6035 = vsel %vm331, %v5954, 0
      %v6038 = vsel %vm331, %v5955, 0
      %v6041 = vsel %vm331, %v5956, 0
      %v6044 = vsel %vm331, %v5957, 0
      %v6047 = vsel %vm331, %v5958, 0
      %v6050 = vsel %vm331, %v5959, 0
      %v6053 = vsel %vm331, %v5960, 0
      %v6056 = vsel %vm331, %v5961, 0
      %v6059 = vsel %vm331, %v5962, 0
      %6061 = vmatprep.subr.mxu0 0.0
      %6062 = vmatpush1.msra.mxu0 %v5964
      %6063 = vmatprep.subr.mxu0 0.0
      %6064 = vmatpush1.msra.mxu0 0.0
      %6065 = vmatprep.subr.mxu0 0.0
      %6066 = vmatpush1.msra.mxu0 0.0
      %6067 = vmatprep.subr.mxu0 0.0
      %6068 = vmatpush1.msra.mxu0 0.0
      %6069 = vmatprep.subr.mxu0 0.0
      %6070 = vmatpush1.msra.mxu0 0.0
      %6071 = vmatprep.subr.mxu0 0.0
      %6072 = vmatpush1.msra.mxu0 0.0
      %6073 = vmatprep.subr.mxu0 0.0
      %6074 = vmatpush1.msra.mxu0 0.0
      %6075 = vmatprep.subr.mxu0 0.0
      %6076 = vmatpush1.msra.mxu0 0.0
      %6077 = vmatprep.subr.mxu0 0.0
      %6078 = vmatpush1.msra.mxu0 0.0
      %6079 = vmatprep.subr.mxu0 0.0
      %6080 = vmatpush1.msra.mxu0 0.0
      %6081 = vmatprep.subr.mxu0 0.0
      %6082 = vmatpush1.msra.mxu0 0.0
      %6083 = vmatprep.subr.mxu0 0.0
      %6084 = vmatpush1.msra.mxu0 0.0
      %6085 = vmatprep.subr.mxu0 0.0
      %6086 = vmatpush1.msra.mxu0 0.0
      %6087 = vmatprep.subr.mxu0 0.0
      %6088 = vmatpush1.msra.mxu0 0.0
      %6089 = vmatprep.subr.mxu0 0.0
      %6090 = vmatpush1.msra.mxu0 0.0
      %6091 = vmatprep.subr.mxu0 0.0
      %6092 = vmatpush1.msra.mxu0 0.0
      %6093 = vmatprep.subr.mxu0 0.0
      %6094 = vmatpush1.msra.mxu0 0.0
      %6095 = vmatprep.subr.mxu0 0.0
      %6096 = vmatpush1.msra.mxu0 0.0
      %6097 = vmatprep.subr.mxu0 0.0
      %6098 = vmatpush1.msra.mxu0 0.0
      %6099 = vmatprep.subr.mxu0 0.0
      %6100 = vmatpush1.msra.mxu0 0.0
      %6101 = vmatprep.subr.mxu0 0.0
      %6102 = vmatpush1.msra.mxu0 0.0
      %6103 = vmatprep.subr.mxu0 0.0
      %6104 = vmatpush1.msra.mxu0 0.0
      %6105 = vmatprep.subr.mxu0 0.0
      %6106 = vmatpush1.msra.mxu0 0.0
      %6107 = vmatprep.subr.mxu0 0.0
      %6108 = vmatpush1.msra.mxu0 0.0
      %6109 = vmatprep.subr.mxu0 0.0
      %6110 = vmatpush1.msra.mxu0 0.0
      %6111 = vmatprep.subr.mxu0 0.0
      %6112 = vmatpush1.msra.mxu0 0.0
      %6113 = vmatprep.subr.mxu0 0.0
      %6114 = vmatpush1.msra.mxu0 0.0
      %6115 = vmatprep.subr.mxu0 0.0
      %6116 = vmatpush1.msra.mxu0 0.0
      %6117 = vmatprep.subr.mxu0 0.0
      %6118 = vmatpush1.msra.mxu0 0.0
      %6119 = vmatprep.subr.mxu0 0.0
      %6120 = vmatpush1.msra.mxu0 0.0
      %6121 = vmatprep.subr.mxu0 0.0
      %6122 = vmatpush1.msra.mxu0 0.0
      %6123 = vmatprep.subr.mxu0 0.0
      %6124 = vmatpush1.msra.mxu0 0.0
      %6125 = vmatprep.mubr.f32.mxu0 0.0
      %6126 = vmatmul.mubr.f32.gmra.mrb[0].mxu0 %v5966
      %v6127 = vpop.f32.mrb[0].mxu0
      %v6128 = vadd.f32 0.0, %v6127
      %v6129 = vpop.f32.mrb[0].mxu0
      %6130 = vmatprep.mubr.f32.mxu0 0.0
      %6131 = vmatmul.mubr.f32.gmra.mrb[0].mxu0 %v5969
      %v6132 = vpop.f32.mrb[0].mxu0
      %v6133 = vadd.f32 0.0, %v6132
      %v6134 = vpop.f32.mrb[0].mxu0
      %6135 = vmatprep.mubr.f32.mxu0 0.0
      %6136 = vmatmul.mubr.f32.gmra.mrb[0].mxu0 %v5972
      %v6137 = vpop.f32.mrb[0].mxu0
      %v6138 = vadd.f32 0.0, %v6137
      %v6139 = vpop.f32.mrb[0].mxu0
      %6140 = vmatprep.mubr.f32.mxu0 0.0
      %6141 = vmatmul.mubr.f32.gmra.mrb[0].mxu0 %v5975
      %v6142 = vpop.f32.mrb[0].mxu0
      %v6143 = vadd.f32 0.0, %v6142
      %v6144 = vpop.f32.mrb[0].mxu0
      %6145 = vmatprep.mubr.f32.mxu0 0.0
      %6146 = vmatmul.mubr.f32.gmra.mrb[0].mxu0 %v5978
      %v6147 = vpop.f32.mrb[0].mxu0
      %v6148 = vadd.f32 0.0, %v6147
      %v6149 = vpop.f32.mrb[0].mxu0
      %6150 = vmatprep.mubr.f32.mxu0 0.0
      %6151 = vmatmul.mubr.f32.gmra.mrb[0].mxu0 %v5981
      %v6152 = vpop.f32.mrb[0].mxu0
      %v6153 = vadd.f32 0.0, %v6152
      %v6154 = vpop.f32.mrb[0].mxu0
      %6155 = vmatprep.mubr.f32.mxu0 0.0
      %6156 = vmatmul.mubr.f32.gmra.mrb[0].mxu0 %v5984
      %v6157 = vpop.f32.mrb[0].mxu0
      %v6158 = vadd.f32 0.0, %v6157
      %v6159 = vpop.f32.mrb[0].mxu0
      %6160 = vmatprep.mubr.f32.mxu0 0.0
      %6161 = vmatmul.mubr.f32.gmra.mrb[0].mxu0 %v5987
      %v6162 = vpop.f32.mrb[0].mxu0
      %v6163 = vadd.f32 0.0, %v6162
      %v6164 = vpop.f32.mrb[0].mxu0
      %6165 = vmatprep.mubr.f32.mxu0 0.0
      %6166 = vmatmul.mubr.f32.gmra.mrb[0].mxu0 %v5990
      %v6167 = vpop.f32.mrb[0].mxu0
      %v6168 = vadd.f32 0.0, %v6167
      %v6169 = vpop.f32.mrb[0].mxu0
      %6170 = vmatprep.mubr.f32.mxu0 0.0
      %6171 = vmatmul.mubr.f32.gmra.mrb[0].mxu0 %v5993
      %v6172 = vpop.f32.mrb[0].mxu0
      %v6173 = vadd.f32 0.0, %v6172
      %v6174 = vpop.f32.mrb[0].mxu0
      %6175 = vmatprep.mubr.f32.mxu0 0.0
      %6176 = vmatmul.mubr.f32.gmra.mrb[0].mxu0 %v5996
      %v6177 = vpop.f32.mrb[0].mxu0
      %v6178 = vadd.f32 0.0, %v6177
      %v6179 = vpop.f32.mrb[0].mxu0
      %6180 = vmatprep.mubr.f32.mxu0 0.0
      %6181 = vmatmul.mubr.f32.gmra.mrb[0].mxu0 %v5999
      %v6182 = vpop.f32.mrb[0].mxu0
      %v6183 = vadd.f32 0.0, %v6182
      %v6184 = vpop.f32.mrb[0].mxu0
      %6185 = vmatprep.mubr.f32.mxu0 0.0
      %6186 = vmatmul.mubr.f32.gmra.mrb[0].mxu0 %v6002
      %v6187 = vpop.f32.mrb[0].mxu0
      %v6188 = vadd.f32 0.0, %v6187
      %v6189 = vpop.f32.mrb[0].mxu0
      %6190 = vmatprep.mubr.f32.mxu0 0.0
      %6191 = vmatmul.mubr.f32.gmra.mrb[0].mxu0 %v6005
      %v6192 = vpop.f32.mrb[0].mxu0
      %v6193 = vadd.f32 0.0, %v6192
      %v6194 = vpop.f32.mrb[0].mxu0
      %6195 = vmatprep.mubr.f32.mxu0 0.0
      %6196 = vmatmul.mubr.f32.gmra.mrb[0].mxu0 %v6008
      %v6197 = vpop.f32.mrb[0].mxu0
      %v6198 = vadd.f32 0.0, %v6197
      %v6199 = vpop.f32.mrb[0].mxu0
      %6200 = vmatprep.mubr.f32.mxu0 0.0
      %6201 = vmatmul.mubr.f32.gmra.mrb[0].mxu0 %v6011
      %v6202 = vpop.f32.mrb[0].mxu0
      %v6203 = vadd.f32 0.0, %v6202
      %v6204 = vpop.f32.mrb[0].mxu0
      %6205 = vmatprep.mubr.f32.mxu0 0.0
      %6206 = vmatmul.mubr.f32.gmra.mrb[0].mxu0 %v6014
      %v6207 = vpop.f32.mrb[0].mxu0
      %v6208 = vadd.f32 0.0, %v6207
      %v6209 = vpop.f32.mrb[0].mxu0
      %6210 = vmatprep.mubr.f32.mxu0 0.0
      %6211 = vmatmul.mubr.f32.gmra.mrb[0].mxu0 %v6017
      %v6212 = vpop.f32.mrb[0].mxu0
      %v6213 = vadd.f32 0.0, %v6212
      %v6214 = vpop.f32.mrb[0].mxu0
      %6215 = vmatprep.mubr.f32.mxu0 0.0
      %6216 = vmatmul.mubr.f32.gmra.mrb[0].mxu0 %v6020
      %v6217 = vpop.f32.mrb[0].mxu0
      %v6218 = vadd.f32 0.0, %v6217
      %v6219 = vpop.f32.mrb[0].mxu0
      %6220 = vmatprep.mubr.f32.mxu0 0.0
      %6221 = vmatmul.mubr.f32.gmra.mrb[0].mxu0 %v6023
      %v6222 = vpop.f32.mrb[0].mxu0
      %v6223 = vadd.f32 0.0, %v6222
      %v6224 = vpop.f32.mrb[0].mxu0
      %6225 = vmatprep.mubr.f32.mxu0 0.0
      %6226 = vmatmul.mubr.f32.gmra.mrb[0].mxu0 %v6026
      %v6227 = vpop.f32.mrb[0].mxu0
      %v6228 = vadd.f32 0.0, %v6227
      %v6229 = vpop.f32.mrb[0].mxu0
      %6230 = vmatprep.mubr.f32.mxu0 0.0
      %6231 = vmatmul.mubr.f32.gmra.mrb[0].mxu0 %v6029
      %v6232 = vpop.f32.mrb[0].mxu0
      %v6233 = vadd.f32 0.0, %v6232
      %v6234 = vpop.f32.mrb[0].mxu0
      %6235 = vmatprep.mubr.f32.mxu0 0.0
      %6236 = vmatmul.mubr.f32.gmra.mrb[0].mxu0 %v6032
      %v6237 = vpop.f32.mrb[0].mxu0
      %v6238 = vadd.f32 0.0, %v6237
      %v6239 = vpop.f32.mrb[0].mxu0
      %6240 = vmatprep.mubr.f32.mxu0 0.0
      %6241 = vmatmul.mubr.f32.gmra.mrb[0].mxu0 %v6035
      %v6242 = vpop.f32.mrb[0].mxu0
      %v6243 = vadd.f32 0.0, %v6242
      %v6244 = vpop.f32.mrb[0].mxu0
      %6245 = vmatprep.mubr.f32.mxu0 0.0
      %6246 = vmatmul.mubr.f32.gmra.mrb[0].mxu0 %v6038
      %v6247 = vpop.f32.mrb[0].mxu0
      %v6248 = vadd.f32 0.0, %v6247
      %v6249 = vpop.f32.mrb[0].mxu0
      %6250 = vmatprep.mubr.f32.mxu0 0.0
      %6251 = vmatmul.mubr.f32.gmra.mrb[0].mxu0 %v6041
      %v6252 = vpop.f32.mrb[0].mxu0
      %v6253 = vadd.f32 0.0, %v6252
      %v6254 = vpop.f32.mrb[0].mxu0
      %6255 = vmatprep.mubr.f32.mxu0 0.0
      %6256 = vmatmul.mubr.f32.gmra.mrb[0].mxu0 %v6044
      %v6257 = vpop.f32.mrb[0].mxu0
      %v6258 = vadd.f32 0.0, %v6257
      %v6259 = vpop.f32.mrb[0].mxu0
      %6260 = vmatprep.mubr.f32.mxu0 0.0
      %6261 = vmatmul.mubr.f32.gmra.mrb[0].mxu0 %v6047
      %v6262 = vpop.f32.mrb[0].mxu0
      %v6263 = vadd.f32 0.0, %v6262
      %v6264 = vpop.f32.mrb[0].mxu0
      %6265 = vmatprep.mubr.f32.mxu0 0.0
      %6266 = vmatmul.mubr.f32.gmra.mrb[0].mxu0 %v6050
      %v6267 = vpop.f32.mrb[0].mxu0
      %v6268 = vadd.f32 0.0, %v6267
      %v6269 = vpop.f32.mrb[0].mxu0
      %6270 = vmatprep.mubr.f32.mxu0 0.0
      %6271 = vmatmul.mubr.f32.gmra.mrb[0].mxu0 %v6053
      %v6272 = vpop.f32.mrb[0].mxu0
      %v6273 = vadd.f32 0.0, %v6272
      %v6274 = vpop.f32.mrb[0].mxu0
      %6275 = vmatprep.mubr.f32.mxu0 0.0
      %6276 = vmatmul.mubr.f32.gmra.mrb[0].mxu0 %v6056
      %v6277 = vpop.f32.mrb[0].mxu0
      %v6278 = vadd.f32 0.0, %v6277
      %v6279 = vpop.f32.mrb[0].mxu0
      %6280 = vmatprep.mubr.f32.mxu0 0.0
      %6281 = vmatmul.mubr.f32.gmra.mrb[0].mxu0 %v6059
      %v6282 = vpop.f32.mrb[0].mxu0
      %v6283 = vadd.f32 0.0, %v6282
      %v6284 = vpop.f32.mrb[0].mxu0
      %6285 = vdwg.mxu0
      %v6286 = vadd.f32 %v5899, %v6128
      %v6287 = vadd.f32 %v5900, %v6133
      %v6288 = vadd.f32 %v5901, %v6138
      %v6289 = vadd.f32 %v5902, %v6143
      %v6290 = vadd.f32 %v5903, %v6148
      %v6291 = vadd.f32 %v5904, %v6153
      %v6292 = vadd.f32 %v5905, %v6158
      %v6293 = vadd.f32 %v5906, %v6163
      %v6294 = vadd.f32 %v5907, %v6168
      %v6295 = vadd.f32 %v5908, %v6173
      %v6296 = vadd.f32 %v5909, %v6178
      %v6297 = vadd.f32 %v5910, %v6183
      %v6298 = vadd.f32 %v5911, %v6188
      %v6299 = vadd.f32 %v5912, %v6193
      %v6300 = vadd.f32 %v5913, %v6198
      %v6301 = vadd.f32 %v5914, %v6203
      %v6302 = vadd.f32 %v5915, %v6208
      %v6303 = vadd.f32 %v5916, %v6213
      %v6304 = vadd.f32 %v5917, %v6218
      %v6305 = vadd.f32 %v5918, %v6223
      %v6306 = vadd.f32 %v5919, %v6228
      %v6307 = vadd.f32 %v5920, %v6233
      %v6308 = vadd.f32 %v5921, %v6238
      %v6309 = vadd.f32 %v5922, %v6243
      %v6310 = vadd.f32 %v5923, %v6248
      %v6311 = vadd.f32 %v5924, %v6253
      %v6312 = vadd.f32 %v5925, %v6258
      %v6313 = vadd.f32 %v5926, %v6263
      %v6314 = vadd.f32 %v5927, %v6268
      %v6315 = vadd.f32 %v5928, %v6273
      %v6316 = vadd.f32 %v5929, %v6278
      %v6317 = vadd.f32 %v5930, %v6283
      %s6318 = scalar_lea.vmem [#allocation3], 128
      %v6319 = vld [vmem:[%s6318 + $0x6] sm:$0xff]
      %v6320 = vld [vmem:[%s6318 + $0xe] sm:$0xff]
      %v6321 = vld [vmem:[%s6318 + $0x26] sm:$0xff]
      %v6322 = vld [vmem:[%s6318 + $0x2e] sm:$0xff]
      %v6323 = vld [vmem:[%s6318 + $0x46] sm:$0xff]
      %v6324 = vld [vmem:[%s6318 + $0x4e] sm:$0xff]
      %v6325 = vld [vmem:[%s6318 + $0x66] sm:$0xff]
      %v6326 = vld [vmem:[%s6318 + $0x6e] sm:$0xff]
      %v6327 = vld [vmem:[%s6318 + $0x86] sm:$0xff]
      %v6328 = vld [vmem:[%s6318 + $0x8e] sm:$0xff]
      %v6329 = vld [vmem:[%s6318 + $0xa6] sm:$0xff]
      %v6330 = vld [vmem:[%s6318 + $0xae] sm:$0xff]
      %v6331 = vld [vmem:[%s6318 + $0xc6] sm:$0xff]
      %v6332 = vld [vmem:[%s6318 + $0xce] sm:$0xff]
      %v6333 = vld [vmem:[%s6318 + $0xe6] sm:$0xff]
      %v6334 = vld [vmem:[%s6318 + $0xee] sm:$0xff]
      %v6335 = vld [vmem:[%s6318 + $0x106] sm:$0xff]
      %v6336 = vld [vmem:[%s6318 + $0x10e] sm:$0xff]
      %v6337 = vld [vmem:[%s6318 + $0x126] sm:$0xff]
      %v6338 = vld [vmem:[%s6318 + $0x12e] sm:$0xff]
      %v6339 = vld [vmem:[%s6318 + $0x146] sm:$0xff]
      %v6340 = vld [vmem:[%s6318 + $0x14e] sm:$0xff]
      %v6341 = vld [vmem:[%s6318 + $0x166] sm:$0xff]
      %v6342 = vld [vmem:[%s6318 + $0x16e] sm:$0xff]
      %v6343 = vld [vmem:[%s6318 + $0x186] sm:$0xff]
      %v6344 = vld [vmem:[%s6318 + $0x18e] sm:$0xff]
      %v6345 = vld [vmem:[%s6318 + $0x1a6] sm:$0xff]
      %v6346 = vld [vmem:[%s6318 + $0x1ae] sm:$0xff]
      %v6347 = vld [vmem:[%s6318 + $0x1c6] sm:$0xff]
      %v6348 = vld [vmem:[%s6318 + $0x1ce] sm:$0xff]
      %v6349 = vld [vmem:[%s6318 + $0x1e6] sm:$0xff]
      %v6350 = vld [vmem:[%s6318 + $0x1ee] sm:$0xff]
      %s6351 = scalar_lea.vmem %s3, 48
      %v6352 = vld [vmem:[%s6351] sm:$0xff]
      %v6354 = vsel %vm331, %v6319, 0
      %v6357 = vsel %vm331, %v6320, 0
      %v6360 = vsel %vm331, %v6321, 0
      %v6363 = vsel %vm331, %v6322, 0
      %v6366 = vsel %vm331, %v6323, 0
      %v6369 = vsel %vm331, %v6324, 0
      %v6372 = vsel %vm331, %v6325, 0
      %v6375 = vsel %vm331, %v6326, 0
      %v6378 = vsel %vm331, %v6327, 0
      %v6381 = vsel %vm331, %v6328, 0
      %v6384 = vsel %vm331, %v6329, 0
      %v6387 = vsel %vm331, %v6330, 0
      %v6390 = vsel %vm331, %v6331, 0
      %v6393 = vsel %vm331, %v6332, 0
      %v6396 = vsel %vm331, %v6333, 0
      %v6399 = vsel %vm331, %v6334, 0
      %v6402 = vsel %vm331, %v6335, 0
      %v6405 = vsel %vm331, %v6336, 0
      %v6408 = vsel %vm331, %v6337, 0
      %v6411 = vsel %vm331, %v6338, 0
      %v6414 = vsel %vm331, %v6339, 0
      %v6417 = vsel %vm331, %v6340, 0
      %v6420 = vsel %vm331, %v6341, 0
      %v6423 = vsel %vm331, %v6342, 0
      %v6426 = vsel %vm331, %v6343, 0
      %v6429 = vsel %vm331, %v6344, 0
      %v6432 = vsel %vm331, %v6345, 0
      %v6435 = vsel %vm331, %v6346, 0
      %v6438 = vsel %vm331, %v6347, 0
      %v6441 = vsel %vm331, %v6348, 0
      %v6444 = vsel %vm331, %v6349, 0
      %v6447 = vsel %vm331, %v6350, 0
      %6449 = vmatprep.subr.mxu0 0.0
      %6450 = vmatpush1.msra.mxu0 %v6352
      %6451 = vmatprep.subr.mxu0 0.0
      %6452 = vmatpush1.msra.mxu0 0.0
      %6453 = vmatprep.subr.mxu0 0.0
      %6454 = vmatpush1.msra.mxu0 0.0
      %6455 = vmatprep.subr.mxu0 0.0
      %6456 = vmatpush1.msra.mxu0 0.0
      %6457 = vmatprep.subr.mxu0 0.0
      %6458 = vmatpush1.msra.mxu0 0.0
      %6459 = vmatprep.subr.mxu0 0.0
      %6460 = vmatpush1.msra.mxu0 0.0
      %6461 = vmatprep.subr.mxu0 0.0
      %6462 = vmatpush1.msra.mxu0 0.0
      %6463 = vmatprep.subr.mxu0 0.0
      %6464 = vmatpush1.msra.mxu0 0.0
      %6465 = vmatprep.subr.mxu0 0.0
      %6466 = vmatpush1.msra.mxu0 0.0
      %6467 = vmatprep.subr.mxu0 0.0
      %6468 = vmatpush1.msra.mxu0 0.0
      %6469 = vmatprep.subr.mxu0 0.0
      %6470 = vmatpush1.msra.mxu0 0.0
      %6471 = vmatprep.subr.mxu0 0.0
      %6472 = vmatpush1.msra.mxu0 0.0
      %6473 = vmatprep.subr.mxu0 0.0
      %6474 = vmatpush1.msra.mxu0 0.0
      %6475 = vmatprep.subr.mxu0 0.0
      %6476 = vmatpush1.msra.mxu0 0.0
      %6477 = vmatprep.subr.mxu0 0.0
      %6478 = vmatpush1.msra.mxu0 0.0
      %6479 = vmatprep.subr.mxu0 0.0
      %6480 = vmatpush1.msra.mxu0 0.0
      %6481 = vmatprep.subr.mxu0 0.0
      %6482 = vmatpush1.msra.mxu0 0.0
      %6483 = vmatprep.subr.mxu0 0.0
      %6484 = vmatpush1.msra.mxu0 0.0
      %6485 = vmatprep.subr.mxu0 0.0
      %6486 = vmatpush1.msra.mxu0 0.0
      %6487 = vmatprep.subr.mxu0 0.0
      %6488 = vmatpush1.msra.mxu0 0.0
      %6489 = vmatprep.subr.mxu0 0.0
      %6490 = vmatpush1.msra.mxu0 0.0
      %6491 = vmatprep.subr.mxu0 0.0
      %6492 = vmatpush1.msra.mxu0 0.0
      %6493 = vmatprep.subr.mxu0 0.0
      %6494 = vmatpush1.msra.mxu0 0.0
      %6495 = vmatprep.subr.mxu0 0.0
      %6496 = vmatpush1.msra.mxu0 0.0
      %6497 = vmatprep.subr.mxu0 0.0
      %6498 = vmatpush1.msra.mxu0 0.0
      %6499 = vmatprep.subr.mxu0 0.0
      %6500 = vmatpush1.msra.mxu0 0.0
      %6501 = vmatprep.subr.mxu0 0.0
      %6502 = vmatpush1.msra.mxu0 0.0
      %6503 = vmatprep.subr.mxu0 0.0
      %6504 = vmatpush1.msra.mxu0 0.0
      %6505 = vmatprep.subr.mxu0 0.0
      %6506 = vmatpush1.msra.mxu0 0.0
      %6507 = vmatprep.subr.mxu0 0.0
      %6508 = vmatpush1.msra.mxu0 0.0
      %6509 = vmatprep.subr.mxu0 0.0
      %6510 = vmatpush1.msra.mxu0 0.0
      %6511 = vmatprep.subr.mxu0 0.0
      %6512 = vmatpush1.msra.mxu0 0.0
      %6513 = vmatprep.mubr.f32.mxu0 0.0
      %6514 = vmatmul.mubr.f32.gmra.mrb[0].mxu0 %v6354
      %v6515 = vpop.f32.mrb[0].mxu0
      %v6516 = vadd.f32 0.0, %v6515
      %v6517 = vpop.f32.mrb[0].mxu0
      %6518 = vmatprep.mubr.f32.mxu0 0.0
      %6519 = vmatmul.mubr.f32.gmra.mrb[0].mxu0 %v6357
      %v6520 = vpop.f32.mrb[0].mxu0
      %v6521 = vadd.f32 0.0, %v6520
      %v6522 = vpop.f32.mrb[0].mxu0
      %6523 = vmatprep.mubr.f32.mxu0 0.0
      %6524 = vmatmul.mubr.f32.gmra.mrb[0].mxu0 %v6360
      %v6525 = vpop.f32.mrb[0].mxu0
      %v6526 = vadd.f32 0.0, %v6525
      %v6527 = vpop.f32.mrb[0].mxu0
      %6528 = vmatprep.mubr.f32.mxu0 0.0
      %6529 = vmatmul.mubr.f32.gmra.mrb[0].mxu0 %v6363
      %v6530 = vpop.f32.mrb[0].mxu0
      %v6531 = vadd.f32 0.0, %v6530
      %v6532 = vpop.f32.mrb[0].mxu0
      %6533 = vmatprep.mubr.f32.mxu0 0.0
      %6534 = vmatmul.mubr.f32.gmra.mrb[0].mxu0 %v6366
      %v6535 = vpop.f32.mrb[0].mxu0
      %v6536 = vadd.f32 0.0, %v6535
      %v6537 = vpop.f32.mrb[0].mxu0
      %6538 = vmatprep.mubr.f32.mxu0 0.0
      %6539 = vmatmul.mubr.f32.gmra.mrb[0].mxu0 %v6369
      %v6540 = vpop.f32.mrb[0].mxu0
      %v6541 = vadd.f32 0.0, %v6540
      %v6542 = vpop.f32.mrb[0].mxu0
      %6543 = vmatprep.mubr.f32.mxu0 0.0
      %6544 = vmatmul.mubr.f32.gmra.mrb[0].mxu0 %v6372
      %v6545 = vpop.f32.mrb[0].mxu0
      %v6546 = vadd.f32 0.0, %v6545
      %v6547 = vpop.f32.mrb[0].mxu0
      %6548 = vmatprep.mubr.f32.mxu0 0.0
      %6549 = vmatmul.mubr.f32.gmra.mrb[0].mxu0 %v6375
      %v6550 = vpop.f32.mrb[0].mxu0
      %v6551 = vadd.f32 0.0, %v6550
      %v6552 = vpop.f32.mrb[0].mxu0
      %6553 = vmatprep.mubr.f32.mxu0 0.0
      %6554 = vmatmul.mubr.f32.gmra.mrb[0].mxu0 %v6378
      %v6555 = vpop.f32.mrb[0].mxu0
      %v6556 = vadd.f32 0.0, %v6555
      %v6557 = vpop.f32.mrb[0].mxu0
      %6558 = vmatprep.mubr.f32.mxu0 0.0
      %6559 = vmatmul.mubr.f32.gmra.mrb[0].mxu0 %v6381
      %v6560 = vpop.f32.mrb[0].mxu0
      %v6561 = vadd.f32 0.0, %v6560
      %v6562 = vpop.f32.mrb[0].mxu0
      %6563 = vmatprep.mubr.f32.mxu0 0.0
      %6564 = vmatmul.mubr.f32.gmra.mrb[0].mxu0 %v6384
      %v6565 = vpop.f32.mrb[0].mxu0
      %v6566 = vadd.f32 0.0, %v6565
      %v6567 = vpop.f32.mrb[0].mxu0
      %6568 = vmatprep.mubr.f32.mxu0 0.0
      %6569 = vmatmul.mubr.f32.gmra.mrb[0].mxu0 %v6387
      %v6570 = vpop.f32.mrb[0].mxu0
      %v6571 = vadd.f32 0.0, %v6570
      %v6572 = vpop.f32.mrb[0].mxu0
      %6573 = vmatprep.mubr.f32.mxu0 0.0
      %6574 = vmatmul.mubr.f32.gmra.mrb[0].mxu0 %v6390
      %v6575 = vpop.f32.mrb[0].mxu0
      %v6576 = vadd.f32 0.0, %v6575
      %v6577 = vpop.f32.mrb[0].mxu0
      %6578 = vmatprep.mubr.f32.mxu0 0.0
      %6579 = vmatmul.mubr.f32.gmra.mrb[0].mxu0 %v6393
      %v6580 = vpop.f32.mrb[0].mxu0
      %v6581 = vadd.f32 0.0, %v6580
      %v6582 = vpop.f32.mrb[0].mxu0
      %6583 = vmatprep.mubr.f32.mxu0 0.0
      %6584 = vmatmul.mubr.f32.gmra.mrb[0].mxu0 %v6396
      %v6585 = vpop.f32.mrb[0].mxu0
      %v6586 = vadd.f32 0.0, %v6585
      %v6587 = vpop.f32.mrb[0].mxu0
      %6588 = vmatprep.mubr.f32.mxu0 0.0
      %6589 = vmatmul.mubr.f32.gmra.mrb[0].mxu0 %v6399
      %v6590 = vpop.f32.mrb[0].mxu0
      %v6591 = vadd.f32 0.0, %v6590
      %v6592 = vpop.f32.mrb[0].mxu0
      %6593 = vmatprep.mubr.f32.mxu0 0.0
      %6594 = vmatmul.mubr.f32.gmra.mrb[0].mxu0 %v6402
      %v6595 = vpop.f32.mrb[0].mxu0
      %v6596 = vadd.f32 0.0, %v6595
      %v6597 = vpop.f32.mrb[0].mxu0
      %6598 = vmatprep.mubr.f32.mxu0 0.0
      %6599 = vmatmul.mubr.f32.gmra.mrb[0].mxu0 %v6405
      %v6600 = vpop.f32.mrb[0].mxu0
      %v6601 = vadd.f32 0.0, %v6600
      %v6602 = vpop.f32.mrb[0].mxu0
      %6603 = vmatprep.mubr.f32.mxu0 0.0
      %6604 = vmatmul.mubr.f32.gmra.mrb[0].mxu0 %v6408
      %v6605 = vpop.f32.mrb[0].mxu0
      %v6606 = vadd.f32 0.0, %v6605
      %v6607 = vpop.f32.mrb[0].mxu0
      %6608 = vmatprep.mubr.f32.mxu0 0.0
      %6609 = vmatmul.mubr.f32.gmra.mrb[0].mxu0 %v6411
      %v6610 = vpop.f32.mrb[0].mxu0
      %v6611 = vadd.f32 0.0, %v6610
      %v6612 = vpop.f32.mrb[0].mxu0
      %6613 = vmatprep.mubr.f32.mxu0 0.0
      %6614 = vmatmul.mubr.f32.gmra.mrb[0].mxu0 %v6414
      %v6615 = vpop.f32.mrb[0].mxu0
      %v6616 = vadd.f32 0.0, %v6615
      %v6617 = vpop.f32.mrb[0].mxu0
      %6618 = vmatprep.mubr.f32.mxu0 0.0
      %6619 = vmatmul.mubr.f32.gmra.mrb[0].mxu0 %v6417
      %v6620 = vpop.f32.mrb[0].mxu0
      %v6621 = vadd.f32 0.0, %v6620
      %v6622 = vpop.f32.mrb[0].mxu0
      %6623 = vmatprep.mubr.f32.mxu0 0.0
      %6624 = vmatmul.mubr.f32.gmra.mrb[0].mxu0 %v6420
      %v6625 = vpop.f32.mrb[0].mxu0
      %v6626 = vadd.f32 0.0, %v6625
      %v6627 = vpop.f32.mrb[0].mxu0
      %6628 = vmatprep.mubr.f32.mxu0 0.0
      %6629 = vmatmul.mubr.f32.gmra.mrb[0].mxu0 %v6423
      %v6630 = vpop.f32.mrb[0].mxu0
      %v6631 = vadd.f32 0.0, %v6630
      %v6632 = vpop.f32.mrb[0].mxu0
      %6633 = vmatprep.mubr.f32.mxu0 0.0
      %6634 = vmatmul.mubr.f32.gmra.mrb[0].mxu0 %v6426
      %v6635 = vpop.f32.mrb[0].mxu0
      %v6636 = vadd.f32 0.0, %v6635
      %v6637 = vpop.f32.mrb[0].mxu0
      %6638 = vmatprep.mubr.f32.mxu0 0.0
      %6639 = vmatmul.mubr.f32.gmra.mrb[0].mxu0 %v6429
      %v6640 = vpop.f32.mrb[0].mxu0
      %v6641 = vadd.f32 0.0, %v6640
      %v6642 = vpop.f32.mrb[0].mxu0
      %6643 = vmatprep.mubr.f32.mxu0 0.0
      %6644 = vmatmul.mubr.f32.gmra.mrb[0].mxu0 %v6432
      %v6645 = vpop.f32.mrb[0].mxu0
      %v6646 = vadd.f32 0.0, %v6645
      %v6647 = vpop.f32.mrb[0].mxu0
      %6648 = vmatprep.mubr.f32.mxu0 0.0
      %6649 = vmatmul.mubr.f32.gmra.mrb[0].mxu0 %v6435
      %v6650 = vpop.f32.mrb[0].mxu0
      %v6651 = vadd.f32 0.0, %v6650
      %v6652 = vpop.f32.mrb[0].mxu0
      %6653 = vmatprep.mubr.f32.mxu0 0.0
      %6654 = vmatmul.mubr.f32.gmra.mrb[0].mxu0 %v6438
      %v6655 = vpop.f32.mrb[0].mxu0
      %v6656 = vadd.f32 0.0, %v6655
      %v6657 = vpop.f32.mrb[0].mxu0
      %6658 = vmatprep.mubr.f32.mxu0 0.0
      %6659 = vmatmul.mubr.f32.gmra.mrb[0].mxu0 %v6441
      %v6660 = vpop.f32.mrb[0].mxu0
      %v6661 = vadd.f32 0.0, %v6660
      %v6662 = vpop.f32.mrb[0].mxu0
      %6663 = vmatprep.mubr.f32.mxu0 0.0
      %6664 = vmatmul.mubr.f32.gmra.mrb[0].mxu0 %v6444
      %v6665 = vpop.f32.mrb[0].mxu0
      %v6666 = vadd.f32 0.0, %v6665
      %v6667 = vpop.f32.mrb[0].mxu0
      %6668 = vmatprep.mubr.f32.mxu0 0.0
      %6669 = vmatmul.mubr.f32.gmra.mrb[0].mxu0 %v6447
      %v6670 = vpop.f32.mrb[0].mxu0
      %v6671 = vadd.f32 0.0, %v6670
      %v6672 = vpop.f32.mrb[0].mxu0
      %6673 = vdwg.mxu0
      %v6674 = vadd.f32 %v6286, %v6516
      %v6675 = vadd.f32 %v6287, %v6521
      %v6676 = vadd.f32 %v6288, %v6526
      %v6677 = vadd.f32 %v6289, %v6531
      %v6678 = vadd.f32 %v6290, %v6536
      %v6679 = vadd.f32 %v6291, %v6541
      %v6680 = vadd.f32 %v6292, %v6546
      %v6681 = vadd.f32 %v6293, %v6551
      %v6682 = vadd.f32 %v6294, %v6556
      %v6683 = vadd.f32 %v6295, %v6561
      %v6684 = vadd.f32 %v6296, %v6566
      %v6685 = vadd.f32 %v6297, %v6571
      %v6686 = vadd.f32 %v6298, %v6576
      %v6687 = vadd.f32 %v6299, %v6581
      %v6688 = vadd.f32 %v6300, %v6586
      %v6689 = vadd.f32 %v6301, %v6591
      %v6690 = vadd.f32 %v6302, %v6596
      %v6691 = vadd.f32 %v6303, %v6601
      %v6692 = vadd.f32 %v6304, %v6606
      %v6693 = vadd.f32 %v6305, %v6611
      %v6694 = vadd.f32 %v6306, %v6616
      %v6695 = vadd.f32 %v6307, %v6621
      %v6696 = vadd.f32 %v6308, %v6626
      %v6697 = vadd.f32 %v6309, %v6631
      %v6698 = vadd.f32 %v6310, %v6636
      %v6699 = vadd.f32 %v6311, %v6641
      %v6700 = vadd.f32 %v6312, %v6646
      %v6701 = vadd.f32 %v6313, %v6651
      %v6702 = vadd.f32 %v6314, %v6656
      %v6703 = vadd.f32 %v6315, %v6661
      %v6704 = vadd.f32 %v6316, %v6666
      %v6705 = vadd.f32 %v6317, %v6671
      %v6706 = vld [vmem:[%s6318 + $0x8] sm:$0xff]
      %v6707 = vld [vmem:[%s6318 + $0x10] sm:$0xff]
      %v6708 = vld [vmem:[%s6318 + $0x28] sm:$0xff]
      %v6709 = vld [vmem:[%s6318 + $0x30] sm:$0xff]
      %v6710 = vld [vmem:[%s6318 + $0x48] sm:$0xff]
      %v6711 = vld [vmem:[%s6318 + $0x50] sm:$0xff]
      %v6712 = vld [vmem:[%s6318 + $0x68] sm:$0xff]
      %v6713 = vld [vmem:[%s6318 + $0x70] sm:$0xff]
      %v6714 = vld [vmem:[%s6318 + $0x88] sm:$0xff]
      %v6715 = vld [vmem:[%s6318 + $0x90] sm:$0xff]
      %v6716 = vld [vmem:[%s6318 + $0xa8] sm:$0xff]
      %v6717 = vld [vmem:[%s6318 + $0xb0] sm:$0xff]
      %v6718 = vld [vmem:[%s6318 + $0xc8] sm:$0xff]
      %v6719 = vld [vmem:[%s6318 + $0xd0] sm:$0xff]
      %v6720 = vld [vmem:[%s6318 + $0xe8] sm:$0xff]
      %v6721 = vld [vmem:[%s6318 + $0xf0] sm:$0xff]
      %v6722 = vld [vmem:[%s6318 + $0x108] sm:$0xff]
      %v6723 = vld [vmem:[%s6318 + $0x110] sm:$0xff]
      %v6724 = vld [vmem:[%s6318 + $0x128] sm:$0xff]
      %v6725 = vld [vmem:[%s6318 + $0x130] sm:$0xff]
      %v6726 = vld [vmem:[%s6318 + $0x148] sm:$0xff]
      %v6727 = vld [vmem:[%s6318 + $0x150] sm:$0xff]
      %v6728 = vld [vmem:[%s6318 + $0x168] sm:$0xff]
      %v6729 = vld [vmem:[%s6318 + $0x170] sm:$0xff]
      %v6730 = vld [vmem:[%s6318 + $0x188] sm:$0xff]
      %v6731 = vld [vmem:[%s6318 + $0x190] sm:$0xff]
      %v6732 = vld [vmem:[%s6318 + $0x1a8] sm:$0xff]
      %v6733 = vld [vmem:[%s6318 + $0x1b0] sm:$0xff]
      %v6734 = vld [vmem:[%s6318 + $0x1c8] sm:$0xff]
      %v6735 = vld [vmem:[%s6318 + $0x1d0] sm:$0xff]
      %v6736 = vld [vmem:[%s6318 + $0x1e8] sm:$0xff]
      %v6737 = vld [vmem:[%s6318 + $0x1f0] sm:$0xff]
      %s6738 = scalar_lea.vmem %s3, 56
      %v6739 = vld [vmem:[%s6738] sm:$0xff]
      %v6741 = vsel %vm331, %v6706, 0
      %v6744 = vsel %vm331, %v6707, 0
      %v6747 = vsel %vm331, %v6708, 0
      %v6750 = vsel %vm331, %v6709, 0
      %v6753 = vsel %vm331, %v6710, 0
      %v6756 = vsel %vm331, %v6711, 0
      %v6759 = vsel %vm331, %v6712, 0
      %v6762 = vsel %vm331, %v6713, 0
      %v6765 = vsel %vm331, %v6714, 0
      %v6768 = vsel %vm331, %v6715, 0
      %v6771 = vsel %vm331, %v6716, 0
      %v6774 = vsel %vm331, %v6717, 0
      %v6777 = vsel %vm331, %v6718, 0
      %v6780 = vsel %vm331, %v6719, 0
      %v6783 = vsel %vm331, %v6720, 0
      %v6786 = vsel %vm331, %v6721, 0
      %v6789 = vsel %vm331, %v6722, 0
      %v6792 = vsel %vm331, %v6723, 0
      %v6795 = vsel %vm331, %v6724, 0
      %v6798 = vsel %vm331, %v6725, 0
      %v6801 = vsel %vm331, %v6726, 0
      %v6804 = vsel %vm331, %v6727, 0
      %v6807 = vsel %vm331, %v6728, 0
      %v6810 = vsel %vm331, %v6729, 0
      %v6813 = vsel %vm331, %v6730, 0
      %v6816 = vsel %vm331, %v6731, 0
      %v6819 = vsel %vm331, %v6732, 0
      %v6822 = vsel %vm331, %v6733, 0
      %v6825 = vsel %vm331, %v6734, 0
      %v6828 = vsel %vm331, %v6735, 0
      %v6831 = vsel %vm331, %v6736, 0
      %v6834 = vsel %vm331, %v6737, 0
      %6836 = vmatprep.subr.mxu0 0.0
      %6837 = vmatpush1.msra.mxu0 %v6739
      %6838 = vmatprep.subr.mxu0 0.0
      %6839 = vmatpush1.msra.mxu0 0.0
      %6840 = vmatprep.subr.mxu0 0.0
      %6841 = vmatpush1.msra.mxu0 0.0
      %6842 = vmatprep.subr.mxu0 0.0
      %6843 = vmatpush1.msra.mxu0 0.0
      %6844 = vmatprep.subr.mxu0 0.0
      %6845 = vmatpush1.msra.mxu0 0.0
      %6846 = vmatprep.subr.mxu0 0.0
      %6847 = vmatpush1.msra.mxu0 0.0
      %6848 = vmatprep.subr.mxu0 0.0
      %6849 = vmatpush1.msra.mxu0 0.0
      %6850 = vmatprep.subr.mxu0 0.0
      %6851 = vmatpush1.msra.mxu0 0.0
      %6852 = vmatprep.subr.mxu0 0.0
      %6853 = vmatpush1.msra.mxu0 0.0
      %6854 = vmatprep.subr.mxu0 0.0
      %6855 = vmatpush1.msra.mxu0 0.0
      %6856 = vmatprep.subr.mxu0 0.0
      %6857 = vmatpush1.msra.mxu0 0.0
      %6858 = vmatprep.subr.mxu0 0.0
      %6859 = vmatpush1.msra.mxu0 0.0
      %6860 = vmatprep.subr.mxu0 0.0
      %6861 = vmatpush1.msra.mxu0 0.0
      %6862 = vmatprep.subr.mxu0 0.0
      %6863 = vmatpush1.msra.mxu0 0.0
      %6864 = vmatprep.subr.mxu0 0.0
      %6865 = vmatpush1.msra.mxu0 0.0
      %6866 = vmatprep.subr.mxu0 0.0
      %6867 = vmatpush1.msra.mxu0 0.0
      %6868 = vmatprep.subr.mxu0 0.0
      %6869 = vmatpush1.msra.mxu0 0.0
      %6870 = vmatprep.subr.mxu0 0.0
      %6871 = vmatpush1.msra.mxu0 0.0
      %6872 = vmatprep.subr.mxu0 0.0
      %6873 = vmatpush1.msra.mxu0 0.0
      %6874 = vmatprep.subr.mxu0 0.0
      %6875 = vmatpush1.msra.mxu0 0.0
      %6876 = vmatprep.subr.mxu0 0.0
      %6877 = vmatpush1.msra.mxu0 0.0
      %6878 = vmatprep.subr.mxu0 0.0
      %6879 = vmatpush1.msra.mxu0 0.0
      %6880 = vmatprep.subr.mxu0 0.0
      %6881 = vmatpush1.msra.mxu0 0.0
      %6882 = vmatprep.subr.mxu0 0.0
      %6883 = vmatpush1.msra.mxu0 0.0
      %6884 = vmatprep.subr.mxu0 0.0
      %6885 = vmatpush1.msra.mxu0 0.0
      %6886 = vmatprep.subr.mxu0 0.0
      %6887 = vmatpush1.msra.mxu0 0.0
      %6888 = vmatprep.subr.mxu0 0.0
      %6889 = vmatpush1.msra.mxu0 0.0
      %6890 = vmatprep.subr.mxu0 0.0
      %6891 = vmatpush1.msra.mxu0 0.0
      %6892 = vmatprep.subr.mxu0 0.0
      %6893 = vmatpush1.msra.mxu0 0.0
      %6894 = vmatprep.subr.mxu0 0.0
      %6895 = vmatpush1.msra.mxu0 0.0
      %6896 = vmatprep.subr.mxu0 0.0
      %6897 = vmatpush1.msra.mxu0 0.0
      %6898 = vmatprep.subr.mxu0 0.0
      %6899 = vmatpush1.msra.mxu0 0.0
      %6900 = vmatprep.mubr.f32.mxu0 0.0
      %6901 = vmatmul.mubr.f32.gmra.mrb[0].mxu0 %v6741
      %v6902 = vpop.f32.mrb[0].mxu0
      %v6903 = vadd.f32 0.0, %v6902
      %v6904 = vpop.f32.mrb[0].mxu0
      %6905 = vmatprep.mubr.f32.mxu0 0.0
      %6906 = vmatmul.mubr.f32.gmra.mrb[0].mxu0 %v6744
      %v6907 = vpop.f32.mrb[0].mxu0
      %v6908 = vadd.f32 0.0, %v6907
      %v6909 = vpop.f32.mrb[0].mxu0
      %6910 = vmatprep.mubr.f32.mxu0 0.0
      %6911 = vmatmul.mubr.f32.gmra.mrb[0].mxu0 %v6747
      %v6912 = vpop.f32.mrb[0].mxu0
      %v6913 = vadd.f32 0.0, %v6912
      %v6914 = vpop.f32.mrb[0].mxu0
      %6915 = vmatprep.mubr.f32.mxu0 0.0
      %6916 = vmatmul.mubr.f32.gmra.mrb[0].mxu0 %v6750
      %v6917 = vpop.f32.mrb[0].mxu0
      %v6918 = vadd.f32 0.0, %v6917
      %v6919 = vpop.f32.mrb[0].mxu0
      %6920 = vmatprep.mubr.f32.mxu0 0.0
      %6921 = vmatmul.mubr.f32.gmra.mrb[0].mxu0 %v6753
      %v6922 = vpop.f32.mrb[0].mxu0
      %v6923 = vadd.f32 0.0, %v6922
      %v6924 = vpop.f32.mrb[0].mxu0
      %6925 = vmatprep.mubr.f32.mxu0 0.0
      %6926 = vmatmul.mubr.f32.gmra.mrb[0].mxu0 %v6756
      %v6927 = vpop.f32.mrb[0].mxu0
      %v6928 = vadd.f32 0.0, %v6927
      %v6929 = vpop.f32.mrb[0].mxu0
      %6930 = vmatprep.mubr.f32.mxu0 0.0
      %6931 = vmatmul.mubr.f32.gmra.mrb[0].mxu0 %v6759
      %v6932 = vpop.f32.mrb[0].mxu0
      %v6933 = vadd.f32 0.0, %v6932
      %v6934 = vpop.f32.mrb[0].mxu0
      %6935 = vmatprep.mubr.f32.mxu0 0.0
      %6936 = vmatmul.mubr.f32.gmra.mrb[0].mxu0 %v6762
      %v6937 = vpop.f32.mrb[0].mxu0
      %v6938 = vadd.f32 0.0, %v6937
      %v6939 = vpop.f32.mrb[0].mxu0
      %6940 = vmatprep.mubr.f32.mxu0 0.0
      %6941 = vmatmul.mubr.f32.gmra.mrb[0].mxu0 %v6765
      %v6942 = vpop.f32.mrb[0].mxu0
      %v6943 = vadd.f32 0.0, %v6942
      %v6944 = vpop.f32.mrb[0].mxu0
      %6945 = vmatprep.mubr.f32.mxu0 0.0
      %6946 = vmatmul.mubr.f32.gmra.mrb[0].mxu0 %v6768
      %v6947 = vpop.f32.mrb[0].mxu0
      %v6948 = vadd.f32 0.0, %v6947
      %v6949 = vpop.f32.mrb[0].mxu0
      %6950 = vmatprep.mubr.f32.mxu0 0.0
      %6951 = vmatmul.mubr.f32.gmra.mrb[0].mxu0 %v6771
      %v6952 = vpop.f32.mrb[0].mxu0
      %v6953 = vadd.f32 0.0, %v6952
      %v6954 = vpop.f32.mrb[0].mxu0
      %6955 = vmatprep.mubr.f32.mxu0 0.0
      %6956 = vmatmul.mubr.f32.gmra.mrb[0].mxu0 %v6774
      %v6957 = vpop.f32.mrb[0].mxu0
      %v6958 = vadd.f32 0.0, %v6957
      %v6959 = vpop.f32.mrb[0].mxu0
      %6960 = vmatprep.mubr.f32.mxu0 0.0
      %6961 = vmatmul.mubr.f32.gmra.mrb[0].mxu0 %v6777
      %v6962 = vpop.f32.mrb[0].mxu0
      %v6963 = vadd.f32 0.0, %v6962
      %v6964 = vpop.f32.mrb[0].mxu0
      %6965 = vmatprep.mubr.f32.mxu0 0.0
      %6966 = vmatmul.mubr.f32.gmra.mrb[0].mxu0 %v6780
      %v6967 = vpop.f32.mrb[0].mxu0
      %v6968 = vadd.f32 0.0, %v6967
      %v6969 = vpop.f32.mrb[0].mxu0
      %6970 = vmatprep.mubr.f32.mxu0 0.0
      %6971 = vmatmul.mubr.f32.gmra.mrb[0].mxu0 %v6783
      %v6972 = vpop.f32.mrb[0].mxu0
      %v6973 = vadd.f32 0.0, %v6972
      %v6974 = vpop.f32.mrb[0].mxu0
      %6975 = vmatprep.mubr.f32.mxu0 0.0
      %6976 = vmatmul.mubr.f32.gmra.mrb[0].mxu0 %v6786
      %v6977 = vpop.f32.mrb[0].mxu0
      %v6978 = vadd.f32 0.0, %v6977
      %v6979 = vpop.f32.mrb[0].mxu0
      %6980 = vmatprep.mubr.f32.mxu0 0.0
      %6981 = vmatmul.mubr.f32.gmra.mrb[0].mxu0 %v6789
      %v6982 = vpop.f32.mrb[0].mxu0
      %v6983 = vadd.f32 0.0, %v6982
      %v6984 = vpop.f32.mrb[0].mxu0
      %6985 = vmatprep.mubr.f32.mxu0 0.0
      %6986 = vmatmul.mubr.f32.gmra.mrb[0].mxu0 %v6792
      %v6987 = vpop.f32.mrb[0].mxu0
      %v6988 = vadd.f32 0.0, %v6987
      %v6989 = vpop.f32.mrb[0].mxu0
      %6990 = vmatprep.mubr.f32.mxu0 0.0
      %6991 = vmatmul.mubr.f32.gmra.mrb[0].mxu0 %v6795
      %v6992 = vpop.f32.mrb[0].mxu0
      %v6993 = vadd.f32 0.0, %v6992
      %v6994 = vpop.f32.mrb[0].mxu0
      %6995 = vmatprep.mubr.f32.mxu0 0.0
      %6996 = vmatmul.mubr.f32.gmra.mrb[0].mxu0 %v6798
      %v6997 = vpop.f32.mrb[0].mxu0
      %v6998 = vadd.f32 0.0, %v6997
      %v6999 = vpop.f32.mrb[0].mxu0
      %7000 = vmatprep.mubr.f32.mxu0 0.0
      %7001 = vmatmul.mubr.f32.gmra.mrb[0].mxu0 %v6801
      %v7002 = vpop.f32.mrb[0].mxu0
      %v7003 = vadd.f32 0.0, %v7002
      %v7004 = vpop.f32.mrb[0].mxu0
      %7005 = vmatprep.mubr.f32.mxu0 0.0
      %7006 = vmatmul.mubr.f32.gmra.mrb[0].mxu0 %v6804
      %v7007 = vpop.f32.mrb[0].mxu0
      %v7008 = vadd.f32 0.0, %v7007
      %v7009 = vpop.f32.mrb[0].mxu0
      %7010 = vmatprep.mubr.f32.mxu0 0.0
      %7011 = vmatmul.mubr.f32.gmra.mrb[0].mxu0 %v6807
      %v7012 = vpop.f32.mrb[0].mxu0
      %v7013 = vadd.f32 0.0, %v7012
      %v7014 = vpop.f32.mrb[0].mxu0
      %7015 = vmatprep.mubr.f32.mxu0 0.0
      %7016 = vmatmul.mubr.f32.gmra.mrb[0].mxu0 %v6810
      %v7017 = vpop.f32.mrb[0].mxu0
      %v7018 = vadd.f32 0.0, %v7017
      %v7019 = vpop.f32.mrb[0].mxu0
      %7020 = vmatprep.mubr.f32.mxu0 0.0
      %7021 = vmatmul.mubr.f32.gmra.mrb[0].mxu0 %v6813
      %v7022 = vpop.f32.mrb[0].mxu0
      %v7023 = vadd.f32 0.0, %v7022
      %v7024 = vpop.f32.mrb[0].mxu0
      %7025 = vmatprep.mubr.f32.mxu0 0.0
      %7026 = vmatmul.mubr.f32.gmra.mrb[0].mxu0 %v6816
      %v7027 = vpop.f32.mrb[0].mxu0
      %v7028 = vadd.f32 0.0, %v7027
      %v7029 = vpop.f32.mrb[0].mxu0
      %7030 = vmatprep.mubr.f32.mxu0 0.0
      %7031 = vmatmul.mubr.f32.gmra.mrb[0].mxu0 %v6819
      %v7032 = vpop.f32.mrb[0].mxu0
      %v7033 = vadd.f32 0.0, %v7032
      %v7034 = vpop.f32.mrb[0].mxu0
      %7035 = vmatprep.mubr.f32.mxu0 0.0
      %7036 = vmatmul.mubr.f32.gmra.mrb[0].mxu0 %v6822
      %v7037 = vpop.f32.mrb[0].mxu0
      %v7038 = vadd.f32 0.0, %v7037
      %v7039 = vpop.f32.mrb[0].mxu0
      %7040 = vmatprep.mubr.f32.mxu0 0.0
      %7041 = vmatmul.mubr.f32.gmra.mrb[0].mxu0 %v6825
      %v7042 = vpop.f32.mrb[0].mxu0
      %v7043 = vadd.f32 0.0, %v7042
      %v7044 = vpop.f32.mrb[0].mxu0
      %7045 = vmatprep.mubr.f32.mxu0 0.0
      %7046 = vmatmul.mubr.f32.gmra.mrb[0].mxu0 %v6828
      %v7047 = vpop.f32.mrb[0].mxu0
      %v7048 = vadd.f32 0.0, %v7047
      %v7049 = vpop.f32.mrb[0].mxu0
      %7050 = vmatprep.mubr.f32.mxu0 0.0
      %7051 = vmatmul.mubr.f32.gmra.mrb[0].mxu0 %v6831
      %v7052 = vpop.f32.mrb[0].mxu0
      %v7053 = vadd.f32 0.0, %v7052
      %v7054 = vpop.f32.mrb[0].mxu0
      %7055 = vmatprep.mubr.f32.mxu0 0.0
      %7056 = vmatmul.mubr.f32.gmra.mrb[0].mxu0 %v6834
      %v7057 = vpop.f32.mrb[0].mxu0
      %v7058 = vadd.f32 0.0, %v7057
      %v7059 = vpop.f32.mrb[0].mxu0
      %7060 = vdwg.mxu0
      %v7061 = vadd.f32 %v6674, %v6903
      %v7062 = vadd.f32 %v6675, %v6908
      %v7063 = vadd.f32 %v6676, %v6913
      %v7064 = vadd.f32 %v6677, %v6918
      %v7065 = vadd.f32 %v6678, %v6923
      %v7066 = vadd.f32 %v6679, %v6928
      %v7067 = vadd.f32 %v6680, %v6933
      %v7068 = vadd.f32 %v6681, %v6938
      %v7069 = vadd.f32 %v6682, %v6943
      %v7070 = vadd.f32 %v6683, %v6948
      %v7071 = vadd.f32 %v6684, %v6953
      %v7072 = vadd.f32 %v6685, %v6958
      %v7073 = vadd.f32 %v6686, %v6963
      %v7074 = vadd.f32 %v6687, %v6968
      %v7075 = vadd.f32 %v6688, %v6973
      %v7076 = vadd.f32 %v6689, %v6978
      %v7077 = vadd.f32 %v6690, %v6983
      %v7078 = vadd.f32 %v6691, %v6988
      %v7079 = vadd.f32 %v6692, %v6993
      %v7080 = vadd.f32 %v6693, %v6998
      %v7081 = vadd.f32 %v6694, %v7003
      %v7082 = vadd.f32 %v6695, %v7008
      %v7083 = vadd.f32 %v6696, %v7013
      %v7084 = vadd.f32 %v6697, %v7018
      %v7085 = vadd.f32 %v6698, %v7023
      %v7086 = vadd.f32 %v6699, %v7028
      %v7087 = vadd.f32 %v6700, %v7033
      %v7088 = vadd.f32 %v6701, %v7038
      %v7089 = vadd.f32 %v6702, %v7043
      %v7090 = vadd.f32 %v6703, %v7048
      %v7091 = vadd.f32 %v6704, %v7053
      %v7092 = vadd.f32 %v6705, %v7058
      %v7093 = vld [vmem:[%s6318 + $0xa] sm:$0xff]
      %v7094 = vld [vmem:[%s6318 + $0x12] sm:$0xff]
      %v7095 = vld [vmem:[%s6318 + $0x2a] sm:$0xff]
      %v7096 = vld [vmem:[%s6318 + $0x32] sm:$0xff]
      %v7097 = vld [vmem:[%s6318 + $0x4a] sm:$0xff]
      %v7098 = vld [vmem:[%s6318 + $0x52] sm:$0xff]
      %v7099 = vld [vmem:[%s6318 + $0x6a] sm:$0xff]
      %v7100 = vld [vmem:[%s6318 + $0x72] sm:$0xff]
      %v7101 = vld [vmem:[%s6318 + $0x8a] sm:$0xff]
      %v7102 = vld [vmem:[%s6318 + $0x92] sm:$0xff]
      %v7103 = vld [vmem:[%s6318 + $0xaa] sm:$0xff]
      %v7104 = vld [vmem:[%s6318 + $0xb2] sm:$0xff]
      %v7105 = vld [vmem:[%s6318 + $0xca] sm:$0xff]
      %v7106 = vld [vmem:[%s6318 + $0xd2] sm:$0xff]
      %v7107 = vld [vmem:[%s6318 + $0xea] sm:$0xff]
      %v7108 = vld [vmem:[%s6318 + $0xf2] sm:$0xff]
      %v7109 = vld [vmem:[%s6318 + $0x10a] sm:$0xff]
      %v7110 = vld [vmem:[%s6318 + $0x112] sm:$0xff]
      %v7111 = vld [vmem:[%s6318 + $0x12a] sm:$0xff]
      %v7112 = vld [vmem:[%s6318 + $0x132] sm:$0xff]
      %v7113 = vld [vmem:[%s6318 + $0x14a] sm:$0xff]
      %v7114 = vld [vmem:[%s6318 + $0x152] sm:$0xff]
      %v7115 = vld [vmem:[%s6318 + $0x16a] sm:$0xff]
      %v7116 = vld [vmem:[%s6318 + $0x172] sm:$0xff]
      %v7117 = vld [vmem:[%s6318 + $0x18a] sm:$0xff]
      %v7118 = vld [vmem:[%s6318 + $0x192] sm:$0xff]
      %v7119 = vld [vmem:[%s6318 + $0x1aa] sm:$0xff]
      %v7120 = vld [vmem:[%s6318 + $0x1b2] sm:$0xff]
      %v7121 = vld [vmem:[%s6318 + $0x1ca] sm:$0xff]
      %v7122 = vld [vmem:[%s6318 + $0x1d2] sm:$0xff]
      %v7123 = vld [vmem:[%s6318 + $0x1ea] sm:$0xff]
      %v7124 = vld [vmem:[%s6318 + $0x1f2] sm:$0xff]
      %s7125 = scalar_lea.vmem %s3, 64
      %v7126 = vld [vmem:[%s7125] sm:$0xff]
      %v7128 = vsel %vm331, %v7093, 0
      %v7131 = vsel %vm331, %v7094, 0
      %v7134 = vsel %vm331, %v7095, 0
      %v7137 = vsel %vm331, %v7096, 0
      %v7140 = vsel %vm331, %v7097, 0
      %v7143 = vsel %vm331, %v7098, 0
      %v7146 = vsel %vm331, %v7099, 0
      %v7149 = vsel %vm331, %v7100, 0
      %v7152 = vsel %vm331, %v7101, 0
      %v7155 = vsel %vm331, %v7102, 0
      %v7158 = vsel %vm331, %v7103, 0
      %v7161 = vsel %vm331, %v7104, 0
      %v7164 = vsel %vm331, %v7105, 0
      %v7167 = vsel %vm331, %v7106, 0
      %v7170 = vsel %vm331, %v7107, 0
      %v7173 = vsel %vm331, %v7108, 0
      %v7176 = vsel %vm331, %v7109, 0
      %v7179 = vsel %vm331, %v7110, 0
      %v7182 = vsel %vm331, %v7111, 0
      %v7185 = vsel %vm331, %v7112, 0
      %v7188 = vsel %vm331, %v7113, 0
      %v7191 = vsel %vm331, %v7114, 0
      %v7194 = vsel %vm331, %v7115, 0
      %v7197 = vsel %vm331, %v7116, 0
      %v7200 = vsel %vm331, %v7117, 0
      %v7203 = vsel %vm331, %v7118, 0
      %v7206 = vsel %vm331, %v7119, 0
      %v7209 = vsel %vm331, %v7120, 0
      %v7212 = vsel %vm331, %v7121, 0
      %v7215 = vsel %vm331, %v7122, 0
      %v7218 = vsel %vm331, %v7123, 0
      %v7221 = vsel %vm331, %v7124, 0
      %7223 = vmatprep.subr.mxu0 0.0
      %7224 = vmatpush1.msra.mxu0 %v7126
      %7225 = vmatprep.subr.mxu0 0.0
      %7226 = vmatpush1.msra.mxu0 0.0
      %7227 = vmatprep.subr.mxu0 0.0
      %7228 = vmatpush1.msra.mxu0 0.0
      %7229 = vmatprep.subr.mxu0 0.0
      %7230 = vmatpush1.msra.mxu0 0.0
      %7231 = vmatprep.subr.mxu0 0.0
      %7232 = vmatpush1.msra.mxu0 0.0
      %7233 = vmatprep.subr.mxu0 0.0
      %7234 = vmatpush1.msra.mxu0 0.0
      %7235 = vmatprep.subr.mxu0 0.0
      %7236 = vmatpush1.msra.mxu0 0.0
      %7237 = vmatprep.subr.mxu0 0.0
      %7238 = vmatpush1.msra.mxu0 0.0
      %7239 = vmatprep.subr.mxu0 0.0
      %7240 = vmatpush1.msra.mxu0 0.0
      %7241 = vmatprep.subr.mxu0 0.0
      %7242 = vmatpush1.msra.mxu0 0.0
      %7243 = vmatprep.subr.mxu0 0.0
      %7244 = vmatpush1.msra.mxu0 0.0
      %7245 = vmatprep.subr.mxu0 0.0
      %7246 = vmatpush1.msra.mxu0 0.0
      %7247 = vmatprep.subr.mxu0 0.0
      %7248 = vmatpush1.msra.mxu0 0.0
      %7249 = vmatprep.subr.mxu0 0.0
      %7250 = vmatpush1.msra.mxu0 0.0
      %7251 = vmatprep.subr.mxu0 0.0
      %7252 = vmatpush1.msra.mxu0 0.0
      %7253 = vmatprep.subr.mxu0 0.0
      %7254 = vmatpush1.msra.mxu0 0.0
      %7255 = vmatprep.subr.mxu0 0.0
      %7256 = vmatpush1.msra.mxu0 0.0
      %7257 = vmatprep.subr.mxu0 0.0
      %7258 = vmatpush1.msra.mxu0 0.0
      %7259 = vmatprep.subr.mxu0 0.0
      %7260 = vmatpush1.msra.mxu0 0.0
      %7261 = vmatprep.subr.mxu0 0.0
      %7262 = vmatpush1.msra.mxu0 0.0
      %7263 = vmatprep.subr.mxu0 0.0
      %7264 = vmatpush1.msra.mxu0 0.0
      %7265 = vmatprep.subr.mxu0 0.0
      %7266 = vmatpush1.msra.mxu0 0.0
      %7267 = vmatprep.subr.mxu0 0.0
      %7268 = vmatpush1.msra.mxu0 0.0
      %7269 = vmatprep.subr.mxu0 0.0
      %7270 = vmatpush1.msra.mxu0 0.0
      %7271 = vmatprep.subr.mxu0 0.0
      %7272 = vmatpush1.msra.mxu0 0.0
      %7273 = vmatprep.subr.mxu0 0.0
      %7274 = vmatpush1.msra.mxu0 0.0
      %7275 = vmatprep.subr.mxu0 0.0
      %7276 = vmatpush1.msra.mxu0 0.0
      %7277 = vmatprep.subr.mxu0 0.0
      %7278 = vmatpush1.msra.mxu0 0.0
      %7279 = vmatprep.subr.mxu0 0.0
      %7280 = vmatpush1.msra.mxu0 0.0
      %7281 = vmatprep.subr.mxu0 0.0
      %7282 = vmatpush1.msra.mxu0 0.0
      %7283 = vmatprep.subr.mxu0 0.0
      %7284 = vmatpush1.msra.mxu0 0.0
      %7285 = vmatprep.subr.mxu0 0.0
      %7286 = vmatpush1.msra.mxu0 0.0
      %7287 = vmatprep.mubr.f32.mxu0 0.0
      %7288 = vmatmul.mubr.f32.gmra.mrb[0].mxu0 %v7128
      %v7289 = vpop.f32.mrb[0].mxu0
      %v7290 = vadd.f32 0.0, %v7289
      %v7291 = vpop.f32.mrb[0].mxu0
      %7292 = vmatprep.mubr.f32.mxu0 0.0
      %7293 = vmatmul.mubr.f32.gmra.mrb[0].mxu0 %v7131
      %v7294 = vpop.f32.mrb[0].mxu0
      %v7295 = vadd.f32 0.0, %v7294
      %v7296 = vpop.f32.mrb[0].mxu0
      %7297 = vmatprep.mubr.f32.mxu0 0.0
      %7298 = vmatmul.mubr.f32.gmra.mrb[0].mxu0 %v7134
      %v7299 = vpop.f32.mrb[0].mxu0
      %v7300 = vadd.f32 0.0, %v7299
      %v7301 = vpop.f32.mrb[0].mxu0
      %7302 = vmatprep.mubr.f32.mxu0 0.0
      %7303 = vmatmul.mubr.f32.gmra.mrb[0].mxu0 %v7137
      %v7304 = vpop.f32.mrb[0].mxu0
      %v7305 = vadd.f32 0.0, %v7304
      %v7306 = vpop.f32.mrb[0].mxu0
      %7307 = vmatprep.mubr.f32.mxu0 0.0
      %7308 = vmatmul.mubr.f32.gmra.mrb[0].mxu0 %v7140
      %v7309 = vpop.f32.mrb[0].mxu0
      %v7310 = vadd.f32 0.0, %v7309
      %v7311 = vpop.f32.mrb[0].mxu0
      %7312 = vmatprep.mubr.f32.mxu0 0.0
      %7313 = vmatmul.mubr.f32.gmra.mrb[0].mxu0 %v7143
      %v7314 = vpop.f32.mrb[0].mxu0
      %v7315 = vadd.f32 0.0, %v7314
      %v7316 = vpop.f32.mrb[0].mxu0
      %7317 = vmatprep.mubr.f32.mxu0 0.0
      %7318 = vmatmul.mubr.f32.gmra.mrb[0].mxu0 %v7146
      %v7319 = vpop.f32.mrb[0].mxu0
      %v7320 = vadd.f32 0.0, %v7319
      %v7321 = vpop.f32.mrb[0].mxu0
      %7322 = vmatprep.mubr.f32.mxu0 0.0
      %7323 = vmatmul.mubr.f32.gmra.mrb[0].mxu0 %v7149
      %v7324 = vpop.f32.mrb[0].mxu0
      %v7325 = vadd.f32 0.0, %v7324
      %v7326 = vpop.f32.mrb[0].mxu0
      %7327 = vmatprep.mubr.f32.mxu0 0.0
      %7328 = vmatmul.mubr.f32.gmra.mrb[0].mxu0 %v7152
      %v7329 = vpop.f32.mrb[0].mxu0
      %v7330 = vadd.f32 0.0, %v7329
      %v7331 = vpop.f32.mrb[0].mxu0
      %7332 = vmatprep.mubr.f32.mxu0 0.0
      %7333 = vmatmul.mubr.f32.gmra.mrb[0].mxu0 %v7155
      %v7334 = vpop.f32.mrb[0].mxu0
      %v7335 = vadd.f32 0.0, %v7334
      %v7336 = vpop.f32.mrb[0].mxu0
      %7337 = vmatprep.mubr.f32.mxu0 0.0
      %7338 = vmatmul.mubr.f32.gmra.mrb[0].mxu0 %v7158
      %v7339 = vpop.f32.mrb[0].mxu0
      %v7340 = vadd.f32 0.0, %v7339
      %v7341 = vpop.f32.mrb[0].mxu0
      %7342 = vmatprep.mubr.f32.mxu0 0.0
      %7343 = vmatmul.mubr.f32.gmra.mrb[0].mxu0 %v7161
      %v7344 = vpop.f32.mrb[0].mxu0
      %v7345 = vadd.f32 0.0, %v7344
      %v7346 = vpop.f32.mrb[0].mxu0
      %7347 = vmatprep.mubr.f32.mxu0 0.0
      %7348 = vmatmul.mubr.f32.gmra.mrb[0].mxu0 %v7164
      %v7349 = vpop.f32.mrb[0].mxu0
      %v7350 = vadd.f32 0.0, %v7349
      %v7351 = vpop.f32.mrb[0].mxu0
      %7352 = vmatprep.mubr.f32.mxu0 0.0
      %7353 = vmatmul.mubr.f32.gmra.mrb[0].mxu0 %v7167
      %v7354 = vpop.f32.mrb[0].mxu0
      %v7355 = vadd.f32 0.0, %v7354
      %v7356 = vpop.f32.mrb[0].mxu0
      %7357 = vmatprep.mubr.f32.mxu0 0.0
      %7358 = vmatmul.mubr.f32.gmra.mrb[0].mxu0 %v7170
      %v7359 = vpop.f32.mrb[0].mxu0
      %v7360 = vadd.f32 0.0, %v7359
      %v7361 = vpop.f32.mrb[0].mxu0
      %7362 = vmatprep.mubr.f32.mxu0 0.0
      %7363 = vmatmul.mubr.f32.gmra.mrb[0].mxu0 %v7173
      %v7364 = vpop.f32.mrb[0].mxu0
      %v7365 = vadd.f32 0.0, %v7364
      %v7366 = vpop.f32.mrb[0].mxu0
      %7367 = vmatprep.mubr.f32.mxu0 0.0
      %7368 = vmatmul.mubr.f32.gmra.mrb[0].mxu0 %v7176
      %v7369 = vpop.f32.mrb[0].mxu0
      %v7370 = vadd.f32 0.0, %v7369
      %v7371 = vpop.f32.mrb[0].mxu0
      %7372 = vmatprep.mubr.f32.mxu0 0.0
      %7373 = vmatmul.mubr.f32.gmra.mrb[0].mxu0 %v7179
      %v7374 = vpop.f32.mrb[0].mxu0
      %v7375 = vadd.f32 0.0, %v7374
      %v7376 = vpop.f32.mrb[0].mxu0
      %7377 = vmatprep.mubr.f32.mxu0 0.0
      %7378 = vmatmul.mubr.f32.gmra.mrb[0].mxu0 %v7182
      %v7379 = vpop.f32.mrb[0].mxu0
      %v7380 = vadd.f32 0.0, %v7379
      %v7381 = vpop.f32.mrb[0].mxu0
      %7382 = vmatprep.mubr.f32.mxu0 0.0
      %7383 = vmatmul.mubr.f32.gmra.mrb[0].mxu0 %v7185
      %v7384 = vpop.f32.mrb[0].mxu0
      %v7385 = vadd.f32 0.0, %v7384
      %v7386 = vpop.f32.mrb[0].mxu0
      %7387 = vmatprep.mubr.f32.mxu0 0.0
      %7388 = vmatmul.mubr.f32.gmra.mrb[0].mxu0 %v7188
      %v7389 = vpop.f32.mrb[0].mxu0
      %v7390 = vadd.f32 0.0, %v7389
      %v7391 = vpop.f32.mrb[0].mxu0
      %7392 = vmatprep.mubr.f32.mxu0 0.0
      %7393 = vmatmul.mubr.f32.gmra.mrb[0].mxu0 %v7191
      %v7394 = vpop.f32.mrb[0].mxu0
      %v7395 = vadd.f32 0.0, %v7394
      %v7396 = vpop.f32.mrb[0].mxu0
      %7397 = vmatprep.mubr.f32.mxu0 0.0
      %7398 = vmatmul.mubr.f32.gmra.mrb[0].mxu0 %v7194
      %v7399 = vpop.f32.mrb[0].mxu0
      %v7400 = vadd.f32 0.0, %v7399
      %v7401 = vpop.f32.mrb[0].mxu0
      %7402 = vmatprep.mubr.f32.mxu0 0.0
      %7403 = vmatmul.mubr.f32.gmra.mrb[0].mxu0 %v7197
      %v7404 = vpop.f32.mrb[0].mxu0
      %v7405 = vadd.f32 0.0, %v7404
      %v7406 = vpop.f32.mrb[0].mxu0
      %7407 = vmatprep.mubr.f32.mxu0 0.0
      %7408 = vmatmul.mubr.f32.gmra.mrb[0].mxu0 %v7200
      %v7409 = vpop.f32.mrb[0].mxu0
      %v7410 = vadd.f32 0.0, %v7409
      %v7411 = vpop.f32.mrb[0].mxu0
      %7412 = vmatprep.mubr.f32.mxu0 0.0
      %7413 = vmatmul.mubr.f32.gmra.mrb[0].mxu0 %v7203
      %v7414 = vpop.f32.mrb[0].mxu0
      %v7415 = vadd.f32 0.0, %v7414
      %v7416 = vpop.f32.mrb[0].mxu0
      %7417 = vmatprep.mubr.f32.mxu0 0.0
      %7418 = vmatmul.mubr.f32.gmra.mrb[0].mxu0 %v7206
      %v7419 = vpop.f32.mrb[0].mxu0
      %v7420 = vadd.f32 0.0, %v7419
      %v7421 = vpop.f32.mrb[0].mxu0
      %7422 = vmatprep.mubr.f32.mxu0 0.0
      %7423 = vmatmul.mubr.f32.gmra.mrb[0].mxu0 %v7209
      %v7424 = vpop.f32.mrb[0].mxu0
      %v7425 = vadd.f32 0.0, %v7424
      %v7426 = vpop.f32.mrb[0].mxu0
      %7427 = vmatprep.mubr.f32.mxu0 0.0
      %7428 = vmatmul.mubr.f32.gmra.mrb[0].mxu0 %v7212
      %v7429 = vpop.f32.mrb[0].mxu0
      %v7430 = vadd.f32 0.0, %v7429
      %v7431 = vpop.f32.mrb[0].mxu0
      %7432 = vmatprep.mubr.f32.mxu0 0.0
      %7433 = vmatmul.mubr.f32.gmra.mrb[0].mxu0 %v7215
      %v7434 = vpop.f32.mrb[0].mxu0
      %v7435 = vadd.f32 0.0, %v7434
      %v7436 = vpop.f32.mrb[0].mxu0
      %7437 = vmatprep.mubr.f32.mxu0 0.0
      %7438 = vmatmul.mubr.f32.gmra.mrb[0].mxu0 %v7218
      %v7439 = vpop.f32.mrb[0].mxu0
      %v7440 = vadd.f32 0.0, %v7439
      %v7441 = vpop.f32.mrb[0].mxu0
      %7442 = vmatprep.mubr.f32.mxu0 0.0
      %7443 = vmatmul.mubr.f32.gmra.mrb[0].mxu0 %v7221
      %v7444 = vpop.f32.mrb[0].mxu0
      %v7445 = vadd.f32 0.0, %v7444
      %v7446 = vpop.f32.mrb[0].mxu0
      %7447 = vdwg.mxu0
      %v7448 = vadd.f32 %v7061, %v7290
      %v7449 = vadd.f32 %v7062, %v7295
      %v7450 = vadd.f32 %v7063, %v7300
      %v7451 = vadd.f32 %v7064, %v7305
      %v7452 = vadd.f32 %v7065, %v7310
      %v7453 = vadd.f32 %v7066, %v7315
      %v7454 = vadd.f32 %v7067, %v7320
      %v7455 = vadd.f32 %v7068, %v7325
      %v7456 = vadd.f32 %v7069, %v7330
      %v7457 = vadd.f32 %v7070, %v7335
      %v7458 = vadd.f32 %v7071, %v7340
      %v7459 = vadd.f32 %v7072, %v7345
      %v7460 = vadd.f32 %v7073, %v7350
      %v7461 = vadd.f32 %v7074, %v7355
      %v7462 = vadd.f32 %v7075, %v7360
      %v7463 = vadd.f32 %v7076, %v7365
      %v7464 = vadd.f32 %v7077, %v7370
      %v7465 = vadd.f32 %v7078, %v7375
      %v7466 = vadd.f32 %v7079, %v7380
      %v7467 = vadd.f32 %v7080, %v7385
      %v7468 = vadd.f32 %v7081, %v7390
      %v7469 = vadd.f32 %v7082, %v7395
      %v7470 = vadd.f32 %v7083, %v7400
      %v7471 = vadd.f32 %v7084, %v7405
      %v7472 = vadd.f32 %v7085, %v7410
      %v7473 = vadd.f32 %v7086, %v7415
      %v7474 = vadd.f32 %v7087, %v7420
      %v7475 = vadd.f32 %v7088, %v7425
      %v7476 = vadd.f32 %v7089, %v7430
      %v7477 = vadd.f32 %v7090, %v7435
      %v7478 = vadd.f32 %v7091, %v7440
      %v7479 = vadd.f32 %v7092, %v7445
      %v7480 = vld [vmem:[%s4] sm:$0x1]
      %v7482 = vlaneseq
      %v7483 = vshrl.u32 %v7482, 7
      %v7484 = vsub.s32 0, %v7483
      %v7485 = vrot.slane %v7480, %v7484
      %v7487 = vadd.f32 %v7448, %v7485
      %v7488 = vadd.f32 %v7449, %v7485
      %v7489 = vadd.f32 %v7450, %v7485
      %v7490 = vadd.f32 %v7451, %v7485
      %v7491 = vadd.f32 %v7452, %v7485
      %v7492 = vadd.f32 %v7453, %v7485
      %v7493 = vadd.f32 %v7454, %v7485
      %v7494 = vadd.f32 %v7455, %v7485
      %v7495 = vadd.f32 %v7456, %v7485
      %v7496 = vadd.f32 %v7457, %v7485
      %v7497 = vadd.f32 %v7458, %v7485
      %v7498 = vadd.f32 %v7459, %v7485
      %v7499 = vadd.f32 %v7460, %v7485
      %v7500 = vadd.f32 %v7461, %v7485
      %v7501 = vadd.f32 %v7462, %v7485
      %v7502 = vadd.f32 %v7463, %v7485
      %v7503 = vadd.f32 %v7464, %v7485
      %v7504 = vadd.f32 %v7465, %v7485
      %v7505 = vadd.f32 %v7466, %v7485
      %v7506 = vadd.f32 %v7467, %v7485
      %v7507 = vadd.f32 %v7468, %v7485
      %v7508 = vadd.f32 %v7469, %v7485
      %v7509 = vadd.f32 %v7470, %v7485
      %v7510 = vadd.f32 %v7471, %v7485
      %v7511 = vadd.f32 %v7472, %v7485
      %v7512 = vadd.f32 %v7473, %v7485
      %v7513 = vadd.f32 %v7474, %v7485
      %v7514 = vadd.f32 %v7475, %v7485
      %v7515 = vadd.f32 %v7476, %v7485
      %v7516 = vadd.f32 %v7477, %v7485
      %v7517 = vadd.f32 %v7478, %v7485
      %v7518 = vadd.f32 %v7479, %v7485
      %vm7519 = vcmp.ge.f32.partialorder %v7487, 0.0
      %vm7520 = vcmp.ge.f32.partialorder %v7488, 0.0
      %vm7521 = vcmp.ge.f32.partialorder %v7489, 0.0
      %vm7522 = vcmp.ge.f32.partialorder %v7490, 0.0
      %vm7523 = vcmp.ge.f32.partialorder %v7491, 0.0
      %vm7524 = vcmp.ge.f32.partialorder %v7492, 0.0
      %vm7525 = vcmp.ge.f32.partialorder %v7493, 0.0
      %vm7526 = vcmp.ge.f32.partialorder %v7494, 0.0
      %vm7527 = vcmp.ge.f32.partialorder %v7495, 0.0
      %vm7528 = vcmp.ge.f32.partialorder %v7496, 0.0
      %vm7529 = vcmp.ge.f32.partialorder %v7497, 0.0
      %vm7530 = vcmp.ge.f32.partialorder %v7498, 0.0
      %vm7531 = vcmp.ge.f32.partialorder %v7499, 0.0
      %vm7532 = vcmp.ge.f32.partialorder %v7500, 0.0
      %vm7533 = vcmp.ge.f32.partialorder %v7501, 0.0
      %vm7534 = vcmp.ge.f32.partialorder %v7502, 0.0
      %vm7535 = vcmp.ge.f32.partialorder %v7503, 0.0
      %vm7536 = vcmp.ge.f32.partialorder %v7504, 0.0
      %vm7537 = vcmp.ge.f32.partialorder %v7505, 0.0
      %vm7538 = vcmp.ge.f32.partialorder %v7506, 0.0
      %vm7539 = vcmp.ge.f32.partialorder %v7507, 0.0
      %vm7540 = vcmp.ge.f32.partialorder %v7508, 0.0
      %vm7541 = vcmp.ge.f32.partialorder %v7509, 0.0
      %vm7542 = vcmp.ge.f32.partialorder %v7510, 0.0
      %vm7543 = vcmp.ge.f32.partialorder %v7511, 0.0
      %vm7544 = vcmp.ge.f32.partialorder %v7512, 0.0
      %vm7545 = vcmp.ge.f32.partialorder %v7513, 0.0
      %vm7546 = vcmp.ge.f32.partialorder %v7514, 0.0
      %vm7547 = vcmp.ge.f32.partialorder %v7515, 0.0
      %vm7548 = vcmp.ge.f32.partialorder %v7516, 0.0
      %vm7549 = vcmp.ge.f32.partialorder %v7517, 0.0
      %vm7550 = vcmp.ge.f32.partialorder %v7518, 0.0
      %v7551 = vmul.f32 %v7487, 0.1
      %v7552 = vmul.f32 %v7488, 0.1
      %v7553 = vmul.f32 %v7489, 0.1
      %v7554 = vmul.f32 %v7490, 0.1
      %v7555 = vmul.f32 %v7491, 0.1
      %v7556 = vmul.f32 %v7492, 0.1
      %v7557 = vmul.f32 %v7493, 0.1
      %v7558 = vmul.f32 %v7494, 0.1
      %v7559 = vmul.f32 %v7495, 0.1
      %v7560 = vmul.f32 %v7496, 0.1
      %v7561 = vmul.f32 %v7497, 0.1
      %v7562 = vmul.f32 %v7498, 0.1
      %v7563 = vmul.f32 %v7499, 0.1
      %v7564 = vmul.f32 %v7500, 0.1
      %v7565 = vmul.f32 %v7501, 0.1
      %v7566 = vmul.f32 %v7502, 0.1
      %v7567 = vmul.f32 %v7503, 0.1
      %v7568 = vmul.f32 %v7504, 0.1
      %v7569 = vmul.f32 %v7505, 0.1
      %v7570 = vmul.f32 %v7506, 0.1
      %v7571 = vmul.f32 %v7507, 0.1
      %v7572 = vmul.f32 %v7508, 0.1
      %v7573 = vmul.f32 %v7509, 0.1
      %v7574 = vmul.f32 %v7510, 0.1
      %v7575 = vmul.f32 %v7511, 0.1
      %v7576 = vmul.f32 %v7512, 0.1
      %v7577 = vmul.f32 %v7513, 0.1
      %v7578 = vmul.f32 %v7514, 0.1
      %v7579 = vmul.f32 %v7515, 0.1
      %v7580 = vmul.f32 %v7516, 0.1
      %v7581 = vmul.f32 %v7517, 0.1
      %v7582 = vmul.f32 %v7518, 0.1
      %v7583 = vsel %vm7519, %v7487, %v7551
      %v7584 = vsel %vm7520, %v7488, %v7552
      %v7585 = vsel %vm7521, %v7489, %v7553
      %v7586 = vsel %vm7522, %v7490, %v7554
      %v7587 = vsel %vm7523, %v7491, %v7555
      %v7588 = vsel %vm7524, %v7492, %v7556
      %v7589 = vsel %vm7525, %v7493, %v7557
      %v7590 = vsel %vm7526, %v7494, %v7558
      %v7591 = vsel %vm7527, %v7495, %v7559
      %v7592 = vsel %vm7528, %v7496, %v7560
      %v7593 = vsel %vm7529, %v7497, %v7561
      %v7594 = vsel %vm7530, %v7498, %v7562
      %v7595 = vsel %vm7531, %v7499, %v7563
      %v7596 = vsel %vm7532, %v7500, %v7564
      %v7597 = vsel %vm7533, %v7501, %v7565
      %v7598 = vsel %vm7534, %v7502, %v7566
      %v7599 = vsel %vm7535, %v7503, %v7567
      %v7600 = vsel %vm7536, %v7504, %v7568
      %v7601 = vsel %vm7537, %v7505, %v7569
      %v7602 = vsel %vm7538, %v7506, %v7570
      %v7603 = vsel %vm7539, %v7507, %v7571
      %v7604 = vsel %vm7540, %v7508, %v7572
      %v7605 = vsel %vm7541, %v7509, %v7573
      %v7606 = vsel %vm7542, %v7510, %v7574
      %v7607 = vsel %vm7543, %v7511, %v7575
      %v7608 = vsel %vm7544, %v7512, %v7576
      %v7609 = vsel %vm7545, %v7513, %v7577
      %v7610 = vsel %vm7546, %v7514, %v7578
      %v7611 = vsel %vm7547, %v7515, %v7579
      %v7612 = vsel %vm7548, %v7516, %v7580
      %v7613 = vsel %vm7549, %v7517, %v7581
      %v7614 = vsel %vm7550, %v7518, %v7582
      %v7615 = vld [vmem:[%s298 + $0x8] sm:$0xff]
      %v7616 = vld [vmem:[%s298 + $0x10] sm:$0xff]
      %v7617 = vld [vmem:[%s298 + $0x28] sm:$0xff]
      %v7618 = vld [vmem:[%s298 + $0x30] sm:$0xff]
      %v7619 = vld [vmem:[%s298 + $0x48] sm:$0xff]
      %v7620 = vld [vmem:[%s298 + $0x50] sm:$0xff]
      %v7621 = vld [vmem:[%s298 + $0x68] sm:$0xff]
      %v7622 = vld [vmem:[%s298 + $0x70] sm:$0xff]
      %v7623 = vld [vmem:[%s298 + $0x88] sm:$0xff]
      %v7624 = vld [vmem:[%s298 + $0x90] sm:$0xff]
      %v7625 = vld [vmem:[%s298 + $0xa8] sm:$0xff]
      %v7626 = vld [vmem:[%s298 + $0xb0] sm:$0xff]
      %v7627 = vld [vmem:[%s298 + $0xc8] sm:$0xff]
      %v7628 = vld [vmem:[%s298 + $0xd0] sm:$0xff]
      %v7629 = vld [vmem:[%s298 + $0xe8] sm:$0xff]
      %v7630 = vld [vmem:[%s298 + $0xf0] sm:$0xff]
      %v7631 = vld [vmem:[%s298 + $0x108] sm:$0xff]
      %v7632 = vld [vmem:[%s298 + $0x110] sm:$0xff]
      %v7633 = vld [vmem:[%s298 + $0x128] sm:$0xff]
      %v7634 = vld [vmem:[%s298 + $0x130] sm:$0xff]
      %v7635 = vld [vmem:[%s298 + $0x148] sm:$0xff]
      %v7636 = vld [vmem:[%s298 + $0x150] sm:$0xff]
      %v7637 = vld [vmem:[%s298 + $0x168] sm:$0xff]
      %v7638 = vld [vmem:[%s298 + $0x170] sm:$0xff]
      %v7639 = vld [vmem:[%s298 + $0x188] sm:$0xff]
      %v7640 = vld [vmem:[%s298 + $0x190] sm:$0xff]
      %v7641 = vld [vmem:[%s298 + $0x1a8] sm:$0xff]
      %v7642 = vld [vmem:[%s298 + $0x1b0] sm:$0xff]
      %v7643 = vld [vmem:[%s298 + $0x1c8] sm:$0xff]
      %v7644 = vld [vmem:[%s298 + $0x1d0] sm:$0xff]
      %v7645 = vld [vmem:[%s298 + $0x1e8] sm:$0xff]
      %v7646 = vld [vmem:[%s298 + $0x1f0] sm:$0xff]
      %v7647 = vld [vmem:[%s5] sm:$0xf]
      %v7649 = vsel %vm279, %v7615, 0
      %v7652 = vsel %vm279, %v7616, 0
      %v7655 = vsel %vm279, %v7617, 0
      %v7658 = vsel %vm279, %v7618, 0
      %v7661 = vsel %vm279, %v7619, 0
      %v7664 = vsel %vm279, %v7620, 0
      %v7667 = vsel %vm279, %v7621, 0
      %v7670 = vsel %vm279, %v7622, 0
      %v7673 = vsel %vm279, %v7623, 0
      %v7676 = vsel %vm279, %v7624, 0
      %v7679 = vsel %vm279, %v7625, 0
      %v7682 = vsel %vm279, %v7626, 0
      %v7685 = vsel %vm279, %v7627, 0
      %v7688 = vsel %vm279, %v7628, 0
      %v7691 = vsel %vm279, %v7629, 0
      %v7694 = vsel %vm279, %v7630, 0
      %v7697 = vsel %vm279, %v7631, 0
      %v7700 = vsel %vm279, %v7632, 0
      %v7703 = vsel %vm279, %v7633, 0
      %v7706 = vsel %vm279, %v7634, 0
      %v7709 = vsel %vm279, %v7635, 0
      %v7712 = vsel %vm279, %v7636, 0
      %v7715 = vsel %vm279, %v7637, 0
      %v7718 = vsel %vm279, %v7638, 0
      %v7721 = vsel %vm279, %v7639, 0
      %v7724 = vsel %vm279, %v7640, 0
      %v7727 = vsel %vm279, %v7641, 0
      %v7730 = vsel %vm279, %v7642, 0
      %v7733 = vsel %vm279, %v7643, 0
      %v7736 = vsel %vm279, %v7644, 0
      %v7739 = vsel %vm279, %v7645, 0
      %v7742 = vsel %vm279, %v7646, 0
      %v7745 = vsel %vm610, %v7647, 0
      %7747 = vmatprep.subr.mxu0 0.0
      %7748 = vmatpush1.msra.mxu0 %v7745
      %7749 = vmatprep.subr.mxu0 0.0
      %7750 = vmatpush1.msra.mxu0 0.0
      %7751 = vmatprep.subr.mxu0 0.0
      %7752 = vmatpush1.msra.mxu0 0.0
      %7753 = vmatprep.subr.mxu0 0.0
      %7754 = vmatpush1.msra.mxu0 0.0
      %7755 = vmatprep.subr.mxu0 0.0
      %7756 = vmatpush1.msra.mxu0 0.0
      %7757 = vmatprep.subr.mxu0 0.0
      %7758 = vmatpush1.msra.mxu0 0.0
      %7759 = vmatprep.subr.mxu0 0.0
      %7760 = vmatpush1.msra.mxu0 0.0
      %7761 = vmatprep.subr.mxu0 0.0
      %7762 = vmatpush1.msra.mxu0 0.0
      %7763 = vmatprep.subr.mxu0 0.0
      %7764 = vmatpush1.msra.mxu0 0.0
      %7765 = vmatprep.subr.mxu0 0.0
      %7766 = vmatpush1.msra.mxu0 0.0
      %7767 = vmatprep.subr.mxu0 0.0
      %7768 = vmatpush1.msra.mxu0 0.0
      %7769 = vmatprep.subr.mxu0 0.0
      %7770 = vmatpush1.msra.mxu0 0.0
      %7771 = vmatprep.subr.mxu0 0.0
      %7772 = vmatpush1.msra.mxu0 0.0
      %7773 = vmatprep.subr.mxu0 0.0
      %7774 = vmatpush1.msra.mxu0 0.0
      %7775 = vmatprep.subr.mxu0 0.0
      %7776 = vmatpush1.msra.mxu0 0.0
      %7777 = vmatprep.subr.mxu0 0.0
      %7778 = vmatpush1.msra.mxu0 0.0
      %7779 = vmatprep.subr.mxu0 0.0
      %7780 = vmatpush1.msra.mxu0 0.0
      %7781 = vmatprep.subr.mxu0 0.0
      %7782 = vmatpush1.msra.mxu0 0.0
      %7783 = vmatprep.subr.mxu0 0.0
      %7784 = vmatpush1.msra.mxu0 0.0
      %7785 = vmatprep.subr.mxu0 0.0
      %7786 = vmatpush1.msra.mxu0 0.0
      %7787 = vmatprep.subr.mxu0 0.0
      %7788 = vmatpush1.msra.mxu0 0.0
      %7789 = vmatprep.subr.mxu0 0.0
      %7790 = vmatpush1.msra.mxu0 0.0
      %7791 = vmatprep.subr.mxu0 0.0
      %7792 = vmatpush1.msra.mxu0 0.0
      %7793 = vmatprep.subr.mxu0 0.0
      %7794 = vmatpush1.msra.mxu0 0.0
      %7795 = vmatprep.subr.mxu0 0.0
      %7796 = vmatpush1.msra.mxu0 0.0
      %7797 = vmatprep.subr.mxu0 0.0
      %7798 = vmatpush1.msra.mxu0 0.0
      %7799 = vmatprep.subr.mxu0 0.0
      %7800 = vmatpush1.msra.mxu0 0.0
      %7801 = vmatprep.subr.mxu0 0.0
      %7802 = vmatpush1.msra.mxu0 0.0
      %7803 = vmatprep.subr.mxu0 0.0
      %7804 = vmatpush1.msra.mxu0 0.0
      %7805 = vmatprep.subr.mxu0 0.0
      %7806 = vmatpush1.msra.mxu0 0.0
      %7807 = vmatprep.subr.mxu0 0.0
      %7808 = vmatpush1.msra.mxu0 0.0
      %7809 = vmatprep.subr.mxu0 0.0
      %7810 = vmatpush1.msra.mxu0 0.0
      %7811 = vmatprep.mubr.f32.mxu0 0.0
      %7812 = vmatmul.mubr.f32.gmra.mrb[0].mxu0 %v7649
      %v7813 = vpop.f32.mrb[0].mxu0
      %v7814 = vadd.f32 0.0, %v7813
      %v7815 = vpop.f32.mrb[0].mxu0
      %7816 = vmatprep.mubr.f32.mxu0 0.0
      %7817 = vmatmul.mubr.f32.gmra.mrb[0].mxu0 %v7652
      %v7818 = vpop.f32.mrb[0].mxu0
      %v7819 = vadd.f32 0.0, %v7818
      %v7820 = vpop.f32.mrb[0].mxu0
      %7821 = vmatprep.mubr.f32.mxu0 0.0
      %7822 = vmatmul.mubr.f32.gmra.mrb[0].mxu0 %v7655
      %v7823 = vpop.f32.mrb[0].mxu0
      %v7824 = vadd.f32 0.0, %v7823
      %v7825 = vpop.f32.mrb[0].mxu0
      %7826 = vmatprep.mubr.f32.mxu0 0.0
      %7827 = vmatmul.mubr.f32.gmra.mrb[0].mxu0 %v7658
      %v7828 = vpop.f32.mrb[0].mxu0
      %v7829 = vadd.f32 0.0, %v7828
      %v7830 = vpop.f32.mrb[0].mxu0
      %7831 = vmatprep.mubr.f32.mxu0 0.0
      %7832 = vmatmul.mubr.f32.gmra.mrb[0].mxu0 %v7661
      %v7833 = vpop.f32.mrb[0].mxu0
      %v7834 = vadd.f32 0.0, %v7833
      %v7835 = vpop.f32.mrb[0].mxu0
      %7836 = vmatprep.mubr.f32.mxu0 0.0
      %7837 = vmatmul.mubr.f32.gmra.mrb[0].mxu0 %v7664
      %v7838 = vpop.f32.mrb[0].mxu0
      %v7839 = vadd.f32 0.0, %v7838
      %v7840 = vpop.f32.mrb[0].mxu0
      %7841 = vmatprep.mubr.f32.mxu0 0.0
      %7842 = vmatmul.mubr.f32.gmra.mrb[0].mxu0 %v7667
      %v7843 = vpop.f32.mrb[0].mxu0
      %v7844 = vadd.f32 0.0, %v7843
      %v7845 = vpop.f32.mrb[0].mxu0
      %7846 = vmatprep.mubr.f32.mxu0 0.0
      %7847 = vmatmul.mubr.f32.gmra.mrb[0].mxu0 %v7670
      %v7848 = vpop.f32.mrb[0].mxu0
      %v7849 = vadd.f32 0.0, %v7848
      %v7850 = vpop.f32.mrb[0].mxu0
      %7851 = vmatprep.mubr.f32.mxu0 0.0
      %7852 = vmatmul.mubr.f32.gmra.mrb[0].mxu0 %v7673
      %v7853 = vpop.f32.mrb[0].mxu0
      %v7854 = vadd.f32 0.0, %v7853
      %v7855 = vpop.f32.mrb[0].mxu0
      %7856 = vmatprep.mubr.f32.mxu0 0.0
      %7857 = vmatmul.mubr.f32.gmra.mrb[0].mxu0 %v7676
      %v7858 = vpop.f32.mrb[0].mxu0
      %v7859 = vadd.f32 0.0, %v7858
      %v7860 = vpop.f32.mrb[0].mxu0
      %7861 = vmatprep.mubr.f32.mxu0 0.0
      %7862 = vmatmul.mubr.f32.gmra.mrb[0].mxu0 %v7679
      %v7863 = vpop.f32.mrb[0].mxu0
      %v7864 = vadd.f32 0.0, %v7863
      %v7865 = vpop.f32.mrb[0].mxu0
      %7866 = vmatprep.mubr.f32.mxu0 0.0
      %7867 = vmatmul.mubr.f32.gmra.mrb[0].mxu0 %v7682
      %v7868 = vpop.f32.mrb[0].mxu0
      %v7869 = vadd.f32 0.0, %v7868
      %v7870 = vpop.f32.mrb[0].mxu0
      %7871 = vmatprep.mubr.f32.mxu0 0.0
      %7872 = vmatmul.mubr.f32.gmra.mrb[0].mxu0 %v7685
      %v7873 = vpop.f32.mrb[0].mxu0
      %v7874 = vadd.f32 0.0, %v7873
      %v7875 = vpop.f32.mrb[0].mxu0
      %7876 = vmatprep.mubr.f32.mxu0 0.0
      %7877 = vmatmul.mubr.f32.gmra.mrb[0].mxu0 %v7688
      %v7878 = vpop.f32.mrb[0].mxu0
      %v7879 = vadd.f32 0.0, %v7878
      %v7880 = vpop.f32.mrb[0].mxu0
      %7881 = vmatprep.mubr.f32.mxu0 0.0
      %7882 = vmatmul.mubr.f32.gmra.mrb[0].mxu0 %v7691
      %v7883 = vpop.f32.mrb[0].mxu0
      %v7884 = vadd.f32 0.0, %v7883
      %v7885 = vpop.f32.mrb[0].mxu0
      %7886 = vmatprep.mubr.f32.mxu0 0.0
      %7887 = vmatmul.mubr.f32.gmra.mrb[0].mxu0 %v7694
      %v7888 = vpop.f32.mrb[0].mxu0
      %v7889 = vadd.f32 0.0, %v7888
      %v7890 = vpop.f32.mrb[0].mxu0
      %7891 = vmatprep.mubr.f32.mxu0 0.0
      %7892 = vmatmul.mubr.f32.gmra.mrb[0].mxu0 %v7697
      %v7893 = vpop.f32.mrb[0].mxu0
      %v7894 = vadd.f32 0.0, %v7893
      %v7895 = vpop.f32.mrb[0].mxu0
      %7896 = vmatprep.mubr.f32.mxu0 0.0
      %7897 = vmatmul.mubr.f32.gmra.mrb[0].mxu0 %v7700
      %v7898 = vpop.f32.mrb[0].mxu0
      %v7899 = vadd.f32 0.0, %v7898
      %v7900 = vpop.f32.mrb[0].mxu0
      %7901 = vmatprep.mubr.f32.mxu0 0.0
      %7902 = vmatmul.mubr.f32.gmra.mrb[0].mxu0 %v7703
      %v7903 = vpop.f32.mrb[0].mxu0
      %v7904 = vadd.f32 0.0, %v7903
      %v7905 = vpop.f32.mrb[0].mxu0
      %7906 = vmatprep.mubr.f32.mxu0 0.0
      %7907 = vmatmul.mubr.f32.gmra.mrb[0].mxu0 %v7706
      %v7908 = vpop.f32.mrb[0].mxu0
      %v7909 = vadd.f32 0.0, %v7908
      %v7910 = vpop.f32.mrb[0].mxu0
      %7911 = vmatprep.mubr.f32.mxu0 0.0
      %7912 = vmatmul.mubr.f32.gmra.mrb[0].mxu0 %v7709
      %v7913 = vpop.f32.mrb[0].mxu0
      %v7914 = vadd.f32 0.0, %v7913
      %v7915 = vpop.f32.mrb[0].mxu0
      %7916 = vmatprep.mubr.f32.mxu0 0.0
      %7917 = vmatmul.mubr.f32.gmra.mrb[0].mxu0 %v7712
      %v7918 = vpop.f32.mrb[0].mxu0
      %v7919 = vadd.f32 0.0, %v7918
      %v7920 = vpop.f32.mrb[0].mxu0
      %7921 = vmatprep.mubr.f32.mxu0 0.0
      %7922 = vmatmul.mubr.f32.gmra.mrb[0].mxu0 %v7715
      %v7923 = vpop.f32.mrb[0].mxu0
      %v7924 = vadd.f32 0.0, %v7923
      %v7925 = vpop.f32.mrb[0].mxu0
      %7926 = vmatprep.mubr.f32.mxu0 0.0
      %7927 = vmatmul.mubr.f32.gmra.mrb[0].mxu0 %v7718
      %v7928 = vpop.f32.mrb[0].mxu0
      %v7929 = vadd.f32 0.0, %v7928
      %v7930 = vpop.f32.mrb[0].mxu0
      %7931 = vmatprep.mubr.f32.mxu0 0.0
      %7932 = vmatmul.mubr.f32.gmra.mrb[0].mxu0 %v7721
      %v7933 = vpop.f32.mrb[0].mxu0
      %v7934 = vadd.f32 0.0, %v7933
      %v7935 = vpop.f32.mrb[0].mxu0
      %7936 = vmatprep.mubr.f32.mxu0 0.0
      %7937 = vmatmul.mubr.f32.gmra.mrb[0].mxu0 %v7724
      %v7938 = vpop.f32.mrb[0].mxu0
      %v7939 = vadd.f32 0.0, %v7938
      %v7940 = vpop.f32.mrb[0].mxu0
      %7941 = vmatprep.mubr.f32.mxu0 0.0
      %7942 = vmatmul.mubr.f32.gmra.mrb[0].mxu0 %v7727
      %v7943 = vpop.f32.mrb[0].mxu0
      %v7944 = vadd.f32 0.0, %v7943
      %v7945 = vpop.f32.mrb[0].mxu0
      %7946 = vmatprep.mubr.f32.mxu0 0.0
      %7947 = vmatmul.mubr.f32.gmra.mrb[0].mxu0 %v7730
      %v7948 = vpop.f32.mrb[0].mxu0
      %v7949 = vadd.f32 0.0, %v7948
      %v7950 = vpop.f32.mrb[0].mxu0
      %7951 = vmatprep.mubr.f32.mxu0 0.0
      %7952 = vmatmul.mubr.f32.gmra.mrb[0].mxu0 %v7733
      %v7953 = vpop.f32.mrb[0].mxu0
      %v7954 = vadd.f32 0.0, %v7953
      %v7955 = vpop.f32.mrb[0].mxu0
      %7956 = vmatprep.mubr.f32.mxu0 0.0
      %7957 = vmatmul.mubr.f32.gmra.mrb[0].mxu0 %v7736
      %v7958 = vpop.f32.mrb[0].mxu0
      %v7959 = vadd.f32 0.0, %v7958
      %v7960 = vpop.f32.mrb[0].mxu0
      %7961 = vmatprep.mubr.f32.mxu0 0.0
      %7962 = vmatmul.mubr.f32.gmra.mrb[0].mxu0 %v7739
      %v7963 = vpop.f32.mrb[0].mxu0
      %v7964 = vadd.f32 0.0, %v7963
      %v7965 = vpop.f32.mrb[0].mxu0
      %7966 = vmatprep.mubr.f32.mxu0 0.0
      %7967 = vmatmul.mubr.f32.gmra.mrb[0].mxu0 %v7742
      %v7968 = vpop.f32.mrb[0].mxu0
      %v7969 = vadd.f32 0.0, %v7968
      %v7970 = vpop.f32.mrb[0].mxu0
      %7971 = vdwg.mxu0
      %v7972 = vadd.f32 %v7583, %v7814
      %v7973 = vadd.f32 %v7584, %v7819
      %v7974 = vadd.f32 %v7585, %v7824
      %v7975 = vadd.f32 %v7586, %v7829
      %v7976 = vadd.f32 %v7587, %v7834
      %v7977 = vadd.f32 %v7588, %v7839
      %v7978 = vadd.f32 %v7589, %v7844
      %v7979 = vadd.f32 %v7590, %v7849
      %v7980 = vadd.f32 %v7591, %v7854
      %v7981 = vadd.f32 %v7592, %v7859
      %v7982 = vadd.f32 %v7593, %v7864
      %v7983 = vadd.f32 %v7594, %v7869
      %v7984 = vadd.f32 %v7595, %v7874
      %v7985 = vadd.f32 %v7596, %v7879
      %v7986 = vadd.f32 %v7597, %v7884
      %v7987 = vadd.f32 %v7598, %v7889
      %v7988 = vadd.f32 %v7599, %v7894
      %v7989 = vadd.f32 %v7600, %v7899
      %v7990 = vadd.f32 %v7601, %v7904
      %v7991 = vadd.f32 %v7602, %v7909
      %v7992 = vadd.f32 %v7603, %v7914
      %v7993 = vadd.f32 %v7604, %v7919
      %v7994 = vadd.f32 %v7605, %v7924
      %v7995 = vadd.f32 %v7606, %v7929
      %v7996 = vadd.f32 %v7607, %v7934
      %v7997 = vadd.f32 %v7608, %v7939
      %v7998 = vadd.f32 %v7609, %v7944
      %v7999 = vadd.f32 %v7610, %v7949
      %v8000 = vadd.f32 %v7611, %v7954
      %v8001 = vadd.f32 %v7612, %v7959
      %v8002 = vadd.f32 %v7613, %v7964
      %v8003 = vadd.f32 %v7614, %v7969
      %v8004 = vld [vmem:[%s6] sm:$0x1]
      %v8006 = vlaneseq
      %v8007 = vshrl.u32 %v8006, 7
      %v8008 = vsub.s32 0, %v8007
      %v8009 = vrot.slane %v8004, %v8008
      %v8011 = vadd.f32 %v7972, %v8009
      %v8012 = vadd.f32 %v7973, %v8009
      %v8013 = vadd.f32 %v7974, %v8009
      %v8014 = vadd.f32 %v7975, %v8009
      %v8015 = vadd.f32 %v7976, %v8009
      %v8016 = vadd.f32 %v7977, %v8009
      %v8017 = vadd.f32 %v7978, %v8009
      %v8018 = vadd.f32 %v7979, %v8009
      %v8019 = vadd.f32 %v7980, %v8009
      %v8020 = vadd.f32 %v7981, %v8009
      %v8021 = vadd.f32 %v7982, %v8009
      %v8022 = vadd.f32 %v7983, %v8009
      %v8023 = vadd.f32 %v7984, %v8009
      %v8024 = vadd.f32 %v7985, %v8009
      %v8025 = vadd.f32 %v7986, %v8009
      %v8026 = vadd.f32 %v7987, %v8009
      %v8027 = vadd.f32 %v7988, %v8009
      %v8028 = vadd.f32 %v7989, %v8009
      %v8029 = vadd.f32 %v7990, %v8009
      %v8030 = vadd.f32 %v7991, %v8009
      %v8031 = vadd.f32 %v7992, %v8009
      %v8032 = vadd.f32 %v7993, %v8009
      %v8033 = vadd.f32 %v7994, %v8009
      %v8034 = vadd.f32 %v7995, %v8009
      %v8035 = vadd.f32 %v7996, %v8009
      %v8036 = vadd.f32 %v7997, %v8009
      %v8037 = vadd.f32 %v7998, %v8009
      %v8038 = vadd.f32 %v7999, %v8009
      %v8039 = vadd.f32 %v8000, %v8009
      %v8040 = vadd.f32 %v8001, %v8009
      %v8041 = vadd.f32 %v8002, %v8009
      %v8042 = vadd.f32 %v8003, %v8009
      %8043 = vst.msk [vmem:[%s278] sm:$0xff] %vm331, %v8011
      %8044 = vst.msk [vmem:[%s278 + $0x8] sm:$0xff] %vm331, %v8012
      %8045 = vst.msk [vmem:[%s278 + $0x10] sm:$0xff] %vm331, %v8013
      %8046 = vst.msk [vmem:[%s278 + $0x18] sm:$0xff] %vm331, %v8014
      %8047 = vst.msk [vmem:[%s278 + $0x20] sm:$0xff] %vm331, %v8015
      %8048 = vst.msk [vmem:[%s278 + $0x28] sm:$0xff] %vm331, %v8016
      %8049 = vst.msk [vmem:[%s278 + $0x30] sm:$0xff] %vm331, %v8017
      %8050 = vst.msk [vmem:[%s278 + $0x38] sm:$0xff] %vm331, %v8018
      %8051 = vst.msk [vmem:[%s278 + $0x40] sm:$0xff] %vm331, %v8019
      %8052 = vst.msk [vmem:[%s278 + $0x48] sm:$0xff] %vm331, %v8020
      %8053 = vst.msk [vmem:[%s278 + $0x50] sm:$0xff] %vm331, %v8021
      %8054 = vst.msk [vmem:[%s278 + $0x58] sm:$0xff] %vm331, %v8022
      %8055 = vst.msk [vmem:[%s278 + $0x60] sm:$0xff] %vm331, %v8023
      %8056 = vst.msk [vmem:[%s278 + $0x68] sm:$0xff] %vm331, %v8024
      %8057 = vst.msk [vmem:[%s278 + $0x70] sm:$0xff] %vm331, %v8025
      %8058 = vst.msk [vmem:[%s278 + $0x78] sm:$0xff] %vm331, %v8026
      %8059 = vst.msk [vmem:[%s278 + $0x80] sm:$0xff] %vm331, %v8027
      %8060 = vst.msk [vmem:[%s278 + $0x88] sm:$0xff] %vm331, %v8028
      %8061 = vst.msk [vmem:[%s278 + $0x90] sm:$0xff] %vm331, %v8029
      %8062 = vst.msk [vmem:[%s278 + $0x98] sm:$0xff] %vm331, %v8030
      %8063 = vst.msk [vmem:[%s278 + $0xa0] sm:$0xff] %vm331, %v8031
      %8064 = vst.msk [vmem:[%s278 + $0xa8] sm:$0xff] %vm331, %v8032
      %8065 = vst.msk [vmem:[%s278 + $0xb0] sm:$0xff] %vm331, %v8033
      %8066 = vst.msk [vmem:[%s278 + $0xb8] sm:$0xff] %vm331, %v8034
      %8067 = vst.msk [vmem:[%s278 + $0xc0] sm:$0xff] %vm331, %v8035
      %8068 = vst.msk [vmem:[%s278 + $0xc8] sm:$0xff] %vm331, %v8036
      %8069 = vst.msk [vmem:[%s278 + $0xd0] sm:$0xff] %vm331, %v8037
      %8070 = vst.msk [vmem:[%s278 + $0xd8] sm:$0xff] %vm331, %v8038
      %8071 = vst.msk [vmem:[%s278 + $0xe0] sm:$0xff] %vm331, %v8039
      %8072 = vst.msk [vmem:[%s278 + $0xe8] sm:$0xff] %vm331, %v8040
      %8073 = vst.msk [vmem:[%s278 + $0xf0] sm:$0xff] %vm331, %v8041
      %8074 = vst.msk [vmem:[%s278 + $0xf8] sm:$0xff] %vm331, %v8042
      %p8075 = scmp.lt.s32.totalorder %s18, 1
      %s8076 = scalar_select %p8075, %s18, 1
      %s8077 = smul.addr %s8076, 32
      %s8078 = smul.addr %s8077, 8
      %s8079 = scalar_lea.vmem %s7, %s8078
      // Predicated region
      $region49: #{tpu_custom_call.1} parent=47 // pred_check
        %p8080 = pneg %p188
      $region50: #{tpu_custom_call.1} parent=47 // pred_check_branch
        %8082 = sbr.rel (%p8080) target = $region52
      $region51: #{tpu_custom_call.1} parent=47 // pred_region
        _
      $region52: #{tpu_custom_call.1} parent=47 // pred_fallthru
        _
    $region48: #{tpu_custom_call.1} parent=5 // pred_fallthru
      _
    %p8083 = scmp.le.s32.totalorder 2, %s13
    // Predicated region
    $region53: #{tpu_custom_call.1} parent=5 // pred_check
      %p8084 = pneg %p8083
    $region54: #{tpu_custom_call.1} parent=5 // pred_check_branch
      %8086 = sbr.rel (%p8084) target = $region56
    $region55: #{tpu_custom_call.1} parent=5 // pred_region
      %s8087 = ssub.s32 %s13, 2
      // Predicated region
      $region57: #{tpu_custom_call.1} parent=55 // pred_check
        %p8088 = pneg %p194
      $region58: #{tpu_custom_call.1} parent=55 // pred_check_branch
        %8090 = sbr.rel (%p8088) target = $region60
      $region59: #{tpu_custom_call.1} parent=55 // pred_region
        %p8091 = scmp.lt.s32.totalorder %s19, 1
        %s8092 = scalar_select %p8091, %s19, 1
        %s8093 = smul.addr %s8092, 32
        %s8094 = smul.addr %s8093, 8
        %s8095 = scalar_lea.vmem %s7, %s8094
      $region60: #{tpu_custom_call.1} parent=55 // pred_fallthru
        _
    $region56: #{tpu_custom_call.1} parent=5 // pred_fallthru
      _
  $region6: #{tpu_custom_call.1} parent=0 // loop_footer
    %s17 = sadd.s32 1, %s13
  $region7: #{tpu_custom_call.1} parent=0 // loop_footer_branch
    %12 = sbr.rel target = $region3
  $region8: #{tpu_custom_call.1} parent=0 // loop_exit
    _

</llo_original>
